<compile_context>
chip_gen: v6e
topology: v6e:2x2x1
jax: 0.10.0
libtpu: 0.0.40
codegen_flags: <defaults>
</compile_context>

<pallas_src>
import functools

import numpy as np

import jax
import jax.numpy as jnp
from jax.experimental import pallas as pl
from jax.experimental.pallas import tpu as pltpu


# ----------------------------- Pallas kernel --------------------------------

def _conv_kernel(*refs, offs, relu, with_stats):
    """Implicit-GEMM conv for one batch element (one grid step).

    refs (in order):
      x_ref : (1, R, Kc)   bf16  flattened (coarse-row-major) padded activation
      w_ref : (T, Kc, Co)  bf16  per-tap weight matrices
      b_ref : (1, Co)      f32   bias
      m_ref : (L, 1)       f32   [only if with_stats] 1.0 on valid rows, 0.0 on
                                 the junk column added by the flat-row trick
      y_ref : (1, L, Co)         conv(+bias)(+ReLU) output (junk cols included)
      s1_ref, s2_ref : (1, 1, Co) f32  [only if with_stats] per-channel sum and
                                 sum-of-squares over this element's valid rows.

    Each tap t reads a CONTIGUOUS row window x[offs[t] : offs[t] + L], so the
    kernel needs no strided slicing, reshapes, or iota masks.
    """
    if with_stats:
        x_ref, w_ref, b_ref, m_ref, y_ref, s1_ref, s2_ref = refs
    else:
        x_ref, w_ref, b_ref, y_ref = refs

    L = y_ref.shape[1]
    acc = None
    for t, off in enumerate(offs):
        xt = x_ref[0, off:off + L, :]                        # (L, Kc) bf16
        p = jnp.dot(xt, w_ref[t], preferred_element_type=jnp.float32)
        acc = p if acc is None else acc + p
    acc = acc + b_ref[...]                                   # (L, Co) f32
    if relu:
        acc = jnp.maximum(acc, 0.0)
    y_ref[0] = acc.astype(y_ref.dtype)

    if with_stats:
        av = acc * m_ref[...]                                # zero junk rows
        s1_ref[0] = jnp.sum(av, axis=0, keepdims=True)
        s2_ref[0] = jnp.sum(av * av, axis=0, keepdims=True)


def conv_layer_pallas(xflat, w_taps, bias, offs, out_rows, *, relu, with_stats,
                      mask=None, out_dtype=jnp.bfloat16):
    """One conv layer. Grid over batch; full per-batch-element blocks."""
    N, R, Kc = xflat.shape
    T, Kc2, Co = w_taps.shape
    assert Kc == Kc2 and max(offs) + out_rows <= R

    kern = functools.partial(_conv_kernel, offs=tuple(int(o) for o in offs),
                             relu=relu, with_stats=with_stats)

    in_specs = [pl.BlockSpec((1, R, Kc), lambda n: (n, 0, 0)),
                pl.BlockSpec((T, Kc, Co), lambda n: (0, 0, 0)),   # resident W
                pl.BlockSpec((1, Co), lambda n: (0, 0))]          # resident bias
    inputs = [xflat, w_taps, bias]
    if with_stats:
        in_specs.append(pl.BlockSpec((out_rows, 1), lambda n: (0, 0)))
        inputs.append(mask)
        out_shape = (jax.ShapeDtypeStruct((N, out_rows, Co), out_dtype),
                     jax.ShapeDtypeStruct((N, 1, Co), jnp.float32),
                     jax.ShapeDtypeStruct((N, 1, Co), jnp.float32))
        out_specs = (pl.BlockSpec((1, out_rows, Co), lambda n: (n, 0, 0)),
                     pl.BlockSpec((1, 1, Co), lambda n: (n, 0, 0)),
                     pl.BlockSpec((1, 1, Co), lambda n: (n, 0, 0)))
    else:
        out_shape = jax.ShapeDtypeStruct((N, out_rows, Co), out_dtype)
        out_specs = pl.BlockSpec((1, out_rows, Co), lambda n: (n, 0, 0))

    return pl.pallas_call(
        kern,
        grid=(N,),
        in_specs=in_specs,
        out_specs=out_specs,
        out_shape=out_shape,
        compiler_params=pltpu.CompilerParams(
            dimension_semantics=("parallel",),
            vmem_limit_bytes=48 * 1024 * 1024),
    )(*inputs)


# ------------------------- plain-JAX glue (fused by XLA) --------------------

def _prep_stride2(x, scale, shift):
    """BN affine (optional) + pad(1) + space-to-depth + flatten for a 3x3/s2 conv.

    Returns (xflat (N, Hcc*Wcc, 4C) bf16, Ho, Wo, Wcc)."""
    N, H, W, C = x.shape
    if scale is not None:
        x = (x.astype(jnp.float32) * scale + shift).astype(jnp.bfloat16)
    Ho, Wo = (H + 1) // 2, (W + 1) // 2
    Hcc, Wcc = Ho + 2, Wo + 1           # extra coarse row absorbs the tap overrun
    xp = jnp.pad(x, ((0, 0), (1, 2 * Hcc - H - 1), (1, 2 * Wcc - W - 1), (0, 0)))
    xsd = jnp.concatenate([xp[:, p::2, q::2, :] for p in (0, 1) for q in (0, 1)],
                          axis=-1)       # (N, Hcc, Wcc, 4C), phase index 2p+q
    return xsd.reshape(N, Hcc * Wcc, 4 * C), Ho, Wo, Wcc


def _prep_stride1(x, scale, shift):
    """BN affine (optional) + pad(1) + flatten for the 3x3/s1 validity head."""
    N, H, W, C = x.shape
    if scale is not None:
        x = (x.astype(jnp.float32) * scale + shift).astype(jnp.bfloat16)
    Hcc, Wcc = H + 3, W + 2
    xp = jnp.pad(x, ((0, 0), (1, Hcc - H - 1), (1, Wcc - W - 1), (0, 0)))
    return xp.reshape(N, Hcc * Wcc, C), H, W, Wcc


def _valid_row_mask(out_rows, wcc, wo):
    """Static (out_rows, 1) f32 mask: 1.0 for real output pixels, 0.0 for junk."""
    return jnp.asarray((np.arange(out_rows) % wcc < wo)
                       .astype(np.float32).reshape(out_rows, 1))


def _bn_scale_shift(s1p, s2p, count, gamma, beta, eps=1e-5):
    """Training-mode BatchNorm (biased variance) scale/shift from fused partials."""
    s1 = jnp.sum(s1p, axis=(0, 1))
    s2 = jnp.sum(s2p, axis=(0, 1))
    mean = s1 / count
    var = jnp.maximum(s2 / count - mean * mean, 0.0)
    inv = jax.lax.rsqrt(var + eps)
    scale = gamma * inv
    shift = beta - mean * scale
    return scale, shift


# ----------------------------- parameters -----------------------------------

def _make_s2_taps(w):
    """(3,3,Cin,Cout) -> (4, 4*Cin, Cout) coarse-tap weights for the s2d layout."""
    cin, cout = w.shape[2], w.shape[3]
    wt = jnp.zeros((4, 4 * cin, cout), jnp.float32)
    for dh in range(3):
        for dw in range(3):
            a, p = divmod(dh, 2)
            c, q = divmod(dw, 2)
            ph = 2 * p + q
            wt = wt.at[2 * a + c, ph * cin:(ph + 1) * cin, :].set(w[dh, dw])
    return wt.astype(jnp.bfloat16)


def _make_s1_taps(w):
    """(3,3,Cin,Cout) -> (9, Cin, Cout) tap weights for the stride-1 head."""
    return jnp.stack([w[dh, dw] for dh in range(3) for dw in range(3)],
                     axis=0).astype(jnp.bfloat16)


def init_params(key, n_feats=32):
    # (cin, cout, use_bn) for block1..block4 of FUnIEDiscriminator.
    cfg = [(3 * 2, n_feats, False),
           (n_feats, 2 * n_feats, True),
           (2 * n_feats, 4 * n_feats, True),
           (4 * n_feats, 8 * n_feats, True)]
    blocks = []
    for cin, cout, use_bn in cfg:
        key, kw, kb, kg, kbe = jax.random.split(key, 5)
        w = 0.05 * jax.random.normal(kw, (3, 3, cin, cout), jnp.float32)
        b = 0.05 * jax.random.normal(kb, (cout,), jnp.float32)
        blk = dict(w_taps=_make_s2_taps(w), bias=b.reshape(1, cout), use_bn=use_bn)
        if use_bn:
            blk["gamma"] = 1.0 + 0.1 * jax.random.normal(kg, (cout,), jnp.float32)
            blk["beta"] = 0.1 * jax.random.normal(kbe, (cout,), jnp.float32)
        blocks.append(blk)
    key, kw, kb = jax.random.split(key, 3)
    cin = 8 * n_feats
    w = 0.05 * jax.random.normal(kw, (3, 3, cin, 1), jnp.float32)
    b = 0.05 * jax.random.normal(kb, (1,), jnp.float32)
    head = dict(w_taps=_make_s1_taps(w), bias=b.reshape(1, 1))
    return dict(blocks=blocks, head=head)


# ----------------------------- model -----------------------------------------

def funie_discriminator(x1_nchw, x2_nchw, params):
    x = jnp.concatenate([x1_nchw, x2_nchw], axis=1)            # torch.cat(dim=1)
    x = jnp.transpose(x, (0, 2, 3, 1)).astype(jnp.bfloat16)    # NCHW -> NHWC
    N = x.shape[0]

    scale = shift = None
    for blk in params["blocks"]:
        # Conv(3x3, s2, p1) -> ReLU -> [BatchNorm]  (matches _block order);
        # the previous layer's BN affine is applied inside the fused prep.
        xflat, Ho, Wo, Wcc = _prep_stride2(x, scale, shift)
        L = Ho * Wcc
        offs = [a * Wcc + b for a in (0, 1) for b in (0, 1)]
        if blk["use_bn"]:
            mask = _valid_row_mask(L, Wcc, Wo)
            y, s1p, s2p = conv_layer_pallas(
                xflat, blk["w_taps"], blk["bias"], offs, L,
                relu=True, with_stats=True, mask=mask)
            scale, shift = _bn_scale_shift(s1p, s2p, N * Ho * Wo,
                                           blk["gamma"], blk["beta"])
        else:
            y = conv_layer_pallas(xflat, blk["w_taps"], blk["bias"], offs, L,
                                  relu=True, with_stats=False)
            scale = shift = None
        x = y.reshape(N, Ho, Wcc, -1)[:, :, :Wo, :]            # drop junk column

    # validity head: Conv2d(8*nf, 1, 3, 1, 1) with bias, no activation.
    xflat, Hf, Wf, Wcc = _prep_stride1(x, scale, shift)
    L = Hf * Wcc
    offs = [dh * Wcc + dw for dh in range(3) for dw in range(3)]
    v = conv_layer_pallas(xflat, params["head"]["w_taps"], params["head"]["bias"],
                          offs, L, relu=False, with_stats=False,
                          out_dtype=jnp.float32)
    return v.reshape(N, Hf, Wcc, 1)[:, :, :Wf, 0]              # == valid.squeeze(1)


if __name__ == "__main__":
    key = jax.random.PRNGKey(0)
    k1, k2, kp = jax.random.split(key, 3)
    x1 = jax.random.normal(k1, (2, 3, 16, 16), jnp.float32)    # NCHW like PyTorch
    x2 = jax.random.normal(k2, (2, 3, 16, 16), jnp.float32)
    params = init_params(kp, n_feats=32)

    fwd = jax.jit(lambda a, b: funie_discriminator(a, b, params))
    out = jax.block_until_ready(fwd(x1, x2))

    assert out.shape == (2, 1, 1), out.shape     # 16 -> 8 -> 4 -> 2 -> 1, head keeps 1
    assert bool(jnp.all(jnp.isfinite(out)))
    print("KERNEL_OK")
</pallas_src>

<mosaic_0001>
module attributes {stable_mosaic.version = 11 : i64} {
  func.func @_conv_kernel(%arg0: i32, %arg1: memref<1x90x24xbf16, #tpu.memory_space<vmem>>, %arg2: memref<4x24x32xbf16, #tpu.memory_space<vmem>>, %arg3: memref<1x32xf32, #tpu.memory_space<vmem>>, %arg4: memref<1x72x32xbf16, #tpu.memory_space<vmem>>) attributes {dimension_semantics = [#tpu.dimension_semantics<parallel>], iteration_bounds = array<i64: 2>, scalar_prefetch = 0 : i64, scratch_operands = 0 : i64, tpu.core_type = #tpu.core_type<tc>, window_params = [{transform_indices = @transform_0, window_bounds = array<i64: 1, 90, 24>}, {pipeline_mode = #tpu.pipeline_mode<synchronous>, transform_indices = @transform_1, window_bounds = array<i64: 4, 24, 32>}, {pipeline_mode = #tpu.pipeline_mode<synchronous>, transform_indices = @transform_2, window_bounds = array<i64: 1, 32>}, {transform_indices = @transform_3, window_bounds = array<i64: 1, 72, 32>}]} {
    %c0 = arith.constant 0 : index
    %c0_0 = arith.constant 0 : index
    %c0_1 = arith.constant 0 : index
    %0 = vector.load %arg1[%c0, %c0_0, %c0_1] : memref<1x90x24xbf16, #tpu.memory_space<vmem>>, vector<1x72x24xbf16>
    %1 = vector.shape_cast %0 : vector<1x72x24xbf16> to vector<72x24xbf16>
    %c0_2 = arith.constant 0 : index
    %c0_3 = arith.constant 0 : index
    %c0_4 = arith.constant 0 : index
    %2 = vector.load %arg2[%c0_2, %c0_3, %c0_4] : memref<4x24x32xbf16, #tpu.memory_space<vmem>>, vector<1x24x32xbf16>
    %3 = vector.shape_cast %2 : vector<1x24x32xbf16> to vector<24x32xbf16>
    %cst = arith.constant dense<0.000000e+00> : vector<72x32xf32>
    %4 = tpu.matmul %1, %3, %cst {dimension_numbers = #tpu.dot_dimension_numbers<[1], [0], [0], [1], [0, 0, 1, 1], [], []>} : vector<72x24xbf16>, vector<24x32xbf16>, vector<72x32xf32> -> vector<72x32xf32>
    %c0_5 = arith.constant 0 : index
    %c1 = arith.constant 1 : index
    %c0_6 = arith.constant 0 : index
    %5 = vector.load %arg1[%c0_5, %c1, %c0_6] : memref<1x90x24xbf16, #tpu.memory_space<vmem>>, vector<1x72x24xbf16>
    %6 = vector.shape_cast %5 : vector<1x72x24xbf16> to vector<72x24xbf16>
    %c1_7 = arith.constant 1 : index
    %c0_8 = arith.constant 0 : index
    %c0_9 = arith.constant 0 : index
    %7 = vector.load %arg2[%c1_7, %c0_8, %c0_9] : memref<4x24x32xbf16, #tpu.memory_space<vmem>>, vector<1x24x32xbf16>
    %8 = vector.shape_cast %7 : vector<1x24x32xbf16> to vector<24x32xbf16>
    %cst_10 = arith.constant dense<0.000000e+00> : vector<72x32xf32>
    %9 = tpu.matmul %6, %8, %cst_10 {dimension_numbers = #tpu.dot_dimension_numbers<[1], [0], [0], [1], [0, 0, 1, 1], [], []>} : vector<72x24xbf16>, vector<24x32xbf16>, vector<72x32xf32> -> vector<72x32xf32>
    %10 = arith.addf %4, %9 : vector<72x32xf32>
    %c0_11 = arith.constant 0 : index
    %c9 = arith.constant 9 : index
    %c0_12 = arith.constant 0 : index
    %11 = vector.load %arg1[%c0_11, %c9, %c0_12] : memref<1x90x24xbf16, #tpu.memory_space<vmem>>, vector<1x72x24xbf16>
    %12 = vector.shape_cast %11 : vector<1x72x24xbf16> to vector<72x24xbf16>
    %c2 = arith.constant 2 : index
    %c0_13 = arith.constant 0 : index
    %c0_14 = arith.constant 0 : index
    %13 = vector.load %arg2[%c2, %c0_13, %c0_14] : memref<4x24x32xbf16, #tpu.memory_space<vmem>>, vector<1x24x32xbf16>
    %14 = vector.shape_cast %13 : vector<1x24x32xbf16> to vector<24x32xbf16>
    %cst_15 = arith.constant dense<0.000000e+00> : vector<72x32xf32>
    %15 = tpu.matmul %12, %14, %cst_15 {dimension_numbers = #tpu.dot_dimension_numbers<[1], [0], [0], [1], [0, 0, 1, 1], [], []>} : vector<72x24xbf16>, vector<24x32xbf16>, vector<72x32xf32> -> vector<72x32xf32>
    %16 = arith.addf %10, %15 : vector<72x32xf32>
    %c0_16 = arith.constant 0 : index
    %c10 = arith.constant 10 : index
    %c0_17 = arith.constant 0 : index
    %17 = vector.load %arg1[%c0_16, %c10, %c0_17] : memref<1x90x24xbf16, #tpu.memory_space<vmem>>, vector<1x72x24xbf16>
    %18 = vector.shape_cast %17 : vector<1x72x24xbf16> to vector<72x24xbf16>
    %c3 = arith.constant 3 : index
    %c0_18 = arith.constant 0 : index
    %c0_19 = arith.constant 0 : index
    %19 = vector.load %arg2[%c3, %c0_18, %c0_19] : memref<4x24x32xbf16, #tpu.memory_space<vmem>>, vector<1x24x32xbf16>
    %20 = vector.shape_cast %19 : vector<1x24x32xbf16> to vector<24x32xbf16>
    %cst_20 = arith.constant dense<0.000000e+00> : vector<72x32xf32>
    %21 = tpu.matmul %18, %20, %cst_20 {dimension_numbers = #tpu.dot_dimension_numbers<[1], [0], [0], [1], [0, 0, 1, 1], [], []>} : vector<72x24xbf16>, vector<24x32xbf16>, vector<72x32xf32> -> vector<72x32xf32>
    %22 = arith.addf %16, %21 : vector<72x32xf32>
    %c0_21 = arith.constant 0 : index
    %c0_22 = arith.constant 0 : index
    %23 = vector.load %arg3[%c0_21, %c0_22] : memref<1x32xf32, #tpu.memory_space<vmem>>, vector<1x32xf32>
    %24 = vector.broadcast %23 : vector<1x32xf32> to vector<72x32xf32>
    %25 = arith.addf %22, %24 : vector<72x32xf32>
    %cst_23 = arith.constant 0.000000e+00 : f32
    %26 = vector.broadcast %cst_23 : f32 to vector<72x32xf32>
    %27 = arith.maximumf %25, %26 : vector<72x32xf32>
    %28 = arith.truncf %27 : vector<72x32xf32> to vector<72x32xbf16>
    %c0_24 = arith.constant 0 : index
    %c0_25 = arith.constant 0 : index
    %c0_26 = arith.constant 0 : index
    %29 = vector.load %arg4[%c0_24, %c0_25, %c0_26] : memref<1x72x32xbf16, #tpu.memory_space<vmem>>, vector<1x72x32xbf16>
    %30 = vector.shape_cast %29 : vector<1x72x32xbf16> to vector<72x32xbf16>
    %31 = vector.shape_cast %28 : vector<72x32xbf16> to vector<1x72x32xbf16>
    tpu.vector_store %arg4[%c0_24, %c0_25, %c0_26], %31 {strides = array<i32>} : memref<1x72x32xbf16, #tpu.memory_space<vmem>>, vector<1x72x32xbf16>,
    return
  }
  func.func @transform_0(%arg0: i32) -> (i32, i32, i32) {
    %c0_i32 = arith.constant 0 : i32
    %c0_i32_0 = arith.constant 0 : i32
    %c0_i32_1 = arith.constant 0 : i32
    return %arg0, %c0_i32, %c0_i32_0 : i32, i32, i32
  }
  func.func @transform_1(%arg0: i32) -> (i32, i32, i32) {
    %c0_i32 = arith.constant 0 : i32
    %c0_i32_0 = arith.constant 0 : i32
    %c0_i32_1 = arith.constant 0 : i32
    %c0_i32_2 = arith.constant 0 : i32
    return %c0_i32, %c0_i32_0, %c0_i32_1 : i32, i32, i32
  }
  func.func @transform_2(%arg0: i32) -> (i32, i32) {
    %c0_i32 = arith.constant 0 : i32
    %c0_i32_0 = arith.constant 0 : i32
    %c0_i32_1 = arith.constant 0 : i32
    return %c0_i32, %c0_i32_0 : i32, i32
  }
  func.func @transform_3(%arg0: i32) -> (i32, i32, i32) {
    %c0_i32 = arith.constant 0 : i32
    %c0_i32_0 = arith.constant 0 : i32
    %c0_i32_1 = arith.constant 0 : i32
    return %arg0, %c0_i32, %c0_i32_0 : i32, i32, i32
  }
}

module attributes {stable_mosaic.version = 11 : i64} {
  func.func @_conv_kernel(%arg0: i32, %arg1: memref<1x30x128xbf16, #tpu.memory_space<vmem>>, %arg2: memref<4x128x64xbf16, #tpu.memory_space<vmem>>, %arg3: memref<1x64xf32, #tpu.memory_space<vmem>>, %arg4: memref<20x1xf32, #tpu.memory_space<vmem>>, %arg5: memref<1x20x64xbf16, #tpu.memory_space<vmem>>, %arg6: memref<1x1x64xf32, #tpu.memory_space<vmem>>, %arg7: memref<1x1x64xf32, #tpu.memory_space<vmem>>) attributes {dimension_semantics = [#tpu.dimension_semantics<parallel>], iteration_bounds = array<i64: 2>, scalar_prefetch = 0 : i64, scratch_operands = 0 : i64, tpu.core_type = #tpu.core_type<tc>, window_params = [{transform_indices = @transform_0, window_bounds = array<i64: 1, 30, 128>}, {pipeline_mode = #tpu.pipeline_mode<synchronous>, transform_indices = @transform_1, window_bounds = array<i64: 4, 128, 64>}, {pipeline_mode = #tpu.pipeline_mode<synchronous>, transform_indices = @transform_2, window_bounds = array<i64: 1, 64>}, {pipeline_mode = #tpu.pipeline_mode<synchronous>, transform_indices = @transform_3, window_bounds = array<i64: 20, 1>}, {transform_indices = @transform_4, window_bounds = array<i64: 1, 20, 64>}, {transform_indices = @transform_5, window_bounds = array<i64: 1, 1, 64>}, {transform_indices = @transform_6, window_bounds = array<i64: 1, 1, 64>}]} {
    %c0 = arith.constant 0 : index
    %c0_0 = arith.constant 0 : index
    %c0_1 = arith.constant 0 : index
    %0 = vector.load %arg1[%c0, %c0_0, %c0_1] : memref<1x30x128xbf16, #tpu.memory_space<vmem>>, vector<1x20x128xbf16>
    %1 = vector.shape_cast %0 : vector<1x20x128xbf16> to vector<20x128xbf16>
    %c0_2 = arith.constant 0 : index
    %c0_3 = arith.constant 0 : index
    %c0_4 = arith.constant 0 : index
    %2 = vector.load %arg2[%c0_2, %c0_3, %c0_4] : memref<4x128x64xbf16, #tpu.memory_space<vmem>>, vector<1x128x64xbf16>
    %3 = vector.shape_cast %2 : vector<1x128x64xbf16> to vector<128x64xbf16>
    %cst = arith.constant dense<0.000000e+00> : vector<20x64xf32>
    %4 = tpu.matmul %1, %3, %cst {dimension_numbers = #tpu.dot_dimension_numbers<[1], [0], [0], [1], [0, 0, 1, 1], [], []>} : vector<20x128xbf16>, vector<128x64xbf16>, vector<20x64xf32> -> vector<20x64xf32>
    %c0_5 = arith.constant 0 : index
    %c1 = arith.constant 1 : index
    %c0_6 = arith.constant 0 : index
    %5 = vector.load %arg1[%c0_5, %c1, %c0_6] : memref<1x30x128xbf16, #tpu.memory_space<vmem>>, vector<1x20x128xbf16>
    %6 = vector.shape_cast %5 : vector<1x20x128xbf16> to vector<20x128xbf16>
    %c1_7 = arith.constant 1 : index
    %c0_8 = arith.constant 0 : index
    %c0_9 = arith.constant 0 : index
    %7 = vector.load %arg2[%c1_7, %c0_8, %c0_9] : memref<4x128x64xbf16, #tpu.memory_space<vmem>>, vector<1x128x64xbf16>
    %8 = vector.shape_cast %7 : vector<1x128x64xbf16> to vector<128x64xbf16>
    %cst_10 = arith.constant dense<0.000000e+00> : vector<20x64xf32>
    %9 = tpu.matmul %6, %8, %cst_10 {dimension_numbers = #tpu.dot_dimension_numbers<[1], [0], [0], [1], [0, 0, 1, 1], [], []>} : vector<20x128xbf16>, vector<128x64xbf16>, vector<20x64xf32> -> vector<20x64xf32>
    %10 = arith.addf %4, %9 : vector<20x64xf32>
    %c0_11 = arith.constant 0 : index
    %c5 = arith.constant 5 : index
    %c0_12 = arith.constant 0 : index
    %11 = vector.load %arg1[%c0_11, %c5, %c0_12] : memref<1x30x128xbf16, #tpu.memory_space<vmem>>, vector<1x20x128xbf16>
    %12 = vector.shape_cast %11 : vector<1x20x128xbf16> to vector<20x128xbf16>
    %c2 = arith.constant 2 : index
    %c0_13 = arith.constant 0 : index
    %c0_14 = arith.constant 0 : index
    %13 = vector.load %arg2[%c2, %c0_13, %c0_14] : memref<4x128x64xbf16, #tpu.memory_space<vmem>>, vector<1x128x64xbf16>
    %14 = vector.shape_cast %13 : vector<1x128x64xbf16> to vector<128x64xbf16>
    %cst_15 = arith.constant dense<0.000000e+00> : vector<20x64xf32>
    %15 = tpu.matmul %12, %14, %cst_15 {dimension_numbers = #tpu.dot_dimension_numbers<[1], [0], [0], [1], [0, 0, 1, 1], [], []>} : vector<20x128xbf16>, vector<128x64xbf16>, vector<20x64xf32> -> vector<20x64xf32>
    %16 = arith.addf %10, %15 : vector<20x64xf32>
    %c0_16 = arith.constant 0 : index
    %c6 = arith.constant 6 : index
    %c0_17 = arith.constant 0 : index
    %17 = vector.load %arg1[%c0_16, %c6, %c0_17] : memref<1x30x128xbf16, #tpu.memory_space<vmem>>, vector<1x20x128xbf16>
    %18 = vector.shape_cast %17 : vector<1x20x128xbf16> to vector<20x128xbf16>
    %c3 = arith.constant 3 : index
    %c0_18 = arith.constant 0 : index
    %c0_19 = arith.constant 0 : index
    %19 = vector.load %arg2[%c3, %c0_18, %c0_19] : memref<4x128x64xbf16, #tpu.memory_space<vmem>>, vector<1x128x64xbf16>
    %20 = vector.shape_cast %19 : vector<1x128x64xbf16> to vector<128x64xbf16>
    %cst_20 = arith.constant dense<0.000000e+00> : vector<20x64xf32>
    %21 = tpu.matmul %18, %20, %cst_20 {dimension_numbers = #tpu.dot_dimension_numbers<[1], [0], [0], [1], [0, 0, 1, 1], [], []>} : vector<20x128xbf16>, vector<128x64xbf16>, vector<20x64xf32> -> vector<20x64xf32>
    %22 = arith.addf %16, %21 : vector<20x64xf32>
    %c0_21 = arith.constant 0 : index
    %c0_22 = arith.constant 0 : index
    %23 = vector.load %arg3[%c0_21, %c0_22] : memref<1x64xf32, #tpu.memory_space<vmem>>, vector<1x64xf32>
    %24 = vector.broadcast %23 : vector<1x64xf32> to vector<20x64xf32>
    %25 = arith.addf %22, %24 : vector<20x64xf32>
    %cst_23 = arith.constant 0.000000e+00 : f32
    %26 = vector.broadcast %cst_23 : f32 to vector<20x64xf32>
    %27 = arith.maximumf %25, %26 : vector<20x64xf32>
    %28 = arith.truncf %27 : vector<20x64xf32> to vector<20x64xbf16>
    %c0_24 = arith.constant 0 : index
    %c0_25 = arith.constant 0 : index
    %c0_26 = arith.constant 0 : index
    %29 = vector.load %arg5[%c0_24, %c0_25, %c0_26] : memref<1x20x64xbf16, #tpu.memory_space<vmem>>, vector<1x20x64xbf16>
    %30 = vector.shape_cast %29 : vector<1x20x64xbf16> to vector<20x64xbf16>
    %31 = vector.shape_cast %28 : vector<20x64xbf16> to vector<1x20x64xbf16>
    tpu.vector_store %arg5[%c0_24, %c0_25, %c0_26], %31 {strides = array<i32>} : memref<1x20x64xbf16, #tpu.memory_space<vmem>>, vector<1x20x64xbf16>,
    %c0_27 = arith.constant 0 : index
    %c0_28 = arith.constant 0 : index
    %32 = vector.load %arg4[%c0_27, %c0_28] : memref<20x1xf32, #tpu.memory_space<vmem>>, vector<20x1xf32>
    %33 = vector.broadcast %32 : vector<20x1xf32> to vector<20x64xf32>
    %34 = arith.mulf %27, %33 : vector<20x64xf32>
    %cst_29 = arith.constant dense<0.000000e+00> : vector<64xf32>
    %35 = vector.multi_reduction <add>, %34, %cst_29 [0] : vector<20x64xf32> to vector<64xf32>
    %36 = vector.shape_cast %35 : vector<64xf32> to vector<1x64xf32>
    %c0_30 = arith.constant 0 : index
    %c0_31 = arith.constant 0 : index
    %c0_32 = arith.constant 0 : index
    %37 = vector.load %arg6[%c0_30, %c0_31, %c0_32] : memref<1x1x64xf32, #tpu.memory_space<vmem>>, vector<1x1x64xf32>
    %38 = vector.shape_cast %37 : vector<1x1x64xf32> to vector<1x64xf32>
    %39 = vector.shape_cast %36 : vector<1x64xf32> to vector<1x1x64xf32>
    tpu.vector_store %arg6[%c0_30, %c0_31, %c0_32], %39 {strides = array<i32>} : memref<1x1x64xf32, #tpu.memory_space<vmem>>, vector<1x1x64xf32>,
    %40 = arith.mulf %34, %34 : vector<20x64xf32>
    %cst_33 = arith.constant dense<0.000000e+00> : vector<64xf32>
    %41 = vector.multi_reduction <add>, %40, %cst_33 [0] : vector<20x64xf32> to vector<64xf32>
    %42 = vector.shape_cast %41 : vector<64xf32> to vector<1x64xf32>
    %c0_34 = arith.constant 0 : index
    %c0_35 = arith.constant 0 : index
    %c0_36 = arith.constant 0 : index
    %43 = vector.load %arg7[%c0_34, %c0_35, %c0_36] : memref<1x1x64xf32, #tpu.memory_space<vmem>>, vector<1x1x64xf32>
    %44 = vector.shape_cast %43 : vector<1x1x64xf32> to vector<1x64xf32>
    %45 = vector.shape_cast %42 : vector<1x64xf32> to vector<1x1x64xf32>
    tpu.vector_store %arg7[%c0_34, %c0_35, %c0_36], %45 {strides = array<i32>} : memref<1x1x64xf32, #tpu.memory_space<vmem>>, vector<1x1x64xf32>,
    return
  }
  func.func @transform_0(%arg0: i32) -> (i32, i32, i32) {
    %c0_i32 = arith.constant 0 : i32
    %c0_i32_0 = arith.constant 0 : i32
    %c0_i32_1 = arith.constant 0 : i32
    return %arg0, %c0_i32, %c0_i32_0 : i32, i32, i32
  }
  func.func @transform_1(%arg0: i32) -> (i32, i32, i32) {
    %c0_i32 = arith.constant 0 : i32
    %c0_i32_0 = arith.constant 0 : i32
    %c0_i32_1 = arith.constant 0 : i32
    %c0_i32_2 = arith.constant 0 : i32
    return %c0_i32, %c0_i32_0, %c0_i32_1 : i32, i32, i32
  }
  func.func @transform_2(%arg0: i32) -> (i32, i32) {
    %c0_i32 = arith.constant 0 : i32
    %c0_i32_0 = arith.constant 0 : i32
    %c0_i32_1 = arith.constant 0 : i32
    return %c0_i32, %c0_i32_0 : i32, i32
  }
  func.func @transform_3(%arg0: i32) -> (i32, i32) {
    %c0_i32 = arith.constant 0 : i32
    %c0_i32_0 = arith.constant 0 : i32
    %c0_i32_1 = arith.constant 0 : i32
    return %c0_i32, %c0_i32_0 : i32, i32
  }
  func.func @transform_4(%arg0: i32) -> (i32, i32, i32) {
    %c0_i32 = arith.constant 0 : i32
    %c0_i32_0 = arith.constant 0 : i32
    %c0_i32_1 = arith.constant 0 : i32
    return %arg0, %c0_i32, %c0_i32_0 : i32, i32, i32
  }
  func.func @transform_5(%arg0: i32) -> (i32, i32, i32) {
    %c0_i32 = arith.constant 0 : i32
    %c0_i32_0 = arith.constant 0 : i32
    %c0_i32_1 = arith.constant 0 : i32
    return %arg0, %c0_i32, %c0_i32_0 : i32, i32, i32
  }
  func.func @transform_6(%arg0: i32) -> (i32, i32, i32) {
    %c0_i32 = arith.constant 0 : i32
    %c0_i32_0 = arith.constant 0 : i32
    %c0_i32_1 = arith.constant 0 : i32
    return %arg0, %c0_i32, %c0_i32_0 : i32, i32, i32
  }
}

module attributes {stable_mosaic.version = 11 : i64} {
  func.func @_conv_kernel(%arg0: i32, %arg1: memref<1x12x256xbf16, #tpu.memory_space<vmem>>, %arg2: memref<4x256x128xbf16, #tpu.memory_space<vmem>>, %arg3: memref<1x128xf32, #tpu.memory_space<vmem>>, %arg4: memref<6x1xf32, #tpu.memory_space<vmem>>, %arg5: memref<1x6x128xbf16, #tpu.memory_space<vmem>>, %arg6: memref<1x1x128xf32, #tpu.memory_space<vmem>>, %arg7: memref<1x1x128xf32, #tpu.memory_space<vmem>>) attributes {dimension_semantics = [#tpu.dimension_semantics<parallel>], iteration_bounds = array<i64: 2>, scalar_prefetch = 0 : i64, scratch_operands = 0 : i64, tpu.core_type = #tpu.core_type<tc>, window_params = [{transform_indices = @transform_0, window_bounds = array<i64: 1, 12, 256>}, {pipeline_mode = #tpu.pipeline_mode<synchronous>, transform_indices = @transform_1, window_bounds = array<i64: 4, 256, 128>}, {pipeline_mode = #tpu.pipeline_mode<synchronous>, transform_indices = @transform_2, window_bounds = array<i64: 1, 128>}, {pipeline_mode = #tpu.pipeline_mode<synchronous>, transform_indices = @transform_3, window_bounds = array<i64: 6, 1>}, {transform_indices = @transform_4, window_bounds = array<i64: 1, 6, 128>}, {transform_indices = @transform_5, window_bounds = array<i64: 1, 1, 128>}, {transform_indices = @transform_6, window_bounds = array<i64: 1, 1, 128>}]} {
    %c0 = arith.constant 0 : index
    %c0_0 = arith.constant 0 : index
    %c0_1 = arith.constant 0 : index
    %0 = vector.load %arg1[%c0, %c0_0, %c0_1] : memref<1x12x256xbf16, #tpu.memory_space<vmem>>, vector<1x6x256xbf16>
    %1 = vector.shape_cast %0 : vector<1x6x256xbf16> to vector<6x256xbf16>
    %c0_2 = arith.constant 0 : index
    %c0_3 = arith.constant 0 : index
    %c0_4 = arith.constant 0 : index
    %2 = vector.load %arg2[%c0_2, %c0_3, %c0_4] : memref<4x256x128xbf16, #tpu.memory_space<vmem>>, vector<1x256x128xbf16>
    %3 = vector.shape_cast %2 : vector<1x256x128xbf16> to vector<256x128xbf16>
    %cst = arith.constant dense<0.000000e+00> : vector<6x128xf32>
    %4 = tpu.matmul %1, %3, %cst {dimension_numbers = #tpu.dot_dimension_numbers<[1], [0], [0], [1], [0, 0, 1, 1], [], []>} : vector<6x256xbf16>, vector<256x128xbf16>, vector<6x128xf32> -> vector<6x128xf32>
    %c0_5 = arith.constant 0 : index
    %c1 = arith.constant 1 : index
    %c0_6 = arith.constant 0 : index
    %5 = vector.load %arg1[%c0_5, %c1, %c0_6] : memref<1x12x256xbf16, #tpu.memory_space<vmem>>, vector<1x6x256xbf16>
    %6 = vector.shape_cast %5 : vector<1x6x256xbf16> to vector<6x256xbf16>
    %c1_7 = arith.constant 1 : index
    %c0_8 = arith.constant 0 : index
    %c0_9 = arith.constant 0 : index
    %7 = vector.load %arg2[%c1_7, %c0_8, %c0_9] : memref<4x256x128xbf16, #tpu.memory_space<vmem>>, vector<1x256x128xbf16>
    %8 = vector.shape_cast %7 : vector<1x256x128xbf16> to vector<256x128xbf16>
    %cst_10 = arith.constant dense<0.000000e+00> : vector<6x128xf32>
    %9 = tpu.matmul %6, %8, %cst_10 {dimension_numbers = #tpu.dot_dimension_numbers<[1], [0], [0], [1], [0, 0, 1, 1], [], []>} : vector<6x256xbf16>, vector<256x128xbf16>, vector<6x128xf32> -> vector<6x128xf32>
    %10 = arith.addf %4, %9 : vector<6x128xf32>
    %c0_11 = arith.constant 0 : index
    %c3 = arith.constant 3 : index
    %c0_12 = arith.constant 0 : index
    %11 = vector.load %arg1[%c0_11, %c3, %c0_12] : memref<1x12x256xbf16, #tpu.memory_space<vmem>>, vector<1x6x256xbf16>
    %12 = vector.shape_cast %11 : vector<1x6x256xbf16> to vector<6x256xbf16>
    %c2 = arith.constant 2 : index
    %c0_13 = arith.constant 0 : index
    %c0_14 = arith.constant 0 : index
    %13 = vector.load %arg2[%c2, %c0_13, %c0_14] : memref<4x256x128xbf16, #tpu.memory_space<vmem>>, vector<1x256x128xbf16>
    %14 = vector.shape_cast %13 : vector<1x256x128xbf16> to vector<256x128xbf16>
    %cst_15 = arith.constant dense<0.000000e+00> : vector<6x128xf32>
    %15 = tpu.matmul %12, %14, %cst_15 {dimension_numbers = #tpu.dot_dimension_numbers<[1], [0], [0], [1], [0, 0, 1, 1], [], []>} : vector<6x256xbf16>, vector<256x128xbf16>, vector<6x128xf32> -> vector<6x128xf32>
    %16 = arith.addf %10, %15 : vector<6x128xf32>
    %c0_16 = arith.constant 0 : index
    %c4 = arith.constant 4 : index
    %c0_17 = arith.constant 0 : index
    %17 = vector.load %arg1[%c0_16, %c4, %c0_17] : memref<1x12x256xbf16, #tpu.memory_space<vmem>>, vector<1x6x256xbf16>
    %18 = vector.shape_cast %17 : vector<1x6x256xbf16> to vector<6x256xbf16>
    %c3_18 = arith.constant 3 : index
    %c0_19 = arith.constant 0 : index
    %c0_20 = arith.constant 0 : index
    %19 = vector.load %arg2[%c3_18, %c0_19, %c0_20] : memref<4x256x128xbf16, #tpu.memory_space<vmem>>, vector<1x256x128xbf16>
    %20 = vector.shape_cast %19 : vector<1x256x128xbf16> to vector<256x128xbf16>
    %cst_21 = arith.constant dense<0.000000e+00> : vector<6x128xf32>
    %21 = tpu.matmul %18, %20, %cst_21 {dimension_numbers = #tpu.dot_dimension_numbers<[1], [0], [0], [1], [0, 0, 1, 1], [], []>} : vector<6x256xbf16>, vector<256x128xbf16>, vector<6x128xf32> -> vector<6x128xf32>
    %22 = arith.addf %16, %21 : vector<6x128xf32>
    %c0_22 = arith.constant 0 : index
    %c0_23 = arith.constant 0 : index
    %23 = vector.load %arg3[%c0_22, %c0_23] : memref<1x128xf32, #tpu.memory_space<vmem>>, vector<1x128xf32>
    %24 = vector.broadcast %23 : vector<1x128xf32> to vector<6x128xf32>
    %25 = arith.addf %22, %24 : vector<6x128xf32>
    %cst_24 = arith.constant 0.000000e+00 : f32
    %26 = vector.broadcast %cst_24 : f32 to vector<6x128xf32>
    %27 = arith.maximumf %25, %26 : vector<6x128xf32>
    %28 = arith.truncf %27 : vector<6x128xf32> to vector<6x128xbf16>
    %c0_25 = arith.constant 0 : index
    %c0_26 = arith.constant 0 : index
    %c0_27 = arith.constant 0 : index
    %29 = vector.load %arg5[%c0_25, %c0_26, %c0_27] : memref<1x6x128xbf16, #tpu.memory_space<vmem>>, vector<1x6x128xbf16>
    %30 = vector.shape_cast %29 : vector<1x6x128xbf16> to vector<6x128xbf16>
    %31 = vector.shape_cast %28 : vector<6x128xbf16> to vector<1x6x128xbf16>
    tpu.vector_store %arg5[%c0_25, %c0_26, %c0_27], %31 {strides = array<i32>} : memref<1x6x128xbf16, #tpu.memory_space<vmem>>, vector<1x6x128xbf16>,
    %c0_28 = arith.constant 0 : index
    %c0_29 = arith.constant 0 : index
    %32 = vector.load %arg4[%c0_28, %c0_29] : memref<6x1xf32, #tpu.memory_space<vmem>>, vector<6x1xf32>
    %33 = vector.broadcast %32 : vector<6x1xf32> to vector<6x128xf32>
    %34 = arith.mulf %27, %33 : vector<6x128xf32>
    %cst_30 = arith.constant dense<0.000000e+00> : vector<128xf32>
    %35 = vector.multi_reduction <add>, %34, %cst_30 [0] : vector<6x128xf32> to vector<128xf32>
    %36 = vector.shape_cast %35 : vector<128xf32> to vector<1x128xf32>
    %c0_31 = arith.constant 0 : index
    %c0_32 = arith.constant 0 : index
    %c0_33 = arith.constant 0 : index
    %37 = vector.load %arg6[%c0_31, %c0_32, %c0_33] : memref<1x1x128xf32, #tpu.memory_space<vmem>>, vector<1x1x128xf32>
    %38 = vector.shape_cast %37 : vector<1x1x128xf32> to vector<1x128xf32>
    %39 = vector.shape_cast %36 : vector<1x128xf32> to vector<1x1x128xf32>
    tpu.vector_store %arg6[%c0_31, %c0_32, %c0_33], %39 {strides = array<i32>} : memref<1x1x128xf32, #tpu.memory_space<vmem>>, vector<1x1x128xf32>,
    %40 = arith.mulf %34, %34 : vector<6x128xf32>
    %cst_34 = arith.constant dense<0.000000e+00> : vector<128xf32>
    %41 = vector.multi_reduction <add>, %40, %cst_34 [0] : vector<6x128xf32> to vector<128xf32>
    %42 = vector.shape_cast %41 : vector<128xf32> to vector<1x128xf32>
    %c0_35 = arith.constant 0 : index
    %c0_36 = arith.constant 0 : index
    %c0_37 = arith.constant 0 : index
    %43 = vector.load %arg7[%c0_35, %c0_36, %c0_37] : memref<1x1x128xf32, #tpu.memory_space<vmem>>, vector<1x1x128xf32>
    %44 = vector.shape_cast %43 : vector<1x1x128xf32> to vector<1x128xf32>
    %45 = vector.shape_cast %42 : vector<1x128xf32> to vector<1x1x128xf32>
    tpu.vector_store %arg7[%c0_35, %c0_36, %c0_37], %45 {strides = array<i32>} : memref<1x1x128xf32, #tpu.memory_space<vmem>>, vector<1x1x128xf32>,
    return
  }
  func.func @transform_0(%arg0: i32) -> (i32, i32, i32) {
    %c0_i32 = arith.constant 0 : i32
    %c0_i32_0 = arith.constant 0 : i32
    %c0_i32_1 = arith.constant 0 : i32
    return %arg0, %c0_i32, %c0_i32_0 : i32, i32, i32
  }
  func.func @transform_1(%arg0: i32) -> (i32, i32, i32) {
    %c0_i32 = arith.constant 0 : i32
    %c0_i32_0 = arith.constant 0 : i32
    %c0_i32_1 = arith.constant 0 : i32
    %c0_i32_2 = arith.constant 0 : i32
    return %c0_i32, %c0_i32_0, %c0_i32_1 : i32, i32, i32
  }
  func.func @transform_2(%arg0: i32) -> (i32, i32) {
    %c0_i32 = arith.constant 0 : i32
    %c0_i32_0 = arith.constant 0 : i32
    %c0_i32_1 = arith.constant 0 : i32
    return %c0_i32, %c0_i32_0 : i32, i32
  }
  func.func @transform_3(%arg0: i32) -> (i32, i32) {
    %c0_i32 = arith.constant 0 : i32
    %c0_i32_0 = arith.constant 0 : i32
    %c0_i32_1 = arith.constant 0 : i32
    return %c0_i32, %c0_i32_0 : i32, i32
  }
  func.func @transform_4(%arg0: i32) -> (i32, i32, i32) {
    %c0_i32 = arith.constant 0 : i32
    %c0_i32_0 = arith.constant 0 : i32
    %c0_i32_1 = arith.constant 0 : i32
    return %arg0, %c0_i32, %c0_i32_0 : i32, i32, i32
  }
  func.func @transform_5(%arg0: i32) -> (i32, i32, i32) {
    %c0_i32 = arith.constant 0 : i32
    %c0_i32_0 = arith.constant 0 : i32
    %c0_i32_1 = arith.constant 0 : i32
    return %arg0, %c0_i32, %c0_i32_0 : i32, i32, i32
  }
  func.func @transform_6(%arg0: i32) -> (i32, i32, i32) {
    %c0_i32 = arith.constant 0 : i32
    %c0_i32_0 = arith.constant 0 : i32
    %c0_i32_1 = arith.constant 0 : i32
    return %arg0, %c0_i32, %c0_i32_0 : i32, i32, i32
  }
}

module attributes {stable_mosaic.version = 11 : i64} {
  func.func @_conv_kernel(%arg0: i32, %arg1: memref<1x6x512xbf16, #tpu.memory_space<vmem>>, %arg2: memref<4x512x256xbf16, #tpu.memory_space<vmem>>, %arg3: memref<1x256xf32, #tpu.memory_space<vmem>>, %arg4: memref<2x1xf32, #tpu.memory_space<vmem>>, %arg5: memref<1x2x256xbf16, #tpu.memory_space<vmem>>, %arg6: memref<1x1x256xf32, #tpu.memory_space<vmem>>, %arg7: memref<1x1x256xf32, #tpu.memory_space<vmem>>) attributes {dimension_semantics = [#tpu.dimension_semantics<parallel>], iteration_bounds = array<i64: 2>, scalar_prefetch = 0 : i64, scratch_operands = 0 : i64, tpu.core_type = #tpu.core_type<tc>, window_params = [{transform_indices = @transform_0, window_bounds = array<i64: 1, 6, 512>}, {pipeline_mode = #tpu.pipeline_mode<synchronous>, transform_indices = @transform_1, window_bounds = array<i64: 4, 512, 256>}, {pipeline_mode = #tpu.pipeline_mode<synchronous>, transform_indices = @transform_2, window_bounds = array<i64: 1, 256>}, {pipeline_mode = #tpu.pipeline_mode<synchronous>, transform_indices = @transform_3, window_bounds = array<i64: 2, 1>}, {transform_indices = @transform_4, window_bounds = array<i64: 1, 2, 256>}, {transform_indices = @transform_5, window_bounds = array<i64: 1, 1, 256>}, {transform_indices = @transform_6, window_bounds = array<i64: 1, 1, 256>}]} {
    %c0 = arith.constant 0 : index
    %c0_0 = arith.constant 0 : index
    %c0_1 = arith.constant 0 : index
    %0 = vector.load %arg1[%c0, %c0_0, %c0_1] : memref<1x6x512xbf16, #tpu.memory_space<vmem>>, vector<1x2x512xbf16>
    %1 = vector.shape_cast %0 : vector<1x2x512xbf16> to vector<2x512xbf16>
    %c0_2 = arith.constant 0 : index
    %c0_3 = arith.constant 0 : index
    %c0_4 = arith.constant 0 : index
    %2 = vector.load %arg2[%c0_2, %c0_3, %c0_4] : memref<4x512x256xbf16, #tpu.memory_space<vmem>>, vector<1x512x256xbf16>
    %3 = vector.shape_cast %2 : vector<1x512x256xbf16> to vector<512x256xbf16>
    %cst = arith.constant dense<0.000000e+00> : vector<2x256xf32>
    %4 = tpu.matmul %1, %3, %cst {dimension_numbers = #tpu.dot_dimension_numbers<[1], [0], [0], [1], [0, 0, 1, 1], [], []>} : vector<2x512xbf16>, vector<512x256xbf16>, vector<2x256xf32> -> vector<2x256xf32>
    %c0_5 = arith.constant 0 : index
    %c1 = arith.constant 1 : index
    %c0_6 = arith.constant 0 : index
    %5 = vector.load %arg1[%c0_5, %c1, %c0_6] : memref<1x6x512xbf16, #tpu.memory_space<vmem>>, vector<1x2x512xbf16>
    %6 = vector.shape_cast %5 : vector<1x2x512xbf16> to vector<2x512xbf16>
    %c1_7 = arith.constant 1 : index
    %c0_8 = arith.constant 0 : index
    %c0_9 = arith.constant 0 : index
    %7 = vector.load %arg2[%c1_7, %c0_8, %c0_9] : memref<4x512x256xbf16, #tpu.memory_space<vmem>>, vector<1x512x256xbf16>
    %8 = vector.shape_cast %7 : vector<1x512x256xbf16> to vector<512x256xbf16>
    %cst_10 = arith.constant dense<0.000000e+00> : vector<2x256xf32>
    %9 = tpu.matmul %6, %8, %cst_10 {dimension_numbers = #tpu.dot_dimension_numbers<[1], [0], [0], [1], [0, 0, 1, 1], [], []>} : vector<2x512xbf16>, vector<512x256xbf16>, vector<2x256xf32> -> vector<2x256xf32>
    %10 = arith.addf %4, %9 : vector<2x256xf32>
    %c0_11 = arith.constant 0 : index
    %c2 = arith.constant 2 : index
    %c0_12 = arith.constant 0 : index
    %11 = vector.load %arg1[%c0_11, %c2, %c0_12] : memref<1x6x512xbf16, #tpu.memory_space<vmem>>, vector<1x2x512xbf16>
    %12 = vector.shape_cast %11 : vector<1x2x512xbf16> to vector<2x512xbf16>
    %c2_13 = arith.constant 2 : index
    %c0_14 = arith.constant 0 : index
    %c0_15 = arith.constant 0 : index
    %13 = vector.load %arg2[%c2_13, %c0_14, %c0_15] : memref<4x512x256xbf16, #tpu.memory_space<vmem>>, vector<1x512x256xbf16>
    %14 = vector.shape_cast %13 : vector<1x512x256xbf16> to vector<512x256xbf16>
    %cst_16 = arith.constant dense<0.000000e+00> : vector<2x256xf32>
    %15 = tpu.matmul %12, %14, %cst_16 {dimension_numbers = #tpu.dot_dimension_numbers<[1], [0], [0], [1], [0, 0, 1, 1], [], []>} : vector<2x512xbf16>, vector<512x256xbf16>, vector<2x256xf32> -> vector<2x256xf32>
    %16 = arith.addf %10, %15 : vector<2x256xf32>
    %c0_17 = arith.constant 0 : index
    %c3 = arith.constant 3 : index
    %c0_18 = arith.constant 0 : index
    %17 = vector.load %arg1[%c0_17, %c3, %c0_18] : memref<1x6x512xbf16, #tpu.memory_space<vmem>>, vector<1x2x512xbf16>
    %18 = vector.shape_cast %17 : vector<1x2x512xbf16> to vector<2x512xbf16>
    %c3_19 = arith.constant 3 : index
    %c0_20 = arith.constant 0 : index
    %c0_21 = arith.constant 0 : index
    %19 = vector.load %arg2[%c3_19, %c0_20, %c0_21] : memref<4x512x256xbf16, #tpu.memory_space<vmem>>, vector<1x512x256xbf16>
    %20 = vector.shape_cast %19 : vector<1x512x256xbf16> to vector<512x256xbf16>
    %cst_22 = arith.constant dense<0.000000e+00> : vector<2x256xf32>
    %21 = tpu.matmul %18, %20, %cst_22 {dimension_numbers = #tpu.dot_dimension_numbers<[1], [0], [0], [1], [0, 0, 1, 1], [], []>} : vector<2x512xbf16>, vector<512x256xbf16>, vector<2x256xf32> -> vector<2x256xf32>
    %22 = arith.addf %16, %21 : vector<2x256xf32>
    %c0_23 = arith.constant 0 : index
    %c0_24 = arith.constant 0 : index
    %23 = vector.load %arg3[%c0_23, %c0_24] : memref<1x256xf32, #tpu.memory_space<vmem>>, vector<1x256xf32>
    %24 = vector.broadcast %23 : vector<1x256xf32> to vector<2x256xf32>
    %25 = arith.addf %22, %24 : vector<2x256xf32>
    %cst_25 = arith.constant 0.000000e+00 : f32
    %26 = vector.broadcast %cst_25 : f32 to vector<2x256xf32>
    %27 = arith.maximumf %25, %26 : vector<2x256xf32>
    %28 = arith.truncf %27 : vector<2x256xf32> to vector<2x256xbf16>
    %c0_26 = arith.constant 0 : index
    %c0_27 = arith.constant 0 : index
    %c0_28 = arith.constant 0 : index
    %29 = vector.load %arg5[%c0_26, %c0_27, %c0_28] : memref<1x2x256xbf16, #tpu.memory_space<vmem>>, vector<1x2x256xbf16>
    %30 = vector.shape_cast %29 : vector<1x2x256xbf16> to vector<2x256xbf16>
    %31 = vector.shape_cast %28 : vector<2x256xbf16> to vector<1x2x256xbf16>
    tpu.vector_store %arg5[%c0_26, %c0_27, %c0_28], %31 {strides = array<i32>} : memref<1x2x256xbf16, #tpu.memory_space<vmem>>, vector<1x2x256xbf16>,
    %c0_29 = arith.constant 0 : index
    %c0_30 = arith.constant 0 : index
    %32 = vector.load %arg4[%c0_29, %c0_30] : memref<2x1xf32, #tpu.memory_space<vmem>>, vector<2x1xf32>
    %33 = vector.broadcast %32 : vector<2x1xf32> to vector<2x256xf32>
    %34 = arith.mulf %27, %33 : vector<2x256xf32>
    %cst_31 = arith.constant dense<0.000000e+00> : vector<256xf32>
    %35 = vector.multi_reduction <add>, %34, %cst_31 [0] : vector<2x256xf32> to vector<256xf32>
    %36 = vector.shape_cast %35 : vector<256xf32> to vector<1x256xf32>
    %c0_32 = arith.constant 0 : index
    %c0_33 = arith.constant 0 : index
    %c0_34 = arith.constant 0 : index
    %37 = vector.load %arg6[%c0_32, %c0_33, %c0_34] : memref<1x1x256xf32, #tpu.memory_space<vmem>>, vector<1x1x256xf32>
    %38 = vector.shape_cast %37 : vector<1x1x256xf32> to vector<1x256xf32>
    %39 = vector.shape_cast %36 : vector<1x256xf32> to vector<1x1x256xf32>
    tpu.vector_store %arg6[%c0_32, %c0_33, %c0_34], %39 {strides = array<i32>} : memref<1x1x256xf32, #tpu.memory_space<vmem>>, vector<1x1x256xf32>,
    %40 = arith.mulf %34, %34 : vector<2x256xf32>
    %cst_35 = arith.constant dense<0.000000e+00> : vector<256xf32>
    %41 = vector.multi_reduction <add>, %40, %cst_35 [0] : vector<2x256xf32> to vector<256xf32>
    %42 = vector.shape_cast %41 : vector<256xf32> to vector<1x256xf32>
    %c0_36 = arith.constant 0 : index
    %c0_37 = arith.constant 0 : index
    %c0_38 = arith.constant 0 : index
    %43 = vector.load %arg7[%c0_36, %c0_37, %c0_38] : memref<1x1x256xf32, #tpu.memory_space<vmem>>, vector<1x1x256xf32>
    %44 = vector.shape_cast %43 : vector<1x1x256xf32> to vector<1x256xf32>
    %45 = vector.shape_cast %42 : vector<1x256xf32> to vector<1x1x256xf32>
    tpu.vector_store %arg7[%c0_36, %c0_37, %c0_38], %45 {strides = array<i32>} : memref<1x1x256xf32, #tpu.memory_space<vmem>>, vector<1x1x256xf32>,
    return
  }
  func.func @transform_0(%arg0: i32) -> (i32, i32, i32) {
    %c0_i32 = arith.constant 0 : i32
    %c0_i32_0 = arith.constant 0 : i32
    %c0_i32_1 = arith.constant 0 : i32
    return %arg0, %c0_i32, %c0_i32_0 : i32, i32, i32
  }
  func.func @transform_1(%arg0: i32) -> (i32, i32, i32) {
    %c0_i32 = arith.constant 0 : i32
    %c0_i32_0 = arith.constant 0 : i32
    %c0_i32_1 = arith.constant 0 : i32
    %c0_i32_2 = arith.constant 0 : i32
    return %c0_i32, %c0_i32_0, %c0_i32_1 : i32, i32, i32
  }
  func.func @transform_2(%arg0: i32) -> (i32, i32) {
    %c0_i32 = arith.constant 0 : i32
    %c0_i32_0 = arith.constant 0 : i32
    %c0_i32_1 = arith.constant 0 : i32
    return %c0_i32, %c0_i32_0 : i32, i32
  }
  func.func @transform_3(%arg0: i32) -> (i32, i32) {
    %c0_i32 = arith.constant 0 : i32
    %c0_i32_0 = arith.constant 0 : i32
    %c0_i32_1 = arith.constant 0 : i32
    return %c0_i32, %c0_i32_0 : i32, i32
  }
  func.func @transform_4(%arg0: i32) -> (i32, i32, i32) {
    %c0_i32 = arith.constant 0 : i32
    %c0_i32_0 = arith.constant 0 : i32
    %c0_i32_1 = arith.constant 0 : i32
    return %arg0, %c0_i32, %c0_i32_0 : i32, i32, i32
  }
  func.func @transform_5(%arg0: i32) -> (i32, i32, i32) {
    %c0_i32 = arith.constant 0 : i32
    %c0_i32_0 = arith.constant 0 : i32
    %c0_i32_1 = arith.constant 0 : i32
    return %arg0, %c0_i32, %c0_i32_0 : i32, i32, i32
  }
  func.func @transform_6(%arg0: i32) -> (i32, i32, i32) {
    %c0_i32 = arith.constant 0 : i32
    %c0_i32_0 = arith.constant 0 : i32
    %c0_i32_1 = arith.constant 0 : i32
    return %arg0, %c0_i32, %c0_i32_0 : i32, i32, i32
  }
}

module attributes {stable_mosaic.version = 11 : i64} {
  func.func @_conv_kernel(%arg0: i32, %arg1: memref<1x12x256xbf16, #tpu.memory_space<vmem>>, %arg2: memref<9x256x1xbf16, #tpu.memory_space<vmem>>, %arg3: memref<1x1xf32, #tpu.memory_space<vmem>>, %arg4: memref<1x3x1xf32, #tpu.memory_space<vmem>>) attributes {dimension_semantics = [#tpu.dimension_semantics<parallel>], iteration_bounds = array<i64: 2>, scalar_prefetch = 0 : i64, scratch_operands = 0 : i64, tpu.core_type = #tpu.core_type<tc>, window_params = [{transform_indices = @transform_0, window_bounds = array<i64: 1, 12, 256>}, {pipeline_mode = #tpu.pipeline_mode<synchronous>, transform_indices = @transform_1, window_bounds = array<i64: 9, 256, 1>}, {pipeline_mode = #tpu.pipeline_mode<synchronous>, transform_indices = @transform_2, window_bounds = array<i64: 1, 1>}, {transform_indices = @transform_3, window_bounds = array<i64: 1, 3, 1>}]} {
    %c0 = arith.constant 0 : index
    %c0_0 = arith.constant 0 : index
    %c0_1 = arith.constant 0 : index
    %0 = vector.load %arg1[%c0, %c0_0, %c0_1] : memref<1x12x256xbf16, #tpu.memory_space<vmem>>, vector<1x3x256xbf16>
    %1 = vector.shape_cast %0 : vector<1x3x256xbf16> to vector<3x256xbf16>
    %c0_2 = arith.constant 0 : index
    %c0_3 = arith.constant 0 : index
    %c0_4 = arith.constant 0 : index
    %2 = vector.load %arg2[%c0_2, %c0_3, %c0_4] : memref<9x256x1xbf16, #tpu.memory_space<vmem>>, vector<1x256x1xbf16>
    %3 = vector.shape_cast %2 : vector<1x256x1xbf16> to vector<256x1xbf16>
    %cst = arith.constant dense<0.000000e+00> : vector<3x1xf32>
    %4 = tpu.matmul %1, %3, %cst {dimension_numbers = #tpu.dot_dimension_numbers<[1], [0], [0], [1], [0, 0, 1, 1], [], []>} : vector<3x256xbf16>, vector<256x1xbf16>, vector<3x1xf32> -> vector<3x1xf32>
    %c0_5 = arith.constant 0 : index
    %c1 = arith.constant 1 : index
    %c0_6 = arith.constant 0 : index
    %5 = vector.load %arg1[%c0_5, %c1, %c0_6] : memref<1x12x256xbf16, #tpu.memory_space<vmem>>, vector<1x3x256xbf16>
    %6 = vector.shape_cast %5 : vector<1x3x256xbf16> to vector<3x256xbf16>
    %c1_7 = arith.constant 1 : index
    %c0_8 = arith.constant 0 : index
    %c0_9 = arith.constant 0 : index
    %7 = vector.load %arg2[%c1_7, %c0_8, %c0_9] : memref<9x256x1xbf16, #tpu.memory_space<vmem>>, vector<1x256x1xbf16>
    %8 = vector.shape_cast %7 : vector<1x256x1xbf16> to vector<256x1xbf16>
    %cst_10 = arith.constant dense<0.000000e+00> : vector<3x1xf32>
    %9 = tpu.matmul %6, %8, %cst_10 {dimension_numbers = #tpu.dot_dimension_numbers<[1], [0], [0], [1], [0, 0, 1, 1], [], []>} : vector<3x256xbf16>, vector<256x1xbf16>, vector<3x1xf32> -> vector<3x1xf32>
    %10 = arith.addf %4, %9 : vector<3x1xf32>
    %c0_11 = arith.constant 0 : index
    %c2 = arith.constant 2 : index
    %c0_12 = arith.constant 0 : index
    %11 = vector.load %arg1[%c0_11, %c2, %c0_12] : memref<1x12x256xbf16, #tpu.memory_space<vmem>>, vector<1x3x256xbf16>
    %12 = vector.shape_cast %11 : vector<1x3x256xbf16> to vector<3x256xbf16>
    %c2_13 = arith.constant 2 : index
    %c0_14 = arith.constant 0 : index
    %c0_15 = arith.constant 0 : index
    %13 = vector.load %arg2[%c2_13, %c0_14, %c0_15] : memref<9x256x1xbf16, #tpu.memory_space<vmem>>, vector<1x256x1xbf16>
    %14 = vector.shape_cast %13 : vector<1x256x1xbf16> to vector<256x1xbf16>
    %cst_16 = arith.constant dense<0.000000e+00> : vector<3x1xf32>
    %15 = tpu.matmul %12, %14, %cst_16 {dimension_numbers = #tpu.dot_dimension_numbers<[1], [0], [0], [1], [0, 0, 1, 1], [], []>} : vector<3x256xbf16>, vector<256x1xbf16>, vector<3x1xf32> -> vector<3x1xf32>
    %16 = arith.addf %10, %15 : vector<3x1xf32>
    %c0_17 = arith.constant 0 : index
    %c3 = arith.constant 3 : index
    %c0_18 = arith.constant 0 : index
    %17 = vector.load %arg1[%c0_17, %c3, %c0_18] : memref<1x12x256xbf16, #tpu.memory_space<vmem>>, vector<1x3x256xbf16>
    %18 = vector.shape_cast %17 : vector<1x3x256xbf16> to vector<3x256xbf16>
    %c3_19 = arith.constant 3 : index
    %c0_20 = arith.constant 0 : index
    %c0_21 = arith.constant 0 : index
    %19 = vector.load %arg2[%c3_19, %c0_20, %c0_21] : memref<9x256x1xbf16, #tpu.memory_space<vmem>>, vector<1x256x1xbf16>
    %20 = vector.shape_cast %19 : vector<1x256x1xbf16> to vector<256x1xbf16>
    %cst_22 = arith.constant dense<0.000000e+00> : vector<3x1xf32>
    %21 = tpu.matmul %18, %20, %cst_22 {dimension_numbers = #tpu.dot_dimension_numbers<[1], [0], [0], [1], [0, 0, 1, 1], [], []>} : vector<3x256xbf16>, vector<256x1xbf16>, vector<3x1xf32> -> vector<3x1xf32>
    %22 = arith.addf %16, %21 : vector<3x1xf32>
    %c0_23 = arith.constant 0 : index
    %c4 = arith.constant 4 : index
    %c0_24 = arith.constant 0 : index
    %23 = vector.load %arg1[%c0_23, %c4, %c0_24] : memref<1x12x256xbf16, #tpu.memory_space<vmem>>, vector<1x3x256xbf16>
    %24 = vector.shape_cast %23 : vector<1x3x256xbf16> to vector<3x256xbf16>
    %c4_25 = arith.constant 4 : index
    %c0_26 = arith.constant 0 : index
    %c0_27 = arith.constant 0 : index
    %25 = vector.load %arg2[%c4_25, %c0_26, %c0_27] : memref<9x256x1xbf16, #tpu.memory_space<vmem>>, vector<1x256x1xbf16>
    %26 = vector.shape_cast %25 : vector<1x256x1xbf16> to vector<256x1xbf16>
    %cst_28 = arith.constant dense<0.000000e+00> : vector<3x1xf32>
    %27 = tpu.matmul %24, %26, %cst_28 {dimension_numbers = #tpu.dot_dimension_numbers<[1], [0], [0], [1], [0, 0, 1, 1], [], []>} : vector<3x256xbf16>, vector<256x1xbf16>, vector<3x1xf32> -> vector<3x1xf32>
    %28 = arith.addf %22, %27 : vector<3x1xf32>
    %c0_29 = arith.constant 0 : index
    %c5 = arith.constant 5 : index
    %c0_30 = arith.constant 0 : index
    %29 = vector.load %arg1[%c0_29, %c5, %c0_30] : memref<1x12x256xbf16, #tpu.memory_space<vmem>>, vector<1x3x256xbf16>
    %30 = vector.shape_cast %29 : vector<1x3x256xbf16> to vector<3x256xbf16>
    %c5_31 = arith.constant 5 : index
    %c0_32 = arith.constant 0 : index
    %c0_33 = arith.constant 0 : index
    %31 = vector.load %arg2[%c5_31, %c0_32, %c0_33] : memref<9x256x1xbf16, #tpu.memory_space<vmem>>, vector<1x256x1xbf16>
    %32 = vector.shape_cast %31 : vector<1x256x1xbf16> to vector<256x1xbf16>
    %cst_34 = arith.constant dense<0.000000e+00> : vector<3x1xf32>
    %33 = tpu.matmul %30, %32, %cst_34 {dimension_numbers = #tpu.dot_dimension_numbers<[1], [0], [0], [1], [0, 0, 1, 1], [], []>} : vector<3x256xbf16>, vector<256x1xbf16>, vector<3x1xf32> -> vector<3x1xf32>
    %34 = arith.addf %28, %33 : vector<3x1xf32>
    %c0_35 = arith.constant 0 : index
    %c6 = arith.constant 6 : index
    %c0_36 = arith.constant 0 : index
    %35 = vector.load %arg1[%c0_35, %c6, %c0_36] : memref<1x12x256xbf16, #tpu.memory_space<vmem>>, vector<1x3x256xbf16>
    %36 = vector.shape_cast %35 : vector<1x3x256xbf16> to vector<3x256xbf16>
    %c6_37 = arith.constant 6 : index
    %c0_38 = arith.constant 0 : index
    %c0_39 = arith.constant 0 : index
    %37 = vector.load %arg2[%c6_37, %c0_38, %c0_39] : memref<9x256x1xbf16, #tpu.memory_space<vmem>>, vector<1x256x1xbf16>
    %38 = vector.shape_cast %37 : vector<1x256x1xbf16> to vector<256x1xbf16>
    %cst_40 = arith.constant dense<0.000000e+00> : vector<3x1xf32>
    %39 = tpu.matmul %36, %38, %cst_40 {dimension_numbers = #tpu.dot_dimension_numbers<[1], [0], [0], [1], [0, 0, 1, 1], [], []>} : vector<3x256xbf16>, vector<256x1xbf16>, vector<3x1xf32> -> vector<3x1xf32>
    %40 = arith.addf %34, %39 : vector<3x1xf32>
    %c0_41 = arith.constant 0 : index
    %c7 = arith.constant 7 : index
    %c0_42 = arith.constant 0 : index
    %41 = vector.load %arg1[%c0_41, %c7, %c0_42] : memref<1x12x256xbf16, #tpu.memory_space<vmem>>, vector<1x3x256xbf16>
    %42 = vector.shape_cast %41 : vector<1x3x256xbf16> to vector<3x256xbf16>
    %c7_43 = arith.constant 7 : index
    %c0_44 = arith.constant 0 : index
    %c0_45 = arith.constant 0 : index
    %43 = vector.load %arg2[%c7_43, %c0_44, %c0_45] : memref<9x256x1xbf16, #tpu.memory_space<vmem>>, vector<1x256x1xbf16>
    %44 = vector.shape_cast %43 : vector<1x256x1xbf16> to vector<256x1xbf16>
    %cst_46 = arith.constant dense<0.000000e+00> : vector<3x1xf32>
    %45 = tpu.matmul %42, %44, %cst_46 {dimension_numbers = #tpu.dot_dimension_numbers<[1], [0], [0], [1], [0, 0, 1, 1], [], []>} : vector<3x256xbf16>, vector<256x1xbf16>, vector<3x1xf32> -> vector<3x1xf32>
    %46 = arith.addf %40, %45 : vector<3x1xf32>
    %c0_47 = arith.constant 0 : index
    %c8 = arith.constant 8 : index
    %c0_48 = arith.constant 0 : index
    %47 = vector.load %arg1[%c0_47, %c8, %c0_48] : memref<1x12x256xbf16, #tpu.memory_space<vmem>>, vector<1x3x256xbf16>
    %48 = vector.shape_cast %47 : vector<1x3x256xbf16> to vector<3x256xbf16>
    %c8_49 = arith.constant 8 : index
    %c0_50 = arith.constant 0 : index
    %c0_51 = arith.constant 0 : index
    %49 = vector.load %arg2[%c8_49, %c0_50, %c0_51] : memref<9x256x1xbf16, #tpu.memory_space<vmem>>, vector<1x256x1xbf16>
    %50 = vector.shape_cast %49 : vector<1x256x1xbf16> to vector<256x1xbf16>
    %cst_52 = arith.constant dense<0.000000e+00> : vector<3x1xf32>
    %51 = tpu.matmul %48, %50, %cst_52 {dimension_numbers = #tpu.dot_dimension_numbers<[1], [0], [0], [1], [0, 0, 1, 1], [], []>} : vector<3x256xbf16>, vector<256x1xbf16>, vector<3x1xf32> -> vector<3x1xf32>
    %52 = arith.addf %46, %51 : vector<3x1xf32>
    %c0_53 = arith.constant 0 : index
    %c0_54 = arith.constant 0 : index
    %53 = vector.load %arg3[%c0_53, %c0_54] : memref<1x1xf32, #tpu.memory_space<vmem>>, vector<1x1xf32>
    %54 = vector.broadcast %53 : vector<1x1xf32> to vector<3x1xf32>
    %55 = arith.addf %52, %54 : vector<3x1xf32>
    %c0_55 = arith.constant 0 : index
    %c0_56 = arith.constant 0 : index
    %c0_57 = arith.constant 0 : index
    %56 = vector.load %arg4[%c0_55, %c0_56, %c0_57] : memref<1x3x1xf32, #tpu.memory_space<vmem>>, vector<1x3x1xf32>
    %57 = vector.shape_cast %56 : vector<1x3x1xf32> to vector<3x1xf32>
    %58 = vector.shape_cast %55 : vector<3x1xf32> to vector<1x3x1xf32>
    tpu.vector_store %arg4[%c0_55, %c0_56, %c0_57], %58 {strides = array<i32>} : memref<1x3x1xf32, #tpu.memory_space<vmem>>, vector<1x3x1xf32>,
    return
  }
  func.func @transform_0(%arg0: i32) -> (i32, i32, i32) {
    %c0_i32 = arith.constant 0 : i32
    %c0_i32_0 = arith.constant 0 : i32
    %c0_i32_1 = arith.constant 0 : i32
    return %arg0, %c0_i32, %c0_i32_0 : i32, i32, i32
  }
  func.func @transform_1(%arg0: i32) -> (i32, i32, i32) {
    %c0_i32 = arith.constant 0 : i32
    %c0_i32_0 = arith.constant 0 : i32
    %c0_i32_1 = arith.constant 0 : i32
    %c0_i32_2 = arith.constant 0 : i32
    return %c0_i32, %c0_i32_0, %c0_i32_1 : i32, i32, i32
  }
  func.func @transform_2(%arg0: i32) -> (i32, i32) {
    %c0_i32 = arith.constant 0 : i32
    %c0_i32_0 = arith.constant 0 : i32
    %c0_i32_1 = arith.constant 0 : i32
    return %c0_i32, %c0_i32_0 : i32, i32
  }
  func.func @transform_3(%arg0: i32) -> (i32, i32, i32) {
    %c0_i32 = arith.constant 0 : i32
    %c0_i32_0 = arith.constant 0 : i32
    %c0_i32_1 = arith.constant 0 : i32
    return %arg0, %c0_i32, %c0_i32_0 : i32, i32, i32
  }
}

</mosaic_0001>

<llo_original>
// kernel: _lambda_.5
$region0: #{_lambda_.5}
  #allocation0 [shape = 'u32[]', space=smem, size = 0x4, offset = 0x4, fixed_abs, tag = 'smem constant byte address 0x4 - core index']
  #allocation1 [shape = 'u32[144,128]{1,0:T(1,128)}', space=vmem, size = 0x12000, scoped, tag = 'internal scratch']
  %s0 = inlined_call_operand.vmem [shape: bf16[2,90,24], index: 0, kind: input, shape index: {}]
  %s1 = inlined_call_operand.vmem [shape: bf16[4,24,32], index: 1, kind: input, shape index: {}]
  %s2 = inlined_call_operand.vmem [shape: f32[1,32], index: 2, kind: input, shape index: {}]
  %s3 = inlined_call_operand.vmem [shape: bf16[2,72,32], index: 3, kind: output, shape index: {}]
  %s4 = sld [smem:[#allocation0]]
  $region45: #{_lambda_.5} parent=0
    _
  %s6 = ssub.s32 1, %s4
  %s7 = scalar_select 0, %s6, %s4
  loop: start=0, step=1, limit=4
  $region2: #{_lambda_.5} parent=0 // loop_pre_header
    _
  $region3: #{_lambda_.5} parent=0 // loop_header
    %s9 = sphi 0, %s13
    %p10 = scmp.ge.s32.totalorder %s9, 4
    %s19 = sphi 0, %s21
    %s22 = sphi 0, %s19
    %s23 = sphi 0, %s22
    %s39 = sphi 0, %s23
    %s43 = sphi 0, %s43
    %s45 = sphi 0, %s43
    %s46 = sphi 0, %s45
    %s60 = sphi 0, %s46
    %s64 = sphi 0, %s64
    %s66 = sphi 0, %s64
    %s67 = sphi 0, %s66
    %s81 = sphi 0, %s67
    %s87 = sphi 0, %s89
    %s90 = sphi 0, %s87
    %s91 = sphi 0, %s90
    %s107 = sphi 0, %s91
  $region4: #{_lambda_.5} parent=0 // loop_header_branch
    %12 = sbr.rel (%p10) target = $region8
  $region5: #{_lambda_.5} parent=0 // loop_body
    %s14 = ssub.s32 %s9, 1
    %s15 = ssub.s32 %s9, 2
    %s16 = sadd.s32 %s9, 1
    %s17 = ssub.s32 %s9, %s16
    %p18 = scmp.eq.s32.totalorder %s17, 0
    %s20 = sadd.s32 %s19, 1
    %s21 = scalar_select %p18, %s19, %s20
    %p24 = pneg %p18
    %p25 = scmp.eq.s32.totalorder %s9, 1
    %p26 = por %p24, %p25
    %p27 = scmp.ne.s32.totalorder %s19, %s22
    %p28 = scmp.eq.s32.totalorder %s9, 0
    %p29 = por %p27, %p28
    %p30 = scmp.ne.s32.totalorder %s19, %s22
    %p31 = scmp.eq.s32.totalorder %s14, 1
    %p32 = por %p30, %p31
    %p33 = scmp.ne.s32.totalorder %s22, %s23
    %p34 = scmp.eq.s32.totalorder %s14, 0
    %p35 = por %p33, %p34
    %p36 = scmp.ne.s32.totalorder %s22, %s23
    %p37 = scmp.eq.s32.totalorder %s15, 1
    %p38 = por %p36, %p37
    %p40 = scmp.ne.s32.totalorder %s23, %s39
    %p41 = scmp.eq.s32.totalorder %s15, 0
    %p42 = por %p40, %p41
    %s44 = sadd.s32 %s43, 1
    %p47 = scmp.eq.s32.totalorder %s9, 1
    %p48 = scmp.ne.s32.totalorder %s43, %s45
    %p49 = scmp.eq.s32.totalorder %s9, 0
    %p50 = por %p48, %p49
    %p51 = scmp.ne.s32.totalorder %s43, %s45
    %p52 = scmp.eq.s32.totalorder %s14, 1
    %p53 = por %p51, %p52
    %p54 = scmp.ne.s32.totalorder %s45, %s46
    %p55 = scmp.eq.s32.totalorder %s14, 0
    %p56 = por %p54, %p55
    %p57 = scmp.ne.s32.totalorder %s45, %s46
    %p58 = scmp.eq.s32.totalorder %s15, 1
    %p59 = por %p57, %p58
    %p61 = scmp.ne.s32.totalorder %s46, %s60
    %p62 = scmp.eq.s32.totalorder %s15, 0
    %p63 = por %p61, %p62
    %s65 = sadd.s32 %s64, 1
    %p68 = scmp.eq.s32.totalorder %s9, 1
    %p69 = scmp.ne.s32.totalorder %s64, %s66
    %p70 = scmp.eq.s32.totalorder %s9, 0
    %p71 = por %p69, %p70
    %p72 = scmp.ne.s32.totalorder %s64, %s66
    %p73 = scmp.eq.s32.totalorder %s14, 1
    %p74 = por %p72, %p73
    %p75 = scmp.ne.s32.totalorder %s66, %s67
    %p76 = scmp.eq.s32.totalorder %s14, 0
    %p77 = por %p75, %p76
    %p78 = scmp.ne.s32.totalorder %s66, %s67
    %p79 = scmp.eq.s32.totalorder %s15, 1
    %p80 = por %p78, %p79
    %p82 = scmp.ne.s32.totalorder %s67, %s81
    %p83 = scmp.eq.s32.totalorder %s15, 0
    %p84 = por %p82, %p83
    %s85 = ssub.s32 %s9, %s16
    %p86 = scmp.eq.s32.totalorder %s85, 0
    %s88 = sadd.s32 %s87, 1
    %s89 = scalar_select %p86, %s87, %s88
    %p92 = pneg %p86
    %p93 = scmp.eq.s32.totalorder %s9, 1
    %p94 = por %p92, %p93
    %p95 = scmp.ne.s32.totalorder %s87, %s90
    %p96 = scmp.eq.s32.totalorder %s9, 0
    %p97 = por %p95, %p96
    %p98 = scmp.ne.s32.totalorder %s87, %s90
    %p99 = scmp.eq.s32.totalorder %s14, 1
    %p100 = por %p98, %p99
    %p101 = scmp.ne.s32.totalorder %s90, %s91
    %p102 = scmp.eq.s32.totalorder %s14, 0
    %p103 = por %p101, %p102
    %p104 = scmp.ne.s32.totalorder %s90, %s91
    %p105 = scmp.eq.s32.totalorder %s15, 1
    %p106 = por %p104, %p105
    %p108 = scmp.ne.s32.totalorder %s91, %s107
    %p109 = scmp.eq.s32.totalorder %s15, 0
    %p110 = por %p108, %p109
    %p111 = scmp.le.s32.totalorder 1, %s9
    %p112 = scmp.lt.s32.totalorder %s9, 3
    %p113 = pnand %p111, %p112
    %p114 = pneg %p113
    // Predicated region
    $region9: #{_lambda_.5} parent=5 // pred_check
      _
    $region10: #{_lambda_.5} parent=5 // pred_check_branch
      %116 = sbr.rel (%p113) target = $region12
    $region11: #{_lambda_.5} parent=5 // pred_region
      %s117 = ssub.s32 %s9, 1
      // Predicated region
      $region13: #{_lambda_.5} parent=11 // pred_check
        %p118 = pneg %p56
      $region14: #{_lambda_.5} parent=11 // pred_check_branch
        %120 = sbr.rel (%p118) target = $region16
      $region15: #{_lambda_.5} parent=11 // pred_region
        _
      $region16: #{_lambda_.5} parent=11 // pred_fallthru
        _
      // Predicated region
      $region17: #{_lambda_.5} parent=11 // pred_check
        %p121 = pneg %p77
      $region18: #{_lambda_.5} parent=11 // pred_check_branch
        %123 = sbr.rel (%p121) target = $region20
      $region19: #{_lambda_.5} parent=11 // pred_region
        _
      $region20: #{_lambda_.5} parent=11 // pred_fallthru
        _
    $region12: #{_lambda_.5} parent=5 // pred_fallthru
      _
    %p124 = scmp.lt.s32.totalorder %s9, 2
    // Predicated region
    $region21: #{_lambda_.5} parent=5 // pred_check
      %p125 = pneg %p124
    $region22: #{_lambda_.5} parent=5 // pred_check_branch
      %127 = sbr.rel (%p125) target = $region24
    $region23: #{_lambda_.5} parent=5 // pred_region
      // Predicated region
      $region25: #{_lambda_.5} parent=23 // pred_check
        %p128 = pneg %p29
      $region26: #{_lambda_.5} parent=23 // pred_check_branch
        %130 = sbr.rel (%p128) target = $region28
      $region27: #{_lambda_.5} parent=23 // pred_region
        %p131 = scmp.lt.s32.totalorder %s9, 1
        %s132 = scalar_select %p131, %s9, 1
        %s133 = smul.addr %s132, 12
        %s134 = smul.addr %s133, 4
        %s135 = scalar_lea.vmem %s0, %s134
      $region28: #{_lambda_.5} parent=23 // pred_fallthru
        _
    $region24: #{_lambda_.5} parent=5 // pred_fallthru
      _
    %p136 = scmp.le.s32.totalorder 1, %s9
    %p137 = scmp.lt.s32.totalorder %s9, 3
    %p138 = pnand %p136, %p137
    %p139 = pneg %p138
    // Predicated region
    $region29: #{_lambda_.5} parent=5 // pred_check
      _
    $region30: #{_lambda_.5} parent=5 // pred_check_branch
      %141 = sbr.rel (%p138) target = $region32
    $region31: #{_lambda_.5} parent=5 // pred_region
      %s142 = ssub.s32 %s9, 1
      %p143 = scmp.lt.s32.totalorder %s14, 1
      %s144 = scalar_select %p143, %s14, 1
      %s145 = smul.addr %s144, 12
      %s146 = smul.addr %s145, 4
      %s147 = scalar_lea.vmem %s0, %s146
      %p148 = pneg %p35
      %p149 = pneg %p32
      %p150 = pneg %p56
      %p151 = pneg %p53
      %p152 = pneg %p77
      %p153 = pneg %p74
      %p154 = pneg %p103
      %p155 = pneg %p100
      %p156 = scmp.lt.s32.totalorder %s14, 1
      %s157 = scalar_select %p156, %s14, 1
      %s158 = smul.addr %s157, 9
      %s159 = smul.addr %s158, 4
      %s160 = scalar_lea.vmem %s3, %s159
      %p161 = scmp.lt.s32.totalorder %s14, 1
      %s162 = scalar_select %p161, %s14, 1
      %s163 = smul.addr %s162, 12
      %s164 = smul.addr %s163, 4
      %s165 = scalar_lea.vmem %s0, %s164
      %p166 = scmp.lt.s32.totalorder %s14, 1
      %s167 = scalar_select %p166, %s14, 1
      %s168 = smul.addr %s167, 9
      %s169 = smul.addr %s168, 4
      %s170 = scalar_lea.vmem %s3, %s169
      %v172 = vld [vmem:[%s165] sm:$0xf]
      %v173 = vld [vmem:[%s165 + $0x4] sm:$0xf]
      %v174 = vld [vmem:[%s165 + $0x8] sm:$0xf]
      %v175 = vld [vmem:[%s165 + $0xc] sm:$0xf]
      %v176 = vld [vmem:[%s165 + $0x10] sm:$0xf]
      %v177 = vld [vmem:[%s165 + $0x14] sm:$0xf]
      %v178 = vld [vmem:[%s165 + $0x18] sm:$0xf]
      %v179 = vld [vmem:[%s165 + $0x1c] sm:$0xf]
      %v180 = vld [vmem:[%s165 + $0x20] sm:$0xf]
      %v181 = vld [vmem:[%s1] sm:$0xf]
      %v182 = vld [vmem:[%s1 + $0x4] sm:$0xf]
      %v183 = vld [vmem:[%s1 + $0x8] sm:$0xf]
      %v184 = vld [vmem:[%s165 + $0x24] sm:$0x1]
      %s185 = scalar_lea.vmem %s1, 12
      %v186 = vld [vmem:[%s185] sm:$0xf]
      %v187 = vld [vmem:[%s185 + $0x4] sm:$0xf]
      %v188 = vld [vmem:[%s185 + $0x8] sm:$0xf]
      %v199 = vunpack.c.l.b16 %v172
      %v200 = vunpack.c.l.b16 %v173
      %v201 = vunpack.c.l.b16 %v174
      %v202 = vunpack.c.l.b16 %v175
      %v203 = vunpack.c.l.b16 %v176
      %v204 = vunpack.c.l.b16 %v177
      %v205 = vunpack.c.l.b16 %v178
      %v206 = vunpack.c.l.b16 %v179
      %v207 = vunpack.c.l.b16 %v180
      %v208 = vunpack.c.l.b16 %v184
      %v209 = vpack.c.b16 %v200, %v199
      %v210 = vpack.c.b16 %v202, %v201
      %v211 = vpack.c.b16 %v204, %v203
      %v212 = vpack.c.b16 %v206, %v205
      %v213 = vpack.c.b16 %v208, %v207
      %vm214 = vsmask.f32 7424
      %v216 = vshrl.u32 %v209, 16
      %v218 = vshll.u32 %v209, 16
      %v220 = vrot.slane %v218, 1
      %v221 = vor.u32 %v216, %v220
      %v223 = vshll.u32 %v210, 16
      %v225 = vrot.slane %v223, 1
      %v226 = vsel %vm214, %v221, %v225
      %v227 = vshrl.u32 %v210, 16
      %v229 = vor.u32 %v227, %v225
      %v231 = vshll.u32 %v211, 16
      %v233 = vrot.slane %v231, 1
      %v234 = vsel %vm214, %v229, %v233
      %v235 = vshrl.u32 %v211, 16
      %v237 = vor.u32 %v235, %v233
      %v239 = vshll.u32 %v212, 16
      %v241 = vrot.slane %v239, 1
      %v242 = vsel %vm214, %v237, %v241
      %v243 = vshrl.u32 %v212, 16
      %v245 = vor.u32 %v243, %v241
      %v247 = vshll.u32 %v213, 16
      %v249 = vrot.slane %v247, 1
      %v250 = vsel %vm214, %v245, %v249
      %v251 = vshrl.u32 %v213, 16
      %v253 = vor.u32 %v251, %v249
      %v257 = vunpack.c.l.b16 %v186
      %v258 = vunpack.c.l.b16 %v187
      %v259 = vunpack.c.l.b16 %v188
      %v260 = vpack.c.b16 %v258, %v257
      %v261 = vpack.c.b16 %v259, %v259
      %vm263 = vcmask 195584
      %v265 = vsel %vm263, %v226, 0
      %v268 = vsel %vm263, %v234, 0
      %v271 = vsel %vm263, %v242, 0
      %v274 = vsel %vm263, %v250, 0
      %v277 = vsel %vm263, %v253, 0
      %vm279 = vcmask 1043456
      %v281 = vsel %vm279, %v261, 0
      %283 = vmatprep.subr.bf16.mxu0 0
      %284 = vmatpush1.bf16.msra.mxu0 0
      %285 = vmatprep.subr.bf16.mxu0 0
      %286 = vmatpush1.bf16.msra.mxu0 0
      %287 = vmatprep.subr.bf16.mxu0 0
      %288 = vmatpush1.bf16.msra.mxu0 0
      %289 = vmatprep.subr.bf16.mxu0 0
      %290 = vmatpush1.bf16.msra.mxu0 0
      %291 = vmatprep.subr.bf16.mxu0 0
      %292 = vmatpush1.bf16.msra.mxu0 0
      %293 = vmatprep.subr.bf16.mxu0 0
      %294 = vmatpush1.bf16.msra.mxu0 0
      %295 = vmatprep.subr.bf16.mxu0 0
      %296 = vmatpush1.bf16.msra.mxu0 %v281
      %297 = vmatprep.subr.bf16.mxu0 0
      %298 = vmatpush1.bf16.msra.mxu0 %v260
      %299 = vmatprep.subr.bf16.mxu0 0
      %300 = vmatpush2.bf16.msra.mxu0 0
      %301 = vmatprep.subr.bf16.mxu0 0
      %302 = vmatpush2.bf16.msra.mxu0 0
      %303 = vmatprep.subr.bf16.mxu0 0
      %304 = vmatpush2.bf16.msra.mxu0 0
      %305 = vmatprep.subr.bf16.mxu0 0
      %306 = vmatpush2.bf16.msra.mxu0 0
      %307 = vmatprep.subr.bf16.mxu0 0
      %308 = vmatpush2.bf16.msra.mxu0 0
      %309 = vmatprep.subr.bf16.mxu0 0
      %310 = vmatpush2.bf16.msra.mxu0 0
      %311 = vmatprep.subr.bf16.mxu0 0
      %312 = vmatpush2.bf16.msra.mxu0 0
      %313 = vmatprep.subr.bf16.mxu0 0
      %314 = vmatpush2.bf16.msra.mxu0 0
      %315 = vmatprep.mubr.bf16.mxu0 0
      %316 = vmatmul.mubr.bf16.gmra.mxu0 %v265
      %v317 = vpop.f32.mrf.mxu0
      %v318 = vadd.f32 0.0, %v317
      %v319 = vpop.f32.mrf.mxu0
      %v320 = vpop.f32.mrf.mxu0
      %v321 = vadd.f32 0.0, %v320
      %v322 = vpop.f32.mrf.mxu0
      %323 = vmatprep.mubr.bf16.mxu0 0
      %324 = vmatmul.mubr.bf16.gmra.mxu0 %v268
      %v325 = vpop.f32.mrf.mxu0
      %v326 = vadd.f32 0.0, %v325
      %v327 = vpop.f32.mrf.mxu0
      %v328 = vpop.f32.mrf.mxu0
      %v329 = vadd.f32 0.0, %v328
      %v330 = vpop.f32.mrf.mxu0
      %331 = vmatprep.mubr.bf16.mxu0 0
      %332 = vmatmul.mubr.bf16.gmra.mxu0 %v271
      %v333 = vpop.f32.mrf.mxu0
      %v334 = vadd.f32 0.0, %v333
      %v335 = vpop.f32.mrf.mxu0
      %v336 = vpop.f32.mrf.mxu0
      %v337 = vadd.f32 0.0, %v336
      %v338 = vpop.f32.mrf.mxu0
      %339 = vmatprep.mubr.bf16.mxu0 0
      %340 = vmatmul.mubr.bf16.gmra.mxu0 %v274
      %v341 = vpop.f32.mrf.mxu0
      %v342 = vadd.f32 0.0, %v341
      %v343 = vpop.f32.mrf.mxu0
      %v344 = vpop.f32.mrf.mxu0
      %v345 = vadd.f32 0.0, %v344
      %v346 = vpop.f32.mrf.mxu0
      %347 = vmatprep.mubr.bf16.mxu0 0
      %348 = vmatmul.mubr.bf16.gmra.mxu0 %v277
      %v349 = vpop.f32.mrf.mxu0
      %v350 = vadd.f32 0.0, %v349
      %v351 = vpop.f32.mrf.mxu0
      %v352 = vpop.f32.mrf.mxu0
      %v353 = vpop.f32.mrf.mxu0
      %354 = vdwg.mxu0
      %v355 = vpack.c.b16 %v207, %v207
      %v359 = vunpack.c.l.b16 %v181
      %v360 = vunpack.c.l.b16 %v182
      %v361 = vunpack.c.l.b16 %v183
      %v362 = vpack.c.b16 %v360, %v359
      %v363 = vpack.c.b16 %v361, %v361
      %v365 = vsel %vm263, %v209, 0
      %v367 = vsel %vm263, %v210, 0
      %v369 = vsel %vm263, %v211, 0
      %v371 = vsel %vm263, %v212, 0
      %v374 = vsel %vm263, %v355, 0
      %v377 = vsel %vm279, %v363, 0
      %379 = vmatprep.subr.bf16.mxu0 0
      %380 = vmatpush1.bf16.msra.mxu0 0
      %381 = vmatprep.subr.bf16.mxu0 0
      %382 = vmatpush1.bf16.msra.mxu0 0
      %383 = vmatprep.subr.bf16.mxu0 0
      %384 = vmatpush1.bf16.msra.mxu0 0
      %385 = vmatprep.subr.bf16.mxu0 0
      %386 = vmatpush1.bf16.msra.mxu0 0
      %387 = vmatprep.subr.bf16.mxu0 0
      %388 = vmatpush1.bf16.msra.mxu0 0
      %389 = vmatprep.subr.bf16.mxu0 0
      %390 = vmatpush1.bf16.msra.mxu0 0
      %391 = vmatprep.subr.bf16.mxu0 0
      %392 = vmatpush1.bf16.msra.mxu0 %v377
      %393 = vmatprep.subr.bf16.mxu0 0
      %394 = vmatpush1.bf16.msra.mxu0 %v362
      %395 = vmatprep.subr.bf16.mxu0 0
      %396 = vmatpush2.bf16.msra.mxu0 0
      %397 = vmatprep.subr.bf16.mxu0 0
      %398 = vmatpush2.bf16.msra.mxu0 0
      %399 = vmatprep.subr.bf16.mxu0 0
      %400 = vmatpush2.bf16.msra.mxu0 0
      %401 = vmatprep.subr.bf16.mxu0 0
      %402 = vmatpush2.bf16.msra.mxu0 0
      %403 = vmatprep.subr.bf16.mxu0 0
      %404 = vmatpush2.bf16.msra.mxu0 0
      %405 = vmatprep.subr.bf16.mxu0 0
      %406 = vmatpush2.bf16.msra.mxu0 0
      %407 = vmatprep.subr.bf16.mxu0 0
      %408 = vmatpush2.bf16.msra.mxu0 0
      %409 = vmatprep.subr.bf16.mxu0 0
      %410 = vmatpush2.bf16.msra.mxu0 0
      %411 = vmatprep.mubr.bf16.mxu0 0
      %412 = vmatmul.mubr.bf16.gmra.mxu0 %v365
      %v413 = vpop.f32.mrf.mxu0
      %v414 = vadd.f32 %v318, %v413
      %v415 = vpop.f32.mrf.mxu0
      %v416 = vpop.f32.mrf.mxu0
      %v417 = vadd.f32 %v321, %v416
      %v418 = vpop.f32.mrf.mxu0
      %419 = vmatprep.mubr.bf16.mxu0 0
      %420 = vmatmul.mubr.bf16.gmra.mxu0 %v367
      %v421 = vpop.f32.mrf.mxu0
      %v422 = vadd.f32 %v326, %v421
      %v423 = vpop.f32.mrf.mxu0
      %v424 = vpop.f32.mrf.mxu0
      %v425 = vadd.f32 %v329, %v424
      %v426 = vpop.f32.mrf.mxu0
      %427 = vmatprep.mubr.bf16.mxu0 0
      %428 = vmatmul.mubr.bf16.gmra.mxu0 %v369
      %v429 = vpop.f32.mrf.mxu0
      %v430 = vadd.f32 %v334, %v429
      %v431 = vpop.f32.mrf.mxu0
      %v432 = vpop.f32.mrf.mxu0
      %v433 = vadd.f32 %v337, %v432
      %v434 = vpop.f32.mrf.mxu0
      %435 = vmatprep.mubr.bf16.mxu0 0
      %436 = vmatmul.mubr.bf16.gmra.mxu0 %v371
      %v437 = vpop.f32.mrf.mxu0
      %v438 = vadd.f32 %v342, %v437
      %v439 = vpop.f32.mrf.mxu0
      %v440 = vpop.f32.mrf.mxu0
      %v441 = vadd.f32 %v345, %v440
      %v442 = vpop.f32.mrf.mxu0
      %443 = vmatprep.mubr.bf16.mxu0 0
      %444 = vmatmul.mubr.bf16.gmra.mxu0 %v374
      %v445 = vpop.f32.mrf.mxu0
      %v446 = vadd.f32 %v350, %v445
      %v447 = vpop.f32.mrf.mxu0
      %v448 = vpop.f32.mrf.mxu0
      %v449 = vpop.f32.mrf.mxu0
      %450 = vdwg.mxu0
      %v451 = vld [vmem:[%s165 + $0x4] sm:$0xf]
      %v452 = vld [vmem:[%s165 + $0x8] sm:$0xf]
      %v453 = vld [vmem:[%s165 + $0xc] sm:$0xf]
      %v454 = vld [vmem:[%s165 + $0x10] sm:$0xf]
      %v455 = vld [vmem:[%s165 + $0x14] sm:$0xf]
      %v456 = vld [vmem:[%s165 + $0x18] sm:$0xf]
      %v457 = vld [vmem:[%s165 + $0x1c] sm:$0xf]
      %v458 = vld [vmem:[%s165 + $0x20] sm:$0xf]
      %v459 = vld [vmem:[%s165 + $0x24] sm:$0xf]
      %v460 = vld [vmem:[%s165 + $0x28] sm:$0x1]
      %s461 = scalar_lea.vmem %s1, 24
      %v462 = vld [vmem:[%s461] sm:$0xf]
      %v463 = vld [vmem:[%s461 + $0x4] sm:$0xf]
      %v464 = vld [vmem:[%s461 + $0x8] sm:$0xf]
      %v475 = vunpack.c.l.b16 %v451
      %v476 = vunpack.c.l.b16 %v452
      %v477 = vunpack.c.l.b16 %v453
      %v478 = vunpack.c.l.b16 %v454
      %v479 = vunpack.c.l.b16 %v455
      %v480 = vunpack.c.l.b16 %v456
      %v481 = vunpack.c.l.b16 %v457
      %v482 = vunpack.c.l.b16 %v458
      %v483 = vunpack.c.l.b16 %v459
      %v484 = vunpack.c.l.b16 %v460
      %v485 = vpack.c.b16 %v476, %v475
      %v486 = vpack.c.b16 %v478, %v477
      %v487 = vpack.c.b16 %v480, %v479
      %v488 = vpack.c.b16 %v482, %v481
      %v489 = vpack.c.b16 %v484, %v483
      %v491 = vshrl.u32 %v485, 16
      %v493 = vshll.u32 %v485, 16
      %v495 = vrot.slane %v493, 1
      %v496 = vor.u32 %v491, %v495
      %v498 = vshll.u32 %v486, 16
      %v500 = vrot.slane %v498, 1
      %v501 = vsel %vm214, %v496, %v500
      %v502 = vshrl.u32 %v486, 16
      %v504 = vor.u32 %v502, %v500
      %v506 = vshll.u32 %v487, 16
      %v508 = vrot.slane %v506, 1
      %v509 = vsel %vm214, %v504, %v508
      %v510 = vshrl.u32 %v487, 16
      %v512 = vor.u32 %v510, %v508
      %v514 = vshll.u32 %v488, 16
      %v516 = vrot.slane %v514, 1
      %v517 = vsel %vm214, %v512, %v516
      %v518 = vshrl.u32 %v488, 16
      %v520 = vor.u32 %v518, %v516
      %v522 = vshll.u32 %v489, 16
      %v524 = vrot.slane %v522, 1
      %v525 = vsel %vm214, %v520, %v524
      %v526 = vshrl.u32 %v489, 16
      %v528 = vor.u32 %v526, %v524
      %v532 = vunpack.c.l.b16 %v462
      %v533 = vunpack.c.l.b16 %v463
      %v534 = vunpack.c.l.b16 %v464
      %v535 = vpack.c.b16 %v533, %v532
      %v536 = vpack.c.b16 %v534, %v534
      %v539 = vsel %vm263, %v501, 0
      %v542 = vsel %vm263, %v509, 0
      %v545 = vsel %vm263, %v517, 0
      %v548 = vsel %vm263, %v525, 0
      %v551 = vsel %vm263, %v528, 0
      %v554 = vsel %vm279, %v536, 0
      %556 = vmatprep.subr.bf16.mxu0 0
      %557 = vmatpush1.bf16.msra.mxu0 0
      %558 = vmatprep.subr.bf16.mxu0 0
      %559 = vmatpush1.bf16.msra.mxu0 0
      %560 = vmatprep.subr.bf16.mxu0 0
      %561 = vmatpush1.bf16.msra.mxu0 0
      %562 = vmatprep.subr.bf16.mxu0 0
      %563 = vmatpush1.bf16.msra.mxu0 0
      %564 = vmatprep.subr.bf16.mxu0 0
      %565 = vmatpush1.bf16.msra.mxu0 0
      %566 = vmatprep.subr.bf16.mxu0 0
      %567 = vmatpush1.bf16.msra.mxu0 0
      %568 = vmatprep.subr.bf16.mxu0 0
      %569 = vmatpush1.bf16.msra.mxu0 %v554
      %570 = vmatprep.subr.bf16.mxu0 0
      %571 = vmatpush1.bf16.msra.mxu0 %v535
      %572 = vmatprep.subr.bf16.mxu0 0
      %573 = vmatpush2.bf16.msra.mxu0 0
      %574 = vmatprep.subr.bf16.mxu0 0
      %575 = vmatpush2.bf16.msra.mxu0 0
      %576 = vmatprep.subr.bf16.mxu0 0
      %577 = vmatpush2.bf16.msra.mxu0 0
      %578 = vmatprep.subr.bf16.mxu0 0
      %579 = vmatpush2.bf16.msra.mxu0 0
      %580 = vmatprep.subr.bf16.mxu0 0
      %581 = vmatpush2.bf16.msra.mxu0 0
      %582 = vmatprep.subr.bf16.mxu0 0
      %583 = vmatpush2.bf16.msra.mxu0 0
      %584 = vmatprep.subr.bf16.mxu0 0
      %585 = vmatpush2.bf16.msra.mxu0 0
      %586 = vmatprep.subr.bf16.mxu0 0
      %587 = vmatpush2.bf16.msra.mxu0 0
      %588 = vmatprep.mubr.bf16.mxu0 0
      %589 = vmatmul.mubr.bf16.gmra.mxu0 %v539
      %v590 = vpop.f32.mrf.mxu0
      %v591 = vadd.f32 0.0, %v590
      %v592 = vpop.f32.mrf.mxu0
      %v593 = vpop.f32.mrf.mxu0
      %v594 = vadd.f32 0.0, %v593
      %v595 = vpop.f32.mrf.mxu0
      %596 = vmatprep.mubr.bf16.mxu0 0
      %597 = vmatmul.mubr.bf16.gmra.mxu0 %v542
      %v598 = vpop.f32.mrf.mxu0
      %v599 = vadd.f32 0.0, %v598
      %v600 = vpop.f32.mrf.mxu0
      %v601 = vpop.f32.mrf.mxu0
      %v602 = vadd.f32 0.0, %v601
      %v603 = vpop.f32.mrf.mxu0
      %604 = vmatprep.mubr.bf16.mxu0 0
      %605 = vmatmul.mubr.bf16.gmra.mxu0 %v545
      %v606 = vpop.f32.mrf.mxu0
      %v607 = vadd.f32 0.0, %v606
      %v608 = vpop.f32.mrf.mxu0
      %v609 = vpop.f32.mrf.mxu0
      %v610 = vadd.f32 0.0, %v609
      %v611 = vpop.f32.mrf.mxu0
      %612 = vmatprep.mubr.bf16.mxu0 0
      %613 = vmatmul.mubr.bf16.gmra.mxu0 %v548
      %v614 = vpop.f32.mrf.mxu0
      %v615 = vadd.f32 0.0, %v614
      %v616 = vpop.f32.mrf.mxu0
      %v617 = vpop.f32.mrf.mxu0
      %v618 = vadd.f32 0.0, %v617
      %v619 = vpop.f32.mrf.mxu0
      %620 = vmatprep.mubr.bf16.mxu0 0
      %621 = vmatmul.mubr.bf16.gmra.mxu0 %v551
      %v622 = vpop.f32.mrf.mxu0
      %v623 = vadd.f32 0.0, %v622
      %v624 = vpop.f32.mrf.mxu0
      %v625 = vpop.f32.mrf.mxu0
      %v626 = vpop.f32.mrf.mxu0
      %627 = vdwg.mxu0
      %v628 = vadd.f32 %v414, %v591
      %v629 = vadd.f32 %v417, %v594
      %v630 = vadd.f32 %v422, %v599
      %v631 = vadd.f32 %v425, %v602
      %v632 = vadd.f32 %v430, %v607
      %v633 = vadd.f32 %v433, %v610
      %v634 = vadd.f32 %v438, %v615
      %v635 = vadd.f32 %v441, %v618
      %v636 = vadd.f32 %v446, %v623
      %v637 = vld [vmem:[%s165 + $0x4] sm:$0xe]
      %s638 = scalar_lea.vmem %s1, 36
      %v639 = vld [vmem:[%s638] sm:$0xf]
      %v640 = vld [vmem:[%s638 + $0x4] sm:$0xf]
      %v641 = vld [vmem:[%s638 + $0x8] sm:$0xf]
      %v643 = vunpack.c.l.b16 %v637
      %v644 = vpack.c.b16 %v476, %v643
      %vm645 = vcmask 1046528
      %v646 = vrot.slane %v644, 1
      %v647 = vrot.slane %v486, 1
      %v648 = vsel %vm645, %v646, %v647
      %v649 = vrot.slane %v487, 1
      %v650 = vsel %vm645, %v647, %v649
      %v651 = vrot.slane %v488, 1
      %v652 = vsel %vm645, %v649, %v651
      %v653 = vrot.slane %v489, 1
      %v654 = vsel %vm645, %v651, %v653
      %v658 = vunpack.c.l.b16 %v639
      %v659 = vunpack.c.l.b16 %v640
      %v660 = vunpack.c.l.b16 %v641
      %v661 = vpack.c.b16 %v659, %v658
      %v662 = vpack.c.b16 %v660, %v660
      %v665 = vsel %vm263, %v648, 0
      %v668 = vsel %vm263, %v650, 0
      %v671 = vsel %vm263, %v652, 0
      %v674 = vsel %vm263, %v654, 0
      %v677 = vsel %vm263, %v653, 0
      %v680 = vsel %vm279, %v662, 0
      %682 = vmatprep.subr.bf16.mxu0 0
      %683 = vmatpush1.bf16.msra.mxu0 0
      %684 = vmatprep.subr.bf16.mxu0 0
      %685 = vmatpush1.bf16.msra.mxu0 0
      %686 = vmatprep.subr.bf16.mxu0 0
      %687 = vmatpush1.bf16.msra.mxu0 0
      %688 = vmatprep.subr.bf16.mxu0 0
      %689 = vmatpush1.bf16.msra.mxu0 0
      %690 = vmatprep.subr.bf16.mxu0 0
      %691 = vmatpush1.bf16.msra.mxu0 0
      %692 = vmatprep.subr.bf16.mxu0 0
      %693 = vmatpush1.bf16.msra.mxu0 0
      %694 = vmatprep.subr.bf16.mxu0 0
      %695 = vmatpush1.bf16.msra.mxu0 %v680
      %696 = vmatprep.subr.bf16.mxu0 0
      %697 = vmatpush1.bf16.msra.mxu0 %v661
      %698 = vmatprep.subr.bf16.mxu0 0
      %699 = vmatpush2.bf16.msra.mxu0 0
      %700 = vmatprep.subr.bf16.mxu0 0
      %701 = vmatpush2.bf16.msra.mxu0 0
      %702 = vmatprep.subr.bf16.mxu0 0
      %703 = vmatpush2.bf16.msra.mxu0 0
      %704 = vmatprep.subr.bf16.mxu0 0
      %705 = vmatpush2.bf16.msra.mxu0 0
      %706 = vmatprep.subr.bf16.mxu0 0
      %707 = vmatpush2.bf16.msra.mxu0 0
      %708 = vmatprep.subr.bf16.mxu0 0
      %709 = vmatpush2.bf16.msra.mxu0 0
      %710 = vmatprep.subr.bf16.mxu0 0
      %711 = vmatpush2.bf16.msra.mxu0 0
      %712 = vmatprep.subr.bf16.mxu0 0
      %713 = vmatpush2.bf16.msra.mxu0 0
      %714 = vmatprep.mubr.bf16.mxu0 0
      %715 = vmatmul.mubr.bf16.gmra.mxu0 %v665
      %v716 = vpop.f32.mrf.mxu0
      %v717 = vadd.f32 0.0, %v716
      %v718 = vpop.f32.mrf.mxu0
      %v719 = vpop.f32.mrf.mxu0
      %v720 = vadd.f32 0.0, %v719
      %v721 = vpop.f32.mrf.mxu0
      %722 = vmatprep.mubr.bf16.mxu0 0
      %723 = vmatmul.mubr.bf16.gmra.mxu0 %v668
      %v724 = vpop.f32.mrf.mxu0
      %v725 = vadd.f32 0.0, %v724
      %v726 = vpop.f32.mrf.mxu0
      %v727 = vpop.f32.mrf.mxu0
      %v728 = vadd.f32 0.0, %v727
      %v729 = vpop.f32.mrf.mxu0
      %730 = vmatprep.mubr.bf16.mxu0 0
      %731 = vmatmul.mubr.bf16.gmra.mxu0 %v671
      %v732 = vpop.f32.mrf.mxu0
      %v733 = vadd.f32 0.0, %v732
      %v734 = vpop.f32.mrf.mxu0
      %v735 = vpop.f32.mrf.mxu0
      %v736 = vadd.f32 0.0, %v735
      %v737 = vpop.f32.mrf.mxu0
      %738 = vmatprep.mubr.bf16.mxu0 0
      %739 = vmatmul.mubr.bf16.gmra.mxu0 %v674
      %v740 = vpop.f32.mrf.mxu0
      %v741 = vadd.f32 0.0, %v740
      %v742 = vpop.f32.mrf.mxu0
      %v743 = vpop.f32.mrf.mxu0
      %v744 = vadd.f32 0.0, %v743
      %v745 = vpop.f32.mrf.mxu0
      %746 = vmatprep.mubr.bf16.mxu0 0
      %747 = vmatmul.mubr.bf16.gmra.mxu0 %v677
      %v748 = vpop.f32.mrf.mxu0
      %v749 = vadd.f32 0.0, %v748
      %v750 = vpop.f32.mrf.mxu0
      %v751 = vpop.f32.mrf.mxu0
      %v752 = vpop.f32.mrf.mxu0
      %753 = vdwg.mxu0
      %v754 = vadd.f32 %v628, %v717
      %v755 = vadd.f32 %v629, %v720
      %v756 = vadd.f32 %v630, %v725
      %v757 = vadd.f32 %v631, %v728
      %v758 = vadd.f32 %v632, %v733
      %v759 = vadd.f32 %v633, %v736
      %v760 = vadd.f32 %v634, %v741
      %v761 = vadd.f32 %v635, %v744
      %v762 = vadd.f32 %v636, %v749
      %v763 = vld [vmem:[%s2] sm:$0x1]
      %v765 = vlaneseq
      %v766 = vshrl.u32 %v765, 7
      %v767 = vsub.s32 0, %v766
      %v768 = vrot.slane %v763, %v767
      %v770 = vadd.f32 %v754, %v768
      %v771 = vadd.f32 %v755, %v768
      %v772 = vadd.f32 %v756, %v768
      %v773 = vadd.f32 %v757, %v768
      %v774 = vadd.f32 %v758, %v768
      %v775 = vadd.f32 %v759, %v768
      %v776 = vadd.f32 %v760, %v768
      %v777 = vadd.f32 %v761, %v768
      %v778 = vadd.f32 %v762, %v768
      %v779 = vmax.f32 %v770, 0.0
      %v780 = vmax.f32 %v771, 0.0
      %v781 = vmax.f32 %v772, 0.0
      %v782 = vmax.f32 %v773, 0.0
      %v783 = vmax.f32 %v774, 0.0
      %v784 = vmax.f32 %v775, 0.0
      %v785 = vmax.f32 %v776, 0.0
      %v786 = vmax.f32 %v777, 0.0
      %v787 = vmax.f32 %v778, 0.0
      %v788 = vpack.c.bf16 %v780, %v779
      %v789 = vpack.c.bf16 %v782, %v781
      %v790 = vpack.c.bf16 %v784, %v783
      %v791 = vpack.c.bf16 %v786, %v785
      %v792 = vpack.c.bf16 %v787, %v787
      %v798 = vunpack.c.l.b16 %v788
      %v799 = vunpack.c.h.b16 %v788
      %v800 = vunpack.c.l.b16 %v789
      %v801 = vunpack.c.h.b16 %v789
      %v802 = vunpack.c.l.b16 %v790
      %v803 = vunpack.c.h.b16 %v790
      %v804 = vunpack.c.l.b16 %v791
      %v805 = vunpack.c.h.b16 %v791
      %v806 = vunpack.c.l.b16 %v792
      %v807 = vpack.c.b16 %v798, %v798
      %v808 = vpack.c.b16 %v799, %v799
      %v809 = vpack.c.b16 %v800, %v800
      %v810 = vpack.c.b16 %v801, %v801
      %v811 = vpack.c.b16 %v802, %v802
      %v812 = vpack.c.b16 %v803, %v803
      %v813 = vpack.c.b16 %v804, %v804
      %v814 = vpack.c.b16 %v805, %v805
      %v815 = vpack.c.b16 %v806, %v806
      %vm825 = vcmask 257024
      %826 = vst.msk [vmem:[%s170] sm:$0xf] %vm825, %v807
      %827 = vst.msk [vmem:[%s170 + $0x4] sm:$0xf] %vm825, %v808
      %828 = vst.msk [vmem:[%s170 + $0x8] sm:$0xf] %vm825, %v809
      %829 = vst.msk [vmem:[%s170 + $0xc] sm:$0xf] %vm825, %v810
      %830 = vst.msk [vmem:[%s170 + $0x10] sm:$0xf] %vm825, %v811
      %831 = vst.msk [vmem:[%s170 + $0x14] sm:$0xf] %vm825, %v812
      %832 = vst.msk [vmem:[%s170 + $0x18] sm:$0xf] %vm825, %v813
      %833 = vst.msk [vmem:[%s170 + $0x1c] sm:$0xf] %vm825, %v814
      %834 = vst.msk [vmem:[%s170 + $0x20] sm:$0xf] %vm825, %v815
      %p835 = scmp.lt.s32.totalorder %s14, 1
      %s836 = scalar_select %p835, %s14, 1
      %s837 = smul.addr %s836, 9
      %s838 = smul.addr %s837, 4
      %s839 = scalar_lea.vmem %s3, %s838
      // Predicated region
      $region33: #{_lambda_.5} parent=31 // pred_check
        %p840 = pneg %p100
      $region34: #{_lambda_.5} parent=31 // pred_check_branch
        %842 = sbr.rel (%p840) target = $region36
      $region35: #{_lambda_.5} parent=31 // pred_region
        _
      $region36: #{_lambda_.5} parent=31 // pred_fallthru
        _
    $region32: #{_lambda_.5} parent=5 // pred_fallthru
      _
    %p843 = scmp.le.s32.totalorder 2, %s9
    // Predicated region
    $region37: #{_lambda_.5} parent=5 // pred_check
      %p844 = pneg %p843
    $region38: #{_lambda_.5} parent=5 // pred_check_branch
      %846 = sbr.rel (%p844) target = $region40
    $region39: #{_lambda_.5} parent=5 // pred_region
      %s847 = ssub.s32 %s9, 2
      // Predicated region
      $region41: #{_lambda_.5} parent=39 // pred_check
        %p848 = pneg %p106
      $region42: #{_lambda_.5} parent=39 // pred_check_branch
        %850 = sbr.rel (%p848) target = $region44
      $region43: #{_lambda_.5} parent=39 // pred_region
        %p851 = scmp.lt.s32.totalorder %s15, 1
        %s852 = scalar_select %p851, %s15, 1
        %s853 = smul.addr %s852, 9
        %s854 = smul.addr %s853, 4
        %s855 = scalar_lea.vmem %s3, %s854
      $region44: #{_lambda_.5} parent=39 // pred_fallthru
        _
    $region40: #{_lambda_.5} parent=5 // pred_fallthru
      _
  $region6: #{_lambda_.5} parent=0 // loop_footer
    %s13 = sadd.s32 1, %s9
  $region7: #{_lambda_.5} parent=0 // loop_footer_branch
    %8 = sbr.rel target = $region3
  $region8: #{_lambda_.5} parent=0 // loop_exit
    _

// kernel: _lambda_.6
$region0: #{_lambda_.6}
  #allocation0 [shape = 'u32[]', space=smem, size = 0x4, offset = 0x4, fixed_abs, tag = 'smem constant byte address 0x4 - core index']
  #allocation1 [shape = 'u32[144,128]{1,0:T(1,128)}', space=vmem, size = 0x12000, scoped, tag = 'internal scratch']
  %s0 = inlined_call_operand.vmem [shape: bf16[2,30,128], index: 0, kind: input, shape index: {}]
  %s1 = inlined_call_operand.vmem [shape: bf16[4,128,64], index: 1, kind: input, shape index: {}]
  %s2 = inlined_call_operand.vmem [shape: f32[1,64], index: 2, kind: input, shape index: {}]
  %s3 = inlined_call_operand.vmem [shape: f32[20,1], index: 3, kind: input, shape index: {}]
  %s4 = inlined_call_operand.vmem [shape: bf16[2,20,64], index: 4, kind: output, shape index: {0}]
  %s5 = inlined_call_operand.vmem [shape: f32[2,1,64], index: 5, kind: output, shape index: {1}]
  %s6 = inlined_call_operand.vmem [shape: f32[2,1,64], index: 6, kind: output, shape index: {2}]
  %7 = xla_tuple %s4, %s5, %s6
  %s8 = sld [smem:[#allocation0]]
  $region65: #{_lambda_.6} parent=0
    _
  %s10 = ssub.s32 1, %s8
  %s11 = scalar_select 0, %s10, %s8
  loop: start=0, step=1, limit=4
  $region2: #{_lambda_.6} parent=0 // loop_pre_header
    _
  $region3: #{_lambda_.6} parent=0 // loop_header
    %s13 = sphi 0, %s17
    %p14 = scmp.ge.s32.totalorder %s13, 4
    %s23 = sphi 0, %s25
    %s26 = sphi 0, %s23
    %s27 = sphi 0, %s26
    %s43 = sphi 0, %s27
    %s47 = sphi 0, %s47
    %s49 = sphi 0, %s47
    %s50 = sphi 0, %s49
    %s64 = sphi 0, %s50
    %s68 = sphi 0, %s68
    %s70 = sphi 0, %s68
    %s71 = sphi 0, %s70
    %s85 = sphi 0, %s71
    %s89 = sphi 0, %s89
    %s91 = sphi 0, %s89
    %s92 = sphi 0, %s91
    %s106 = sphi 0, %s92
    %s112 = sphi 0, %s114
    %s115 = sphi 0, %s112
    %s116 = sphi 0, %s115
    %s132 = sphi 0, %s116
    %s138 = sphi 0, %s140
    %s141 = sphi 0, %s138
    %s142 = sphi 0, %s141
    %s158 = sphi 0, %s142
    %s164 = sphi 0, %s166
    %s167 = sphi 0, %s164
    %s168 = sphi 0, %s167
    %s184 = sphi 0, %s168
  $region4: #{_lambda_.6} parent=0 // loop_header_branch
    %16 = sbr.rel (%p14) target = $region8
  $region5: #{_lambda_.6} parent=0 // loop_body
    %s18 = ssub.s32 %s13, 1
    %s19 = ssub.s32 %s13, 2
    %s20 = sadd.s32 %s13, 1
    %s21 = ssub.s32 %s13, %s20
    %p22 = scmp.eq.s32.totalorder %s21, 0
    %s24 = sadd.s32 %s23, 1
    %s25 = scalar_select %p22, %s23, %s24
    %p28 = pneg %p22
    %p29 = scmp.eq.s32.totalorder %s13, 1
    %p30 = por %p28, %p29
    %p31 = scmp.ne.s32.totalorder %s23, %s26
    %p32 = scmp.eq.s32.totalorder %s13, 0
    %p33 = por %p31, %p32
    %p34 = scmp.ne.s32.totalorder %s23, %s26
    %p35 = scmp.eq.s32.totalorder %s18, 1
    %p36 = por %p34, %p35
    %p37 = scmp.ne.s32.totalorder %s26, %s27
    %p38 = scmp.eq.s32.totalorder %s18, 0
    %p39 = por %p37, %p38
    %p40 = scmp.ne.s32.totalorder %s26, %s27
    %p41 = scmp.eq.s32.totalorder %s19, 1
    %p42 = por %p40, %p41
    %p44 = scmp.ne.s32.totalorder %s27, %s43
    %p45 = scmp.eq.s32.totalorder %s19, 0
    %p46 = por %p44, %p45
    %s48 = sadd.s32 %s47, 1
    %p51 = scmp.eq.s32.totalorder %s13, 1
    %p52 = scmp.ne.s32.totalorder %s47, %s49
    %p53 = scmp.eq.s32.totalorder %s13, 0
    %p54 = por %p52, %p53
    %p55 = scmp.ne.s32.totalorder %s47, %s49
    %p56 = scmp.eq.s32.totalorder %s18, 1
    %p57 = por %p55, %p56
    %p58 = scmp.ne.s32.totalorder %s49, %s50
    %p59 = scmp.eq.s32.totalorder %s18, 0
    %p60 = por %p58, %p59
    %p61 = scmp.ne.s32.totalorder %s49, %s50
    %p62 = scmp.eq.s32.totalorder %s19, 1
    %p63 = por %p61, %p62
    %p65 = scmp.ne.s32.totalorder %s50, %s64
    %p66 = scmp.eq.s32.totalorder %s19, 0
    %p67 = por %p65, %p66
    %s69 = sadd.s32 %s68, 1
    %p72 = scmp.eq.s32.totalorder %s13, 1
    %p73 = scmp.ne.s32.totalorder %s68, %s70
    %p74 = scmp.eq.s32.totalorder %s13, 0
    %p75 = por %p73, %p74
    %p76 = scmp.ne.s32.totalorder %s68, %s70
    %p77 = scmp.eq.s32.totalorder %s18, 1
    %p78 = por %p76, %p77
    %p79 = scmp.ne.s32.totalorder %s70, %s71
    %p80 = scmp.eq.s32.totalorder %s18, 0
    %p81 = por %p79, %p80
    %p82 = scmp.ne.s32.totalorder %s70, %s71
    %p83 = scmp.eq.s32.totalorder %s19, 1
    %p84 = por %p82, %p83
    %p86 = scmp.ne.s32.totalorder %s71, %s85
    %p87 = scmp.eq.s32.totalorder %s19, 0
    %p88 = por %p86, %p87
    %s90 = sadd.s32 %s89, 1
    %p93 = scmp.eq.s32.totalorder %s13, 1
    %p94 = scmp.ne.s32.totalorder %s89, %s91
    %p95 = scmp.eq.s32.totalorder %s13, 0
    %p96 = por %p94, %p95
    %p97 = scmp.ne.s32.totalorder %s89, %s91
    %p98 = scmp.eq.s32.totalorder %s18, 1
    %p99 = por %p97, %p98
    %p100 = scmp.ne.s32.totalorder %s91, %s92
    %p101 = scmp.eq.s32.totalorder %s18, 0
    %p102 = por %p100, %p101
    %p103 = scmp.ne.s32.totalorder %s91, %s92
    %p104 = scmp.eq.s32.totalorder %s19, 1
    %p105 = por %p103, %p104
    %p107 = scmp.ne.s32.totalorder %s92, %s106
    %p108 = scmp.eq.s32.totalorder %s19, 0
    %p109 = por %p107, %p108
    %s110 = ssub.s32 %s13, %s20
    %p111 = scmp.eq.s32.totalorder %s110, 0
    %s113 = sadd.s32 %s112, 1
    %s114 = scalar_select %p111, %s112, %s113
    %p117 = pneg %p111
    %p118 = scmp.eq.s32.totalorder %s13, 1
    %p119 = por %p117, %p118
    %p120 = scmp.ne.s32.totalorder %s112, %s115
    %p121 = scmp.eq.s32.totalorder %s13, 0
    %p122 = por %p120, %p121
    %p123 = scmp.ne.s32.totalorder %s112, %s115
    %p124 = scmp.eq.s32.totalorder %s18, 1
    %p125 = por %p123, %p124
    %p126 = scmp.ne.s32.totalorder %s115, %s116
    %p127 = scmp.eq.s32.totalorder %s18, 0
    %p128 = por %p126, %p127
    %p129 = scmp.ne.s32.totalorder %s115, %s116
    %p130 = scmp.eq.s32.totalorder %s19, 1
    %p131 = por %p129, %p130
    %p133 = scmp.ne.s32.totalorder %s116, %s132
    %p134 = scmp.eq.s32.totalorder %s19, 0
    %p135 = por %p133, %p134
    %s136 = ssub.s32 %s13, %s20
    %p137 = scmp.eq.s32.totalorder %s136, 0
    %s139 = sadd.s32 %s138, 1
    %s140 = scalar_select %p137, %s138, %s139
    %p143 = pneg %p137
    %p144 = scmp.eq.s32.totalorder %s13, 1
    %p145 = por %p143, %p144
    %p146 = scmp.ne.s32.totalorder %s138, %s141
    %p147 = scmp.eq.s32.totalorder %s13, 0
    %p148 = por %p146, %p147
    %p149 = scmp.ne.s32.totalorder %s138, %s141
    %p150 = scmp.eq.s32.totalorder %s18, 1
    %p151 = por %p149, %p150
    %p152 = scmp.ne.s32.totalorder %s141, %s142
    %p153 = scmp.eq.s32.totalorder %s18, 0
    %p154 = por %p152, %p153
    %p155 = scmp.ne.s32.totalorder %s141, %s142
    %p156 = scmp.eq.s32.totalorder %s19, 1
    %p157 = por %p155, %p156
    %p159 = scmp.ne.s32.totalorder %s142, %s158
    %p160 = scmp.eq.s32.totalorder %s19, 0
    %p161 = por %p159, %p160
    %s162 = ssub.s32 %s13, %s20
    %p163 = scmp.eq.s32.totalorder %s162, 0
    %s165 = sadd.s32 %s164, 1
    %s166 = scalar_select %p163, %s164, %s165
    %p169 = pneg %p163
    %p170 = scmp.eq.s32.totalorder %s13, 1
    %p171 = por %p169, %p170
    %p172 = scmp.ne.s32.totalorder %s164, %s167
    %p173 = scmp.eq.s32.totalorder %s13, 0
    %p174 = por %p172, %p173
    %p175 = scmp.ne.s32.totalorder %s164, %s167
    %p176 = scmp.eq.s32.totalorder %s18, 1
    %p177 = por %p175, %p176
    %p178 = scmp.ne.s32.totalorder %s167, %s168
    %p179 = scmp.eq.s32.totalorder %s18, 0
    %p180 = por %p178, %p179
    %p181 = scmp.ne.s32.totalorder %s167, %s168
    %p182 = scmp.eq.s32.totalorder %s19, 1
    %p183 = por %p181, %p182
    %p185 = scmp.ne.s32.totalorder %s168, %s184
    %p186 = scmp.eq.s32.totalorder %s19, 0
    %p187 = por %p185, %p186
    %p188 = scmp.le.s32.totalorder 1, %s13
    %p189 = scmp.lt.s32.totalorder %s13, 3
    %p190 = pnand %p188, %p189
    %p191 = pneg %p190
    // Predicated region
    $region9: #{_lambda_.6} parent=5 // pred_check
      _
    $region10: #{_lambda_.6} parent=5 // pred_check_branch
      %193 = sbr.rel (%p190) target = $region12
    $region11: #{_lambda_.6} parent=5 // pred_region
      %s194 = ssub.s32 %s13, 1
      // Predicated region
      $region13: #{_lambda_.6} parent=11 // pred_check
        %p195 = pneg %p60
      $region14: #{_lambda_.6} parent=11 // pred_check_branch
        %197 = sbr.rel (%p195) target = $region16
      $region15: #{_lambda_.6} parent=11 // pred_region
        _
      $region16: #{_lambda_.6} parent=11 // pred_fallthru
        _
      // Predicated region
      $region17: #{_lambda_.6} parent=11 // pred_check
        %p198 = pneg %p81
      $region18: #{_lambda_.6} parent=11 // pred_check_branch
        %200 = sbr.rel (%p198) target = $region20
      $region19: #{_lambda_.6} parent=11 // pred_region
        _
      $region20: #{_lambda_.6} parent=11 // pred_fallthru
        _
      // Predicated region
      $region21: #{_lambda_.6} parent=11 // pred_check
        %p201 = pneg %p102
      $region22: #{_lambda_.6} parent=11 // pred_check_branch
        %203 = sbr.rel (%p201) target = $region24
      $region23: #{_lambda_.6} parent=11 // pred_region
        _
      $region24: #{_lambda_.6} parent=11 // pred_fallthru
        _
    $region12: #{_lambda_.6} parent=5 // pred_fallthru
      _
    %p204 = scmp.lt.s32.totalorder %s13, 2
    // Predicated region
    $region25: #{_lambda_.6} parent=5 // pred_check
      %p205 = pneg %p204
    $region26: #{_lambda_.6} parent=5 // pred_check_branch
      %207 = sbr.rel (%p205) target = $region28
    $region27: #{_lambda_.6} parent=5 // pred_region
      // Predicated region
      $region29: #{_lambda_.6} parent=27 // pred_check
        %p208 = pneg %p33
      $region30: #{_lambda_.6} parent=27 // pred_check_branch
        %210 = sbr.rel (%p208) target = $region32
      $region31: #{_lambda_.6} parent=27 // pred_region
        %p211 = scmp.lt.s32.totalorder %s13, 1
        %s212 = scalar_select %p211, %s13, 1
        %s213 = smul.addr %s212, 4
        %s214 = smul.addr %s213, 4
        %s215 = scalar_lea.vmem %s0, %s214
      $region32: #{_lambda_.6} parent=27 // pred_fallthru
        _
    $region28: #{_lambda_.6} parent=5 // pred_fallthru
      _
    %p216 = scmp.le.s32.totalorder 1, %s13
    %p217 = scmp.lt.s32.totalorder %s13, 3
    %p218 = pnand %p216, %p217
    %p219 = pneg %p218
    // Predicated region
    $region33: #{_lambda_.6} parent=5 // pred_check
      _
    $region34: #{_lambda_.6} parent=5 // pred_check_branch
      %221 = sbr.rel (%p218) target = $region36
    $region35: #{_lambda_.6} parent=5 // pred_region
      %s222 = ssub.s32 %s13, 1
      %p223 = scmp.lt.s32.totalorder %s18, 1
      %s224 = scalar_select %p223, %s18, 1
      %s225 = smul.addr %s224, 4
      %s226 = smul.addr %s225, 4
      %s227 = scalar_lea.vmem %s0, %s226
      %p228 = pneg %p39
      %p229 = pneg %p36
      %p230 = pneg %p60
      %p231 = pneg %p57
      %p232 = pneg %p81
      %p233 = pneg %p78
      %p234 = pneg %p102
      %p235 = pneg %p99
      %p236 = pneg %p128
      %p237 = pneg %p125
      %p238 = scmp.lt.s32.totalorder %s18, 1
      %s239 = scalar_select %p238, %s18, 1
      %s240 = smul.addr %s239, 3
      %s241 = smul.addr %s240, 4
      %s242 = scalar_lea.vmem %s4, %s241
      %p243 = pneg %p154
      %p244 = pneg %p151
      %p245 = scmp.lt.s32.totalorder %s18, 1
      %s246 = scalar_select %p245, %s18, 1
      %s247 = scalar_lea.vmem %s5, %s246
      %p248 = pneg %p180
      %p249 = pneg %p177
      %p250 = scmp.lt.s32.totalorder %s18, 1
      %s251 = scalar_select %p250, %s18, 1
      %s252 = scalar_lea.vmem %s6, %s251
      %p253 = scmp.lt.s32.totalorder %s18, 1
      %s254 = scalar_select %p253, %s18, 1
      %s255 = smul.addr %s254, 4
      %s256 = smul.addr %s255, 4
      %s257 = scalar_lea.vmem %s0, %s256
      %p258 = scmp.lt.s32.totalorder %s18, 1
      %s259 = scalar_select %p258, %s18, 1
      %s260 = smul.addr %s259, 3
      %s261 = smul.addr %s260, 4
      %s262 = scalar_lea.vmem %s4, %s261
      %p263 = scmp.lt.s32.totalorder %s18, 1
      %s264 = scalar_select %p263, %s18, 1
      %s265 = scalar_lea.vmem %s5, %s264
      %p266 = scmp.lt.s32.totalorder %s18, 1
      %s267 = scalar_select %p266, %s18, 1
      %s268 = scalar_lea.vmem %s6, %s267
      %v270 = vld [vmem:[%s257] sm:$0xf]
      %v271 = vld [vmem:[%s257 + $0x4] sm:$0xf]
      %v272 = vld [vmem:[%s257 + $0x8] sm:$0x3]
      %v273 = vld [vmem:[%s1] sm:$0xf]
      %v274 = vld [vmem:[%s1 + $0x4] sm:$0xf]
      %v275 = vld [vmem:[%s1 + $0x8] sm:$0xf]
      %v276 = vld [vmem:[%s1 + $0xc] sm:$0xf]
      %v277 = vld [vmem:[%s1 + $0x10] sm:$0xf]
      %v278 = vld [vmem:[%s1 + $0x14] sm:$0xf]
      %v279 = vld [vmem:[%s1 + $0x18] sm:$0xf]
      %v280 = vld [vmem:[%s1 + $0x1c] sm:$0xf]
      %v281 = vld [vmem:[%s1 + $0x20] sm:$0xf]
      %v282 = vld [vmem:[%s1 + $0x24] sm:$0xf]
      %v283 = vld [vmem:[%s1 + $0x28] sm:$0xf]
      %v284 = vld [vmem:[%s1 + $0x2c] sm:$0xf]
      %v285 = vld [vmem:[%s1 + $0x30] sm:$0xf]
      %v286 = vld [vmem:[%s1 + $0x34] sm:$0xf]
      %v287 = vld [vmem:[%s1 + $0x38] sm:$0xf]
      %v288 = vld [vmem:[%s1 + $0x3c] sm:$0xf]
      %v289 = vld [vmem:[%s257 + $0x8] sm:$0x7]
      %s290 = scalar_lea.vmem %s1, 64
      %v291 = vld [vmem:[%s290] sm:$0xf]
      %v292 = vld [vmem:[%s290 + $0x4] sm:$0xf]
      %v293 = vld [vmem:[%s290 + $0x8] sm:$0xf]
      %v294 = vld [vmem:[%s290 + $0xc] sm:$0xf]
      %v295 = vld [vmem:[%s290 + $0x10] sm:$0xf]
      %v296 = vld [vmem:[%s290 + $0x14] sm:$0xf]
      %v297 = vld [vmem:[%s290 + $0x18] sm:$0xf]
      %v298 = vld [vmem:[%s290 + $0x1c] sm:$0xf]
      %v299 = vld [vmem:[%s290 + $0x20] sm:$0xf]
      %v300 = vld [vmem:[%s290 + $0x24] sm:$0xf]
      %v301 = vld [vmem:[%s290 + $0x28] sm:$0xf]
      %v302 = vld [vmem:[%s290 + $0x2c] sm:$0xf]
      %v303 = vld [vmem:[%s290 + $0x30] sm:$0xf]
      %v304 = vld [vmem:[%s290 + $0x34] sm:$0xf]
      %v305 = vld [vmem:[%s290 + $0x38] sm:$0xf]
      %v306 = vld [vmem:[%s290 + $0x3c] sm:$0xf]
      %v310 = vunpack.c.l.b16 %v270
      %v311 = vunpack.c.l.b16 %v271
      %v312 = vunpack.c.l.b16 %v289
      %v313 = vpack.c.b16 %v311, %v310
      %v314 = vpack.c.b16 %v312, %v312
      %vm315 = vsmask.f32 7424
      %v317 = vshrl.u32 %v313, 16
      %v319 = vshll.u32 %v313, 16
      %v321 = vrot.slane %v319, 1
      %v322 = vor.u32 %v317, %v321
      %v324 = vshll.u32 %v314, 16
      %v326 = vrot.slane %v324, 1
      %v327 = vsel %vm315, %v322, %v326
      %v328 = vshrl.u32 %v314, 16
      %v330 = vor.u32 %v328, %v326
      %v349 = vunpack.c.l.b16 %v291
      %v350 = vunpack.c.l.b16 %v292
      %v351 = vunpack.c.l.b16 %v293
      %v352 = vunpack.c.l.b16 %v294
      %v353 = vunpack.c.l.b16 %v295
      %v354 = vunpack.c.l.b16 %v296
      %v355 = vunpack.c.l.b16 %v297
      %v356 = vunpack.c.l.b16 %v298
      %v357 = vunpack.c.l.b16 %v299
      %v358 = vunpack.c.l.b16 %v300
      %v359 = vunpack.c.l.b16 %v301
      %v360 = vunpack.c.l.b16 %v302
      %v361 = vunpack.c.l.b16 %v303
      %v362 = vunpack.c.l.b16 %v304
      %v363 = vunpack.c.l.b16 %v305
      %v364 = vunpack.c.l.b16 %v306
      %v365 = vpack.c.b16 %v350, %v349
      %v366 = vpack.c.b16 %v352, %v351
      %v367 = vpack.c.b16 %v354, %v353
      %v368 = vpack.c.b16 %v356, %v355
      %v369 = vpack.c.b16 %v358, %v357
      %v370 = vpack.c.b16 %v360, %v359
      %v371 = vpack.c.b16 %v362, %v361
      %v372 = vpack.c.b16 %v364, %v363
      %381 = vmatprep.subr.bf16.mxu0 0
      %382 = vmatpush1.bf16.msra.mxu0 %v372
      %383 = vmatprep.subr.bf16.mxu0 0
      %384 = vmatpush1.bf16.msra.mxu0 %v371
      %385 = vmatprep.subr.bf16.mxu0 0
      %386 = vmatpush1.bf16.msra.mxu0 %v370
      %387 = vmatprep.subr.bf16.mxu0 0
      %388 = vmatpush1.bf16.msra.mxu0 %v369
      %389 = vmatprep.subr.bf16.mxu0 0
      %390 = vmatpush1.bf16.msra.mxu0 %v368
      %391 = vmatprep.subr.bf16.mxu0 0
      %392 = vmatpush1.bf16.msra.mxu0 %v367
      %393 = vmatprep.subr.bf16.mxu0 0
      %394 = vmatpush1.bf16.msra.mxu0 %v366
      %395 = vmatprep.subr.bf16.mxu0 0
      %396 = vmatpush1.bf16.msra.mxu0 %v365
      %397 = vmatprep.subr.bf16.mxu0 0
      %398 = vmatpush2.bf16.msra.mxu0 0
      %399 = vmatprep.subr.bf16.mxu0 0
      %400 = vmatpush2.bf16.msra.mxu0 0
      %401 = vmatprep.subr.bf16.mxu0 0
      %402 = vmatpush2.bf16.msra.mxu0 0
      %403 = vmatprep.subr.bf16.mxu0 0
      %404 = vmatpush2.bf16.msra.mxu0 0
      %405 = vmatprep.subr.bf16.mxu0 0
      %406 = vmatpush2.bf16.msra.mxu0 0
      %407 = vmatprep.subr.bf16.mxu0 0
      %408 = vmatpush2.bf16.msra.mxu0 0
      %409 = vmatprep.subr.bf16.mxu0 0
      %410 = vmatpush2.bf16.msra.mxu0 0
      %411 = vmatprep.subr.bf16.mxu0 0
      %412 = vmatpush2.bf16.msra.mxu0 0
      %413 = vmatprep.mubr.bf16.mxu0 0
      %414 = vmatmul.mubr.bf16.gmra.mxu0 %v327
      %v415 = vpop.f32.mrf.mxu0
      %v416 = vadd.f32 0.0, %v415
      %v417 = vpop.f32.mrf.mxu0
      %v418 = vpop.f32.mrf.mxu0
      %v419 = vadd.f32 0.0, %v418
      %v420 = vpop.f32.mrf.mxu0
      %421 = vmatprep.mubr.bf16.mxu0 0
      %422 = vmatmul.mubr.bf16.gmra.mxu0 %v330
      %v423 = vpop.f32.mrf.mxu0
      %v424 = vadd.f32 0.0, %v423
      %v425 = vpop.f32.mrf.mxu0
      %v426 = vpop.f32.mrf.mxu0
      %v427 = vpop.f32.mrf.mxu0
      %428 = vdwg.mxu0
      %v430 = vunpack.c.l.b16 %v272
      %v431 = vpack.c.b16 %v430, %v430
      %v450 = vunpack.c.l.b16 %v273
      %v451 = vunpack.c.l.b16 %v274
      %v452 = vunpack.c.l.b16 %v275
      %v453 = vunpack.c.l.b16 %v276
      %v454 = vunpack.c.l.b16 %v277
      %v455 = vunpack.c.l.b16 %v278
      %v456 = vunpack.c.l.b16 %v279
      %v457 = vunpack.c.l.b16 %v280
      %v458 = vunpack.c.l.b16 %v281
      %v459 = vunpack.c.l.b16 %v282
      %v460 = vunpack.c.l.b16 %v283
      %v461 = vunpack.c.l.b16 %v284
      %v462 = vunpack.c.l.b16 %v285
      %v463 = vunpack.c.l.b16 %v286
      %v464 = vunpack.c.l.b16 %v287
      %v465 = vunpack.c.l.b16 %v288
      %v466 = vpack.c.b16 %v451, %v450
      %v467 = vpack.c.b16 %v453, %v452
      %v468 = vpack.c.b16 %v455, %v454
      %v469 = vpack.c.b16 %v457, %v456
      %v470 = vpack.c.b16 %v459, %v458
      %v471 = vpack.c.b16 %v461, %v460
      %v472 = vpack.c.b16 %v463, %v462
      %v473 = vpack.c.b16 %v465, %v464
      %482 = vmatprep.subr.bf16.mxu0 0
      %483 = vmatpush1.bf16.msra.mxu0 %v473
      %484 = vmatprep.subr.bf16.mxu0 0
      %485 = vmatpush1.bf16.msra.mxu0 %v472
      %486 = vmatprep.subr.bf16.mxu0 0
      %487 = vmatpush1.bf16.msra.mxu0 %v471
      %488 = vmatprep.subr.bf16.mxu0 0
      %489 = vmatpush1.bf16.msra.mxu0 %v470
      %490 = vmatprep.subr.bf16.mxu0 0
      %491 = vmatpush1.bf16.msra.mxu0 %v469
      %492 = vmatprep.subr.bf16.mxu0 0
      %493 = vmatpush1.bf16.msra.mxu0 %v468
      %494 = vmatprep.subr.bf16.mxu0 0
      %495 = vmatpush1.bf16.msra.mxu0 %v467
      %496 = vmatprep.subr.bf16.mxu0 0
      %497 = vmatpush1.bf16.msra.mxu0 %v466
      %498 = vmatprep.subr.bf16.mxu0 0
      %499 = vmatpush2.bf16.msra.mxu0 0
      %500 = vmatprep.subr.bf16.mxu0 0
      %501 = vmatpush2.bf16.msra.mxu0 0
      %502 = vmatprep.subr.bf16.mxu0 0
      %503 = vmatpush2.bf16.msra.mxu0 0
      %504 = vmatprep.subr.bf16.mxu0 0
      %505 = vmatpush2.bf16.msra.mxu0 0
      %506 = vmatprep.subr.bf16.mxu0 0
      %507 = vmatpush2.bf16.msra.mxu0 0
      %508 = vmatprep.subr.bf16.mxu0 0
      %509 = vmatpush2.bf16.msra.mxu0 0
      %510 = vmatprep.subr.bf16.mxu0 0
      %511 = vmatpush2.bf16.msra.mxu0 0
      %512 = vmatprep.subr.bf16.mxu0 0
      %513 = vmatpush2.bf16.msra.mxu0 0
      %514 = vmatprep.mubr.bf16.mxu0 0
      %515 = vmatmul.mubr.bf16.gmra.mxu0 %v313
      %v516 = vpop.f32.mrf.mxu0
      %v517 = vadd.f32 %v416, %v516
      %v518 = vpop.f32.mrf.mxu0
      %v519 = vpop.f32.mrf.mxu0
      %v520 = vadd.f32 %v419, %v519
      %v521 = vpop.f32.mrf.mxu0
      %522 = vmatprep.mubr.bf16.mxu0 0
      %523 = vmatmul.mubr.bf16.gmra.mxu0 %v431
      %v524 = vpop.f32.mrf.mxu0
      %v525 = vadd.f32 %v424, %v524
      %v526 = vpop.f32.mrf.mxu0
      %v527 = vpop.f32.mrf.mxu0
      %v528 = vpop.f32.mrf.mxu0
      %529 = vdwg.mxu0
      %v530 = vld [vmem:[%s257] sm:$0xc]
      %v531 = vld [vmem:[%s257 + $0x4] sm:$0xf]
      %v532 = vld [vmem:[%s257 + $0x8] sm:$0xf]
      %v533 = vld [vmem:[%s257 + $0xc] sm:$0x1]
      %s534 = scalar_lea.vmem %s1, 128
      %v535 = vld [vmem:[%s534] sm:$0xf]
      %v536 = vld [vmem:[%s534 + $0x4] sm:$0xf]
      %v537 = vld [vmem:[%s534 + $0x8] sm:$0xf]
      %v538 = vld [vmem:[%s534 + $0xc] sm:$0xf]
      %v539 = vld [vmem:[%s534 + $0x10] sm:$0xf]
      %v540 = vld [vmem:[%s534 + $0x14] sm:$0xf]
      %v541 = vld [vmem:[%s534 + $0x18] sm:$0xf]
      %v542 = vld [vmem:[%s534 + $0x1c] sm:$0xf]
      %v543 = vld [vmem:[%s534 + $0x20] sm:$0xf]
      %v544 = vld [vmem:[%s534 + $0x24] sm:$0xf]
      %v545 = vld [vmem:[%s534 + $0x28] sm:$0xf]
      %v546 = vld [vmem:[%s534 + $0x2c] sm:$0xf]
      %v547 = vld [vmem:[%s534 + $0x30] sm:$0xf]
      %v548 = vld [vmem:[%s534 + $0x34] sm:$0xf]
      %v549 = vld [vmem:[%s534 + $0x38] sm:$0xf]
      %v550 = vld [vmem:[%s534 + $0x3c] sm:$0xf]
      %v555 = vunpack.c.l.b16 %v530
      %v556 = vunpack.c.l.b16 %v531
      %v557 = vunpack.c.l.b16 %v532
      %v558 = vunpack.c.l.b16 %v533
      %v559 = vpack.c.b16 %v556, %v555
      %v560 = vpack.c.b16 %v558, %v557
      %vm561 = vsmask.f32 5376
      %v563 = vshrl.u32 %v559, 16
      %v565 = vrot.slane %v563, 2
      %v566 = vshll.u32 %v559, 16
      %v568 = vrot.slane %v566, 3
      %v569 = vor.u32 %v565, %v568
      %v571 = vshrl.u32 %v560, 16
      %v573 = vrot.slane %v571, 2
      %v574 = vshll.u32 %v560, 16
      %v576 = vrot.slane %v574, 3
      %v577 = vor.u32 %v573, %v576
      %v578 = vsel %vm561, %v569, %v577
      %v597 = vunpack.c.l.b16 %v535
      %v598 = vunpack.c.l.b16 %v536
      %v599 = vunpack.c.l.b16 %v537
      %v600 = vunpack.c.l.b16 %v538
      %v601 = vunpack.c.l.b16 %v539
      %v602 = vunpack.c.l.b16 %v540
      %v603 = vunpack.c.l.b16 %v541
      %v604 = vunpack.c.l.b16 %v542
      %v605 = vunpack.c.l.b16 %v543
      %v606 = vunpack.c.l.b16 %v544
      %v607 = vunpack.c.l.b16 %v545
      %v608 = vunpack.c.l.b16 %v546
      %v609 = vunpack.c.l.b16 %v547
      %v610 = vunpack.c.l.b16 %v548
      %v611 = vunpack.c.l.b16 %v549
      %v612 = vunpack.c.l.b16 %v550
      %v613 = vpack.c.b16 %v598, %v597
      %v614 = vpack.c.b16 %v600, %v599
      %v615 = vpack.c.b16 %v602, %v601
      %v616 = vpack.c.b16 %v604, %v603
      %v617 = vpack.c.b16 %v606, %v605
      %v618 = vpack.c.b16 %v608, %v607
      %v619 = vpack.c.b16 %v610, %v609
      %v620 = vpack.c.b16 %v612, %v611
      %629 = vmatprep.subr.bf16.mxu0 0
      %630 = vmatpush1.bf16.msra.mxu0 %v620
      %631 = vmatprep.subr.bf16.mxu0 0
      %632 = vmatpush1.bf16.msra.mxu0 %v619
      %633 = vmatprep.subr.bf16.mxu0 0
      %634 = vmatpush1.bf16.msra.mxu0 %v618
      %635 = vmatprep.subr.bf16.mxu0 0
      %636 = vmatpush1.bf16.msra.mxu0 %v617
      %637 = vmatprep.subr.bf16.mxu0 0
      %638 = vmatpush1.bf16.msra.mxu0 %v616
      %639 = vmatprep.subr.bf16.mxu0 0
      %640 = vmatpush1.bf16.msra.mxu0 %v615
      %641 = vmatprep.subr.bf16.mxu0 0
      %642 = vmatpush1.bf16.msra.mxu0 %v614
      %643 = vmatprep.subr.bf16.mxu0 0
      %644 = vmatpush1.bf16.msra.mxu0 %v613
      %645 = vmatprep.subr.bf16.mxu0 0
      %646 = vmatpush2.bf16.msra.mxu0 0
      %647 = vmatprep.subr.bf16.mxu0 0
      %648 = vmatpush2.bf16.msra.mxu0 0
      %649 = vmatprep.subr.bf16.mxu0 0
      %650 = vmatpush2.bf16.msra.mxu0 0
      %651 = vmatprep.subr.bf16.mxu0 0
      %652 = vmatpush2.bf16.msra.mxu0 0
      %653 = vmatprep.subr.bf16.mxu0 0
      %654 = vmatpush2.bf16.msra.mxu0 0
      %655 = vmatprep.subr.bf16.mxu0 0
      %656 = vmatpush2.bf16.msra.mxu0 0
      %657 = vmatprep.subr.bf16.mxu0 0
      %658 = vmatpush2.bf16.msra.mxu0 0
      %659 = vmatprep.subr.bf16.mxu0 0
      %660 = vmatpush2.bf16.msra.mxu0 0
      %661 = vmatprep.mubr.bf16.mxu0 0
      %662 = vmatmul.mubr.bf16.gmra.mxu0 %v578
      %v663 = vpop.f32.mrf.mxu0
      %v664 = vadd.f32 0.0, %v663
      %v665 = vpop.f32.mrf.mxu0
      %v666 = vpop.f32.mrf.mxu0
      %v667 = vadd.f32 0.0, %v666
      %v668 = vpop.f32.mrf.mxu0
      %669 = vmatprep.mubr.bf16.mxu0 0
      %670 = vmatmul.mubr.bf16.gmra.mxu0 %v577
      %v671 = vpop.f32.mrf.mxu0
      %v672 = vadd.f32 0.0, %v671
      %v673 = vpop.f32.mrf.mxu0
      %v674 = vpop.f32.mrf.mxu0
      %v675 = vpop.f32.mrf.mxu0
      %676 = vdwg.mxu0
      %v677 = vadd.f32 %v517, %v664
      %v678 = vadd.f32 %v520, %v667
      %v679 = vadd.f32 %v525, %v672
      %v680 = vld [vmem:[%s257] sm:$0x8]
      %s681 = scalar_lea.vmem %s1, 192
      %v682 = vld [vmem:[%s681] sm:$0xf]
      %v683 = vld [vmem:[%s681 + $0x4] sm:$0xf]
      %v684 = vld [vmem:[%s681 + $0x8] sm:$0xf]
      %v685 = vld [vmem:[%s681 + $0xc] sm:$0xf]
      %v686 = vld [vmem:[%s681 + $0x10] sm:$0xf]
      %v687 = vld [vmem:[%s681 + $0x14] sm:$0xf]
      %v688 = vld [vmem:[%s681 + $0x18] sm:$0xf]
      %v689 = vld [vmem:[%s681 + $0x1c] sm:$0xf]
      %v690 = vld [vmem:[%s681 + $0x20] sm:$0xf]
      %v691 = vld [vmem:[%s681 + $0x24] sm:$0xf]
      %v692 = vld [vmem:[%s681 + $0x28] sm:$0xf]
      %v693 = vld [vmem:[%s681 + $0x2c] sm:$0xf]
      %v694 = vld [vmem:[%s681 + $0x30] sm:$0xf]
      %v695 = vld [vmem:[%s681 + $0x34] sm:$0xf]
      %v696 = vld [vmem:[%s681 + $0x38] sm:$0xf]
      %v697 = vld [vmem:[%s681 + $0x3c] sm:$0xf]
      %v699 = vunpack.c.l.b16 %v680
      %v700 = vpack.c.b16 %v556, %v699
      %vm701 = vcmask 1044480
      %v702 = vrot.slane %v700, 3
      %v703 = vrot.slane %v560, 3
      %v704 = vsel %vm701, %v702, %v703
      %v723 = vunpack.c.l.b16 %v682
      %v724 = vunpack.c.l.b16 %v683
      %v725 = vunpack.c.l.b16 %v684
      %v726 = vunpack.c.l.b16 %v685
      %v727 = vunpack.c.l.b16 %v686
      %v728 = vunpack.c.l.b16 %v687
      %v729 = vunpack.c.l.b16 %v688
      %v730 = vunpack.c.l.b16 %v689
      %v731 = vunpack.c.l.b16 %v690
      %v732 = vunpack.c.l.b16 %v691
      %v733 = vunpack.c.l.b16 %v692
      %v734 = vunpack.c.l.b16 %v693
      %v735 = vunpack.c.l.b16 %v694
      %v736 = vunpack.c.l.b16 %v695
      %v737 = vunpack.c.l.b16 %v696
      %v738 = vunpack.c.l.b16 %v697
      %v739 = vpack.c.b16 %v724, %v723
      %v740 = vpack.c.b16 %v726, %v725
      %v741 = vpack.c.b16 %v728, %v727
      %v742 = vpack.c.b16 %v730, %v729
      %v743 = vpack.c.b16 %v732, %v731
      %v744 = vpack.c.b16 %v734, %v733
      %v745 = vpack.c.b16 %v736, %v735
      %v746 = vpack.c.b16 %v738, %v737
      %755 = vmatprep.subr.bf16.mxu0 0
      %756 = vmatpush1.bf16.msra.mxu0 %v746
      %757 = vmatprep.subr.bf16.mxu0 0
      %758 = vmatpush1.bf16.msra.mxu0 %v745
      %759 = vmatprep.subr.bf16.mxu0 0
      %760 = vmatpush1.bf16.msra.mxu0 %v744
      %761 = vmatprep.subr.bf16.mxu0 0
      %762 = vmatpush1.bf16.msra.mxu0 %v743
      %763 = vmatprep.subr.bf16.mxu0 0
      %764 = vmatpush1.bf16.msra.mxu0 %v742
      %765 = vmatprep.subr.bf16.mxu0 0
      %766 = vmatpush1.bf16.msra.mxu0 %v741
      %767 = vmatprep.subr.bf16.mxu0 0
      %768 = vmatpush1.bf16.msra.mxu0 %v740
      %769 = vmatprep.subr.bf16.mxu0 0
      %770 = vmatpush1.bf16.msra.mxu0 %v739
      %771 = vmatprep.subr.bf16.mxu0 0
      %772 = vmatpush2.bf16.msra.mxu0 0
      %773 = vmatprep.subr.bf16.mxu0 0
      %774 = vmatpush2.bf16.msra.mxu0 0
      %775 = vmatprep.subr.bf16.mxu0 0
      %776 = vmatpush2.bf16.msra.mxu0 0
      %777 = vmatprep.subr.bf16.mxu0 0
      %778 = vmatpush2.bf16.msra.mxu0 0
      %779 = vmatprep.subr.bf16.mxu0 0
      %780 = vmatpush2.bf16.msra.mxu0 0
      %781 = vmatprep.subr.bf16.mxu0 0
      %782 = vmatpush2.bf16.msra.mxu0 0
      %783 = vmatprep.subr.bf16.mxu0 0
      %784 = vmatpush2.bf16.msra.mxu0 0
      %785 = vmatprep.subr.bf16.mxu0 0
      %786 = vmatpush2.bf16.msra.mxu0 0
      %787 = vmatprep.mubr.bf16.mxu0 0
      %788 = vmatmul.mubr.bf16.gmra.mxu0 %v704
      %v789 = vpop.f32.mrf.mxu0
      %v790 = vadd.f32 0.0, %v789
      %v791 = vpop.f32.mrf.mxu0
      %v792 = vpop.f32.mrf.mxu0
      %v793 = vadd.f32 0.0, %v792
      %v794 = vpop.f32.mrf.mxu0
      %795 = vmatprep.mubr.bf16.mxu0 0
      %796 = vmatmul.mubr.bf16.gmra.mxu0 %v703
      %v797 = vpop.f32.mrf.mxu0
      %v798 = vadd.f32 0.0, %v797
      %v799 = vpop.f32.mrf.mxu0
      %v800 = vpop.f32.mrf.mxu0
      %v801 = vpop.f32.mrf.mxu0
      %802 = vdwg.mxu0
      %v803 = vadd.f32 %v677, %v790
      %v804 = vadd.f32 %v678, %v793
      %v805 = vadd.f32 %v679, %v798
      %v806 = vld [vmem:[%s2] sm:$0x1]
      %v808 = vlaneseq
      %v809 = vshrl.u32 %v808, 7
      %v810 = vsub.s32 0, %v809
      %v811 = vrot.slane %v806, %v810
      %v813 = vadd.f32 %v803, %v811
      %v814 = vadd.f32 %v804, %v811
      %v815 = vadd.f32 %v805, %v811
      %v816 = vmax.f32 %v813, 0.0
      %v817 = vmax.f32 %v814, 0.0
      %v818 = vmax.f32 %v815, 0.0
      %v819 = vpack.c.bf16 %v817, %v816
      %v820 = vpack.c.bf16 %v818, %v818
      %v823 = vunpack.c.l.b16 %v819
      %v824 = vunpack.c.h.b16 %v819
      %v825 = vunpack.c.l.b16 %v820
      %v826 = vpack.c.b16 %v823, %v823
      %v827 = vpack.c.b16 %v824, %v824
      %v828 = vpack.c.b16 %v825, %v825
      %vm832 = vcmask 519168
      %833 = vst.msk [vmem:[%s262] sm:$0xf] %vm832, %v826
      %834 = vst.msk [vmem:[%s262 + $0x4] sm:$0xf] %vm832, %v827
      %vm835 = vcmask 517120
      %836 = vst.msk [vmem:[%s262 + $0x8] sm:$0x3] %vm835, %v828
      %v837 = vld [vmem:[%s3] sm:$0xff]
      %v838 = vld [vmem:[%s3 + $0x8] sm:$0xff]
      %v839 = vld [vmem:[%s3 + $0x10] sm:$0xf]
      %841 = vset.pattern.permute.xlu0 0
      %842 = vperm.xlu0 %841, %v837
      %v843 = vpop.permute.xlu0 %842
      %846 = vset.pattern.permute.xlu0 0
      %847 = vperm.xlu0 %846, %v838
      %v848 = vpop.permute.xlu0 %847
      %851 = vset.pattern.permute.xlu0 0
      %852 = vperm.xlu0 %851, %v839
      %v853 = vpop.permute.xlu0 %852
      %v855 = vmul.f32 %v816, %v843
      %v856 = vmul.f32 %v817, %v848
      %v857 = vmul.f32 %v818, %v853
      %vm858 = vcmask 523264
      %v859 = vsel %vm858, %v855, 0.0
      %v860 = vsel %vm858, %v856, 0.0
      %v861 = vadd.f32 %v859, %v860
      %v862 = vsel %vm832, %v857, 0.0
      %v863 = vadd.f32 %v861, %v862
      %v864 = vrot.slane %v863, 4
      %v865 = vadd.f32 %v863, %v864
      %v866 = vrot.slane %v865, 2
      %v867 = vadd.f32 %v865, %v866
      %v868 = vrot.slane %v867, 1
      %v869 = vadd.f32 %v867, %v868
      %vm870 = vcmask 516096
      %871 = vst.msk [vmem:[%s265] sm:$0x1] %vm870, %v869
      %v872 = vmul.f32 %v855, %v855
      %v873 = vmul.f32 %v856, %v856
      %v874 = vmul.f32 %v857, %v857
      %v875 = vsel %vm858, %v872, 0.0
      %v876 = vsel %vm858, %v873, 0.0
      %v877 = vadd.f32 %v875, %v876
      %v878 = vsel %vm832, %v874, 0.0
      %v879 = vadd.f32 %v877, %v878
      %v880 = vrot.slane %v879, 4
      %v881 = vadd.f32 %v879, %v880
      %v882 = vrot.slane %v881, 2
      %v883 = vadd.f32 %v881, %v882
      %v884 = vrot.slane %v883, 1
      %v885 = vadd.f32 %v883, %v884
      %886 = vst.msk [vmem:[%s268] sm:$0x1] %vm870, %v885
      %p887 = scmp.lt.s32.totalorder %s18, 1
      %s888 = scalar_select %p887, %s18, 1
      %s889 = smul.addr %s888, 3
      %s890 = smul.addr %s889, 4
      %s891 = scalar_lea.vmem %s4, %s890
      %p892 = scmp.lt.s32.totalorder %s18, 1
      %s893 = scalar_select %p892, %s18, 1
      %s894 = scalar_lea.vmem %s5, %s893
      %p895 = scmp.lt.s32.totalorder %s18, 1
      %s896 = scalar_select %p895, %s18, 1
      %s897 = scalar_lea.vmem %s6, %s896
      // Predicated region
      $region37: #{_lambda_.6} parent=35 // pred_check
        %p898 = pneg %p125
      $region38: #{_lambda_.6} parent=35 // pred_check_branch
        %900 = sbr.rel (%p898) target = $region40
      $region39: #{_lambda_.6} parent=35 // pred_region
        _
      $region40: #{_lambda_.6} parent=35 // pred_fallthru
        _
      // Predicated region
      $region41: #{_lambda_.6} parent=35 // pred_check
        %p901 = pneg %p151
      $region42: #{_lambda_.6} parent=35 // pred_check_branch
        %903 = sbr.rel (%p901) target = $region44
      $region43: #{_lambda_.6} parent=35 // pred_region
        _
      $region44: #{_lambda_.6} parent=35 // pred_fallthru
        _
      // Predicated region
      $region45: #{_lambda_.6} parent=35 // pred_check
        %p904 = pneg %p177
      $region46: #{_lambda_.6} parent=35 // pred_check_branch
        %906 = sbr.rel (%p904) target = $region48
      $region47: #{_lambda_.6} parent=35 // pred_region
        _
      $region48: #{_lambda_.6} parent=35 // pred_fallthru
        _
    $region36: #{_lambda_.6} parent=5 // pred_fallthru
      _
    %p907 = scmp.le.s32.totalorder 2, %s13
    // Predicated region
    $region49: #{_lambda_.6} parent=5 // pred_check
      %p908 = pneg %p907
    $region50: #{_lambda_.6} parent=5 // pred_check_branch
      %910 = sbr.rel (%p908) target = $region52
    $region51: #{_lambda_.6} parent=5 // pred_region
      %s911 = ssub.s32 %s13, 2
      // Predicated region
      $region53: #{_lambda_.6} parent=51 // pred_check
        %p912 = pneg %p131
      $region54: #{_lambda_.6} parent=51 // pred_check_branch
        %914 = sbr.rel (%p912) target = $region56
      $region55: #{_lambda_.6} parent=51 // pred_region
        %p915 = scmp.lt.s32.totalorder %s19, 1
        %s916 = scalar_select %p915, %s19, 1
        %s917 = smul.addr %s916, 3
        %s918 = smul.addr %s917, 4
        %s919 = scalar_lea.vmem %s4, %s918
      $region56: #{_lambda_.6} parent=51 // pred_fallthru
        _
      // Predicated region
      $region57: #{_lambda_.6} parent=51 // pred_check
        %p920 = pneg %p157
      $region58: #{_lambda_.6} parent=51 // pred_check_branch
        %922 = sbr.rel (%p920) target = $region60
      $region59: #{_lambda_.6} parent=51 // pred_region
        %p923 = scmp.lt.s32.totalorder %s19, 1
        %s924 = scalar_select %p923, %s19, 1
        %s925 = scalar_lea.vmem %s5, %s924
      $region60: #{_lambda_.6} parent=51 // pred_fallthru
        _
      // Predicated region
      $region61: #{_lambda_.6} parent=51 // pred_check
        %p926 = pneg %p183
      $region62: #{_lambda_.6} parent=51 // pred_check_branch
        %928 = sbr.rel (%p926) target = $region64
      $region63: #{_lambda_.6} parent=51 // pred_region
        %p929 = scmp.lt.s32.totalorder %s19, 1
        %s930 = scalar_select %p929, %s19, 1
        %s931 = scalar_lea.vmem %s6, %s930
      $region64: #{_lambda_.6} parent=51 // pred_fallthru
        _
    $region52: #{_lambda_.6} parent=5 // pred_fallthru
      _
  $region6: #{_lambda_.6} parent=0 // loop_footer
    %s17 = sadd.s32 1, %s13
  $region7: #{_lambda_.6} parent=0 // loop_footer_branch
    %12 = sbr.rel target = $region3
  $region8: #{_lambda_.6} parent=0 // loop_exit
    _

// kernel: _lambda_.7
$region0: #{_lambda_.7}
  #allocation0 [shape = 'u32[]', space=smem, size = 0x4, offset = 0x4, fixed_abs, tag = 'smem constant byte address 0x4 - core index']
  #allocation1 [shape = 'u32[144,128]{1,0:T(1,128)}', space=vmem, size = 0x12000, scoped, tag = 'internal scratch']
  %s0 = inlined_call_operand.vmem [shape: bf16[2,12,256], index: 0, kind: input, shape index: {}]
  %s1 = inlined_call_operand.vmem [shape: bf16[4,256,128], index: 1, kind: input, shape index: {}]
  %s2 = inlined_call_operand.vmem [shape: f32[1,128], index: 2, kind: input, shape index: {}]
  %s3 = inlined_call_operand.vmem [shape: f32[6,1], index: 3, kind: input, shape index: {}]
  %s4 = inlined_call_operand.vmem [shape: bf16[2,6,128], index: 4, kind: output, shape index: {0}]
  %s5 = inlined_call_operand.vmem [shape: f32[2,1,128], index: 5, kind: output, shape index: {1}]
  %s6 = inlined_call_operand.vmem [shape: f32[2,1,128], index: 6, kind: output, shape index: {2}]
  %7 = xla_tuple %s4, %s5, %s6
  %s8 = sld [smem:[#allocation0]]
  $region65: #{_lambda_.7} parent=0
    _
  %s10 = ssub.s32 1, %s8
  %s11 = scalar_select 0, %s10, %s8
  loop: start=0, step=1, limit=4
  $region2: #{_lambda_.7} parent=0 // loop_pre_header
    _
  $region3: #{_lambda_.7} parent=0 // loop_header
    %s13 = sphi 0, %s17
    %p14 = scmp.ge.s32.totalorder %s13, 4
    %s23 = sphi 0, %s25
    %s26 = sphi 0, %s23
    %s27 = sphi 0, %s26
    %s43 = sphi 0, %s27
    %s47 = sphi 0, %s47
    %s49 = sphi 0, %s47
    %s50 = sphi 0, %s49
    %s64 = sphi 0, %s50
    %s68 = sphi 0, %s68
    %s70 = sphi 0, %s68
    %s71 = sphi 0, %s70
    %s85 = sphi 0, %s71
    %s89 = sphi 0, %s89
    %s91 = sphi 0, %s89
    %s92 = sphi 0, %s91
    %s106 = sphi 0, %s92
    %s112 = sphi 0, %s114
    %s115 = sphi 0, %s112
    %s116 = sphi 0, %s115
    %s132 = sphi 0, %s116
    %s138 = sphi 0, %s140
    %s141 = sphi 0, %s138
    %s142 = sphi 0, %s141
    %s158 = sphi 0, %s142
    %s164 = sphi 0, %s166
    %s167 = sphi 0, %s164
    %s168 = sphi 0, %s167
    %s184 = sphi 0, %s168
  $region4: #{_lambda_.7} parent=0 // loop_header_branch
    %16 = sbr.rel (%p14) target = $region8
  $region5: #{_lambda_.7} parent=0 // loop_body
    %s18 = ssub.s32 %s13, 1
    %s19 = ssub.s32 %s13, 2
    %s20 = sadd.s32 %s13, 1
    %s21 = ssub.s32 %s13, %s20
    %p22 = scmp.eq.s32.totalorder %s21, 0
    %s24 = sadd.s32 %s23, 1
    %s25 = scalar_select %p22, %s23, %s24
    %p28 = pneg %p22
    %p29 = scmp.eq.s32.totalorder %s13, 1
    %p30 = por %p28, %p29
    %p31 = scmp.ne.s32.totalorder %s23, %s26
    %p32 = scmp.eq.s32.totalorder %s13, 0
    %p33 = por %p31, %p32
    %p34 = scmp.ne.s32.totalorder %s23, %s26
    %p35 = scmp.eq.s32.totalorder %s18, 1
    %p36 = por %p34, %p35
    %p37 = scmp.ne.s32.totalorder %s26, %s27
    %p38 = scmp.eq.s32.totalorder %s18, 0
    %p39 = por %p37, %p38
    %p40 = scmp.ne.s32.totalorder %s26, %s27
    %p41 = scmp.eq.s32.totalorder %s19, 1
    %p42 = por %p40, %p41
    %p44 = scmp.ne.s32.totalorder %s27, %s43
    %p45 = scmp.eq.s32.totalorder %s19, 0
    %p46 = por %p44, %p45
    %s48 = sadd.s32 %s47, 1
    %p51 = scmp.eq.s32.totalorder %s13, 1
    %p52 = scmp.ne.s32.totalorder %s47, %s49
    %p53 = scmp.eq.s32.totalorder %s13, 0
    %p54 = por %p52, %p53
    %p55 = scmp.ne.s32.totalorder %s47, %s49
    %p56 = scmp.eq.s32.totalorder %s18, 1
    %p57 = por %p55, %p56
    %p58 = scmp.ne.s32.totalorder %s49, %s50
    %p59 = scmp.eq.s32.totalorder %s18, 0
    %p60 = por %p58, %p59
    %p61 = scmp.ne.s32.totalorder %s49, %s50
    %p62 = scmp.eq.s32.totalorder %s19, 1
    %p63 = por %p61, %p62
    %p65 = scmp.ne.s32.totalorder %s50, %s64
    %p66 = scmp.eq.s32.totalorder %s19, 0
    %p67 = por %p65, %p66
    %s69 = sadd.s32 %s68, 1
    %p72 = scmp.eq.s32.totalorder %s13, 1
    %p73 = scmp.ne.s32.totalorder %s68, %s70
    %p74 = scmp.eq.s32.totalorder %s13, 0
    %p75 = por %p73, %p74
    %p76 = scmp.ne.s32.totalorder %s68, %s70
    %p77 = scmp.eq.s32.totalorder %s18, 1
    %p78 = por %p76, %p77
    %p79 = scmp.ne.s32.totalorder %s70, %s71
    %p80 = scmp.eq.s32.totalorder %s18, 0
    %p81 = por %p79, %p80
    %p82 = scmp.ne.s32.totalorder %s70, %s71
    %p83 = scmp.eq.s32.totalorder %s19, 1
    %p84 = por %p82, %p83
    %p86 = scmp.ne.s32.totalorder %s71, %s85
    %p87 = scmp.eq.s32.totalorder %s19, 0
    %p88 = por %p86, %p87
    %s90 = sadd.s32 %s89, 1
    %p93 = scmp.eq.s32.totalorder %s13, 1
    %p94 = scmp.ne.s32.totalorder %s89, %s91
    %p95 = scmp.eq.s32.totalorder %s13, 0
    %p96 = por %p94, %p95
    %p97 = scmp.ne.s32.totalorder %s89, %s91
    %p98 = scmp.eq.s32.totalorder %s18, 1
    %p99 = por %p97, %p98
    %p100 = scmp.ne.s32.totalorder %s91, %s92
    %p101 = scmp.eq.s32.totalorder %s18, 0
    %p102 = por %p100, %p101
    %p103 = scmp.ne.s32.totalorder %s91, %s92
    %p104 = scmp.eq.s32.totalorder %s19, 1
    %p105 = por %p103, %p104
    %p107 = scmp.ne.s32.totalorder %s92, %s106
    %p108 = scmp.eq.s32.totalorder %s19, 0
    %p109 = por %p107, %p108
    %s110 = ssub.s32 %s13, %s20
    %p111 = scmp.eq.s32.totalorder %s110, 0
    %s113 = sadd.s32 %s112, 1
    %s114 = scalar_select %p111, %s112, %s113
    %p117 = pneg %p111
    %p118 = scmp.eq.s32.totalorder %s13, 1
    %p119 = por %p117, %p118
    %p120 = scmp.ne.s32.totalorder %s112, %s115
    %p121 = scmp.eq.s32.totalorder %s13, 0
    %p122 = por %p120, %p121
    %p123 = scmp.ne.s32.totalorder %s112, %s115
    %p124 = scmp.eq.s32.totalorder %s18, 1
    %p125 = por %p123, %p124
    %p126 = scmp.ne.s32.totalorder %s115, %s116
    %p127 = scmp.eq.s32.totalorder %s18, 0
    %p128 = por %p126, %p127
    %p129 = scmp.ne.s32.totalorder %s115, %s116
    %p130 = scmp.eq.s32.totalorder %s19, 1
    %p131 = por %p129, %p130
    %p133 = scmp.ne.s32.totalorder %s116, %s132
    %p134 = scmp.eq.s32.totalorder %s19, 0
    %p135 = por %p133, %p134
    %s136 = ssub.s32 %s13, %s20
    %p137 = scmp.eq.s32.totalorder %s136, 0
    %s139 = sadd.s32 %s138, 1
    %s140 = scalar_select %p137, %s138, %s139
    %p143 = pneg %p137
    %p144 = scmp.eq.s32.totalorder %s13, 1
    %p145 = por %p143, %p144
    %p146 = scmp.ne.s32.totalorder %s138, %s141
    %p147 = scmp.eq.s32.totalorder %s13, 0
    %p148 = por %p146, %p147
    %p149 = scmp.ne.s32.totalorder %s138, %s141
    %p150 = scmp.eq.s32.totalorder %s18, 1
    %p151 = por %p149, %p150
    %p152 = scmp.ne.s32.totalorder %s141, %s142
    %p153 = scmp.eq.s32.totalorder %s18, 0
    %p154 = por %p152, %p153
    %p155 = scmp.ne.s32.totalorder %s141, %s142
    %p156 = scmp.eq.s32.totalorder %s19, 1
    %p157 = por %p155, %p156
    %p159 = scmp.ne.s32.totalorder %s142, %s158
    %p160 = scmp.eq.s32.totalorder %s19, 0
    %p161 = por %p159, %p160
    %s162 = ssub.s32 %s13, %s20
    %p163 = scmp.eq.s32.totalorder %s162, 0
    %s165 = sadd.s32 %s164, 1
    %s166 = scalar_select %p163, %s164, %s165
    %p169 = pneg %p163
    %p170 = scmp.eq.s32.totalorder %s13, 1
    %p171 = por %p169, %p170
    %p172 = scmp.ne.s32.totalorder %s164, %s167
    %p173 = scmp.eq.s32.totalorder %s13, 0
    %p174 = por %p172, %p173
    %p175 = scmp.ne.s32.totalorder %s164, %s167
    %p176 = scmp.eq.s32.totalorder %s18, 1
    %p177 = por %p175, %p176
    %p178 = scmp.ne.s32.totalorder %s167, %s168
    %p179 = scmp.eq.s32.totalorder %s18, 0
    %p180 = por %p178, %p179
    %p181 = scmp.ne.s32.totalorder %s167, %s168
    %p182 = scmp.eq.s32.totalorder %s19, 1
    %p183 = por %p181, %p182
    %p185 = scmp.ne.s32.totalorder %s168, %s184
    %p186 = scmp.eq.s32.totalorder %s19, 0
    %p187 = por %p185, %p186
    %p188 = scmp.le.s32.totalorder 1, %s13
    %p189 = scmp.lt.s32.totalorder %s13, 3
    %p190 = pnand %p188, %p189
    %p191 = pneg %p190
    // Predicated region
    $region9: #{_lambda_.7} parent=5 // pred_check
      _
    $region10: #{_lambda_.7} parent=5 // pred_check_branch
      %193 = sbr.rel (%p190) target = $region12
    $region11: #{_lambda_.7} parent=5 // pred_region
      %s194 = ssub.s32 %s13, 1
      // Predicated region
      $region13: #{_lambda_.7} parent=11 // pred_check
        %p195 = pneg %p60
      $region14: #{_lambda_.7} parent=11 // pred_check_branch
        %197 = sbr.rel (%p195) target = $region16
      $region15: #{_lambda_.7} parent=11 // pred_region
        _
      $region16: #{_lambda_.7} parent=11 // pred_fallthru
        _
      // Predicated region
      $region17: #{_lambda_.7} parent=11 // pred_check
        %p198 = pneg %p81
      $region18: #{_lambda_.7} parent=11 // pred_check_branch
        %200 = sbr.rel (%p198) target = $region20
      $region19: #{_lambda_.7} parent=11 // pred_region
        _
      $region20: #{_lambda_.7} parent=11 // pred_fallthru
        _
      // Predicated region
      $region21: #{_lambda_.7} parent=11 // pred_check
        %p201 = pneg %p102
      $region22: #{_lambda_.7} parent=11 // pred_check_branch
        %203 = sbr.rel (%p201) target = $region24
      $region23: #{_lambda_.7} parent=11 // pred_region
        _
      $region24: #{_lambda_.7} parent=11 // pred_fallthru
        _
    $region12: #{_lambda_.7} parent=5 // pred_fallthru
      _
    %p204 = scmp.lt.s32.totalorder %s13, 2
    // Predicated region
    $region25: #{_lambda_.7} parent=5 // pred_check
      %p205 = pneg %p204
    $region26: #{_lambda_.7} parent=5 // pred_check_branch
      %207 = sbr.rel (%p205) target = $region28
    $region27: #{_lambda_.7} parent=5 // pred_region
      // Predicated region
      $region29: #{_lambda_.7} parent=27 // pred_check
        %p208 = pneg %p33
      $region30: #{_lambda_.7} parent=27 // pred_check_branch
        %210 = sbr.rel (%p208) target = $region32
      $region31: #{_lambda_.7} parent=27 // pred_region
        %p211 = scmp.lt.s32.totalorder %s13, 1
        %s212 = scalar_select %p211, %s13, 1
        %s213 = smul.addr %s212, 4
        %s214 = smul.addr %s213, 4
        %s215 = scalar_lea.vmem %s0, %s214
      $region32: #{_lambda_.7} parent=27 // pred_fallthru
        _
    $region28: #{_lambda_.7} parent=5 // pred_fallthru
      _
    %p216 = scmp.le.s32.totalorder 1, %s13
    %p217 = scmp.lt.s32.totalorder %s13, 3
    %p218 = pnand %p216, %p217
    %p219 = pneg %p218
    // Predicated region
    $region33: #{_lambda_.7} parent=5 // pred_check
      _
    $region34: #{_lambda_.7} parent=5 // pred_check_branch
      %221 = sbr.rel (%p218) target = $region36
    $region35: #{_lambda_.7} parent=5 // pred_region
      %s222 = ssub.s32 %s13, 1
      %p223 = scmp.lt.s32.totalorder %s18, 1
      %s224 = scalar_select %p223, %s18, 1
      %s225 = smul.addr %s224, 4
      %s226 = smul.addr %s225, 4
      %s227 = scalar_lea.vmem %s0, %s226
      %p228 = pneg %p39
      %p229 = pneg %p36
      %p230 = pneg %p60
      %p231 = pneg %p57
      %p232 = pneg %p81
      %p233 = pneg %p78
      %p234 = pneg %p102
      %p235 = pneg %p99
      %p236 = pneg %p128
      %p237 = pneg %p125
      %p238 = scmp.lt.s32.totalorder %s18, 1
      %s239 = scalar_select %p238, %s18, 1
      %s240 = smul.addr %s239, 4
      %s241 = scalar_lea.vmem %s4, %s240
      %p242 = pneg %p154
      %p243 = pneg %p151
      %p244 = scmp.lt.s32.totalorder %s18, 1
      %s245 = scalar_select %p244, %s18, 1
      %s246 = scalar_lea.vmem %s5, %s245
      %p247 = pneg %p180
      %p248 = pneg %p177
      %p249 = scmp.lt.s32.totalorder %s18, 1
      %s250 = scalar_select %p249, %s18, 1
      %s251 = scalar_lea.vmem %s6, %s250
      %p252 = scmp.lt.s32.totalorder %s18, 1
      %s253 = scalar_select %p252, %s18, 1
      %s254 = smul.addr %s253, 4
      %s255 = smul.addr %s254, 4
      %s256 = scalar_lea.vmem %s0, %s255
      %p257 = scmp.lt.s32.totalorder %s18, 1
      %s258 = scalar_select %p257, %s18, 1
      %s259 = smul.addr %s258, 4
      %s260 = scalar_lea.vmem %s4, %s259
      %p261 = scmp.lt.s32.totalorder %s18, 1
      %s262 = scalar_select %p261, %s18, 1
      %s263 = scalar_lea.vmem %s5, %s262
      %p264 = scmp.lt.s32.totalorder %s18, 1
      %s265 = scalar_select %p264, %s18, 1
      %s266 = scalar_lea.vmem %s6, %s265
      %v268 = vld [vmem:[%s256] sm:$0x77]
      %v269 = vld [vmem:[%s1] sm:$0xf]
      %v270 = vld [vmem:[%s1 + $0x4] sm:$0xf]
      %v271 = vld [vmem:[%s1 + $0x8] sm:$0xf]
      %v272 = vld [vmem:[%s1 + $0xc] sm:$0xf]
      %v273 = vld [vmem:[%s1 + $0x10] sm:$0xf]
      %v274 = vld [vmem:[%s1 + $0x14] sm:$0xf]
      %v275 = vld [vmem:[%s1 + $0x18] sm:$0xf]
      %v276 = vld [vmem:[%s1 + $0x1c] sm:$0xf]
      %v277 = vld [vmem:[%s1 + $0x20] sm:$0xf]
      %v278 = vld [vmem:[%s1 + $0x24] sm:$0xf]
      %v279 = vld [vmem:[%s1 + $0x28] sm:$0xf]
      %v280 = vld [vmem:[%s1 + $0x2c] sm:$0xf]
      %v281 = vld [vmem:[%s1 + $0x30] sm:$0xf]
      %v282 = vld [vmem:[%s1 + $0x34] sm:$0xf]
      %v283 = vld [vmem:[%s1 + $0x38] sm:$0xf]
      %v284 = vld [vmem:[%s1 + $0x3c] sm:$0xf]
      %v285 = vld [vmem:[%s1 + $0x40] sm:$0xf]
      %v286 = vld [vmem:[%s1 + $0x44] sm:$0xf]
      %v287 = vld [vmem:[%s1 + $0x48] sm:$0xf]
      %v288 = vld [vmem:[%s1 + $0x4c] sm:$0xf]
      %v289 = vld [vmem:[%s1 + $0x50] sm:$0xf]
      %v290 = vld [vmem:[%s1 + $0x54] sm:$0xf]
      %v291 = vld [vmem:[%s1 + $0x58] sm:$0xf]
      %v292 = vld [vmem:[%s1 + $0x5c] sm:$0xf]
      %v293 = vld [vmem:[%s1 + $0x60] sm:$0xf]
      %v294 = vld [vmem:[%s1 + $0x64] sm:$0xf]
      %v295 = vld [vmem:[%s1 + $0x68] sm:$0xf]
      %v296 = vld [vmem:[%s1 + $0x6c] sm:$0xf]
      %v297 = vld [vmem:[%s1 + $0x70] sm:$0xf]
      %v298 = vld [vmem:[%s1 + $0x74] sm:$0xf]
      %v299 = vld [vmem:[%s1 + $0x78] sm:$0xf]
      %v300 = vld [vmem:[%s1 + $0x7c] sm:$0xf]
      %v301 = vld [vmem:[%s256] sm:$0xff]
      %s302 = scalar_lea.vmem %s1, 128
      %v303 = vld [vmem:[%s302] sm:$0xf]
      %v304 = vld [vmem:[%s302 + $0x4] sm:$0xf]
      %v305 = vld [vmem:[%s302 + $0x8] sm:$0xf]
      %v306 = vld [vmem:[%s302 + $0xc] sm:$0xf]
      %v307 = vld [vmem:[%s302 + $0x10] sm:$0xf]
      %v308 = vld [vmem:[%s302 + $0x14] sm:$0xf]
      %v309 = vld [vmem:[%s302 + $0x18] sm:$0xf]
      %v310 = vld [vmem:[%s302 + $0x1c] sm:$0xf]
      %v311 = vld [vmem:[%s302 + $0x20] sm:$0xf]
      %v312 = vld [vmem:[%s302 + $0x24] sm:$0xf]
      %v313 = vld [vmem:[%s302 + $0x28] sm:$0xf]
      %v314 = vld [vmem:[%s302 + $0x2c] sm:$0xf]
      %v315 = vld [vmem:[%s302 + $0x30] sm:$0xf]
      %v316 = vld [vmem:[%s302 + $0x34] sm:$0xf]
      %v317 = vld [vmem:[%s302 + $0x38] sm:$0xf]
      %v318 = vld [vmem:[%s302 + $0x3c] sm:$0xf]
      %v319 = vld [vmem:[%s302 + $0x40] sm:$0xf]
      %v320 = vld [vmem:[%s302 + $0x44] sm:$0xf]
      %v321 = vld [vmem:[%s302 + $0x48] sm:$0xf]
      %v322 = vld [vmem:[%s302 + $0x4c] sm:$0xf]
      %v323 = vld [vmem:[%s302 + $0x50] sm:$0xf]
      %v324 = vld [vmem:[%s302 + $0x54] sm:$0xf]
      %v325 = vld [vmem:[%s302 + $0x58] sm:$0xf]
      %v326 = vld [vmem:[%s302 + $0x5c] sm:$0xf]
      %v327 = vld [vmem:[%s302 + $0x60] sm:$0xf]
      %v328 = vld [vmem:[%s302 + $0x64] sm:$0xf]
      %v329 = vld [vmem:[%s302 + $0x68] sm:$0xf]
      %v330 = vld [vmem:[%s302 + $0x6c] sm:$0xf]
      %v331 = vld [vmem:[%s302 + $0x70] sm:$0xf]
      %v332 = vld [vmem:[%s302 + $0x74] sm:$0xf]
      %v333 = vld [vmem:[%s302 + $0x78] sm:$0xf]
      %v334 = vld [vmem:[%s302 + $0x7c] sm:$0xf]
      %v336 = vunpack.c.l.b16 %v301
      %v337 = vunpack.c.h.b16 %v301
      %v338 = vpack.c.b16 %v336, %v336
      %v339 = vpack.c.b16 %v337, %v337
      %v341 = vshrl.u32 %v338, 16
      %v343 = vshll.u32 %v338, 16
      %v345 = vrot.slane %v343, 1
      %v346 = vor.u32 %v341, %v345
      %v348 = vshrl.u32 %v339, 16
      %v350 = vshll.u32 %v339, 16
      %v352 = vrot.slane %v350, 1
      %v353 = vor.u32 %v348, %v352
      %v388 = vunpack.c.l.b16 %v303
      %v389 = vunpack.c.l.b16 %v304
      %v390 = vunpack.c.l.b16 %v305
      %v391 = vunpack.c.l.b16 %v306
      %v392 = vunpack.c.l.b16 %v307
      %v393 = vunpack.c.l.b16 %v308
      %v394 = vunpack.c.l.b16 %v309
      %v395 = vunpack.c.l.b16 %v310
      %v396 = vunpack.c.l.b16 %v311
      %v397 = vunpack.c.l.b16 %v312
      %v398 = vunpack.c.l.b16 %v313
      %v399 = vunpack.c.l.b16 %v314
      %v400 = vunpack.c.l.b16 %v315
      %v401 = vunpack.c.l.b16 %v316
      %v402 = vunpack.c.l.b16 %v317
      %v403 = vunpack.c.l.b16 %v318
      %v404 = vunpack.c.l.b16 %v319
      %v405 = vunpack.c.l.b16 %v320
      %v406 = vunpack.c.l.b16 %v321
      %v407 = vunpack.c.l.b16 %v322
      %v408 = vunpack.c.l.b16 %v323
      %v409 = vunpack.c.l.b16 %v324
      %v410 = vunpack.c.l.b16 %v325
      %v411 = vunpack.c.l.b16 %v326
      %v412 = vunpack.c.l.b16 %v327
      %v413 = vunpack.c.l.b16 %v328
      %v414 = vunpack.c.l.b16 %v329
      %v415 = vunpack.c.l.b16 %v330
      %v416 = vunpack.c.l.b16 %v331
      %v417 = vunpack.c.l.b16 %v332
      %v418 = vunpack.c.l.b16 %v333
      %v419 = vunpack.c.l.b16 %v334
      %v420 = vpack.c.b16 %v389, %v388
      %v421 = vpack.c.b16 %v391, %v390
      %v422 = vpack.c.b16 %v393, %v392
      %v423 = vpack.c.b16 %v395, %v394
      %v424 = vpack.c.b16 %v397, %v396
      %v425 = vpack.c.b16 %v399, %v398
      %v426 = vpack.c.b16 %v401, %v400
      %v427 = vpack.c.b16 %v403, %v402
      %v428 = vpack.c.b16 %v405, %v404
      %v429 = vpack.c.b16 %v407, %v406
      %v430 = vpack.c.b16 %v409, %v408
      %v431 = vpack.c.b16 %v411, %v410
      %v432 = vpack.c.b16 %v413, %v412
      %v433 = vpack.c.b16 %v415, %v414
      %v434 = vpack.c.b16 %v417, %v416
      %v435 = vpack.c.b16 %v419, %v418
      %452 = vmatprep.subr.bf16.mxu0 0
      %453 = vmatpush1.bf16.msra.mxu0 %v427
      %454 = vmatprep.subr.bf16.mxu0 0
      %455 = vmatpush1.bf16.msra.mxu0 %v426
      %456 = vmatprep.subr.bf16.mxu0 0
      %457 = vmatpush1.bf16.msra.mxu0 %v425
      %458 = vmatprep.subr.bf16.mxu0 0
      %459 = vmatpush1.bf16.msra.mxu0 %v424
      %460 = vmatprep.subr.bf16.mxu0 0
      %461 = vmatpush1.bf16.msra.mxu0 %v423
      %462 = vmatprep.subr.bf16.mxu0 0
      %463 = vmatpush1.bf16.msra.mxu0 %v422
      %464 = vmatprep.subr.bf16.mxu0 0
      %465 = vmatpush1.bf16.msra.mxu0 %v421
      %466 = vmatprep.subr.bf16.mxu0 0
      %467 = vmatpush1.bf16.msra.mxu0 %v420
      %468 = vmatprep.subr.bf16.mxu0 0
      %469 = vmatpush2.bf16.msra.mxu0 %v435
      %470 = vmatprep.subr.bf16.mxu0 0
      %471 = vmatpush2.bf16.msra.mxu0 %v434
      %472 = vmatprep.subr.bf16.mxu0 0
      %473 = vmatpush2.bf16.msra.mxu0 %v433
      %474 = vmatprep.subr.bf16.mxu0 0
      %475 = vmatpush2.bf16.msra.mxu0 %v432
      %476 = vmatprep.subr.bf16.mxu0 0
      %477 = vmatpush2.bf16.msra.mxu0 %v431
      %478 = vmatprep.subr.bf16.mxu0 0
      %479 = vmatpush2.bf16.msra.mxu0 %v430
      %480 = vmatprep.subr.bf16.mxu0 0
      %481 = vmatpush2.bf16.msra.mxu0 %v429
      %482 = vmatprep.subr.bf16.mxu0 0
      %483 = vmatpush2.bf16.msra.mxu0 %v428
      %484 = vmatprep.mubr.bf16.mxu0 %v353
      %485 = vmatmul.mubr.bf16.gmra.mxu0 %v346
      %v486 = vpop.f32.mrf.mxu0
      %v487 = vadd.f32 0.0, %v486
      %v488 = vpop.f32.mrf.mxu0
      %v489 = vpop.f32.mrf.mxu0
      %v490 = vpop.f32.mrf.mxu0
      %491 = vdwg.mxu0
      %v493 = vunpack.c.l.b16 %v268
      %v494 = vunpack.c.h.b16 %v268
      %v495 = vpack.c.b16 %v493, %v493
      %v496 = vpack.c.b16 %v494, %v494
      %v531 = vunpack.c.l.b16 %v269
      %v532 = vunpack.c.l.b16 %v270
      %v533 = vunpack.c.l.b16 %v271
      %v534 = vunpack.c.l.b16 %v272
      %v535 = vunpack.c.l.b16 %v273
      %v536 = vunpack.c.l.b16 %v274
      %v537 = vunpack.c.l.b16 %v275
      %v538 = vunpack.c.l.b16 %v276
      %v539 = vunpack.c.l.b16 %v277
      %v540 = vunpack.c.l.b16 %v278
      %v541 = vunpack.c.l.b16 %v279
      %v542 = vunpack.c.l.b16 %v280
      %v543 = vunpack.c.l.b16 %v281
      %v544 = vunpack.c.l.b16 %v282
      %v545 = vunpack.c.l.b16 %v283
      %v546 = vunpack.c.l.b16 %v284
      %v547 = vunpack.c.l.b16 %v285
      %v548 = vunpack.c.l.b16 %v286
      %v549 = vunpack.c.l.b16 %v287
      %v550 = vunpack.c.l.b16 %v288
      %v551 = vunpack.c.l.b16 %v289
      %v552 = vunpack.c.l.b16 %v290
      %v553 = vunpack.c.l.b16 %v291
      %v554 = vunpack.c.l.b16 %v292
      %v555 = vunpack.c.l.b16 %v293
      %v556 = vunpack.c.l.b16 %v294
      %v557 = vunpack.c.l.b16 %v295
      %v558 = vunpack.c.l.b16 %v296
      %v559 = vunpack.c.l.b16 %v297
      %v560 = vunpack.c.l.b16 %v298
      %v561 = vunpack.c.l.b16 %v299
      %v562 = vunpack.c.l.b16 %v300
      %v563 = vpack.c.b16 %v532, %v531
      %v564 = vpack.c.b16 %v534, %v533
      %v565 = vpack.c.b16 %v536, %v535
      %v566 = vpack.c.b16 %v538, %v537
      %v567 = vpack.c.b16 %v540, %v539
      %v568 = vpack.c.b16 %v542, %v541
      %v569 = vpack.c.b16 %v544, %v543
      %v570 = vpack.c.b16 %v546, %v545
      %v571 = vpack.c.b16 %v548, %v547
      %v572 = vpack.c.b16 %v550, %v549
      %v573 = vpack.c.b16 %v552, %v551
      %v574 = vpack.c.b16 %v554, %v553
      %v575 = vpack.c.b16 %v556, %v555
      %v576 = vpack.c.b16 %v558, %v557
      %v577 = vpack.c.b16 %v560, %v559
      %v578 = vpack.c.b16 %v562, %v561
      %595 = vmatprep.subr.bf16.mxu0 0
      %596 = vmatpush1.bf16.msra.mxu0 %v570
      %597 = vmatprep.subr.bf16.mxu0 0
      %598 = vmatpush1.bf16.msra.mxu0 %v569
      %599 = vmatprep.subr.bf16.mxu0 0
      %600 = vmatpush1.bf16.msra.mxu0 %v568
      %601 = vmatprep.subr.bf16.mxu0 0
      %602 = vmatpush1.bf16.msra.mxu0 %v567
      %603 = vmatprep.subr.bf16.mxu0 0
      %604 = vmatpush1.bf16.msra.mxu0 %v566
      %605 = vmatprep.subr.bf16.mxu0 0
      %606 = vmatpush1.bf16.msra.mxu0 %v565
      %607 = vmatprep.subr.bf16.mxu0 0
      %608 = vmatpush1.bf16.msra.mxu0 %v564
      %609 = vmatprep.subr.bf16.mxu0 0
      %610 = vmatpush1.bf16.msra.mxu0 %v563
      %611 = vmatprep.subr.bf16.mxu0 0
      %612 = vmatpush2.bf16.msra.mxu0 %v578
      %613 = vmatprep.subr.bf16.mxu0 0
      %614 = vmatpush2.bf16.msra.mxu0 %v577
      %615 = vmatprep.subr.bf16.mxu0 0
      %616 = vmatpush2.bf16.msra.mxu0 %v576
      %617 = vmatprep.subr.bf16.mxu0 0
      %618 = vmatpush2.bf16.msra.mxu0 %v575
      %619 = vmatprep.subr.bf16.mxu0 0
      %620 = vmatpush2.bf16.msra.mxu0 %v574
      %621 = vmatprep.subr.bf16.mxu0 0
      %622 = vmatpush2.bf16.msra.mxu0 %v573
      %623 = vmatprep.subr.bf16.mxu0 0
      %624 = vmatpush2.bf16.msra.mxu0 %v572
      %625 = vmatprep.subr.bf16.mxu0 0
      %626 = vmatpush2.bf16.msra.mxu0 %v571
      %627 = vmatprep.mubr.bf16.mxu0 %v496
      %628 = vmatmul.mubr.bf16.gmra.mxu0 %v495
      %v629 = vpop.f32.mrf.mxu0
      %v630 = vadd.f32 %v487, %v629
      %v631 = vpop.f32.mrf.mxu0
      %v632 = vpop.f32.mrf.mxu0
      %v633 = vpop.f32.mrf.mxu0
      %634 = vdwg.mxu0
      %v635 = vld [vmem:[%s256] sm:$0xee]
      %v636 = vld [vmem:[%s256 + $0x8] sm:$0x11]
      %s637 = scalar_lea.vmem %s1, 256
      %v638 = vld [vmem:[%s637] sm:$0xf]
      %v639 = vld [vmem:[%s637 + $0x4] sm:$0xf]
      %v640 = vld [vmem:[%s637 + $0x8] sm:$0xf]
      %v641 = vld [vmem:[%s637 + $0xc] sm:$0xf]
      %v642 = vld [vmem:[%s637 + $0x10] sm:$0xf]
      %v643 = vld [vmem:[%s637 + $0x14] sm:$0xf]
      %v644 = vld [vmem:[%s637 + $0x18] sm:$0xf]
      %v645 = vld [vmem:[%s637 + $0x1c] sm:$0xf]
      %v646 = vld [vmem:[%s637 + $0x20] sm:$0xf]
      %v647 = vld [vmem:[%s637 + $0x24] sm:$0xf]
      %v648 = vld [vmem:[%s637 + $0x28] sm:$0xf]
      %v649 = vld [vmem:[%s637 + $0x2c] sm:$0xf]
      %v650 = vld [vmem:[%s637 + $0x30] sm:$0xf]
      %v651 = vld [vmem:[%s637 + $0x34] sm:$0xf]
      %v652 = vld [vmem:[%s637 + $0x38] sm:$0xf]
      %v653 = vld [vmem:[%s637 + $0x3c] sm:$0xf]
      %v654 = vld [vmem:[%s637 + $0x40] sm:$0xf]
      %v655 = vld [vmem:[%s637 + $0x44] sm:$0xf]
      %v656 = vld [vmem:[%s637 + $0x48] sm:$0xf]
      %v657 = vld [vmem:[%s637 + $0x4c] sm:$0xf]
      %v658 = vld [vmem:[%s637 + $0x50] sm:$0xf]
      %v659 = vld [vmem:[%s637 + $0x54] sm:$0xf]
      %v660 = vld [vmem:[%s637 + $0x58] sm:$0xf]
      %v661 = vld [vmem:[%s637 + $0x5c] sm:$0xf]
      %v662 = vld [vmem:[%s637 + $0x60] sm:$0xf]
      %v663 = vld [vmem:[%s637 + $0x64] sm:$0xf]
      %v664 = vld [vmem:[%s637 + $0x68] sm:$0xf]
      %v665 = vld [vmem:[%s637 + $0x6c] sm:$0xf]
      %v666 = vld [vmem:[%s637 + $0x70] sm:$0xf]
      %v667 = vld [vmem:[%s637 + $0x74] sm:$0xf]
      %v668 = vld [vmem:[%s637 + $0x78] sm:$0xf]
      %v669 = vld [vmem:[%s637 + $0x7c] sm:$0xf]
      %v672 = vunpack.c.l.b16 %v635
      %v673 = vunpack.c.h.b16 %v635
      %v674 = vunpack.c.l.b16 %v636
      %v675 = vunpack.c.h.b16 %v636
      %v676 = vpack.c.b16 %v674, %v672
      %v677 = vpack.c.b16 %v675, %v673
      %v679 = vshrl.u32 %v676, 16
      %v681 = vrot.slane %v679, 1
      %v682 = vshll.u32 %v676, 16
      %v684 = vrot.slane %v682, 2
      %v685 = vor.u32 %v681, %v684
      %v687 = vshrl.u32 %v677, 16
      %v689 = vrot.slane %v687, 1
      %v690 = vshll.u32 %v677, 16
      %v692 = vrot.slane %v690, 2
      %v693 = vor.u32 %v689, %v692
      %v728 = vunpack.c.l.b16 %v638
      %v729 = vunpack.c.l.b16 %v639
      %v730 = vunpack.c.l.b16 %v640
      %v731 = vunpack.c.l.b16 %v641
      %v732 = vunpack.c.l.b16 %v642
      %v733 = vunpack.c.l.b16 %v643
      %v734 = vunpack.c.l.b16 %v644
      %v735 = vunpack.c.l.b16 %v645
      %v736 = vunpack.c.l.b16 %v646
      %v737 = vunpack.c.l.b16 %v647
      %v738 = vunpack.c.l.b16 %v648
      %v739 = vunpack.c.l.b16 %v649
      %v740 = vunpack.c.l.b16 %v650
      %v741 = vunpack.c.l.b16 %v651
      %v742 = vunpack.c.l.b16 %v652
      %v743 = vunpack.c.l.b16 %v653
      %v744 = vunpack.c.l.b16 %v654
      %v745 = vunpack.c.l.b16 %v655
      %v746 = vunpack.c.l.b16 %v656
      %v747 = vunpack.c.l.b16 %v657
      %v748 = vunpack.c.l.b16 %v658
      %v749 = vunpack.c.l.b16 %v659
      %v750 = vunpack.c.l.b16 %v660
      %v751 = vunpack.c.l.b16 %v661
      %v752 = vunpack.c.l.b16 %v662
      %v753 = vunpack.c.l.b16 %v663
      %v754 = vunpack.c.l.b16 %v664
      %v755 = vunpack.c.l.b16 %v665
      %v756 = vunpack.c.l.b16 %v666
      %v757 = vunpack.c.l.b16 %v667
      %v758 = vunpack.c.l.b16 %v668
      %v759 = vunpack.c.l.b16 %v669
      %v760 = vpack.c.b16 %v729, %v728
      %v761 = vpack.c.b16 %v731, %v730
      %v762 = vpack.c.b16 %v733, %v732
      %v763 = vpack.c.b16 %v735, %v734
      %v764 = vpack.c.b16 %v737, %v736
      %v765 = vpack.c.b16 %v739, %v738
      %v766 = vpack.c.b16 %v741, %v740
      %v767 = vpack.c.b16 %v743, %v742
      %v768 = vpack.c.b16 %v745, %v744
      %v769 = vpack.c.b16 %v747, %v746
      %v770 = vpack.c.b16 %v749, %v748
      %v771 = vpack.c.b16 %v751, %v750
      %v772 = vpack.c.b16 %v753, %v752
      %v773 = vpack.c.b16 %v755, %v754
      %v774 = vpack.c.b16 %v757, %v756
      %v775 = vpack.c.b16 %v759, %v758
      %792 = vmatprep.subr.bf16.mxu0 0
      %793 = vmatpush1.bf16.msra.mxu0 %v767
      %794 = vmatprep.subr.bf16.mxu0 0
      %795 = vmatpush1.bf16.msra.mxu0 %v766
      %796 = vmatprep.subr.bf16.mxu0 0
      %797 = vmatpush1.bf16.msra.mxu0 %v765
      %798 = vmatprep.subr.bf16.mxu0 0
      %799 = vmatpush1.bf16.msra.mxu0 %v764
      %800 = vmatprep.subr.bf16.mxu0 0
      %801 = vmatpush1.bf16.msra.mxu0 %v763
      %802 = vmatprep.subr.bf16.mxu0 0
      %803 = vmatpush1.bf16.msra.mxu0 %v762
      %804 = vmatprep.subr.bf16.mxu0 0
      %805 = vmatpush1.bf16.msra.mxu0 %v761
      %806 = vmatprep.subr.bf16.mxu0 0
      %807 = vmatpush1.bf16.msra.mxu0 %v760
      %808 = vmatprep.subr.bf16.mxu0 0
      %809 = vmatpush2.bf16.msra.mxu0 %v775
      %810 = vmatprep.subr.bf16.mxu0 0
      %811 = vmatpush2.bf16.msra.mxu0 %v774
      %812 = vmatprep.subr.bf16.mxu0 0
      %813 = vmatpush2.bf16.msra.mxu0 %v773
      %814 = vmatprep.subr.bf16.mxu0 0
      %815 = vmatpush2.bf16.msra.mxu0 %v772
      %816 = vmatprep.subr.bf16.mxu0 0
      %817 = vmatpush2.bf16.msra.mxu0 %v771
      %818 = vmatprep.subr.bf16.mxu0 0
      %819 = vmatpush2.bf16.msra.mxu0 %v770
      %820 = vmatprep.subr.bf16.mxu0 0
      %821 = vmatpush2.bf16.msra.mxu0 %v769
      %822 = vmatprep.subr.bf16.mxu0 0
      %823 = vmatpush2.bf16.msra.mxu0 %v768
      %824 = vmatprep.mubr.bf16.mxu0 %v693
      %825 = vmatmul.mubr.bf16.gmra.mxu0 %v685
      %v826 = vpop.f32.mrf.mxu0
      %v827 = vadd.f32 0.0, %v826
      %v828 = vpop.f32.mrf.mxu0
      %v829 = vpop.f32.mrf.mxu0
      %v830 = vpop.f32.mrf.mxu0
      %831 = vdwg.mxu0
      %v832 = vadd.f32 %v630, %v827
      %v833 = vld [vmem:[%s256] sm:$0xcc]
      %s834 = scalar_lea.vmem %s1, 384
      %v835 = vld [vmem:[%s834] sm:$0xf]
      %v836 = vld [vmem:[%s834 + $0x4] sm:$0xf]
      %v837 = vld [vmem:[%s834 + $0x8] sm:$0xf]
      %v838 = vld [vmem:[%s834 + $0xc] sm:$0xf]
      %v839 = vld [vmem:[%s834 + $0x10] sm:$0xf]
      %v840 = vld [vmem:[%s834 + $0x14] sm:$0xf]
      %v841 = vld [vmem:[%s834 + $0x18] sm:$0xf]
      %v842 = vld [vmem:[%s834 + $0x1c] sm:$0xf]
      %v843 = vld [vmem:[%s834 + $0x20] sm:$0xf]
      %v844 = vld [vmem:[%s834 + $0x24] sm:$0xf]
      %v845 = vld [vmem:[%s834 + $0x28] sm:$0xf]
      %v846 = vld [vmem:[%s834 + $0x2c] sm:$0xf]
      %v847 = vld [vmem:[%s834 + $0x30] sm:$0xf]
      %v848 = vld [vmem:[%s834 + $0x34] sm:$0xf]
      %v849 = vld [vmem:[%s834 + $0x38] sm:$0xf]
      %v850 = vld [vmem:[%s834 + $0x3c] sm:$0xf]
      %v851 = vld [vmem:[%s834 + $0x40] sm:$0xf]
      %v852 = vld [vmem:[%s834 + $0x44] sm:$0xf]
      %v853 = vld [vmem:[%s834 + $0x48] sm:$0xf]
      %v854 = vld [vmem:[%s834 + $0x4c] sm:$0xf]
      %v855 = vld [vmem:[%s834 + $0x50] sm:$0xf]
      %v856 = vld [vmem:[%s834 + $0x54] sm:$0xf]
      %v857 = vld [vmem:[%s834 + $0x58] sm:$0xf]
      %v858 = vld [vmem:[%s834 + $0x5c] sm:$0xf]
      %v859 = vld [vmem:[%s834 + $0x60] sm:$0xf]
      %v860 = vld [vmem:[%s834 + $0x64] sm:$0xf]
      %v861 = vld [vmem:[%s834 + $0x68] sm:$0xf]
      %v862 = vld [vmem:[%s834 + $0x6c] sm:$0xf]
      %v863 = vld [vmem:[%s834 + $0x70] sm:$0xf]
      %v864 = vld [vmem:[%s834 + $0x74] sm:$0xf]
      %v865 = vld [vmem:[%s834 + $0x78] sm:$0xf]
      %v866 = vld [vmem:[%s834 + $0x7c] sm:$0xf]
      %v868 = vunpack.c.l.b16 %v833
      %v869 = vunpack.c.h.b16 %v833
      %v870 = vpack.c.b16 %v674, %v868
      %v871 = vpack.c.b16 %v675, %v869
      %v872 = vrot.slane %v870, 2
      %v873 = vrot.slane %v871, 2
      %v908 = vunpack.c.l.b16 %v835
      %v909 = vunpack.c.l.b16 %v836
      %v910 = vunpack.c.l.b16 %v837
      %v911 = vunpack.c.l.b16 %v838
      %v912 = vunpack.c.l.b16 %v839
      %v913 = vunpack.c.l.b16 %v840
      %v914 = vunpack.c.l.b16 %v841
      %v915 = vunpack.c.l.b16 %v842
      %v916 = vunpack.c.l.b16 %v843
      %v917 = vunpack.c.l.b16 %v844
      %v918 = vunpack.c.l.b16 %v845
      %v919 = vunpack.c.l.b16 %v846
      %v920 = vunpack.c.l.b16 %v847
      %v921 = vunpack.c.l.b16 %v848
      %v922 = vunpack.c.l.b16 %v849
      %v923 = vunpack.c.l.b16 %v850
      %v924 = vunpack.c.l.b16 %v851
      %v925 = vunpack.c.l.b16 %v852
      %v926 = vunpack.c.l.b16 %v853
      %v927 = vunpack.c.l.b16 %v854
      %v928 = vunpack.c.l.b16 %v855
      %v929 = vunpack.c.l.b16 %v856
      %v930 = vunpack.c.l.b16 %v857
      %v931 = vunpack.c.l.b16 %v858
      %v932 = vunpack.c.l.b16 %v859
      %v933 = vunpack.c.l.b16 %v860
      %v934 = vunpack.c.l.b16 %v861
      %v935 = vunpack.c.l.b16 %v862
      %v936 = vunpack.c.l.b16 %v863
      %v937 = vunpack.c.l.b16 %v864
      %v938 = vunpack.c.l.b16 %v865
      %v939 = vunpack.c.l.b16 %v866
      %v940 = vpack.c.b16 %v909, %v908
      %v941 = vpack.c.b16 %v911, %v910
      %v942 = vpack.c.b16 %v913, %v912
      %v943 = vpack.c.b16 %v915, %v914
      %v944 = vpack.c.b16 %v917, %v916
      %v945 = vpack.c.b16 %v919, %v918
      %v946 = vpack.c.b16 %v921, %v920
      %v947 = vpack.c.b16 %v923, %v922
      %v948 = vpack.c.b16 %v925, %v924
      %v949 = vpack.c.b16 %v927, %v926
      %v950 = vpack.c.b16 %v929, %v928
      %v951 = vpack.c.b16 %v931, %v930
      %v952 = vpack.c.b16 %v933, %v932
      %v953 = vpack.c.b16 %v935, %v934
      %v954 = vpack.c.b16 %v937, %v936
      %v955 = vpack.c.b16 %v939, %v938
      %972 = vmatprep.subr.bf16.mxu0 0
      %973 = vmatpush1.bf16.msra.mxu0 %v947
      %974 = vmatprep.subr.bf16.mxu0 0
      %975 = vmatpush1.bf16.msra.mxu0 %v946
      %976 = vmatprep.subr.bf16.mxu0 0
      %977 = vmatpush1.bf16.msra.mxu0 %v945
      %978 = vmatprep.subr.bf16.mxu0 0
      %979 = vmatpush1.bf16.msra.mxu0 %v944
      %980 = vmatprep.subr.bf16.mxu0 0
      %981 = vmatpush1.bf16.msra.mxu0 %v943
      %982 = vmatprep.subr.bf16.mxu0 0
      %983 = vmatpush1.bf16.msra.mxu0 %v942
      %984 = vmatprep.subr.bf16.mxu0 0
      %985 = vmatpush1.bf16.msra.mxu0 %v941
      %986 = vmatprep.subr.bf16.mxu0 0
      %987 = vmatpush1.bf16.msra.mxu0 %v940
      %988 = vmatprep.subr.bf16.mxu0 0
      %989 = vmatpush2.bf16.msra.mxu0 %v955
      %990 = vmatprep.subr.bf16.mxu0 0
      %991 = vmatpush2.bf16.msra.mxu0 %v954
      %992 = vmatprep.subr.bf16.mxu0 0
      %993 = vmatpush2.bf16.msra.mxu0 %v953
      %994 = vmatprep.subr.bf16.mxu0 0
      %995 = vmatpush2.bf16.msra.mxu0 %v952
      %996 = vmatprep.subr.bf16.mxu0 0
      %997 = vmatpush2.bf16.msra.mxu0 %v951
      %998 = vmatprep.subr.bf16.mxu0 0
      %999 = vmatpush2.bf16.msra.mxu0 %v950
      %1000 = vmatprep.subr.bf16.mxu0 0
      %1001 = vmatpush2.bf16.msra.mxu0 %v949
      %1002 = vmatprep.subr.bf16.mxu0 0
      %1003 = vmatpush2.bf16.msra.mxu0 %v948
      %1004 = vmatprep.mubr.bf16.mxu0 %v873
      %1005 = vmatmul.mubr.bf16.gmra.mxu0 %v872
      %v1006 = vpop.f32.mrf.mxu0
      %v1007 = vadd.f32 0.0, %v1006
      %v1008 = vpop.f32.mrf.mxu0
      %v1009 = vpop.f32.mrf.mxu0
      %v1010 = vpop.f32.mrf.mxu0
      %1011 = vdwg.mxu0
      %v1012 = vadd.f32 %v832, %v1007
      %v1013 = vld [vmem:[%s2] sm:$0x1]
      %v1015 = vlaneseq
      %v1016 = vshrl.u32 %v1015, 7
      %v1017 = vsub.s32 0, %v1016
      %v1018 = vrot.slane %v1013, %v1017
      %v1020 = vadd.f32 %v1012, %v1018
      %v1021 = vmax.f32 %v1020, 0.0
      %v1022 = vpack.c.bf16 %v1021, %v1021
      %1023 = vst [vmem:[%s260] sm:$0x7] %v1022
      %v1024 = vld [vmem:[%s3] sm:$0x3f]
      %1026 = vset.pattern.permute.xlu0 0
      %1027 = vperm.xlu0 %1026, %v1024
      %v1028 = vpop.permute.xlu0 %1027
      %v1030 = vmul.f32 %v1021, %v1028
      %vm1031 = vcmask 1045504
      %v1032 = vsel %vm1031, %v1030, 0.0
      %v1033 = vrot.slane %v1032, 4
      %v1034 = vadd.f32 %v1032, %v1033
      %v1035 = vrot.slane %v1034, 2
      %v1036 = vadd.f32 %v1034, %v1035
      %v1037 = vrot.slane %v1036, 1
      %v1038 = vadd.f32 %v1036, %v1037
      %1039 = vst [vmem:[%s263] sm:$0x1] %v1038
      %v1040 = vmul.f32 %v1030, %v1030
      %v1041 = vsel %vm1031, %v1040, 0.0
      %v1042 = vrot.slane %v1041, 4
      %v1043 = vadd.f32 %v1041, %v1042
      %v1044 = vrot.slane %v1043, 2
      %v1045 = vadd.f32 %v1043, %v1044
      %v1046 = vrot.slane %v1045, 1
      %v1047 = vadd.f32 %v1045, %v1046
      %1048 = vst [vmem:[%s266] sm:$0x1] %v1047
      %p1049 = scmp.lt.s32.totalorder %s18, 1
      %s1050 = scalar_select %p1049, %s18, 1
      %s1051 = smul.addr %s1050, 4
      %s1052 = scalar_lea.vmem %s4, %s1051
      %p1053 = scmp.lt.s32.totalorder %s18, 1
      %s1054 = scalar_select %p1053, %s18, 1
      %s1055 = scalar_lea.vmem %s5, %s1054
      %p1056 = scmp.lt.s32.totalorder %s18, 1
      %s1057 = scalar_select %p1056, %s18, 1
      %s1058 = scalar_lea.vmem %s6, %s1057
      // Predicated region
      $region37: #{_lambda_.7} parent=35 // pred_check
        %p1059 = pneg %p125
      $region38: #{_lambda_.7} parent=35 // pred_check_branch
        %1061 = sbr.rel (%p1059) target = $region40
      $region39: #{_lambda_.7} parent=35 // pred_region
        _
      $region40: #{_lambda_.7} parent=35 // pred_fallthru
        _
      // Predicated region
      $region41: #{_lambda_.7} parent=35 // pred_check
        %p1062 = pneg %p151
      $region42: #{_lambda_.7} parent=35 // pred_check_branch
        %1064 = sbr.rel (%p1062) target = $region44
      $region43: #{_lambda_.7} parent=35 // pred_region
        _
      $region44: #{_lambda_.7} parent=35 // pred_fallthru
        _
      // Predicated region
      $region45: #{_lambda_.7} parent=35 // pred_check
        %p1065 = pneg %p177
      $region46: #{_lambda_.7} parent=35 // pred_check_branch
        %1067 = sbr.rel (%p1065) target = $region48
      $region47: #{_lambda_.7} parent=35 // pred_region
        _
      $region48: #{_lambda_.7} parent=35 // pred_fallthru
        _
    $region36: #{_lambda_.7} parent=5 // pred_fallthru
      _
    %p1068 = scmp.le.s32.totalorder 2, %s13
    // Predicated region
    $region49: #{_lambda_.7} parent=5 // pred_check
      %p1069 = pneg %p1068
    $region50: #{_lambda_.7} parent=5 // pred_check_branch
      %1071 = sbr.rel (%p1069) target = $region52
    $region51: #{_lambda_.7} parent=5 // pred_region
      %s1072 = ssub.s32 %s13, 2
      // Predicated region
      $region53: #{_lambda_.7} parent=51 // pred_check
        %p1073 = pneg %p131
      $region54: #{_lambda_.7} parent=51 // pred_check_branch
        %1075 = sbr.rel (%p1073) target = $region56
      $region55: #{_lambda_.7} parent=51 // pred_region
        %p1076 = scmp.lt.s32.totalorder %s19, 1
        %s1077 = scalar_select %p1076, %s19, 1
        %s1078 = smul.addr %s1077, 4
        %s1079 = scalar_lea.vmem %s4, %s1078
      $region56: #{_lambda_.7} parent=51 // pred_fallthru
        _
      // Predicated region
      $region57: #{_lambda_.7} parent=51 // pred_check
        %p1080 = pneg %p157
      $region58: #{_lambda_.7} parent=51 // pred_check_branch
        %1082 = sbr.rel (%p1080) target = $region60
      $region59: #{_lambda_.7} parent=51 // pred_region
        %p1083 = scmp.lt.s32.totalorder %s19, 1
        %s1084 = scalar_select %p1083, %s19, 1
        %s1085 = scalar_lea.vmem %s5, %s1084
      $region60: #{_lambda_.7} parent=51 // pred_fallthru
        _
      // Predicated region
      $region61: #{_lambda_.7} parent=51 // pred_check
        %p1086 = pneg %p183
      $region62: #{_lambda_.7} parent=51 // pred_check_branch
        %1088 = sbr.rel (%p1086) target = $region64
      $region63: #{_lambda_.7} parent=51 // pred_region
        %p1089 = scmp.lt.s32.totalorder %s19, 1
        %s1090 = scalar_select %p1089, %s19, 1
        %s1091 = scalar_lea.vmem %s6, %s1090
      $region64: #{_lambda_.7} parent=51 // pred_fallthru
        _
    $region52: #{_lambda_.7} parent=5 // pred_fallthru
      _
  $region6: #{_lambda_.7} parent=0 // loop_footer
    %s17 = sadd.s32 1, %s13
  $region7: #{_lambda_.7} parent=0 // loop_footer_branch
    %12 = sbr.rel target = $region3
  $region8: #{_lambda_.7} parent=0 // loop_exit
    _

// kernel: _lambda_.8
$region0: #{_lambda_.8}
  #allocation0 [shape = 'u32[]', space=smem, size = 0x4, offset = 0x4, fixed_abs, tag = 'smem constant byte address 0x4 - core index']
  #allocation1 [shape = 'u32[144,128]{1,0:T(1,128)}', space=vmem, size = 0x12000, scoped, tag = 'internal scratch']
  %s0 = inlined_call_operand.vmem [shape: bf16[2,6,512], index: 0, kind: input, shape index: {}]
  %s1 = inlined_call_operand.vmem [shape: bf16[4,512,256], index: 1, kind: input, shape index: {}]
  %s2 = inlined_call_operand.vmem [shape: f32[1,256], index: 2, kind: input, shape index: {}]
  %s3 = inlined_call_operand.vmem [shape: f32[2,1], index: 3, kind: input, shape index: {}]
  %s4 = inlined_call_operand.vmem [shape: bf16[2,2,256], index: 4, kind: output, shape index: {0}]
  %s5 = inlined_call_operand.vmem [shape: f32[2,1,256], index: 5, kind: output, shape index: {1}]
  %s6 = inlined_call_operand.vmem [shape: f32[2,1,256], index: 6, kind: output, shape index: {2}]
  %7 = xla_tuple %s4, %s5, %s6
  %s8 = sld [smem:[#allocation0]]
  $region65: #{_lambda_.8} parent=0
    _
  %s10 = ssub.s32 1, %s8
  %s11 = scalar_select 0, %s10, %s8
  loop: start=0, step=1, limit=4
  $region2: #{_lambda_.8} parent=0 // loop_pre_header
    _
  $region3: #{_lambda_.8} parent=0 // loop_header
    %s13 = sphi 0, %s17
    %p14 = scmp.ge.s32.totalorder %s13, 4
    %s23 = sphi 0, %s25
    %s26 = sphi 0, %s23
    %s27 = sphi 0, %s26
    %s43 = sphi 0, %s27
    %s47 = sphi 0, %s47
    %s49 = sphi 0, %s47
    %s50 = sphi 0, %s49
    %s64 = sphi 0, %s50
    %s68 = sphi 0, %s68
    %s70 = sphi 0, %s68
    %s71 = sphi 0, %s70
    %s85 = sphi 0, %s71
    %s89 = sphi 0, %s89
    %s91 = sphi 0, %s89
    %s92 = sphi 0, %s91
    %s106 = sphi 0, %s92
    %s112 = sphi 0, %s114
    %s115 = sphi 0, %s112
    %s116 = sphi 0, %s115
    %s132 = sphi 0, %s116
    %s138 = sphi 0, %s140
    %s141 = sphi 0, %s138
    %s142 = sphi 0, %s141
    %s158 = sphi 0, %s142
    %s164 = sphi 0, %s166
    %s167 = sphi 0, %s164
    %s168 = sphi 0, %s167
    %s184 = sphi 0, %s168
  $region4: #{_lambda_.8} parent=0 // loop_header_branch
    %16 = sbr.rel (%p14) target = $region8
  $region5: #{_lambda_.8} parent=0 // loop_body
    %s18 = ssub.s32 %s13, 1
    %s19 = ssub.s32 %s13, 2
    %s20 = sadd.s32 %s13, 1
    %s21 = ssub.s32 %s13, %s20
    %p22 = scmp.eq.s32.totalorder %s21, 0
    %s24 = sadd.s32 %s23, 1
    %s25 = scalar_select %p22, %s23, %s24
    %p28 = pneg %p22
    %p29 = scmp.eq.s32.totalorder %s13, 1
    %p30 = por %p28, %p29
    %p31 = scmp.ne.s32.totalorder %s23, %s26
    %p32 = scmp.eq.s32.totalorder %s13, 0
    %p33 = por %p31, %p32
    %p34 = scmp.ne.s32.totalorder %s23, %s26
    %p35 = scmp.eq.s32.totalorder %s18, 1
    %p36 = por %p34, %p35
    %p37 = scmp.ne.s32.totalorder %s26, %s27
    %p38 = scmp.eq.s32.totalorder %s18, 0
    %p39 = por %p37, %p38
    %p40 = scmp.ne.s32.totalorder %s26, %s27
    %p41 = scmp.eq.s32.totalorder %s19, 1
    %p42 = por %p40, %p41
    %p44 = scmp.ne.s32.totalorder %s27, %s43
    %p45 = scmp.eq.s32.totalorder %s19, 0
    %p46 = por %p44, %p45
    %s48 = sadd.s32 %s47, 1
    %p51 = scmp.eq.s32.totalorder %s13, 1
    %p52 = scmp.ne.s32.totalorder %s47, %s49
    %p53 = scmp.eq.s32.totalorder %s13, 0
    %p54 = por %p52, %p53
    %p55 = scmp.ne.s32.totalorder %s47, %s49
    %p56 = scmp.eq.s32.totalorder %s18, 1
    %p57 = por %p55, %p56
    %p58 = scmp.ne.s32.totalorder %s49, %s50
    %p59 = scmp.eq.s32.totalorder %s18, 0
    %p60 = por %p58, %p59
    %p61 = scmp.ne.s32.totalorder %s49, %s50
    %p62 = scmp.eq.s32.totalorder %s19, 1
    %p63 = por %p61, %p62
    %p65 = scmp.ne.s32.totalorder %s50, %s64
    %p66 = scmp.eq.s32.totalorder %s19, 0
    %p67 = por %p65, %p66
    %s69 = sadd.s32 %s68, 1
    %p72 = scmp.eq.s32.totalorder %s13, 1
    %p73 = scmp.ne.s32.totalorder %s68, %s70
    %p74 = scmp.eq.s32.totalorder %s13, 0
    %p75 = por %p73, %p74
    %p76 = scmp.ne.s32.totalorder %s68, %s70
    %p77 = scmp.eq.s32.totalorder %s18, 1
    %p78 = por %p76, %p77
    %p79 = scmp.ne.s32.totalorder %s70, %s71
    %p80 = scmp.eq.s32.totalorder %s18, 0
    %p81 = por %p79, %p80
    %p82 = scmp.ne.s32.totalorder %s70, %s71
    %p83 = scmp.eq.s32.totalorder %s19, 1
    %p84 = por %p82, %p83
    %p86 = scmp.ne.s32.totalorder %s71, %s85
    %p87 = scmp.eq.s32.totalorder %s19, 0
    %p88 = por %p86, %p87
    %s90 = sadd.s32 %s89, 1
    %p93 = scmp.eq.s32.totalorder %s13, 1
    %p94 = scmp.ne.s32.totalorder %s89, %s91
    %p95 = scmp.eq.s32.totalorder %s13, 0
    %p96 = por %p94, %p95
    %p97 = scmp.ne.s32.totalorder %s89, %s91
    %p98 = scmp.eq.s32.totalorder %s18, 1
    %p99 = por %p97, %p98
    %p100 = scmp.ne.s32.totalorder %s91, %s92
    %p101 = scmp.eq.s32.totalorder %s18, 0
    %p102 = por %p100, %p101
    %p103 = scmp.ne.s32.totalorder %s91, %s92
    %p104 = scmp.eq.s32.totalorder %s19, 1
    %p105 = por %p103, %p104
    %p107 = scmp.ne.s32.totalorder %s92, %s106
    %p108 = scmp.eq.s32.totalorder %s19, 0
    %p109 = por %p107, %p108
    %s110 = ssub.s32 %s13, %s20
    %p111 = scmp.eq.s32.totalorder %s110, 0
    %s113 = sadd.s32 %s112, 1
    %s114 = scalar_select %p111, %s112, %s113
    %p117 = pneg %p111
    %p118 = scmp.eq.s32.totalorder %s13, 1
    %p119 = por %p117, %p118
    %p120 = scmp.ne.s32.totalorder %s112, %s115
    %p121 = scmp.eq.s32.totalorder %s13, 0
    %p122 = por %p120, %p121
    %p123 = scmp.ne.s32.totalorder %s112, %s115
    %p124 = scmp.eq.s32.totalorder %s18, 1
    %p125 = por %p123, %p124
    %p126 = scmp.ne.s32.totalorder %s115, %s116
    %p127 = scmp.eq.s32.totalorder %s18, 0
    %p128 = por %p126, %p127
    %p129 = scmp.ne.s32.totalorder %s115, %s116
    %p130 = scmp.eq.s32.totalorder %s19, 1
    %p131 = por %p129, %p130
    %p133 = scmp.ne.s32.totalorder %s116, %s132
    %p134 = scmp.eq.s32.totalorder %s19, 0
    %p135 = por %p133, %p134
    %s136 = ssub.s32 %s13, %s20
    %p137 = scmp.eq.s32.totalorder %s136, 0
    %s139 = sadd.s32 %s138, 1
    %s140 = scalar_select %p137, %s138, %s139
    %p143 = pneg %p137
    %p144 = scmp.eq.s32.totalorder %s13, 1
    %p145 = por %p143, %p144
    %p146 = scmp.ne.s32.totalorder %s138, %s141
    %p147 = scmp.eq.s32.totalorder %s13, 0
    %p148 = por %p146, %p147
    %p149 = scmp.ne.s32.totalorder %s138, %s141
    %p150 = scmp.eq.s32.totalorder %s18, 1
    %p151 = por %p149, %p150
    %p152 = scmp.ne.s32.totalorder %s141, %s142
    %p153 = scmp.eq.s32.totalorder %s18, 0
    %p154 = por %p152, %p153
    %p155 = scmp.ne.s32.totalorder %s141, %s142
    %p156 = scmp.eq.s32.totalorder %s19, 1
    %p157 = por %p155, %p156
    %p159 = scmp.ne.s32.totalorder %s142, %s158
    %p160 = scmp.eq.s32.totalorder %s19, 0
    %p161 = por %p159, %p160
    %s162 = ssub.s32 %s13, %s20
    %p163 = scmp.eq.s32.totalorder %s162, 0
    %s165 = sadd.s32 %s164, 1
    %s166 = scalar_select %p163, %s164, %s165
    %p169 = pneg %p163
    %p170 = scmp.eq.s32.totalorder %s13, 1
    %p171 = por %p169, %p170
    %p172 = scmp.ne.s32.totalorder %s164, %s167
    %p173 = scmp.eq.s32.totalorder %s13, 0
    %p174 = por %p172, %p173
    %p175 = scmp.ne.s32.totalorder %s164, %s167
    %p176 = scmp.eq.s32.totalorder %s18, 1
    %p177 = por %p175, %p176
    %p178 = scmp.ne.s32.totalorder %s167, %s168
    %p179 = scmp.eq.s32.totalorder %s18, 0
    %p180 = por %p178, %p179
    %p181 = scmp.ne.s32.totalorder %s167, %s168
    %p182 = scmp.eq.s32.totalorder %s19, 1
    %p183 = por %p181, %p182
    %p185 = scmp.ne.s32.totalorder %s168, %s184
    %p186 = scmp.eq.s32.totalorder %s19, 0
    %p187 = por %p185, %p186
    %p188 = scmp.le.s32.totalorder 1, %s13
    %p189 = scmp.lt.s32.totalorder %s13, 3
    %p190 = pnand %p188, %p189
    %p191 = pneg %p190
    // Predicated region
    $region9: #{_lambda_.8} parent=5 // pred_check
      _
    $region10: #{_lambda_.8} parent=5 // pred_check_branch
      %193 = sbr.rel (%p190) target = $region12
    $region11: #{_lambda_.8} parent=5 // pred_region
      %s194 = ssub.s32 %s13, 1
      // Predicated region
      $region13: #{_lambda_.8} parent=11 // pred_check
        %p195 = pneg %p60
      $region14: #{_lambda_.8} parent=11 // pred_check_branch
        %197 = sbr.rel (%p195) target = $region16
      $region15: #{_lambda_.8} parent=11 // pred_region
        _
      $region16: #{_lambda_.8} parent=11 // pred_fallthru
        _
      // Predicated region
      $region17: #{_lambda_.8} parent=11 // pred_check
        %p198 = pneg %p81
      $region18: #{_lambda_.8} parent=11 // pred_check_branch
        %200 = sbr.rel (%p198) target = $region20
      $region19: #{_lambda_.8} parent=11 // pred_region
        _
      $region20: #{_lambda_.8} parent=11 // pred_fallthru
        _
      // Predicated region
      $region21: #{_lambda_.8} parent=11 // pred_check
        %p201 = pneg %p102
      $region22: #{_lambda_.8} parent=11 // pred_check_branch
        %203 = sbr.rel (%p201) target = $region24
      $region23: #{_lambda_.8} parent=11 // pred_region
        _
      $region24: #{_lambda_.8} parent=11 // pred_fallthru
        _
    $region12: #{_lambda_.8} parent=5 // pred_fallthru
      _
    %p204 = scmp.lt.s32.totalorder %s13, 2
    // Predicated region
    $region25: #{_lambda_.8} parent=5 // pred_check
      %p205 = pneg %p204
    $region26: #{_lambda_.8} parent=5 // pred_check_branch
      %207 = sbr.rel (%p205) target = $region28
    $region27: #{_lambda_.8} parent=5 // pred_region
      // Predicated region
      $region29: #{_lambda_.8} parent=27 // pred_check
        %p208 = pneg %p33
      $region30: #{_lambda_.8} parent=27 // pred_check_branch
        %210 = sbr.rel (%p208) target = $region32
      $region31: #{_lambda_.8} parent=27 // pred_region
        %p211 = scmp.lt.s32.totalorder %s13, 1
        %s212 = scalar_select %p211, %s13, 1
        %s213 = smul.addr %s212, 4
        %s214 = smul.addr %s213, 4
        %s215 = scalar_lea.vmem %s0, %s214
      $region32: #{_lambda_.8} parent=27 // pred_fallthru
        _
    $region28: #{_lambda_.8} parent=5 // pred_fallthru
      _
    %p216 = scmp.le.s32.totalorder 1, %s13
    %p217 = scmp.lt.s32.totalorder %s13, 3
    %p218 = pnand %p216, %p217
    %p219 = pneg %p218
    // Predicated region
    $region33: #{_lambda_.8} parent=5 // pred_check
      _
    $region34: #{_lambda_.8} parent=5 // pred_check_branch
      %221 = sbr.rel (%p218) target = $region36
    $region35: #{_lambda_.8} parent=5 // pred_region
      %s222 = ssub.s32 %s13, 1
      %p223 = scmp.lt.s32.totalorder %s18, 1
      %s224 = scalar_select %p223, %s18, 1
      %s225 = smul.addr %s224, 4
      %s226 = smul.addr %s225, 4
      %s227 = scalar_lea.vmem %s0, %s226
      %p228 = pneg %p39
      %p229 = pneg %p36
      %p230 = pneg %p60
      %p231 = pneg %p57
      %p232 = pneg %p81
      %p233 = pneg %p78
      %p234 = pneg %p102
      %p235 = pneg %p99
      %p236 = pneg %p128
      %p237 = pneg %p125
      %p238 = scmp.lt.s32.totalorder %s18, 1
      %s239 = scalar_select %p238, %s18, 1
      %s240 = smul.addr %s239, 2
      %s241 = scalar_lea.vmem %s4, %s240
      %p242 = pneg %p154
      %p243 = pneg %p151
      %p244 = scmp.lt.s32.totalorder %s18, 1
      %s245 = scalar_select %p244, %s18, 1
      %s246 = smul.addr %s245, 2
      %s247 = scalar_lea.vmem %s5, %s246
      %p248 = pneg %p180
      %p249 = pneg %p177
      %p250 = scmp.lt.s32.totalorder %s18, 1
      %s251 = scalar_select %p250, %s18, 1
      %s252 = smul.addr %s251, 2
      %s253 = scalar_lea.vmem %s6, %s252
      %p254 = scmp.lt.s32.totalorder %s18, 1
      %s255 = scalar_select %p254, %s18, 1
      %s256 = smul.addr %s255, 4
      %s257 = smul.addr %s256, 4
      %s258 = scalar_lea.vmem %s0, %s257
      %p259 = scmp.lt.s32.totalorder %s18, 1
      %s260 = scalar_select %p259, %s18, 1
      %s261 = smul.addr %s260, 2
      %s262 = scalar_lea.vmem %s4, %s261
      %p263 = scmp.lt.s32.totalorder %s18, 1
      %s264 = scalar_select %p263, %s18, 1
      %s265 = smul.addr %s264, 2
      %s266 = scalar_lea.vmem %s5, %s265
      %p267 = scmp.lt.s32.totalorder %s18, 1
      %s268 = scalar_select %p267, %s18, 1
      %s269 = smul.addr %s268, 2
      %s270 = scalar_lea.vmem %s6, %s269
      %v271 = vld [vmem:[%s258] sm:$0x11]
      %v272 = vld [vmem:[%s258 + $0x8] sm:$0x11]
      %v273 = vld [vmem:[%s1] sm:$0xff]
      %v274 = vld [vmem:[%s1 + $0x8] sm:$0xff]
      %v275 = vld [vmem:[%s1 + $0x10] sm:$0xff]
      %v276 = vld [vmem:[%s1 + $0x18] sm:$0xff]
      %v277 = vld [vmem:[%s1 + $0x20] sm:$0xff]
      %v278 = vld [vmem:[%s1 + $0x28] sm:$0xff]
      %v279 = vld [vmem:[%s1 + $0x30] sm:$0xff]
      %v280 = vld [vmem:[%s1 + $0x38] sm:$0xff]
      %v281 = vld [vmem:[%s1 + $0x40] sm:$0xff]
      %v282 = vld [vmem:[%s1 + $0x48] sm:$0xff]
      %v283 = vld [vmem:[%s1 + $0x50] sm:$0xff]
      %v284 = vld [vmem:[%s1 + $0x58] sm:$0xff]
      %v285 = vld [vmem:[%s1 + $0x60] sm:$0xff]
      %v286 = vld [vmem:[%s1 + $0x68] sm:$0xff]
      %v287 = vld [vmem:[%s1 + $0x70] sm:$0xff]
      %v288 = vld [vmem:[%s1 + $0x78] sm:$0xff]
      %v289 = vld [vmem:[%s1 + $0x80] sm:$0xff]
      %v290 = vld [vmem:[%s1 + $0x88] sm:$0xff]
      %v291 = vld [vmem:[%s1 + $0x90] sm:$0xff]
      %v292 = vld [vmem:[%s1 + $0x98] sm:$0xff]
      %v293 = vld [vmem:[%s1 + $0xa0] sm:$0xff]
      %v294 = vld [vmem:[%s1 + $0xa8] sm:$0xff]
      %v295 = vld [vmem:[%s1 + $0xb0] sm:$0xff]
      %v296 = vld [vmem:[%s1 + $0xb8] sm:$0xff]
      %v297 = vld [vmem:[%s1 + $0xc0] sm:$0xff]
      %v298 = vld [vmem:[%s1 + $0xc8] sm:$0xff]
      %v299 = vld [vmem:[%s1 + $0xd0] sm:$0xff]
      %v300 = vld [vmem:[%s1 + $0xd8] sm:$0xff]
      %v301 = vld [vmem:[%s1 + $0xe0] sm:$0xff]
      %v302 = vld [vmem:[%s1 + $0xe8] sm:$0xff]
      %v303 = vld [vmem:[%s1 + $0xf0] sm:$0xff]
      %v304 = vld [vmem:[%s1 + $0xf8] sm:$0xff]
      %v305 = vld [vmem:[%s1 + $0x100] sm:$0xff]
      %v306 = vld [vmem:[%s1 + $0x108] sm:$0xff]
      %v307 = vld [vmem:[%s1 + $0x110] sm:$0xff]
      %v308 = vld [vmem:[%s1 + $0x118] sm:$0xff]
      %v309 = vld [vmem:[%s1 + $0x120] sm:$0xff]
      %v310 = vld [vmem:[%s1 + $0x128] sm:$0xff]
      %v311 = vld [vmem:[%s1 + $0x130] sm:$0xff]
      %v312 = vld [vmem:[%s1 + $0x138] sm:$0xff]
      %v313 = vld [vmem:[%s1 + $0x140] sm:$0xff]
      %v314 = vld [vmem:[%s1 + $0x148] sm:$0xff]
      %v315 = vld [vmem:[%s1 + $0x150] sm:$0xff]
      %v316 = vld [vmem:[%s1 + $0x158] sm:$0xff]
      %v317 = vld [vmem:[%s1 + $0x160] sm:$0xff]
      %v318 = vld [vmem:[%s1 + $0x168] sm:$0xff]
      %v319 = vld [vmem:[%s1 + $0x170] sm:$0xff]
      %v320 = vld [vmem:[%s1 + $0x178] sm:$0xff]
      %v321 = vld [vmem:[%s1 + $0x180] sm:$0xff]
      %v322 = vld [vmem:[%s1 + $0x188] sm:$0xff]
      %v323 = vld [vmem:[%s1 + $0x190] sm:$0xff]
      %v324 = vld [vmem:[%s1 + $0x198] sm:$0xff]
      %v325 = vld [vmem:[%s1 + $0x1a0] sm:$0xff]
      %v326 = vld [vmem:[%s1 + $0x1a8] sm:$0xff]
      %v327 = vld [vmem:[%s1 + $0x1b0] sm:$0xff]
      %v328 = vld [vmem:[%s1 + $0x1b8] sm:$0xff]
      %v329 = vld [vmem:[%s1 + $0x1c0] sm:$0xff]
      %v330 = vld [vmem:[%s1 + $0x1c8] sm:$0xff]
      %v331 = vld [vmem:[%s1 + $0x1d0] sm:$0xff]
      %v332 = vld [vmem:[%s1 + $0x1d8] sm:$0xff]
      %v333 = vld [vmem:[%s1 + $0x1e0] sm:$0xff]
      %v334 = vld [vmem:[%s1 + $0x1e8] sm:$0xff]
      %v335 = vld [vmem:[%s1 + $0x1f0] sm:$0xff]
      %v336 = vld [vmem:[%s1 + $0x1f8] sm:$0xff]
      %v337 = vld [vmem:[%s258] sm:$0x33]
      %v338 = vld [vmem:[%s258 + $0x8] sm:$0x33]
      %s339 = scalar_lea.vmem %s1, 512
      %v340 = vld [vmem:[%s339] sm:$0xff]
      %v341 = vld [vmem:[%s339 + $0x8] sm:$0xff]
      %v342 = vld [vmem:[%s339 + $0x10] sm:$0xff]
      %v343 = vld [vmem:[%s339 + $0x18] sm:$0xff]
      %v344 = vld [vmem:[%s339 + $0x20] sm:$0xff]
      %v345 = vld [vmem:[%s339 + $0x28] sm:$0xff]
      %v346 = vld [vmem:[%s339 + $0x30] sm:$0xff]
      %v347 = vld [vmem:[%s339 + $0x38] sm:$0xff]
      %v348 = vld [vmem:[%s339 + $0x40] sm:$0xff]
      %v349 = vld [vmem:[%s339 + $0x48] sm:$0xff]
      %v350 = vld [vmem:[%s339 + $0x50] sm:$0xff]
      %v351 = vld [vmem:[%s339 + $0x58] sm:$0xff]
      %v352 = vld [vmem:[%s339 + $0x60] sm:$0xff]
      %v353 = vld [vmem:[%s339 + $0x68] sm:$0xff]
      %v354 = vld [vmem:[%s339 + $0x70] sm:$0xff]
      %v355 = vld [vmem:[%s339 + $0x78] sm:$0xff]
      %v356 = vld [vmem:[%s339 + $0x80] sm:$0xff]
      %v357 = vld [vmem:[%s339 + $0x88] sm:$0xff]
      %v358 = vld [vmem:[%s339 + $0x90] sm:$0xff]
      %v359 = vld [vmem:[%s339 + $0x98] sm:$0xff]
      %v360 = vld [vmem:[%s339 + $0xa0] sm:$0xff]
      %v361 = vld [vmem:[%s339 + $0xa8] sm:$0xff]
      %v362 = vld [vmem:[%s339 + $0xb0] sm:$0xff]
      %v363 = vld [vmem:[%s339 + $0xb8] sm:$0xff]
      %v364 = vld [vmem:[%s339 + $0xc0] sm:$0xff]
      %v365 = vld [vmem:[%s339 + $0xc8] sm:$0xff]
      %v366 = vld [vmem:[%s339 + $0xd0] sm:$0xff]
      %v367 = vld [vmem:[%s339 + $0xd8] sm:$0xff]
      %v368 = vld [vmem:[%s339 + $0xe0] sm:$0xff]
      %v369 = vld [vmem:[%s339 + $0xe8] sm:$0xff]
      %v370 = vld [vmem:[%s339 + $0xf0] sm:$0xff]
      %v371 = vld [vmem:[%s339 + $0xf8] sm:$0xff]
      %v372 = vld [vmem:[%s339 + $0x100] sm:$0xff]
      %v373 = vld [vmem:[%s339 + $0x108] sm:$0xff]
      %v374 = vld [vmem:[%s339 + $0x110] sm:$0xff]
      %v375 = vld [vmem:[%s339 + $0x118] sm:$0xff]
      %v376 = vld [vmem:[%s339 + $0x120] sm:$0xff]
      %v377 = vld [vmem:[%s339 + $0x128] sm:$0xff]
      %v378 = vld [vmem:[%s339 + $0x130] sm:$0xff]
      %v379 = vld [vmem:[%s339 + $0x138] sm:$0xff]
      %v380 = vld [vmem:[%s339 + $0x140] sm:$0xff]
      %v381 = vld [vmem:[%s339 + $0x148] sm:$0xff]
      %v382 = vld [vmem:[%s339 + $0x150] sm:$0xff]
      %v383 = vld [vmem:[%s339 + $0x158] sm:$0xff]
      %v384 = vld [vmem:[%s339 + $0x160] sm:$0xff]
      %v385 = vld [vmem:[%s339 + $0x168] sm:$0xff]
      %v386 = vld [vmem:[%s339 + $0x170] sm:$0xff]
      %v387 = vld [vmem:[%s339 + $0x178] sm:$0xff]
      %v388 = vld [vmem:[%s339 + $0x180] sm:$0xff]
      %v389 = vld [vmem:[%s339 + $0x188] sm:$0xff]
      %v390 = vld [vmem:[%s339 + $0x190] sm:$0xff]
      %v391 = vld [vmem:[%s339 + $0x198] sm:$0xff]
      %v392 = vld [vmem:[%s339 + $0x1a0] sm:$0xff]
      %v393 = vld [vmem:[%s339 + $0x1a8] sm:$0xff]
      %v394 = vld [vmem:[%s339 + $0x1b0] sm:$0xff]
      %v395 = vld [vmem:[%s339 + $0x1b8] sm:$0xff]
      %v396 = vld [vmem:[%s339 + $0x1c0] sm:$0xff]
      %v397 = vld [vmem:[%s339 + $0x1c8] sm:$0xff]
      %v398 = vld [vmem:[%s339 + $0x1d0] sm:$0xff]
      %v399 = vld [vmem:[%s339 + $0x1d8] sm:$0xff]
      %v400 = vld [vmem:[%s339 + $0x1e0] sm:$0xff]
      %v401 = vld [vmem:[%s339 + $0x1e8] sm:$0xff]
      %v402 = vld [vmem:[%s339 + $0x1f0] sm:$0xff]
      %v403 = vld [vmem:[%s339 + $0x1f8] sm:$0xff]
      %v406 = vunpack.c.l.b16 %v337
      %v407 = vunpack.c.h.b16 %v337
      %v408 = vunpack.c.l.b16 %v338
      %v409 = vunpack.c.h.b16 %v338
      %v410 = vpack.c.b16 %v406, %v406
      %v411 = vpack.c.b16 %v407, %v407
      %v412 = vpack.c.b16 %v408, %v408
      %v413 = vpack.c.b16 %v409, %v409
      %v415 = vshrl.u32 %v410, 16
      %v417 = vshll.u32 %v410, 16
      %v419 = vrot.slane %v417, 1
      %v420 = vor.u32 %v415, %v419
      %v422 = vshrl.u32 %v411, 16
      %v424 = vshll.u32 %v411, 16
      %v426 = vrot.slane %v424, 1
      %v427 = vor.u32 %v422, %v426
      %v429 = vshrl.u32 %v412, 16
      %v431 = vshll.u32 %v412, 16
      %v433 = vrot.slane %v431, 1
      %v434 = vor.u32 %v429, %v433
      %v436 = vshrl.u32 %v413, 16
      %v438 = vshll.u32 %v413, 16
      %v440 = vrot.slane %v438, 1
      %v441 = vor.u32 %v436, %v440
      %v510 = vunpack.c.l.b16 %v340
      %v511 = vunpack.c.h.b16 %v340
      %v512 = vunpack.c.l.b16 %v341
      %v513 = vunpack.c.h.b16 %v341
      %v514 = vunpack.c.l.b16 %v342
      %v515 = vunpack.c.h.b16 %v342
      %v516 = vunpack.c.l.b16 %v343
      %v517 = vunpack.c.h.b16 %v343
      %v518 = vunpack.c.l.b16 %v344
      %v519 = vunpack.c.h.b16 %v344
      %v520 = vunpack.c.l.b16 %v345
      %v521 = vunpack.c.h.b16 %v345
      %v522 = vunpack.c.l.b16 %v346
      %v523 = vunpack.c.h.b16 %v346
      %v524 = vunpack.c.l.b16 %v347
      %v525 = vunpack.c.h.b16 %v347
      %v526 = vunpack.c.l.b16 %v348
      %v527 = vunpack.c.h.b16 %v348
      %v528 = vunpack.c.l.b16 %v349
      %v529 = vunpack.c.h.b16 %v349
      %v530 = vunpack.c.l.b16 %v350
      %v531 = vunpack.c.h.b16 %v350
      %v532 = vunpack.c.l.b16 %v351
      %v533 = vunpack.c.h.b16 %v351
      %v534 = vunpack.c.l.b16 %v352
      %v535 = vunpack.c.h.b16 %v352
      %v536 = vunpack.c.l.b16 %v353
      %v537 = vunpack.c.h.b16 %v353
      %v538 = vunpack.c.l.b16 %v354
      %v539 = vunpack.c.h.b16 %v354
      %v540 = vunpack.c.l.b16 %v355
      %v541 = vunpack.c.h.b16 %v355
      %v542 = vunpack.c.l.b16 %v356
      %v543 = vunpack.c.h.b16 %v356
      %v544 = vunpack.c.l.b16 %v357
      %v545 = vunpack.c.h.b16 %v357
      %v546 = vunpack.c.l.b16 %v358
      %v547 = vunpack.c.h.b16 %v358
      %v548 = vunpack.c.l.b16 %v359
      %v549 = vunpack.c.h.b16 %v359
      %v550 = vunpack.c.l.b16 %v360
      %v551 = vunpack.c.h.b16 %v360
      %v552 = vunpack.c.l.b16 %v361
      %v553 = vunpack.c.h.b16 %v361
      %v554 = vunpack.c.l.b16 %v362
      %v555 = vunpack.c.h.b16 %v362
      %v556 = vunpack.c.l.b16 %v363
      %v557 = vunpack.c.h.b16 %v363
      %v558 = vunpack.c.l.b16 %v364
      %v559 = vunpack.c.h.b16 %v364
      %v560 = vunpack.c.l.b16 %v365
      %v561 = vunpack.c.h.b16 %v365
      %v562 = vunpack.c.l.b16 %v366
      %v563 = vunpack.c.h.b16 %v366
      %v564 = vunpack.c.l.b16 %v367
      %v565 = vunpack.c.h.b16 %v367
      %v566 = vunpack.c.l.b16 %v368
      %v567 = vunpack.c.h.b16 %v368
      %v568 = vunpack.c.l.b16 %v369
      %v569 = vunpack.c.h.b16 %v369
      %v570 = vunpack.c.l.b16 %v370
      %v571 = vunpack.c.h.b16 %v370
      %v572 = vunpack.c.l.b16 %v371
      %v573 = vunpack.c.h.b16 %v371
      %v574 = vunpack.c.l.b16 %v372
      %v575 = vunpack.c.h.b16 %v372
      %v576 = vunpack.c.l.b16 %v373
      %v577 = vunpack.c.h.b16 %v373
      %v578 = vunpack.c.l.b16 %v374
      %v579 = vunpack.c.h.b16 %v374
      %v580 = vunpack.c.l.b16 %v375
      %v581 = vunpack.c.h.b16 %v375
      %v582 = vunpack.c.l.b16 %v376
      %v583 = vunpack.c.h.b16 %v376
      %v584 = vunpack.c.l.b16 %v377
      %v585 = vunpack.c.h.b16 %v377
      %v586 = vunpack.c.l.b16 %v378
      %v587 = vunpack.c.h.b16 %v378
      %v588 = vunpack.c.l.b16 %v379
      %v589 = vunpack.c.h.b16 %v379
      %v590 = vunpack.c.l.b16 %v380
      %v591 = vunpack.c.h.b16 %v380
      %v592 = vunpack.c.l.b16 %v381
      %v593 = vunpack.c.h.b16 %v381
      %v594 = vunpack.c.l.b16 %v382
      %v595 = vunpack.c.h.b16 %v382
      %v596 = vunpack.c.l.b16 %v383
      %v597 = vunpack.c.h.b16 %v383
      %v598 = vunpack.c.l.b16 %v384
      %v599 = vunpack.c.h.b16 %v384
      %v600 = vunpack.c.l.b16 %v385
      %v601 = vunpack.c.h.b16 %v385
      %v602 = vunpack.c.l.b16 %v386
      %v603 = vunpack.c.h.b16 %v386
      %v604 = vunpack.c.l.b16 %v387
      %v605 = vunpack.c.h.b16 %v387
      %v606 = vunpack.c.l.b16 %v388
      %v607 = vunpack.c.h.b16 %v388
      %v608 = vunpack.c.l.b16 %v389
      %v609 = vunpack.c.h.b16 %v389
      %v610 = vunpack.c.l.b16 %v390
      %v611 = vunpack.c.h.b16 %v390
      %v612 = vunpack.c.l.b16 %v391
      %v613 = vunpack.c.h.b16 %v391
      %v614 = vunpack.c.l.b16 %v392
      %v615 = vunpack.c.h.b16 %v392
      %v616 = vunpack.c.l.b16 %v393
      %v617 = vunpack.c.h.b16 %v393
      %v618 = vunpack.c.l.b16 %v394
      %v619 = vunpack.c.h.b16 %v394
      %v620 = vunpack.c.l.b16 %v395
      %v621 = vunpack.c.h.b16 %v395
      %v622 = vunpack.c.l.b16 %v396
      %v623 = vunpack.c.h.b16 %v396
      %v624 = vunpack.c.l.b16 %v397
      %v625 = vunpack.c.h.b16 %v397
      %v626 = vunpack.c.l.b16 %v398
      %v627 = vunpack.c.h.b16 %v398
      %v628 = vunpack.c.l.b16 %v399
      %v629 = vunpack.c.h.b16 %v399
      %v630 = vunpack.c.l.b16 %v400
      %v631 = vunpack.c.h.b16 %v400
      %v632 = vunpack.c.l.b16 %v401
      %v633 = vunpack.c.h.b16 %v401
      %v634 = vunpack.c.l.b16 %v402
      %v635 = vunpack.c.h.b16 %v402
      %v636 = vunpack.c.l.b16 %v403
      %v637 = vunpack.c.h.b16 %v403
      %v638 = vpack.c.b16 %v512, %v510
      %v639 = vpack.c.b16 %v513, %v511
      %v640 = vpack.c.b16 %v516, %v514
      %v641 = vpack.c.b16 %v517, %v515
      %v642 = vpack.c.b16 %v520, %v518
      %v643 = vpack.c.b16 %v521, %v519
      %v644 = vpack.c.b16 %v524, %v522
      %v645 = vpack.c.b16 %v525, %v523
      %v646 = vpack.c.b16 %v528, %v526
      %v647 = vpack.c.b16 %v529, %v527
      %v648 = vpack.c.b16 %v532, %v530
      %v649 = vpack.c.b16 %v533, %v531
      %v650 = vpack.c.b16 %v536, %v534
      %v651 = vpack.c.b16 %v537, %v535
      %v652 = vpack.c.b16 %v540, %v538
      %v653 = vpack.c.b16 %v541, %v539
      %v654 = vpack.c.b16 %v544, %v542
      %v655 = vpack.c.b16 %v545, %v543
      %v656 = vpack.c.b16 %v548, %v546
      %v657 = vpack.c.b16 %v549, %v547
      %v658 = vpack.c.b16 %v552, %v550
      %v659 = vpack.c.b16 %v553, %v551
      %v660 = vpack.c.b16 %v556, %v554
      %v661 = vpack.c.b16 %v557, %v555
      %v662 = vpack.c.b16 %v560, %v558
      %v663 = vpack.c.b16 %v561, %v559
      %v664 = vpack.c.b16 %v564, %v562
      %v665 = vpack.c.b16 %v565, %v563
      %v666 = vpack.c.b16 %v568, %v566
      %v667 = vpack.c.b16 %v569, %v567
      %v668 = vpack.c.b16 %v572, %v570
      %v669 = vpack.c.b16 %v573, %v571
      %v670 = vpack.c.b16 %v576, %v574
      %v671 = vpack.c.b16 %v577, %v575
      %v672 = vpack.c.b16 %v580, %v578
      %v673 = vpack.c.b16 %v581, %v579
      %v674 = vpack.c.b16 %v584, %v582
      %v675 = vpack.c.b16 %v585, %v583
      %v676 = vpack.c.b16 %v588, %v586
      %v677 = vpack.c.b16 %v589, %v587
      %v678 = vpack.c.b16 %v592, %v590
      %v679 = vpack.c.b16 %v593, %v591
      %v680 = vpack.c.b16 %v596, %v594
      %v681 = vpack.c.b16 %v597, %v595
      %v682 = vpack.c.b16 %v600, %v598
      %v683 = vpack.c.b16 %v601, %v599
      %v684 = vpack.c.b16 %v604, %v602
      %v685 = vpack.c.b16 %v605, %v603
      %v686 = vpack.c.b16 %v608, %v606
      %v687 = vpack.c.b16 %v609, %v607
      %v688 = vpack.c.b16 %v612, %v610
      %v689 = vpack.c.b16 %v613, %v611
      %v690 = vpack.c.b16 %v616, %v614
      %v691 = vpack.c.b16 %v617, %v615
      %v692 = vpack.c.b16 %v620, %v618
      %v693 = vpack.c.b16 %v621, %v619
      %v694 = vpack.c.b16 %v624, %v622
      %v695 = vpack.c.b16 %v625, %v623
      %v696 = vpack.c.b16 %v628, %v626
      %v697 = vpack.c.b16 %v629, %v627
      %v698 = vpack.c.b16 %v632, %v630
      %v699 = vpack.c.b16 %v633, %v631
      %v700 = vpack.c.b16 %v636, %v634
      %v701 = vpack.c.b16 %v637, %v635
      %766 = vmatprep.subr.bf16.mxu0 %v653
      %767 = vmatpush1.bf16.msra.mxu0 %v652
      %768 = vmatprep.subr.bf16.mxu0 %v651
      %769 = vmatpush1.bf16.msra.mxu0 %v650
      %770 = vmatprep.subr.bf16.mxu0 %v649
      %771 = vmatpush1.bf16.msra.mxu0 %v648
      %772 = vmatprep.subr.bf16.mxu0 %v647
      %773 = vmatpush1.bf16.msra.mxu0 %v646
      %774 = vmatprep.subr.bf16.mxu0 %v645
      %775 = vmatpush1.bf16.msra.mxu0 %v644
      %776 = vmatprep.subr.bf16.mxu0 %v643
      %777 = vmatpush1.bf16.msra.mxu0 %v642
      %778 = vmatprep.subr.bf16.mxu0 %v641
      %779 = vmatpush1.bf16.msra.mxu0 %v640
      %780 = vmatprep.subr.bf16.mxu0 %v639
      %781 = vmatpush1.bf16.msra.mxu0 %v638
      %782 = vmatprep.subr.bf16.mxu0 %v669
      %783 = vmatpush2.bf16.msra.mxu0 %v668
      %784 = vmatprep.subr.bf16.mxu0 %v667
      %785 = vmatpush2.bf16.msra.mxu0 %v666
      %786 = vmatprep.subr.bf16.mxu0 %v665
      %787 = vmatpush2.bf16.msra.mxu0 %v664
      %788 = vmatprep.subr.bf16.mxu0 %v663
      %789 = vmatpush2.bf16.msra.mxu0 %v662
      %790 = vmatprep.subr.bf16.mxu0 %v661
      %791 = vmatpush2.bf16.msra.mxu0 %v660
      %792 = vmatprep.subr.bf16.mxu0 %v659
      %793 = vmatpush2.bf16.msra.mxu0 %v658
      %794 = vmatprep.subr.bf16.mxu0 %v657
      %795 = vmatpush2.bf16.msra.mxu0 %v656
      %796 = vmatprep.subr.bf16.mxu0 %v655
      %797 = vmatpush2.bf16.msra.mxu0 %v654
      %798 = vmatprep.mubr.bf16.mxu0 %v427
      %799 = vmatmul.mubr.bf16.gmra.mxu0 %v420
      %v800 = vpop.f32.mrf.mxu0
      %v801 = vadd.f32 0.0, %v800
      %v802 = vpop.f32.mrf.mxu0
      %v803 = vadd.f32 0.0, %v802
      %v804 = vpop.f32.mrf.mxu0
      %v805 = vpop.f32.mrf.mxu0
      %806 = vdwg.mxu0
      %807 = vmatprep.subr.bf16.mxu0 %v685
      %808 = vmatpush1.bf16.msra.mxu0 %v684
      %809 = vmatprep.subr.bf16.mxu0 %v683
      %810 = vmatpush1.bf16.msra.mxu0 %v682
      %811 = vmatprep.subr.bf16.mxu0 %v681
      %812 = vmatpush1.bf16.msra.mxu0 %v680
      %813 = vmatprep.subr.bf16.mxu0 %v679
      %814 = vmatpush1.bf16.msra.mxu0 %v678
      %815 = vmatprep.subr.bf16.mxu0 %v677
      %816 = vmatpush1.bf16.msra.mxu0 %v676
      %817 = vmatprep.subr.bf16.mxu0 %v675
      %818 = vmatpush1.bf16.msra.mxu0 %v674
      %819 = vmatprep.subr.bf16.mxu0 %v673
      %820 = vmatpush1.bf16.msra.mxu0 %v672
      %821 = vmatprep.subr.bf16.mxu0 %v671
      %822 = vmatpush1.bf16.msra.mxu0 %v670
      %823 = vmatprep.subr.bf16.mxu0 %v701
      %824 = vmatpush2.bf16.msra.mxu0 %v700
      %825 = vmatprep.subr.bf16.mxu0 %v699
      %826 = vmatpush2.bf16.msra.mxu0 %v698
      %827 = vmatprep.subr.bf16.mxu0 %v697
      %828 = vmatpush2.bf16.msra.mxu0 %v696
      %829 = vmatprep.subr.bf16.mxu0 %v695
      %830 = vmatpush2.bf16.msra.mxu0 %v694
      %831 = vmatprep.subr.bf16.mxu0 %v693
      %832 = vmatpush2.bf16.msra.mxu0 %v692
      %833 = vmatprep.subr.bf16.mxu0 %v691
      %834 = vmatpush2.bf16.msra.mxu0 %v690
      %835 = vmatprep.subr.bf16.mxu0 %v689
      %836 = vmatpush2.bf16.msra.mxu0 %v688
      %837 = vmatprep.subr.bf16.mxu0 %v687
      %838 = vmatpush2.bf16.msra.mxu0 %v686
      %839 = vmatprep.mubr.bf16.mxu0 %v441
      %840 = vmatmul.mubr.bf16.gmra.mxu0 %v434
      %v841 = vpop.f32.mrf.mxu0
      %v842 = vadd.f32 %v801, %v841
      %v843 = vpop.f32.mrf.mxu0
      %v844 = vadd.f32 %v803, %v843
      %v845 = vpop.f32.mrf.mxu0
      %v846 = vpop.f32.mrf.mxu0
      %847 = vdwg.mxu0
      %v850 = vunpack.c.l.b16 %v271
      %v851 = vunpack.c.h.b16 %v271
      %v852 = vunpack.c.l.b16 %v272
      %v853 = vunpack.c.h.b16 %v272
      %v854 = vpack.c.b16 %v850, %v850
      %v855 = vpack.c.b16 %v851, %v851
      %v856 = vpack.c.b16 %v852, %v852
      %v857 = vpack.c.b16 %v853, %v853
      %v926 = vunpack.c.l.b16 %v273
      %v927 = vunpack.c.h.b16 %v273
      %v928 = vunpack.c.l.b16 %v274
      %v929 = vunpack.c.h.b16 %v274
      %v930 = vunpack.c.l.b16 %v275
      %v931 = vunpack.c.h.b16 %v275
      %v932 = vunpack.c.l.b16 %v276
      %v933 = vunpack.c.h.b16 %v276
      %v934 = vunpack.c.l.b16 %v277
      %v935 = vunpack.c.h.b16 %v277
      %v936 = vunpack.c.l.b16 %v278
      %v937 = vunpack.c.h.b16 %v278
      %v938 = vunpack.c.l.b16 %v279
      %v939 = vunpack.c.h.b16 %v279
      %v940 = vunpack.c.l.b16 %v280
      %v941 = vunpack.c.h.b16 %v280
      %v942 = vunpack.c.l.b16 %v281
      %v943 = vunpack.c.h.b16 %v281
      %v944 = vunpack.c.l.b16 %v282
      %v945 = vunpack.c.h.b16 %v282
      %v946 = vunpack.c.l.b16 %v283
      %v947 = vunpack.c.h.b16 %v283
      %v948 = vunpack.c.l.b16 %v284
      %v949 = vunpack.c.h.b16 %v284
      %v950 = vunpack.c.l.b16 %v285
      %v951 = vunpack.c.h.b16 %v285
      %v952 = vunpack.c.l.b16 %v286
      %v953 = vunpack.c.h.b16 %v286
      %v954 = vunpack.c.l.b16 %v287
      %v955 = vunpack.c.h.b16 %v287
      %v956 = vunpack.c.l.b16 %v288
      %v957 = vunpack.c.h.b16 %v288
      %v958 = vunpack.c.l.b16 %v289
      %v959 = vunpack.c.h.b16 %v289
      %v960 = vunpack.c.l.b16 %v290
      %v961 = vunpack.c.h.b16 %v290
      %v962 = vunpack.c.l.b16 %v291
      %v963 = vunpack.c.h.b16 %v291
      %v964 = vunpack.c.l.b16 %v292
      %v965 = vunpack.c.h.b16 %v292
      %v966 = vunpack.c.l.b16 %v293
      %v967 = vunpack.c.h.b16 %v293
      %v968 = vunpack.c.l.b16 %v294
      %v969 = vunpack.c.h.b16 %v294
      %v970 = vunpack.c.l.b16 %v295
      %v971 = vunpack.c.h.b16 %v295
      %v972 = vunpack.c.l.b16 %v296
      %v973 = vunpack.c.h.b16 %v296
      %v974 = vunpack.c.l.b16 %v297
      %v975 = vunpack.c.h.b16 %v297
      %v976 = vunpack.c.l.b16 %v298
      %v977 = vunpack.c.h.b16 %v298
      %v978 = vunpack.c.l.b16 %v299
      %v979 = vunpack.c.h.b16 %v299
      %v980 = vunpack.c.l.b16 %v300
      %v981 = vunpack.c.h.b16 %v300
      %v982 = vunpack.c.l.b16 %v301
      %v983 = vunpack.c.h.b16 %v301
      %v984 = vunpack.c.l.b16 %v302
      %v985 = vunpack.c.h.b16 %v302
      %v986 = vunpack.c.l.b16 %v303
      %v987 = vunpack.c.h.b16 %v303
      %v988 = vunpack.c.l.b16 %v304
      %v989 = vunpack.c.h.b16 %v304
      %v990 = vunpack.c.l.b16 %v305
      %v991 = vunpack.c.h.b16 %v305
      %v992 = vunpack.c.l.b16 %v306
      %v993 = vunpack.c.h.b16 %v306
      %v994 = vunpack.c.l.b16 %v307
      %v995 = vunpack.c.h.b16 %v307
      %v996 = vunpack.c.l.b16 %v308
      %v997 = vunpack.c.h.b16 %v308
      %v998 = vunpack.c.l.b16 %v309
      %v999 = vunpack.c.h.b16 %v309
      %v1000 = vunpack.c.l.b16 %v310
      %v1001 = vunpack.c.h.b16 %v310
      %v1002 = vunpack.c.l.b16 %v311
      %v1003 = vunpack.c.h.b16 %v311
      %v1004 = vunpack.c.l.b16 %v312
      %v1005 = vunpack.c.h.b16 %v312
      %v1006 = vunpack.c.l.b16 %v313
      %v1007 = vunpack.c.h.b16 %v313
      %v1008 = vunpack.c.l.b16 %v314
      %v1009 = vunpack.c.h.b16 %v314
      %v1010 = vunpack.c.l.b16 %v315
      %v1011 = vunpack.c.h.b16 %v315
      %v1012 = vunpack.c.l.b16 %v316
      %v1013 = vunpack.c.h.b16 %v316
      %v1014 = vunpack.c.l.b16 %v317
      %v1015 = vunpack.c.h.b16 %v317
      %v1016 = vunpack.c.l.b16 %v318
      %v1017 = vunpack.c.h.b16 %v318
      %v1018 = vunpack.c.l.b16 %v319
      %v1019 = vunpack.c.h.b16 %v319
      %v1020 = vunpack.c.l.b16 %v320
      %v1021 = vunpack.c.h.b16 %v320
      %v1022 = vunpack.c.l.b16 %v321
      %v1023 = vunpack.c.h.b16 %v321
      %v1024 = vunpack.c.l.b16 %v322
      %v1025 = vunpack.c.h.b16 %v322
      %v1026 = vunpack.c.l.b16 %v323
      %v1027 = vunpack.c.h.b16 %v323
      %v1028 = vunpack.c.l.b16 %v324
      %v1029 = vunpack.c.h.b16 %v324
      %v1030 = vunpack.c.l.b16 %v325
      %v1031 = vunpack.c.h.b16 %v325
      %v1032 = vunpack.c.l.b16 %v326
      %v1033 = vunpack.c.h.b16 %v326
      %v1034 = vunpack.c.l.b16 %v327
      %v1035 = vunpack.c.h.b16 %v327
      %v1036 = vunpack.c.l.b16 %v328
      %v1037 = vunpack.c.h.b16 %v328
      %v1038 = vunpack.c.l.b16 %v329
      %v1039 = vunpack.c.h.b16 %v329
      %v1040 = vunpack.c.l.b16 %v330
      %v1041 = vunpack.c.h.b16 %v330
      %v1042 = vunpack.c.l.b16 %v331
      %v1043 = vunpack.c.h.b16 %v331
      %v1044 = vunpack.c.l.b16 %v332
      %v1045 = vunpack.c.h.b16 %v332
      %v1046 = vunpack.c.l.b16 %v333
      %v1047 = vunpack.c.h.b16 %v333
      %v1048 = vunpack.c.l.b16 %v334
      %v1049 = vunpack.c.h.b16 %v334
      %v1050 = vunpack.c.l.b16 %v335
      %v1051 = vunpack.c.h.b16 %v335
      %v1052 = vunpack.c.l.b16 %v336
      %v1053 = vunpack.c.h.b16 %v336
      %v1054 = vpack.c.b16 %v928, %v926
      %v1055 = vpack.c.b16 %v929, %v927
      %v1056 = vpack.c.b16 %v932, %v930
      %v1057 = vpack.c.b16 %v933, %v931
      %v1058 = vpack.c.b16 %v936, %v934
      %v1059 = vpack.c.b16 %v937, %v935
      %v1060 = vpack.c.b16 %v940, %v938
      %v1061 = vpack.c.b16 %v941, %v939
      %v1062 = vpack.c.b16 %v944, %v942
      %v1063 = vpack.c.b16 %v945, %v943
      %v1064 = vpack.c.b16 %v948, %v946
      %v1065 = vpack.c.b16 %v949, %v947
      %v1066 = vpack.c.b16 %v952, %v950
      %v1067 = vpack.c.b16 %v953, %v951
      %v1068 = vpack.c.b16 %v956, %v954
      %v1069 = vpack.c.b16 %v957, %v955
      %v1070 = vpack.c.b16 %v960, %v958
      %v1071 = vpack.c.b16 %v961, %v959
      %v1072 = vpack.c.b16 %v964, %v962
      %v1073 = vpack.c.b16 %v965, %v963
      %v1074 = vpack.c.b16 %v968, %v966
      %v1075 = vpack.c.b16 %v969, %v967
      %v1076 = vpack.c.b16 %v972, %v970
      %v1077 = vpack.c.b16 %v973, %v971
      %v1078 = vpack.c.b16 %v976, %v974
      %v1079 = vpack.c.b16 %v977, %v975
      %v1080 = vpack.c.b16 %v980, %v978
      %v1081 = vpack.c.b16 %v981, %v979
      %v1082 = vpack.c.b16 %v984, %v982
      %v1083 = vpack.c.b16 %v985, %v983
      %v1084 = vpack.c.b16 %v988, %v986
      %v1085 = vpack.c.b16 %v989, %v987
      %v1086 = vpack.c.b16 %v992, %v990
      %v1087 = vpack.c.b16 %v993, %v991
      %v1088 = vpack.c.b16 %v996, %v994
      %v1089 = vpack.c.b16 %v997, %v995
      %v1090 = vpack.c.b16 %v1000, %v998
      %v1091 = vpack.c.b16 %v1001, %v999
      %v1092 = vpack.c.b16 %v1004, %v1002
      %v1093 = vpack.c.b16 %v1005, %v1003
      %v1094 = vpack.c.b16 %v1008, %v1006
      %v1095 = vpack.c.b16 %v1009, %v1007
      %v1096 = vpack.c.b16 %v1012, %v1010
      %v1097 = vpack.c.b16 %v1013, %v1011
      %v1098 = vpack.c.b16 %v1016, %v1014
      %v1099 = vpack.c.b16 %v1017, %v1015
      %v1100 = vpack.c.b16 %v1020, %v1018
      %v1101 = vpack.c.b16 %v1021, %v1019
      %v1102 = vpack.c.b16 %v1024, %v1022
      %v1103 = vpack.c.b16 %v1025, %v1023
      %v1104 = vpack.c.b16 %v1028, %v1026
      %v1105 = vpack.c.b16 %v1029, %v1027
      %v1106 = vpack.c.b16 %v1032, %v1030
      %v1107 = vpack.c.b16 %v1033, %v1031
      %v1108 = vpack.c.b16 %v1036, %v1034
      %v1109 = vpack.c.b16 %v1037, %v1035
      %v1110 = vpack.c.b16 %v1040, %v1038
      %v1111 = vpack.c.b16 %v1041, %v1039
      %v1112 = vpack.c.b16 %v1044, %v1042
      %v1113 = vpack.c.b16 %v1045, %v1043
      %v1114 = vpack.c.b16 %v1048, %v1046
      %v1115 = vpack.c.b16 %v1049, %v1047
      %v1116 = vpack.c.b16 %v1052, %v1050
      %v1117 = vpack.c.b16 %v1053, %v1051
      %1182 = vmatprep.subr.bf16.mxu0 %v1069
      %1183 = vmatpush1.bf16.msra.mxu0 %v1068
      %1184 = vmatprep.subr.bf16.mxu0 %v1067
      %1185 = vmatpush1.bf16.msra.mxu0 %v1066
      %1186 = vmatprep.subr.bf16.mxu0 %v1065
      %1187 = vmatpush1.bf16.msra.mxu0 %v1064
      %1188 = vmatprep.subr.bf16.mxu0 %v1063
      %1189 = vmatpush1.bf16.msra.mxu0 %v1062
      %1190 = vmatprep.subr.bf16.mxu0 %v1061
      %1191 = vmatpush1.bf16.msra.mxu0 %v1060
      %1192 = vmatprep.subr.bf16.mxu0 %v1059
      %1193 = vmatpush1.bf16.msra.mxu0 %v1058
      %1194 = vmatprep.subr.bf16.mxu0 %v1057
      %1195 = vmatpush1.bf16.msra.mxu0 %v1056
      %1196 = vmatprep.subr.bf16.mxu0 %v1055
      %1197 = vmatpush1.bf16.msra.mxu0 %v1054
      %1198 = vmatprep.subr.bf16.mxu0 %v1085
      %1199 = vmatpush2.bf16.msra.mxu0 %v1084
      %1200 = vmatprep.subr.bf16.mxu0 %v1083
      %1201 = vmatpush2.bf16.msra.mxu0 %v1082
      %1202 = vmatprep.subr.bf16.mxu0 %v1081
      %1203 = vmatpush2.bf16.msra.mxu0 %v1080
      %1204 = vmatprep.subr.bf16.mxu0 %v1079
      %1205 = vmatpush2.bf16.msra.mxu0 %v1078
      %1206 = vmatprep.subr.bf16.mxu0 %v1077
      %1207 = vmatpush2.bf16.msra.mxu0 %v1076
      %1208 = vmatprep.subr.bf16.mxu0 %v1075
      %1209 = vmatpush2.bf16.msra.mxu0 %v1074
      %1210 = vmatprep.subr.bf16.mxu0 %v1073
      %1211 = vmatpush2.bf16.msra.mxu0 %v1072
      %1212 = vmatprep.subr.bf16.mxu0 %v1071
      %1213 = vmatpush2.bf16.msra.mxu0 %v1070
      %1214 = vmatprep.mubr.bf16.mxu0 %v855
      %1215 = vmatmul.mubr.bf16.gmra.mxu0 %v854
      %v1216 = vpop.f32.mrf.mxu0
      %v1217 = vadd.f32 %v842, %v1216
      %v1218 = vpop.f32.mrf.mxu0
      %v1219 = vadd.f32 %v844, %v1218
      %v1220 = vpop.f32.mrf.mxu0
      %v1221 = vpop.f32.mrf.mxu0
      %1222 = vdwg.mxu0
      %1223 = vmatprep.subr.bf16.mxu0 %v1101
      %1224 = vmatpush1.bf16.msra.mxu0 %v1100
      %1225 = vmatprep.subr.bf16.mxu0 %v1099
      %1226 = vmatpush1.bf16.msra.mxu0 %v1098
      %1227 = vmatprep.subr.bf16.mxu0 %v1097
      %1228 = vmatpush1.bf16.msra.mxu0 %v1096
      %1229 = vmatprep.subr.bf16.mxu0 %v1095
      %1230 = vmatpush1.bf16.msra.mxu0 %v1094
      %1231 = vmatprep.subr.bf16.mxu0 %v1093
      %1232 = vmatpush1.bf16.msra.mxu0 %v1092
      %1233 = vmatprep.subr.bf16.mxu0 %v1091
      %1234 = vmatpush1.bf16.msra.mxu0 %v1090
      %1235 = vmatprep.subr.bf16.mxu0 %v1089
      %1236 = vmatpush1.bf16.msra.mxu0 %v1088
      %1237 = vmatprep.subr.bf16.mxu0 %v1087
      %1238 = vmatpush1.bf16.msra.mxu0 %v1086
      %1239 = vmatprep.subr.bf16.mxu0 %v1117
      %1240 = vmatpush2.bf16.msra.mxu0 %v1116
      %1241 = vmatprep.subr.bf16.mxu0 %v1115
      %1242 = vmatpush2.bf16.msra.mxu0 %v1114
      %1243 = vmatprep.subr.bf16.mxu0 %v1113
      %1244 = vmatpush2.bf16.msra.mxu0 %v1112
      %1245 = vmatprep.subr.bf16.mxu0 %v1111
      %1246 = vmatpush2.bf16.msra.mxu0 %v1110
      %1247 = vmatprep.subr.bf16.mxu0 %v1109
      %1248 = vmatpush2.bf16.msra.mxu0 %v1108
      %1249 = vmatprep.subr.bf16.mxu0 %v1107
      %1250 = vmatpush2.bf16.msra.mxu0 %v1106
      %1251 = vmatprep.subr.bf16.mxu0 %v1105
      %1252 = vmatpush2.bf16.msra.mxu0 %v1104
      %1253 = vmatprep.subr.bf16.mxu0 %v1103
      %1254 = vmatpush2.bf16.msra.mxu0 %v1102
      %1255 = vmatprep.mubr.bf16.mxu0 %v857
      %1256 = vmatmul.mubr.bf16.gmra.mxu0 %v856
      %v1257 = vpop.f32.mrf.mxu0
      %v1258 = vadd.f32 %v1217, %v1257
      %v1259 = vpop.f32.mrf.mxu0
      %v1260 = vadd.f32 %v1219, %v1259
      %v1261 = vpop.f32.mrf.mxu0
      %v1262 = vpop.f32.mrf.mxu0
      %1263 = vdwg.mxu0
      %v1264 = vld [vmem:[%s258] sm:$0x22]
      %v1265 = vld [vmem:[%s258 + $0x8] sm:$0x22]
      %s1266 = scalar_lea.vmem %s1, 1024
      %v1267 = vld [vmem:[%s1266] sm:$0xff]
      %v1268 = vld [vmem:[%s1266 + $0x8] sm:$0xff]
      %v1269 = vld [vmem:[%s1266 + $0x10] sm:$0xff]
      %v1270 = vld [vmem:[%s1266 + $0x18] sm:$0xff]
      %v1271 = vld [vmem:[%s1266 + $0x20] sm:$0xff]
      %v1272 = vld [vmem:[%s1266 + $0x28] sm:$0xff]
      %v1273 = vld [vmem:[%s1266 + $0x30] sm:$0xff]
      %v1274 = vld [vmem:[%s1266 + $0x38] sm:$0xff]
      %v1275 = vld [vmem:[%s1266 + $0x40] sm:$0xff]
      %v1276 = vld [vmem:[%s1266 + $0x48] sm:$0xff]
      %v1277 = vld [vmem:[%s1266 + $0x50] sm:$0xff]
      %v1278 = vld [vmem:[%s1266 + $0x58] sm:$0xff]
      %v1279 = vld [vmem:[%s1266 + $0x60] sm:$0xff]
      %v1280 = vld [vmem:[%s1266 + $0x68] sm:$0xff]
      %v1281 = vld [vmem:[%s1266 + $0x70] sm:$0xff]
      %v1282 = vld [vmem:[%s1266 + $0x78] sm:$0xff]
      %v1283 = vld [vmem:[%s1266 + $0x80] sm:$0xff]
      %v1284 = vld [vmem:[%s1266 + $0x88] sm:$0xff]
      %v1285 = vld [vmem:[%s1266 + $0x90] sm:$0xff]
      %v1286 = vld [vmem:[%s1266 + $0x98] sm:$0xff]
      %v1287 = vld [vmem:[%s1266 + $0xa0] sm:$0xff]
      %v1288 = vld [vmem:[%s1266 + $0xa8] sm:$0xff]
      %v1289 = vld [vmem:[%s1266 + $0xb0] sm:$0xff]
      %v1290 = vld [vmem:[%s1266 + $0xb8] sm:$0xff]
      %v1291 = vld [vmem:[%s1266 + $0xc0] sm:$0xff]
      %v1292 = vld [vmem:[%s1266 + $0xc8] sm:$0xff]
      %v1293 = vld [vmem:[%s1266 + $0xd0] sm:$0xff]
      %v1294 = vld [vmem:[%s1266 + $0xd8] sm:$0xff]
      %v1295 = vld [vmem:[%s1266 + $0xe0] sm:$0xff]
      %v1296 = vld [vmem:[%s1266 + $0xe8] sm:$0xff]
      %v1297 = vld [vmem:[%s1266 + $0xf0] sm:$0xff]
      %v1298 = vld [vmem:[%s1266 + $0xf8] sm:$0xff]
      %v1299 = vld [vmem:[%s1266 + $0x100] sm:$0xff]
      %v1300 = vld [vmem:[%s1266 + $0x108] sm:$0xff]
      %v1301 = vld [vmem:[%s1266 + $0x110] sm:$0xff]
      %v1302 = vld [vmem:[%s1266 + $0x118] sm:$0xff]
      %v1303 = vld [vmem:[%s1266 + $0x120] sm:$0xff]
      %v1304 = vld [vmem:[%s1266 + $0x128] sm:$0xff]
      %v1305 = vld [vmem:[%s1266 + $0x130] sm:$0xff]
      %v1306 = vld [vmem:[%s1266 + $0x138] sm:$0xff]
      %v1307 = vld [vmem:[%s1266 + $0x140] sm:$0xff]
      %v1308 = vld [vmem:[%s1266 + $0x148] sm:$0xff]
      %v1309 = vld [vmem:[%s1266 + $0x150] sm:$0xff]
      %v1310 = vld [vmem:[%s1266 + $0x158] sm:$0xff]
      %v1311 = vld [vmem:[%s1266 + $0x160] sm:$0xff]
      %v1312 = vld [vmem:[%s1266 + $0x168] sm:$0xff]
      %v1313 = vld [vmem:[%s1266 + $0x170] sm:$0xff]
      %v1314 = vld [vmem:[%s1266 + $0x178] sm:$0xff]
      %v1315 = vld [vmem:[%s1266 + $0x180] sm:$0xff]
      %v1316 = vld [vmem:[%s1266 + $0x188] sm:$0xff]
      %v1317 = vld [vmem:[%s1266 + $0x190] sm:$0xff]
      %v1318 = vld [vmem:[%s1266 + $0x198] sm:$0xff]
      %v1319 = vld [vmem:[%s1266 + $0x1a0] sm:$0xff]
      %v1320 = vld [vmem:[%s1266 + $0x1a8] sm:$0xff]
      %v1321 = vld [vmem:[%s1266 + $0x1b0] sm:$0xff]
      %v1322 = vld [vmem:[%s1266 + $0x1b8] sm:$0xff]
      %v1323 = vld [vmem:[%s1266 + $0x1c0] sm:$0xff]
      %v1324 = vld [vmem:[%s1266 + $0x1c8] sm:$0xff]
      %v1325 = vld [vmem:[%s1266 + $0x1d0] sm:$0xff]
      %v1326 = vld [vmem:[%s1266 + $0x1d8] sm:$0xff]
      %v1327 = vld [vmem:[%s1266 + $0x1e0] sm:$0xff]
      %v1328 = vld [vmem:[%s1266 + $0x1e8] sm:$0xff]
      %v1329 = vld [vmem:[%s1266 + $0x1f0] sm:$0xff]
      %v1330 = vld [vmem:[%s1266 + $0x1f8] sm:$0xff]
      %v1333 = vunpack.c.l.b16 %v1264
      %v1334 = vunpack.c.h.b16 %v1264
      %v1335 = vunpack.c.l.b16 %v1265
      %v1336 = vunpack.c.h.b16 %v1265
      %v1337 = vpack.c.b16 %v1333, %v1333
      %v1338 = vpack.c.b16 %v1334, %v1334
      %v1339 = vpack.c.b16 %v1335, %v1335
      %v1340 = vpack.c.b16 %v1336, %v1336
      %v1341 = vrot.slane %v1337, 1
      %v1342 = vrot.slane %v1338, 1
      %v1343 = vrot.slane %v1339, 1
      %v1344 = vrot.slane %v1340, 1
      %v1413 = vunpack.c.l.b16 %v1267
      %v1414 = vunpack.c.h.b16 %v1267
      %v1415 = vunpack.c.l.b16 %v1268
      %v1416 = vunpack.c.h.b16 %v1268
      %v1417 = vunpack.c.l.b16 %v1269
      %v1418 = vunpack.c.h.b16 %v1269
      %v1419 = vunpack.c.l.b16 %v1270
      %v1420 = vunpack.c.h.b16 %v1270
      %v1421 = vunpack.c.l.b16 %v1271
      %v1422 = vunpack.c.h.b16 %v1271
      %v1423 = vunpack.c.l.b16 %v1272
      %v1424 = vunpack.c.h.b16 %v1272
      %v1425 = vunpack.c.l.b16 %v1273
      %v1426 = vunpack.c.h.b16 %v1273
      %v1427 = vunpack.c.l.b16 %v1274
      %v1428 = vunpack.c.h.b16 %v1274
      %v1429 = vunpack.c.l.b16 %v1275
      %v1430 = vunpack.c.h.b16 %v1275
      %v1431 = vunpack.c.l.b16 %v1276
      %v1432 = vunpack.c.h.b16 %v1276
      %v1433 = vunpack.c.l.b16 %v1277
      %v1434 = vunpack.c.h.b16 %v1277
      %v1435 = vunpack.c.l.b16 %v1278
      %v1436 = vunpack.c.h.b16 %v1278
      %v1437 = vunpack.c.l.b16 %v1279
      %v1438 = vunpack.c.h.b16 %v1279
      %v1439 = vunpack.c.l.b16 %v1280
      %v1440 = vunpack.c.h.b16 %v1280
      %v1441 = vunpack.c.l.b16 %v1281
      %v1442 = vunpack.c.h.b16 %v1281
      %v1443 = vunpack.c.l.b16 %v1282
      %v1444 = vunpack.c.h.b16 %v1282
      %v1445 = vunpack.c.l.b16 %v1283
      %v1446 = vunpack.c.h.b16 %v1283
      %v1447 = vunpack.c.l.b16 %v1284
      %v1448 = vunpack.c.h.b16 %v1284
      %v1449 = vunpack.c.l.b16 %v1285
      %v1450 = vunpack.c.h.b16 %v1285
      %v1451 = vunpack.c.l.b16 %v1286
      %v1452 = vunpack.c.h.b16 %v1286
      %v1453 = vunpack.c.l.b16 %v1287
      %v1454 = vunpack.c.h.b16 %v1287
      %v1455 = vunpack.c.l.b16 %v1288
      %v1456 = vunpack.c.h.b16 %v1288
      %v1457 = vunpack.c.l.b16 %v1289
      %v1458 = vunpack.c.h.b16 %v1289
      %v1459 = vunpack.c.l.b16 %v1290
      %v1460 = vunpack.c.h.b16 %v1290
      %v1461 = vunpack.c.l.b16 %v1291
      %v1462 = vunpack.c.h.b16 %v1291
      %v1463 = vunpack.c.l.b16 %v1292
      %v1464 = vunpack.c.h.b16 %v1292
      %v1465 = vunpack.c.l.b16 %v1293
      %v1466 = vunpack.c.h.b16 %v1293
      %v1467 = vunpack.c.l.b16 %v1294
      %v1468 = vunpack.c.h.b16 %v1294
      %v1469 = vunpack.c.l.b16 %v1295
      %v1470 = vunpack.c.h.b16 %v1295
      %v1471 = vunpack.c.l.b16 %v1296
      %v1472 = vunpack.c.h.b16 %v1296
      %v1473 = vunpack.c.l.b16 %v1297
      %v1474 = vunpack.c.h.b16 %v1297
      %v1475 = vunpack.c.l.b16 %v1298
      %v1476 = vunpack.c.h.b16 %v1298
      %v1477 = vunpack.c.l.b16 %v1299
      %v1478 = vunpack.c.h.b16 %v1299
      %v1479 = vunpack.c.l.b16 %v1300
      %v1480 = vunpack.c.h.b16 %v1300
      %v1481 = vunpack.c.l.b16 %v1301
      %v1482 = vunpack.c.h.b16 %v1301
      %v1483 = vunpack.c.l.b16 %v1302
      %v1484 = vunpack.c.h.b16 %v1302
      %v1485 = vunpack.c.l.b16 %v1303
      %v1486 = vunpack.c.h.b16 %v1303
      %v1487 = vunpack.c.l.b16 %v1304
      %v1488 = vunpack.c.h.b16 %v1304
      %v1489 = vunpack.c.l.b16 %v1305
      %v1490 = vunpack.c.h.b16 %v1305
      %v1491 = vunpack.c.l.b16 %v1306
      %v1492 = vunpack.c.h.b16 %v1306
      %v1493 = vunpack.c.l.b16 %v1307
      %v1494 = vunpack.c.h.b16 %v1307
      %v1495 = vunpack.c.l.b16 %v1308
      %v1496 = vunpack.c.h.b16 %v1308
      %v1497 = vunpack.c.l.b16 %v1309
      %v1498 = vunpack.c.h.b16 %v1309
      %v1499 = vunpack.c.l.b16 %v1310
      %v1500 = vunpack.c.h.b16 %v1310
      %v1501 = vunpack.c.l.b16 %v1311
      %v1502 = vunpack.c.h.b16 %v1311
      %v1503 = vunpack.c.l.b16 %v1312
      %v1504 = vunpack.c.h.b16 %v1312
      %v1505 = vunpack.c.l.b16 %v1313
      %v1506 = vunpack.c.h.b16 %v1313
      %v1507 = vunpack.c.l.b16 %v1314
      %v1508 = vunpack.c.h.b16 %v1314
      %v1509 = vunpack.c.l.b16 %v1315
      %v1510 = vunpack.c.h.b16 %v1315
      %v1511 = vunpack.c.l.b16 %v1316
      %v1512 = vunpack.c.h.b16 %v1316
      %v1513 = vunpack.c.l.b16 %v1317
      %v1514 = vunpack.c.h.b16 %v1317
      %v1515 = vunpack.c.l.b16 %v1318
      %v1516 = vunpack.c.h.b16 %v1318
      %v1517 = vunpack.c.l.b16 %v1319
      %v1518 = vunpack.c.h.b16 %v1319
      %v1519 = vunpack.c.l.b16 %v1320
      %v1520 = vunpack.c.h.b16 %v1320
      %v1521 = vunpack.c.l.b16 %v1321
      %v1522 = vunpack.c.h.b16 %v1321
      %v1523 = vunpack.c.l.b16 %v1322
      %v1524 = vunpack.c.h.b16 %v1322
      %v1525 = vunpack.c.l.b16 %v1323
      %v1526 = vunpack.c.h.b16 %v1323
      %v1527 = vunpack.c.l.b16 %v1324
      %v1528 = vunpack.c.h.b16 %v1324
      %v1529 = vunpack.c.l.b16 %v1325
      %v1530 = vunpack.c.h.b16 %v1325
      %v1531 = vunpack.c.l.b16 %v1326
      %v1532 = vunpack.c.h.b16 %v1326
      %v1533 = vunpack.c.l.b16 %v1327
      %v1534 = vunpack.c.h.b16 %v1327
      %v1535 = vunpack.c.l.b16 %v1328
      %v1536 = vunpack.c.h.b16 %v1328
      %v1537 = vunpack.c.l.b16 %v1329
      %v1538 = vunpack.c.h.b16 %v1329
      %v1539 = vunpack.c.l.b16 %v1330
      %v1540 = vunpack.c.h.b16 %v1330
      %v1541 = vpack.c.b16 %v1415, %v1413
      %v1542 = vpack.c.b16 %v1416, %v1414
      %v1543 = vpack.c.b16 %v1419, %v1417
      %v1544 = vpack.c.b16 %v1420, %v1418
      %v1545 = vpack.c.b16 %v1423, %v1421
      %v1546 = vpack.c.b16 %v1424, %v1422
      %v1547 = vpack.c.b16 %v1427, %v1425
      %v1548 = vpack.c.b16 %v1428, %v1426
      %v1549 = vpack.c.b16 %v1431, %v1429
      %v1550 = vpack.c.b16 %v1432, %v1430
      %v1551 = vpack.c.b16 %v1435, %v1433
      %v1552 = vpack.c.b16 %v1436, %v1434
      %v1553 = vpack.c.b16 %v1439, %v1437
      %v1554 = vpack.c.b16 %v1440, %v1438
      %v1555 = vpack.c.b16 %v1443, %v1441
      %v1556 = vpack.c.b16 %v1444, %v1442
      %v1557 = vpack.c.b16 %v1447, %v1445
      %v1558 = vpack.c.b16 %v1448, %v1446
      %v1559 = vpack.c.b16 %v1451, %v1449
      %v1560 = vpack.c.b16 %v1452, %v1450
      %v1561 = vpack.c.b16 %v1455, %v1453
      %v1562 = vpack.c.b16 %v1456, %v1454
      %v1563 = vpack.c.b16 %v1459, %v1457
      %v1564 = vpack.c.b16 %v1460, %v1458
      %v1565 = vpack.c.b16 %v1463, %v1461
      %v1566 = vpack.c.b16 %v1464, %v1462
      %v1567 = vpack.c.b16 %v1467, %v1465
      %v1568 = vpack.c.b16 %v1468, %v1466
      %v1569 = vpack.c.b16 %v1471, %v1469
      %v1570 = vpack.c.b16 %v1472, %v1470
      %v1571 = vpack.c.b16 %v1475, %v1473
      %v1572 = vpack.c.b16 %v1476, %v1474
      %v1573 = vpack.c.b16 %v1479, %v1477
      %v1574 = vpack.c.b16 %v1480, %v1478
      %v1575 = vpack.c.b16 %v1483, %v1481
      %v1576 = vpack.c.b16 %v1484, %v1482
      %v1577 = vpack.c.b16 %v1487, %v1485
      %v1578 = vpack.c.b16 %v1488, %v1486
      %v1579 = vpack.c.b16 %v1491, %v1489
      %v1580 = vpack.c.b16 %v1492, %v1490
      %v1581 = vpack.c.b16 %v1495, %v1493
      %v1582 = vpack.c.b16 %v1496, %v1494
      %v1583 = vpack.c.b16 %v1499, %v1497
      %v1584 = vpack.c.b16 %v1500, %v1498
      %v1585 = vpack.c.b16 %v1503, %v1501
      %v1586 = vpack.c.b16 %v1504, %v1502
      %v1587 = vpack.c.b16 %v1507, %v1505
      %v1588 = vpack.c.b16 %v1508, %v1506
      %v1589 = vpack.c.b16 %v1511, %v1509
      %v1590 = vpack.c.b16 %v1512, %v1510
      %v1591 = vpack.c.b16 %v1515, %v1513
      %v1592 = vpack.c.b16 %v1516, %v1514
      %v1593 = vpack.c.b16 %v1519, %v1517
      %v1594 = vpack.c.b16 %v1520, %v1518
      %v1595 = vpack.c.b16 %v1523, %v1521
      %v1596 = vpack.c.b16 %v1524, %v1522
      %v1597 = vpack.c.b16 %v1527, %v1525
      %v1598 = vpack.c.b16 %v1528, %v1526
      %v1599 = vpack.c.b16 %v1531, %v1529
      %v1600 = vpack.c.b16 %v1532, %v1530
      %v1601 = vpack.c.b16 %v1535, %v1533
      %v1602 = vpack.c.b16 %v1536, %v1534
      %v1603 = vpack.c.b16 %v1539, %v1537
      %v1604 = vpack.c.b16 %v1540, %v1538
      %1669 = vmatprep.subr.bf16.mxu0 %v1556
      %1670 = vmatpush1.bf16.msra.mxu0 %v1555
      %1671 = vmatprep.subr.bf16.mxu0 %v1554
      %1672 = vmatpush1.bf16.msra.mxu0 %v1553
      %1673 = vmatprep.subr.bf16.mxu0 %v1552
      %1674 = vmatpush1.bf16.msra.mxu0 %v1551
      %1675 = vmatprep.subr.bf16.mxu0 %v1550
      %1676 = vmatpush1.bf16.msra.mxu0 %v1549
      %1677 = vmatprep.subr.bf16.mxu0 %v1548
      %1678 = vmatpush1.bf16.msra.mxu0 %v1547
      %1679 = vmatprep.subr.bf16.mxu0 %v1546
      %1680 = vmatpush1.bf16.msra.mxu0 %v1545
      %1681 = vmatprep.subr.bf16.mxu0 %v1544
      %1682 = vmatpush1.bf16.msra.mxu0 %v1543
      %1683 = vmatprep.subr.bf16.mxu0 %v1542
      %1684 = vmatpush1.bf16.msra.mxu0 %v1541
      %1685 = vmatprep.subr.bf16.mxu0 %v1572
      %1686 = vmatpush2.bf16.msra.mxu0 %v1571
      %1687 = vmatprep.subr.bf16.mxu0 %v1570
      %1688 = vmatpush2.bf16.msra.mxu0 %v1569
      %1689 = vmatprep.subr.bf16.mxu0 %v1568
      %1690 = vmatpush2.bf16.msra.mxu0 %v1567
      %1691 = vmatprep.subr.bf16.mxu0 %v1566
      %1692 = vmatpush2.bf16.msra.mxu0 %v1565
      %1693 = vmatprep.subr.bf16.mxu0 %v1564
      %1694 = vmatpush2.bf16.msra.mxu0 %v1563
      %1695 = vmatprep.subr.bf16.mxu0 %v1562
      %1696 = vmatpush2.bf16.msra.mxu0 %v1561
      %1697 = vmatprep.subr.bf16.mxu0 %v1560
      %1698 = vmatpush2.bf16.msra.mxu0 %v1559
      %1699 = vmatprep.subr.bf16.mxu0 %v1558
      %1700 = vmatpush2.bf16.msra.mxu0 %v1557
      %1701 = vmatprep.mubr.bf16.mxu0 %v1342
      %1702 = vmatmul.mubr.bf16.gmra.mxu0 %v1341
      %v1703 = vpop.f32.mrf.mxu0
      %v1704 = vadd.f32 0.0, %v1703
      %v1705 = vpop.f32.mrf.mxu0
      %v1706 = vadd.f32 0.0, %v1705
      %v1707 = vpop.f32.mrf.mxu0
      %v1708 = vpop.f32.mrf.mxu0
      %1709 = vdwg.mxu0
      %1710 = vmatprep.subr.bf16.mxu0 %v1588
      %1711 = vmatpush1.bf16.msra.mxu0 %v1587
      %1712 = vmatprep.subr.bf16.mxu0 %v1586
      %1713 = vmatpush1.bf16.msra.mxu0 %v1585
      %1714 = vmatprep.subr.bf16.mxu0 %v1584
      %1715 = vmatpush1.bf16.msra.mxu0 %v1583
      %1716 = vmatprep.subr.bf16.mxu0 %v1582
      %1717 = vmatpush1.bf16.msra.mxu0 %v1581
      %1718 = vmatprep.subr.bf16.mxu0 %v1580
      %1719 = vmatpush1.bf16.msra.mxu0 %v1579
      %1720 = vmatprep.subr.bf16.mxu0 %v1578
      %1721 = vmatpush1.bf16.msra.mxu0 %v1577
      %1722 = vmatprep.subr.bf16.mxu0 %v1576
      %1723 = vmatpush1.bf16.msra.mxu0 %v1575
      %1724 = vmatprep.subr.bf16.mxu0 %v1574
      %1725 = vmatpush1.bf16.msra.mxu0 %v1573
      %1726 = vmatprep.subr.bf16.mxu0 %v1604
      %1727 = vmatpush2.bf16.msra.mxu0 %v1603
      %1728 = vmatprep.subr.bf16.mxu0 %v1602
      %1729 = vmatpush2.bf16.msra.mxu0 %v1601
      %1730 = vmatprep.subr.bf16.mxu0 %v1600
      %1731 = vmatpush2.bf16.msra.mxu0 %v1599
      %1732 = vmatprep.subr.bf16.mxu0 %v1598
      %1733 = vmatpush2.bf16.msra.mxu0 %v1597
      %1734 = vmatprep.subr.bf16.mxu0 %v1596
      %1735 = vmatpush2.bf16.msra.mxu0 %v1595
      %1736 = vmatprep.subr.bf16.mxu0 %v1594
      %1737 = vmatpush2.bf16.msra.mxu0 %v1593
      %1738 = vmatprep.subr.bf16.mxu0 %v1592
      %1739 = vmatpush2.bf16.msra.mxu0 %v1591
      %1740 = vmatprep.subr.bf16.mxu0 %v1590
      %1741 = vmatpush2.bf16.msra.mxu0 %v1589
      %1742 = vmatprep.mubr.bf16.mxu0 %v1344
      %1743 = vmatmul.mubr.bf16.gmra.mxu0 %v1343
      %v1744 = vpop.f32.mrf.mxu0
      %v1745 = vadd.f32 %v1704, %v1744
      %v1746 = vpop.f32.mrf.mxu0
      %v1747 = vadd.f32 %v1706, %v1746
      %v1748 = vpop.f32.mrf.mxu0
      %v1749 = vpop.f32.mrf.mxu0
      %1750 = vdwg.mxu0
      %v1751 = vadd.f32 %v1258, %v1745
      %v1752 = vadd.f32 %v1260, %v1747
      %v1753 = vld [vmem:[%s258] sm:$0x66]
      %v1754 = vld [vmem:[%s258 + $0x8] sm:$0x66]
      %s1755 = scalar_lea.vmem %s1, 1536
      %v1756 = vld [vmem:[%s1755] sm:$0xff]
      %v1757 = vld [vmem:[%s1755 + $0x8] sm:$0xff]
      %v1758 = vld [vmem:[%s1755 + $0x10] sm:$0xff]
      %v1759 = vld [vmem:[%s1755 + $0x18] sm:$0xff]
      %v1760 = vld [vmem:[%s1755 + $0x20] sm:$0xff]
      %v1761 = vld [vmem:[%s1755 + $0x28] sm:$0xff]
      %v1762 = vld [vmem:[%s1755 + $0x30] sm:$0xff]
      %v1763 = vld [vmem:[%s1755 + $0x38] sm:$0xff]
      %v1764 = vld [vmem:[%s1755 + $0x40] sm:$0xff]
      %v1765 = vld [vmem:[%s1755 + $0x48] sm:$0xff]
      %v1766 = vld [vmem:[%s1755 + $0x50] sm:$0xff]
      %v1767 = vld [vmem:[%s1755 + $0x58] sm:$0xff]
      %v1768 = vld [vmem:[%s1755 + $0x60] sm:$0xff]
      %v1769 = vld [vmem:[%s1755 + $0x68] sm:$0xff]
      %v1770 = vld [vmem:[%s1755 + $0x70] sm:$0xff]
      %v1771 = vld [vmem:[%s1755 + $0x78] sm:$0xff]
      %v1772 = vld [vmem:[%s1755 + $0x80] sm:$0xff]
      %v1773 = vld [vmem:[%s1755 + $0x88] sm:$0xff]
      %v1774 = vld [vmem:[%s1755 + $0x90] sm:$0xff]
      %v1775 = vld [vmem:[%s1755 + $0x98] sm:$0xff]
      %v1776 = vld [vmem:[%s1755 + $0xa0] sm:$0xff]
      %v1777 = vld [vmem:[%s1755 + $0xa8] sm:$0xff]
      %v1778 = vld [vmem:[%s1755 + $0xb0] sm:$0xff]
      %v1779 = vld [vmem:[%s1755 + $0xb8] sm:$0xff]
      %v1780 = vld [vmem:[%s1755 + $0xc0] sm:$0xff]
      %v1781 = vld [vmem:[%s1755 + $0xc8] sm:$0xff]
      %v1782 = vld [vmem:[%s1755 + $0xd0] sm:$0xff]
      %v1783 = vld [vmem:[%s1755 + $0xd8] sm:$0xff]
      %v1784 = vld [vmem:[%s1755 + $0xe0] sm:$0xff]
      %v1785 = vld [vmem:[%s1755 + $0xe8] sm:$0xff]
      %v1786 = vld [vmem:[%s1755 + $0xf0] sm:$0xff]
      %v1787 = vld [vmem:[%s1755 + $0xf8] sm:$0xff]
      %v1788 = vld [vmem:[%s1755 + $0x100] sm:$0xff]
      %v1789 = vld [vmem:[%s1755 + $0x108] sm:$0xff]
      %v1790 = vld [vmem:[%s1755 + $0x110] sm:$0xff]
      %v1791 = vld [vmem:[%s1755 + $0x118] sm:$0xff]
      %v1792 = vld [vmem:[%s1755 + $0x120] sm:$0xff]
      %v1793 = vld [vmem:[%s1755 + $0x128] sm:$0xff]
      %v1794 = vld [vmem:[%s1755 + $0x130] sm:$0xff]
      %v1795 = vld [vmem:[%s1755 + $0x138] sm:$0xff]
      %v1796 = vld [vmem:[%s1755 + $0x140] sm:$0xff]
      %v1797 = vld [vmem:[%s1755 + $0x148] sm:$0xff]
      %v1798 = vld [vmem:[%s1755 + $0x150] sm:$0xff]
      %v1799 = vld [vmem:[%s1755 + $0x158] sm:$0xff]
      %v1800 = vld [vmem:[%s1755 + $0x160] sm:$0xff]
      %v1801 = vld [vmem:[%s1755 + $0x168] sm:$0xff]
      %v1802 = vld [vmem:[%s1755 + $0x170] sm:$0xff]
      %v1803 = vld [vmem:[%s1755 + $0x178] sm:$0xff]
      %v1804 = vld [vmem:[%s1755 + $0x180] sm:$0xff]
      %v1805 = vld [vmem:[%s1755 + $0x188] sm:$0xff]
      %v1806 = vld [vmem:[%s1755 + $0x190] sm:$0xff]
      %v1807 = vld [vmem:[%s1755 + $0x198] sm:$0xff]
      %v1808 = vld [vmem:[%s1755 + $0x1a0] sm:$0xff]
      %v1809 = vld [vmem:[%s1755 + $0x1a8] sm:$0xff]
      %v1810 = vld [vmem:[%s1755 + $0x1b0] sm:$0xff]
      %v1811 = vld [vmem:[%s1755 + $0x1b8] sm:$0xff]
      %v1812 = vld [vmem:[%s1755 + $0x1c0] sm:$0xff]
      %v1813 = vld [vmem:[%s1755 + $0x1c8] sm:$0xff]
      %v1814 = vld [vmem:[%s1755 + $0x1d0] sm:$0xff]
      %v1815 = vld [vmem:[%s1755 + $0x1d8] sm:$0xff]
      %v1816 = vld [vmem:[%s1755 + $0x1e0] sm:$0xff]
      %v1817 = vld [vmem:[%s1755 + $0x1e8] sm:$0xff]
      %v1818 = vld [vmem:[%s1755 + $0x1f0] sm:$0xff]
      %v1819 = vld [vmem:[%s1755 + $0x1f8] sm:$0xff]
      %v1822 = vunpack.c.l.b16 %v1753
      %v1823 = vunpack.c.h.b16 %v1753
      %v1824 = vunpack.c.l.b16 %v1754
      %v1825 = vunpack.c.h.b16 %v1754
      %v1826 = vpack.c.b16 %v1822, %v1822
      %v1827 = vpack.c.b16 %v1823, %v1823
      %v1828 = vpack.c.b16 %v1824, %v1824
      %v1829 = vpack.c.b16 %v1825, %v1825
      %v1831 = vshrl.u32 %v1826, 16
      %v1833 = vrot.slane %v1831, 1
      %v1834 = vshll.u32 %v1826, 16
      %v1836 = vrot.slane %v1834, 2
      %v1837 = vor.u32 %v1833, %v1836
      %v1839 = vshrl.u32 %v1827, 16
      %v1841 = vrot.slane %v1839, 1
      %v1842 = vshll.u32 %v1827, 16
      %v1844 = vrot.slane %v1842, 2
      %v1845 = vor.u32 %v1841, %v1844
      %v1847 = vshrl.u32 %v1828, 16
      %v1849 = vrot.slane %v1847, 1
      %v1850 = vshll.u32 %v1828, 16
      %v1852 = vrot.slane %v1850, 2
      %v1853 = vor.u32 %v1849, %v1852
      %v1855 = vshrl.u32 %v1829, 16
      %v1857 = vrot.slane %v1855, 1
      %v1858 = vshll.u32 %v1829, 16
      %v1860 = vrot.slane %v1858, 2
      %v1861 = vor.u32 %v1857, %v1860
      %v1930 = vunpack.c.l.b16 %v1756
      %v1931 = vunpack.c.h.b16 %v1756
      %v1932 = vunpack.c.l.b16 %v1757
      %v1933 = vunpack.c.h.b16 %v1757
      %v1934 = vunpack.c.l.b16 %v1758
      %v1935 = vunpack.c.h.b16 %v1758
      %v1936 = vunpack.c.l.b16 %v1759
      %v1937 = vunpack.c.h.b16 %v1759
      %v1938 = vunpack.c.l.b16 %v1760
      %v1939 = vunpack.c.h.b16 %v1760
      %v1940 = vunpack.c.l.b16 %v1761
      %v1941 = vunpack.c.h.b16 %v1761
      %v1942 = vunpack.c.l.b16 %v1762
      %v1943 = vunpack.c.h.b16 %v1762
      %v1944 = vunpack.c.l.b16 %v1763
      %v1945 = vunpack.c.h.b16 %v1763
      %v1946 = vunpack.c.l.b16 %v1764
      %v1947 = vunpack.c.h.b16 %v1764
      %v1948 = vunpack.c.l.b16 %v1765
      %v1949 = vunpack.c.h.b16 %v1765
      %v1950 = vunpack.c.l.b16 %v1766
      %v1951 = vunpack.c.h.b16 %v1766
      %v1952 = vunpack.c.l.b16 %v1767
      %v1953 = vunpack.c.h.b16 %v1767
      %v1954 = vunpack.c.l.b16 %v1768
      %v1955 = vunpack.c.h.b16 %v1768
      %v1956 = vunpack.c.l.b16 %v1769
      %v1957 = vunpack.c.h.b16 %v1769
      %v1958 = vunpack.c.l.b16 %v1770
      %v1959 = vunpack.c.h.b16 %v1770
      %v1960 = vunpack.c.l.b16 %v1771
      %v1961 = vunpack.c.h.b16 %v1771
      %v1962 = vunpack.c.l.b16 %v1772
      %v1963 = vunpack.c.h.b16 %v1772
      %v1964 = vunpack.c.l.b16 %v1773
      %v1965 = vunpack.c.h.b16 %v1773
      %v1966 = vunpack.c.l.b16 %v1774
      %v1967 = vunpack.c.h.b16 %v1774
      %v1968 = vunpack.c.l.b16 %v1775
      %v1969 = vunpack.c.h.b16 %v1775
      %v1970 = vunpack.c.l.b16 %v1776
      %v1971 = vunpack.c.h.b16 %v1776
      %v1972 = vunpack.c.l.b16 %v1777
      %v1973 = vunpack.c.h.b16 %v1777
      %v1974 = vunpack.c.l.b16 %v1778
      %v1975 = vunpack.c.h.b16 %v1778
      %v1976 = vunpack.c.l.b16 %v1779
      %v1977 = vunpack.c.h.b16 %v1779
      %v1978 = vunpack.c.l.b16 %v1780
      %v1979 = vunpack.c.h.b16 %v1780
      %v1980 = vunpack.c.l.b16 %v1781
      %v1981 = vunpack.c.h.b16 %v1781
      %v1982 = vunpack.c.l.b16 %v1782
      %v1983 = vunpack.c.h.b16 %v1782
      %v1984 = vunpack.c.l.b16 %v1783
      %v1985 = vunpack.c.h.b16 %v1783
      %v1986 = vunpack.c.l.b16 %v1784
      %v1987 = vunpack.c.h.b16 %v1784
      %v1988 = vunpack.c.l.b16 %v1785
      %v1989 = vunpack.c.h.b16 %v1785
      %v1990 = vunpack.c.l.b16 %v1786
      %v1991 = vunpack.c.h.b16 %v1786
      %v1992 = vunpack.c.l.b16 %v1787
      %v1993 = vunpack.c.h.b16 %v1787
      %v1994 = vunpack.c.l.b16 %v1788
      %v1995 = vunpack.c.h.b16 %v1788
      %v1996 = vunpack.c.l.b16 %v1789
      %v1997 = vunpack.c.h.b16 %v1789
      %v1998 = vunpack.c.l.b16 %v1790
      %v1999 = vunpack.c.h.b16 %v1790
      %v2000 = vunpack.c.l.b16 %v1791
      %v2001 = vunpack.c.h.b16 %v1791
      %v2002 = vunpack.c.l.b16 %v1792
      %v2003 = vunpack.c.h.b16 %v1792
      %v2004 = vunpack.c.l.b16 %v1793
      %v2005 = vunpack.c.h.b16 %v1793
      %v2006 = vunpack.c.l.b16 %v1794
      %v2007 = vunpack.c.h.b16 %v1794
      %v2008 = vunpack.c.l.b16 %v1795
      %v2009 = vunpack.c.h.b16 %v1795
      %v2010 = vunpack.c.l.b16 %v1796
      %v2011 = vunpack.c.h.b16 %v1796
      %v2012 = vunpack.c.l.b16 %v1797
      %v2013 = vunpack.c.h.b16 %v1797
      %v2014 = vunpack.c.l.b16 %v1798
      %v2015 = vunpack.c.h.b16 %v1798
      %v2016 = vunpack.c.l.b16 %v1799
      %v2017 = vunpack.c.h.b16 %v1799
      %v2018 = vunpack.c.l.b16 %v1800
      %v2019 = vunpack.c.h.b16 %v1800
      %v2020 = vunpack.c.l.b16 %v1801
      %v2021 = vunpack.c.h.b16 %v1801
      %v2022 = vunpack.c.l.b16 %v1802
      %v2023 = vunpack.c.h.b16 %v1802
      %v2024 = vunpack.c.l.b16 %v1803
      %v2025 = vunpack.c.h.b16 %v1803
      %v2026 = vunpack.c.l.b16 %v1804
      %v2027 = vunpack.c.h.b16 %v1804
      %v2028 = vunpack.c.l.b16 %v1805
      %v2029 = vunpack.c.h.b16 %v1805
      %v2030 = vunpack.c.l.b16 %v1806
      %v2031 = vunpack.c.h.b16 %v1806
      %v2032 = vunpack.c.l.b16 %v1807
      %v2033 = vunpack.c.h.b16 %v1807
      %v2034 = vunpack.c.l.b16 %v1808
      %v2035 = vunpack.c.h.b16 %v1808
      %v2036 = vunpack.c.l.b16 %v1809
      %v2037 = vunpack.c.h.b16 %v1809
      %v2038 = vunpack.c.l.b16 %v1810
      %v2039 = vunpack.c.h.b16 %v1810
      %v2040 = vunpack.c.l.b16 %v1811
      %v2041 = vunpack.c.h.b16 %v1811
      %v2042 = vunpack.c.l.b16 %v1812
      %v2043 = vunpack.c.h.b16 %v1812
      %v2044 = vunpack.c.l.b16 %v1813
      %v2045 = vunpack.c.h.b16 %v1813
      %v2046 = vunpack.c.l.b16 %v1814
      %v2047 = vunpack.c.h.b16 %v1814
      %v2048 = vunpack.c.l.b16 %v1815
      %v2049 = vunpack.c.h.b16 %v1815
      %v2050 = vunpack.c.l.b16 %v1816
      %v2051 = vunpack.c.h.b16 %v1816
      %v2052 = vunpack.c.l.b16 %v1817
      %v2053 = vunpack.c.h.b16 %v1817
      %v2054 = vunpack.c.l.b16 %v1818
      %v2055 = vunpack.c.h.b16 %v1818
      %v2056 = vunpack.c.l.b16 %v1819
      %v2057 = vunpack.c.h.b16 %v1819
      %v2058 = vpack.c.b16 %v1932, %v1930
      %v2059 = vpack.c.b16 %v1933, %v1931
      %v2060 = vpack.c.b16 %v1936, %v1934
      %v2061 = vpack.c.b16 %v1937, %v1935
      %v2062 = vpack.c.b16 %v1940, %v1938
      %v2063 = vpack.c.b16 %v1941, %v1939
      %v2064 = vpack.c.b16 %v1944, %v1942
      %v2065 = vpack.c.b16 %v1945, %v1943
      %v2066 = vpack.c.b16 %v1948, %v1946
      %v2067 = vpack.c.b16 %v1949, %v1947
      %v2068 = vpack.c.b16 %v1952, %v1950
      %v2069 = vpack.c.b16 %v1953, %v1951
      %v2070 = vpack.c.b16 %v1956, %v1954
      %v2071 = vpack.c.b16 %v1957, %v1955
      %v2072 = vpack.c.b16 %v1960, %v1958
      %v2073 = vpack.c.b16 %v1961, %v1959
      %v2074 = vpack.c.b16 %v1964, %v1962
      %v2075 = vpack.c.b16 %v1965, %v1963
      %v2076 = vpack.c.b16 %v1968, %v1966
      %v2077 = vpack.c.b16 %v1969, %v1967
      %v2078 = vpack.c.b16 %v1972, %v1970
      %v2079 = vpack.c.b16 %v1973, %v1971
      %v2080 = vpack.c.b16 %v1976, %v1974
      %v2081 = vpack.c.b16 %v1977, %v1975
      %v2082 = vpack.c.b16 %v1980, %v1978
      %v2083 = vpack.c.b16 %v1981, %v1979
      %v2084 = vpack.c.b16 %v1984, %v1982
      %v2085 = vpack.c.b16 %v1985, %v1983
      %v2086 = vpack.c.b16 %v1988, %v1986
      %v2087 = vpack.c.b16 %v1989, %v1987
      %v2088 = vpack.c.b16 %v1992, %v1990
      %v2089 = vpack.c.b16 %v1993, %v1991
      %v2090 = vpack.c.b16 %v1996, %v1994
      %v2091 = vpack.c.b16 %v1997, %v1995
      %v2092 = vpack.c.b16 %v2000, %v1998
      %v2093 = vpack.c.b16 %v2001, %v1999
      %v2094 = vpack.c.b16 %v2004, %v2002
      %v2095 = vpack.c.b16 %v2005, %v2003
      %v2096 = vpack.c.b16 %v2008, %v2006
      %v2097 = vpack.c.b16 %v2009, %v2007
      %v2098 = vpack.c.b16 %v2012, %v2010
      %v2099 = vpack.c.b16 %v2013, %v2011
      %v2100 = vpack.c.b16 %v2016, %v2014
      %v2101 = vpack.c.b16 %v2017, %v2015
      %v2102 = vpack.c.b16 %v2020, %v2018
      %v2103 = vpack.c.b16 %v2021, %v2019
      %v2104 = vpack.c.b16 %v2024, %v2022
      %v2105 = vpack.c.b16 %v2025, %v2023
      %v2106 = vpack.c.b16 %v2028, %v2026
      %v2107 = vpack.c.b16 %v2029, %v2027
      %v2108 = vpack.c.b16 %v2032, %v2030
      %v2109 = vpack.c.b16 %v2033, %v2031
      %v2110 = vpack.c.b16 %v2036, %v2034
      %v2111 = vpack.c.b16 %v2037, %v2035
      %v2112 = vpack.c.b16 %v2040, %v2038
      %v2113 = vpack.c.b16 %v2041, %v2039
      %v2114 = vpack.c.b16 %v2044, %v2042
      %v2115 = vpack.c.b16 %v2045, %v2043
      %v2116 = vpack.c.b16 %v2048, %v2046
      %v2117 = vpack.c.b16 %v2049, %v2047
      %v2118 = vpack.c.b16 %v2052, %v2050
      %v2119 = vpack.c.b16 %v2053, %v2051
      %v2120 = vpack.c.b16 %v2056, %v2054
      %v2121 = vpack.c.b16 %v2057, %v2055
      %2186 = vmatprep.subr.bf16.mxu0 %v2073
      %2187 = vmatpush1.bf16.msra.mxu0 %v2072
      %2188 = vmatprep.subr.bf16.mxu0 %v2071
      %2189 = vmatpush1.bf16.msra.mxu0 %v2070
      %2190 = vmatprep.subr.bf16.mxu0 %v2069
      %2191 = vmatpush1.bf16.msra.mxu0 %v2068
      %2192 = vmatprep.subr.bf16.mxu0 %v2067
      %2193 = vmatpush1.bf16.msra.mxu0 %v2066
      %2194 = vmatprep.subr.bf16.mxu0 %v2065
      %2195 = vmatpush1.bf16.msra.mxu0 %v2064
      %2196 = vmatprep.subr.bf16.mxu0 %v2063
      %2197 = vmatpush1.bf16.msra.mxu0 %v2062
      %2198 = vmatprep.subr.bf16.mxu0 %v2061
      %2199 = vmatpush1.bf16.msra.mxu0 %v2060
      %2200 = vmatprep.subr.bf16.mxu0 %v2059
      %2201 = vmatpush1.bf16.msra.mxu0 %v2058
      %2202 = vmatprep.subr.bf16.mxu0 %v2089
      %2203 = vmatpush2.bf16.msra.mxu0 %v2088
      %2204 = vmatprep.subr.bf16.mxu0 %v2087
      %2205 = vmatpush2.bf16.msra.mxu0 %v2086
      %2206 = vmatprep.subr.bf16.mxu0 %v2085
      %2207 = vmatpush2.bf16.msra.mxu0 %v2084
      %2208 = vmatprep.subr.bf16.mxu0 %v2083
      %2209 = vmatpush2.bf16.msra.mxu0 %v2082
      %2210 = vmatprep.subr.bf16.mxu0 %v2081
      %2211 = vmatpush2.bf16.msra.mxu0 %v2080
      %2212 = vmatprep.subr.bf16.mxu0 %v2079
      %2213 = vmatpush2.bf16.msra.mxu0 %v2078
      %2214 = vmatprep.subr.bf16.mxu0 %v2077
      %2215 = vmatpush2.bf16.msra.mxu0 %v2076
      %2216 = vmatprep.subr.bf16.mxu0 %v2075
      %2217 = vmatpush2.bf16.msra.mxu0 %v2074
      %2218 = vmatprep.mubr.bf16.mxu0 %v1845
      %2219 = vmatmul.mubr.bf16.gmra.mxu0 %v1837
      %v2220 = vpop.f32.mrf.mxu0
      %v2221 = vadd.f32 0.0, %v2220
      %v2222 = vpop.f32.mrf.mxu0
      %v2223 = vadd.f32 0.0, %v2222
      %v2224 = vpop.f32.mrf.mxu0
      %v2225 = vpop.f32.mrf.mxu0
      %2226 = vdwg.mxu0
      %2227 = vmatprep.subr.bf16.mxu0 %v2105
      %2228 = vmatpush1.bf16.msra.mxu0 %v2104
      %2229 = vmatprep.subr.bf16.mxu0 %v2103
      %2230 = vmatpush1.bf16.msra.mxu0 %v2102
      %2231 = vmatprep.subr.bf16.mxu0 %v2101
      %2232 = vmatpush1.bf16.msra.mxu0 %v2100
      %2233 = vmatprep.subr.bf16.mxu0 %v2099
      %2234 = vmatpush1.bf16.msra.mxu0 %v2098
      %2235 = vmatprep.subr.bf16.mxu0 %v2097
      %2236 = vmatpush1.bf16.msra.mxu0 %v2096
      %2237 = vmatprep.subr.bf16.mxu0 %v2095
      %2238 = vmatpush1.bf16.msra.mxu0 %v2094
      %2239 = vmatprep.subr.bf16.mxu0 %v2093
      %2240 = vmatpush1.bf16.msra.mxu0 %v2092
      %2241 = vmatprep.subr.bf16.mxu0 %v2091
      %2242 = vmatpush1.bf16.msra.mxu0 %v2090
      %2243 = vmatprep.subr.bf16.mxu0 %v2121
      %2244 = vmatpush2.bf16.msra.mxu0 %v2120
      %2245 = vmatprep.subr.bf16.mxu0 %v2119
      %2246 = vmatpush2.bf16.msra.mxu0 %v2118
      %2247 = vmatprep.subr.bf16.mxu0 %v2117
      %2248 = vmatpush2.bf16.msra.mxu0 %v2116
      %2249 = vmatprep.subr.bf16.mxu0 %v2115
      %2250 = vmatpush2.bf16.msra.mxu0 %v2114
      %2251 = vmatprep.subr.bf16.mxu0 %v2113
      %2252 = vmatpush2.bf16.msra.mxu0 %v2112
      %2253 = vmatprep.subr.bf16.mxu0 %v2111
      %2254 = vmatpush2.bf16.msra.mxu0 %v2110
      %2255 = vmatprep.subr.bf16.mxu0 %v2109
      %2256 = vmatpush2.bf16.msra.mxu0 %v2108
      %2257 = vmatprep.subr.bf16.mxu0 %v2107
      %2258 = vmatpush2.bf16.msra.mxu0 %v2106
      %2259 = vmatprep.mubr.bf16.mxu0 %v1861
      %2260 = vmatmul.mubr.bf16.gmra.mxu0 %v1853
      %v2261 = vpop.f32.mrf.mxu0
      %v2262 = vadd.f32 %v2221, %v2261
      %v2263 = vpop.f32.mrf.mxu0
      %v2264 = vadd.f32 %v2223, %v2263
      %v2265 = vpop.f32.mrf.mxu0
      %v2266 = vpop.f32.mrf.mxu0
      %2267 = vdwg.mxu0
      %v2268 = vadd.f32 %v1751, %v2262
      %v2269 = vadd.f32 %v1752, %v2264
      %v2270 = vld [vmem:[%s2] sm:$0x3]
      %v2272 = vlaneseq
      %v2273 = vshrl.u32 %v2272, 7
      %v2274 = vsub.s32 0, %v2273
      %v2275 = vrot.slane %v2270, %v2274
      %v2276 = vlaneseq
      %v2277 = vshrl.u32 %v2276, 7
      %v2278 = vsub.s32 1, %v2277
      %v2279 = vrot.slane %v2270, %v2278
      %v2282 = vadd.f32 %v2268, %v2275
      %v2283 = vadd.f32 %v2269, %v2279
      %v2284 = vmax.f32 %v2282, 0.0
      %v2285 = vmax.f32 %v2283, 0.0
      %v2286 = vpack.c.bf16 %v2284, %v2284
      %v2287 = vpack.c.bf16 %v2285, %v2285
      %v2290 = vcombine.low %v2286, %v2287
      %v2292 = vunpack.c.l.s4 1966171168
      %v2293 = vunpack.c.0.s8 %v2292
      %v2294 = vlaneseq
      %v2295 = vshrl.u32 %v2294, 7
      %v2296 = vsub.s32 %v2293, %v2295
      %v2297 = vrot.slane %v2290, %v2296
      %v2299 = vunpack.c.l.s4 1966171168
      %v2300 = vunpack.c.0.s8 %v2299
      %v2301 = vlaneseq
      %v2302 = vshrl.u32 %v2301, 7
      %v2303 = vsub.s32 %v2300, %v2302
      %v2304 = vrot.slane %v2297, %v2303
      %2306 = vst [vmem:[%s262] sm:$0x3] %v2304
      %v2307 = vld [vmem:[%s3] sm:$0x3]
      %2309 = vset.pattern.permute.xlu0 0
      %2310 = vperm.xlu0 %2309, %v2307
      %v2311 = vpop.permute.xlu0 %2310
      %v2313 = vmul.f32 %v2284, %v2311
      %v2314 = vmul.f32 %v2285, %v2311
      %vm2315 = vcmask 1041408
      %v2316 = vsel %vm2315, %v2313, 0.0
      %v2317 = vrot.slane %v2316, 4
      %v2318 = vadd.f32 %v2316, %v2317
      %v2319 = vrot.slane %v2318, 2
      %v2320 = vadd.f32 %v2318, %v2319
      %v2321 = vrot.slane %v2320, 1
      %v2322 = vadd.f32 %v2320, %v2321
      %v2323 = vsel %vm2315, %v2314, 0.0
      %v2324 = vrot.slane %v2323, 4
      %v2325 = vadd.f32 %v2323, %v2324
      %v2326 = vrot.slane %v2325, 2
      %v2327 = vadd.f32 %v2325, %v2326
      %v2328 = vrot.slane %v2327, 1
      %v2329 = vadd.f32 %v2327, %v2328
      %v2332 = vcombine.low %v2322, %v2329
      %v2334 = vunpack.c.l.s4 1966171168
      %v2335 = vunpack.c.0.s8 %v2334
      %v2336 = vlaneseq
      %v2337 = vshrl.u32 %v2336, 7
      %v2338 = vsub.s32 %v2335, %v2337
      %v2339 = vrot.slane %v2332, %v2338
      %v2341 = vunpack.c.l.s4 1966171168
      %v2342 = vunpack.c.0.s8 %v2341
      %v2343 = vlaneseq
      %v2344 = vshrl.u32 %v2343, 7
      %v2345 = vsub.s32 %v2342, %v2344
      %v2346 = vrot.slane %v2339, %v2345
      %v2348 = vlaneseq
      %vm2349 = vcmp.ge.s32.totalorder %v2348, 0
      %vm2350 = vcmp.lt.s32.totalorder %v2348, 256
      %vm2351 = vmand %vm2349, %vm2350
      %2352 = vst.msk [vmem:[%s266] sm:$0x3] %vm2351, %v2346
      %v2353 = vmul.f32 %v2313, %v2313
      %v2354 = vmul.f32 %v2314, %v2314
      %v2355 = vsel %vm2315, %v2353, 0.0
      %v2356 = vrot.slane %v2355, 4
      %v2357 = vadd.f32 %v2355, %v2356
      %v2358 = vrot.slane %v2357, 2
      %v2359 = vadd.f32 %v2357, %v2358
      %v2360 = vrot.slane %v2359, 1
      %v2361 = vadd.f32 %v2359, %v2360
      %v2362 = vsel %vm2315, %v2354, 0.0
      %v2363 = vrot.slane %v2362, 4
      %v2364 = vadd.f32 %v2362, %v2363
      %v2365 = vrot.slane %v2364, 2
      %v2366 = vadd.f32 %v2364, %v2365
      %v2367 = vrot.slane %v2366, 1
      %v2368 = vadd.f32 %v2366, %v2367
      %v2371 = vcombine.low %v2361, %v2368
      %v2373 = vunpack.c.l.s4 1966171168
      %v2374 = vunpack.c.0.s8 %v2373
      %v2375 = vlaneseq
      %v2376 = vshrl.u32 %v2375, 7
      %v2377 = vsub.s32 %v2374, %v2376
      %v2378 = vrot.slane %v2371, %v2377
      %v2380 = vunpack.c.l.s4 1966171168
      %v2381 = vunpack.c.0.s8 %v2380
      %v2382 = vlaneseq
      %v2383 = vshrl.u32 %v2382, 7
      %v2384 = vsub.s32 %v2381, %v2383
      %v2385 = vrot.slane %v2378, %v2384
      %2387 = vst.msk [vmem:[%s270] sm:$0x3] %vm2351, %v2385
      %p2388 = scmp.lt.s32.totalorder %s18, 1
      %s2389 = scalar_select %p2388, %s18, 1
      %s2390 = smul.addr %s2389, 2
      %s2391 = scalar_lea.vmem %s4, %s2390
      %p2392 = scmp.lt.s32.totalorder %s18, 1
      %s2393 = scalar_select %p2392, %s18, 1
      %s2394 = smul.addr %s2393, 2
      %s2395 = scalar_lea.vmem %s5, %s2394
      %p2396 = scmp.lt.s32.totalorder %s18, 1
      %s2397 = scalar_select %p2396, %s18, 1
      %s2398 = smul.addr %s2397, 2
      %s2399 = scalar_lea.vmem %s6, %s2398
      // Predicated region
      $region37: #{_lambda_.8} parent=35 // pred_check
        %p2400 = pneg %p125
      $region38: #{_lambda_.8} parent=35 // pred_check_branch
        %2402 = sbr.rel (%p2400) target = $region40
      $region39: #{_lambda_.8} parent=35 // pred_region
        _
      $region40: #{_lambda_.8} parent=35 // pred_fallthru
        _
      // Predicated region
      $region41: #{_lambda_.8} parent=35 // pred_check
        %p2403 = pneg %p151
      $region42: #{_lambda_.8} parent=35 // pred_check_branch
        %2405 = sbr.rel (%p2403) target = $region44
      $region43: #{_lambda_.8} parent=35 // pred_region
        _
      $region44: #{_lambda_.8} parent=35 // pred_fallthru
        _
      // Predicated region
      $region45: #{_lambda_.8} parent=35 // pred_check
        %p2406 = pneg %p177
      $region46: #{_lambda_.8} parent=35 // pred_check_branch
        %2408 = sbr.rel (%p2406) target = $region48
      $region47: #{_lambda_.8} parent=35 // pred_region
        _
      $region48: #{_lambda_.8} parent=35 // pred_fallthru
        _
    $region36: #{_lambda_.8} parent=5 // pred_fallthru
      _
    %p2409 = scmp.le.s32.totalorder 2, %s13
    // Predicated region
    $region49: #{_lambda_.8} parent=5 // pred_check
      %p2410 = pneg %p2409
    $region50: #{_lambda_.8} parent=5 // pred_check_branch
      %2412 = sbr.rel (%p2410) target = $region52
    $region51: #{_lambda_.8} parent=5 // pred_region
      %s2413 = ssub.s32 %s13, 2
      // Predicated region
      $region53: #{_lambda_.8} parent=51 // pred_check
        %p2414 = pneg %p131
      $region54: #{_lambda_.8} parent=51 // pred_check_branch
        %2416 = sbr.rel (%p2414) target = $region56
      $region55: #{_lambda_.8} parent=51 // pred_region
        %p2417 = scmp.lt.s32.totalorder %s19, 1
        %s2418 = scalar_select %p2417, %s19, 1
        %s2419 = smul.addr %s2418, 2
        %s2420 = scalar_lea.vmem %s4, %s2419
      $region56: #{_lambda_.8} parent=51 // pred_fallthru
        _
      // Predicated region
      $region57: #{_lambda_.8} parent=51 // pred_check
        %p2421 = pneg %p157
      $region58: #{_lambda_.8} parent=51 // pred_check_branch
        %2423 = sbr.rel (%p2421) target = $region60
      $region59: #{_lambda_.8} parent=51 // pred_region
        %p2424 = scmp.lt.s32.totalorder %s19, 1
        %s2425 = scalar_select %p2424, %s19, 1
        %s2426 = smul.addr %s2425, 2
        %s2427 = scalar_lea.vmem %s5, %s2426
      $region60: #{_lambda_.8} parent=51 // pred_fallthru
        _
      // Predicated region
      $region61: #{_lambda_.8} parent=51 // pred_check
        %p2428 = pneg %p183
      $region62: #{_lambda_.8} parent=51 // pred_check_branch
        %2430 = sbr.rel (%p2428) target = $region64
      $region63: #{_lambda_.8} parent=51 // pred_region
        %p2431 = scmp.lt.s32.totalorder %s19, 1
        %s2432 = scalar_select %p2431, %s19, 1
        %s2433 = smul.addr %s2432, 2
        %s2434 = scalar_lea.vmem %s6, %s2433
      $region64: #{_lambda_.8} parent=51 // pred_fallthru
        _
    $region52: #{_lambda_.8} parent=5 // pred_fallthru
      _
  $region6: #{_lambda_.8} parent=0 // loop_footer
    %s17 = sadd.s32 1, %s13
  $region7: #{_lambda_.8} parent=0 // loop_footer_branch
    %12 = sbr.rel target = $region3
  $region8: #{_lambda_.8} parent=0 // loop_exit
    _

// kernel: _lambda_.9
$region0: #{_lambda_.9}
  #allocation0 [shape = 'u32[]', space=smem, size = 0x4, offset = 0x4, fixed_abs, tag = 'smem constant byte address 0x4 - core index']
  #allocation1 [shape = 'u32[144,128]{1,0:T(1,128)}', space=vmem, size = 0x12000, scoped, tag = 'internal scratch']
  #allocation2 [shape = 'f32[1,1]{1,0:T(1,128)S(1)}', space=vmem, size = 0x200, scoped, tag = 'scoped memory for _lambda_.9']
  %s0 = inlined_call_operand.vmem [shape: bf16[2,12,256], index: 0, kind: input, shape index: {}]
  %s1 = inlined_call_operand.vmem [shape: bf16[9,256,1], index: 1, kind: input, shape index: {}]
  %s2 = inlined_call_operand.<no memory space> [shape: f32[1,1], index: 2, kind: input, shape index: {}]
  %s3 = inlined_call_operand.vmem [shape: f32[2,3,1], index: 3, kind: output, shape index: {}]
  %s4 = sld [smem:[#allocation0]]
  $region45: #{_lambda_.9} parent=0
    _
  %s6 = ssub.s32 1, %s4
  %s7 = scalar_select 0, %s6, %s4
  %v8 = vstv %s2
  %9 = vst [vmem:[#allocation2] sm:$0x1] %v8
  loop: start=0, step=1, limit=4
  $region2: #{_lambda_.9} parent=0 // loop_pre_header
    _
  $region3: #{_lambda_.9} parent=0 // loop_header
    %s11 = sphi 0, %s15
    %p12 = scmp.ge.s32.totalorder %s11, 4
    %s21 = sphi 0, %s23
    %s24 = sphi 0, %s21
    %s25 = sphi 0, %s24
    %s41 = sphi 0, %s25
    %s45 = sphi 0, %s45
    %s47 = sphi 0, %s45
    %s48 = sphi 0, %s47
    %s62 = sphi 0, %s48
    %s66 = sphi 0, %s66
    %s68 = sphi 0, %s66
    %s69 = sphi 0, %s68
    %s83 = sphi 0, %s69
    %s89 = sphi 0, %s91
    %s92 = sphi 0, %s89
    %s93 = sphi 0, %s92
    %s109 = sphi 0, %s93
  $region4: #{_lambda_.9} parent=0 // loop_header_branch
    %14 = sbr.rel (%p12) target = $region8
  $region5: #{_lambda_.9} parent=0 // loop_body
    %s16 = ssub.s32 %s11, 1
    %s17 = ssub.s32 %s11, 2
    %s18 = sadd.s32 %s11, 1
    %s19 = ssub.s32 %s11, %s18
    %p20 = scmp.eq.s32.totalorder %s19, 0
    %s22 = sadd.s32 %s21, 1
    %s23 = scalar_select %p20, %s21, %s22
    %p26 = pneg %p20
    %p27 = scmp.eq.s32.totalorder %s11, 1
    %p28 = por %p26, %p27
    %p29 = scmp.ne.s32.totalorder %s21, %s24
    %p30 = scmp.eq.s32.totalorder %s11, 0
    %p31 = por %p29, %p30
    %p32 = scmp.ne.s32.totalorder %s21, %s24
    %p33 = scmp.eq.s32.totalorder %s16, 1
    %p34 = por %p32, %p33
    %p35 = scmp.ne.s32.totalorder %s24, %s25
    %p36 = scmp.eq.s32.totalorder %s16, 0
    %p37 = por %p35, %p36
    %p38 = scmp.ne.s32.totalorder %s24, %s25
    %p39 = scmp.eq.s32.totalorder %s17, 1
    %p40 = por %p38, %p39
    %p42 = scmp.ne.s32.totalorder %s25, %s41
    %p43 = scmp.eq.s32.totalorder %s17, 0
    %p44 = por %p42, %p43
    %s46 = sadd.s32 %s45, 1
    %p49 = scmp.eq.s32.totalorder %s11, 1
    %p50 = scmp.ne.s32.totalorder %s45, %s47
    %p51 = scmp.eq.s32.totalorder %s11, 0
    %p52 = por %p50, %p51
    %p53 = scmp.ne.s32.totalorder %s45, %s47
    %p54 = scmp.eq.s32.totalorder %s16, 1
    %p55 = por %p53, %p54
    %p56 = scmp.ne.s32.totalorder %s47, %s48
    %p57 = scmp.eq.s32.totalorder %s16, 0
    %p58 = por %p56, %p57
    %p59 = scmp.ne.s32.totalorder %s47, %s48
    %p60 = scmp.eq.s32.totalorder %s17, 1
    %p61 = por %p59, %p60
    %p63 = scmp.ne.s32.totalorder %s48, %s62
    %p64 = scmp.eq.s32.totalorder %s17, 0
    %p65 = por %p63, %p64
    %s67 = sadd.s32 %s66, 1
    %p70 = scmp.eq.s32.totalorder %s11, 1
    %p71 = scmp.ne.s32.totalorder %s66, %s68
    %p72 = scmp.eq.s32.totalorder %s11, 0
    %p73 = por %p71, %p72
    %p74 = scmp.ne.s32.totalorder %s66, %s68
    %p75 = scmp.eq.s32.totalorder %s16, 1
    %p76 = por %p74, %p75
    %p77 = scmp.ne.s32.totalorder %s68, %s69
    %p78 = scmp.eq.s32.totalorder %s16, 0
    %p79 = por %p77, %p78
    %p80 = scmp.ne.s32.totalorder %s68, %s69
    %p81 = scmp.eq.s32.totalorder %s17, 1
    %p82 = por %p80, %p81
    %p84 = scmp.ne.s32.totalorder %s69, %s83
    %p85 = scmp.eq.s32.totalorder %s17, 0
    %p86 = por %p84, %p85
    %s87 = ssub.s32 %s11, %s18
    %p88 = scmp.eq.s32.totalorder %s87, 0
    %s90 = sadd.s32 %s89, 1
    %s91 = scalar_select %p88, %s89, %s90
    %p94 = pneg %p88
    %p95 = scmp.eq.s32.totalorder %s11, 1
    %p96 = por %p94, %p95
    %p97 = scmp.ne.s32.totalorder %s89, %s92
    %p98 = scmp.eq.s32.totalorder %s11, 0
    %p99 = por %p97, %p98
    %p100 = scmp.ne.s32.totalorder %s89, %s92
    %p101 = scmp.eq.s32.totalorder %s16, 1
    %p102 = por %p100, %p101
    %p103 = scmp.ne.s32.totalorder %s92, %s93
    %p104 = scmp.eq.s32.totalorder %s16, 0
    %p105 = por %p103, %p104
    %p106 = scmp.ne.s32.totalorder %s92, %s93
    %p107 = scmp.eq.s32.totalorder %s17, 1
    %p108 = por %p106, %p107
    %p110 = scmp.ne.s32.totalorder %s93, %s109
    %p111 = scmp.eq.s32.totalorder %s17, 0
    %p112 = por %p110, %p111
    %p113 = scmp.le.s32.totalorder 1, %s11
    %p114 = scmp.lt.s32.totalorder %s11, 3
    %p115 = pnand %p113, %p114
    %p116 = pneg %p115
    // Predicated region
    $region9: #{_lambda_.9} parent=5 // pred_check
      _
    $region10: #{_lambda_.9} parent=5 // pred_check_branch
      %118 = sbr.rel (%p115) target = $region12
    $region11: #{_lambda_.9} parent=5 // pred_region
      %s119 = ssub.s32 %s11, 1
      // Predicated region
      $region13: #{_lambda_.9} parent=11 // pred_check
        %p120 = pneg %p58
      $region14: #{_lambda_.9} parent=11 // pred_check_branch
        %122 = sbr.rel (%p120) target = $region16
      $region15: #{_lambda_.9} parent=11 // pred_region
        _
      $region16: #{_lambda_.9} parent=11 // pred_fallthru
        _
      // Predicated region
      $region17: #{_lambda_.9} parent=11 // pred_check
        %p123 = pneg %p79
      $region18: #{_lambda_.9} parent=11 // pred_check_branch
        %125 = sbr.rel (%p123) target = $region20
      $region19: #{_lambda_.9} parent=11 // pred_region
        _
      $region20: #{_lambda_.9} parent=11 // pred_fallthru
        _
    $region12: #{_lambda_.9} parent=5 // pred_fallthru
      _
    %p126 = scmp.lt.s32.totalorder %s11, 2
    // Predicated region
    $region21: #{_lambda_.9} parent=5 // pred_check
      %p127 = pneg %p126
    $region22: #{_lambda_.9} parent=5 // pred_check_branch
      %129 = sbr.rel (%p127) target = $region24
    $region23: #{_lambda_.9} parent=5 // pred_region
      // Predicated region
      $region25: #{_lambda_.9} parent=23 // pred_check
        %p130 = pneg %p31
      $region26: #{_lambda_.9} parent=23 // pred_check_branch
        %132 = sbr.rel (%p130) target = $region28
      $region27: #{_lambda_.9} parent=23 // pred_region
        %p133 = scmp.lt.s32.totalorder %s11, 1
        %s134 = scalar_select %p133, %s11, 1
        %s135 = smul.addr %s134, 4
        %s136 = smul.addr %s135, 4
        %s137 = scalar_lea.vmem %s0, %s136
      $region28: #{_lambda_.9} parent=23 // pred_fallthru
        _
    $region24: #{_lambda_.9} parent=5 // pred_fallthru
      _
    %p138 = scmp.le.s32.totalorder 1, %s11
    %p139 = scmp.lt.s32.totalorder %s11, 3
    %p140 = pnand %p138, %p139
    %p141 = pneg %p140
    // Predicated region
    $region29: #{_lambda_.9} parent=5 // pred_check
      _
    $region30: #{_lambda_.9} parent=5 // pred_check_branch
      %143 = sbr.rel (%p140) target = $region32
    $region31: #{_lambda_.9} parent=5 // pred_region
      %s144 = ssub.s32 %s11, 1
      %p145 = scmp.lt.s32.totalorder %s16, 1
      %s146 = scalar_select %p145, %s16, 1
      %s147 = smul.addr %s146, 4
      %s148 = smul.addr %s147, 4
      %s149 = scalar_lea.vmem %s0, %s148
      %p150 = pneg %p37
      %p151 = pneg %p34
      %p152 = pneg %p58
      %p153 = pneg %p55
      %p154 = pneg %p79
      %p155 = pneg %p76
      %p156 = pneg %p105
      %p157 = pneg %p102
      %p158 = scmp.lt.s32.totalorder %s16, 1
      %s159 = scalar_select %p158, %s16, 1
      %s160 = smul.addr %s159, 4
      %s161 = scalar_lea.vmem %s3, %s160
      %p162 = scmp.lt.s32.totalorder %s16, 1
      %s163 = scalar_select %p162, %s16, 1
      %s164 = smul.addr %s163, 4
      %s165 = smul.addr %s164, 4
      %s166 = scalar_lea.vmem %s0, %s165
      %p167 = scmp.lt.s32.totalorder %s16, 1
      %s168 = scalar_select %p167, %s16, 1
      %s169 = smul.addr %s168, 4
      %s170 = scalar_lea.vmem %s3, %s169
      %v172 = vld [vmem:[%s166] sm:$0x33]
      %v173 = vld [vmem:[%s1] sm:$0xf]
      %v174 = vld [vmem:[%s1 + $0x4] sm:$0xf]
      %v175 = vld [vmem:[%s1 + $0x8] sm:$0xf]
      %v176 = vld [vmem:[%s1 + $0xc] sm:$0xf]
      %v177 = vld [vmem:[%s1 + $0x10] sm:$0xf]
      %v178 = vld [vmem:[%s1 + $0x14] sm:$0xf]
      %v179 = vld [vmem:[%s1 + $0x18] sm:$0xf]
      %v180 = vld [vmem:[%s1 + $0x1c] sm:$0xf]
      %v181 = vld [vmem:[%s1 + $0x20] sm:$0xf]
      %v182 = vld [vmem:[%s1 + $0x24] sm:$0xf]
      %v183 = vld [vmem:[%s1 + $0x28] sm:$0xf]
      %v184 = vld [vmem:[%s1 + $0x2c] sm:$0xf]
      %v185 = vld [vmem:[%s1 + $0x30] sm:$0xf]
      %v186 = vld [vmem:[%s1 + $0x34] sm:$0xf]
      %v187 = vld [vmem:[%s1 + $0x38] sm:$0xf]
      %v188 = vld [vmem:[%s1 + $0x3c] sm:$0xf]
      %v189 = vld [vmem:[%s1 + $0x40] sm:$0xf]
      %v190 = vld [vmem:[%s1 + $0x44] sm:$0xf]
      %v191 = vld [vmem:[%s1 + $0x48] sm:$0xf]
      %v192 = vld [vmem:[%s1 + $0x4c] sm:$0xf]
      %v193 = vld [vmem:[%s1 + $0x50] sm:$0xf]
      %v194 = vld [vmem:[%s1 + $0x54] sm:$0xf]
      %v195 = vld [vmem:[%s1 + $0x58] sm:$0xf]
      %v196 = vld [vmem:[%s1 + $0x5c] sm:$0xf]
      %v197 = vld [vmem:[%s1 + $0x60] sm:$0xf]
      %v198 = vld [vmem:[%s1 + $0x64] sm:$0xf]
      %v199 = vld [vmem:[%s1 + $0x68] sm:$0xf]
      %v200 = vld [vmem:[%s1 + $0x6c] sm:$0xf]
      %v201 = vld [vmem:[%s1 + $0x70] sm:$0xf]
      %v202 = vld [vmem:[%s1 + $0x74] sm:$0xf]
      %v203 = vld [vmem:[%s1 + $0x78] sm:$0xf]
      %v204 = vld [vmem:[%s1 + $0x7c] sm:$0xf]
      %s205 = scalar_lea.vmem %s1, 128
      %v206 = vld [vmem:[%s205] sm:$0xf]
      %v207 = vld [vmem:[%s205 + $0x4] sm:$0xf]
      %v208 = vld [vmem:[%s205 + $0x8] sm:$0xf]
      %v209 = vld [vmem:[%s205 + $0xc] sm:$0xf]
      %v210 = vld [vmem:[%s205 + $0x10] sm:$0xf]
      %v211 = vld [vmem:[%s205 + $0x14] sm:$0xf]
      %v212 = vld [vmem:[%s205 + $0x18] sm:$0xf]
      %v213 = vld [vmem:[%s205 + $0x1c] sm:$0xf]
      %v214 = vld [vmem:[%s205 + $0x20] sm:$0xf]
      %v215 = vld [vmem:[%s205 + $0x24] sm:$0xf]
      %v216 = vld [vmem:[%s205 + $0x28] sm:$0xf]
      %v217 = vld [vmem:[%s205 + $0x2c] sm:$0xf]
      %v218 = vld [vmem:[%s205 + $0x30] sm:$0xf]
      %v219 = vld [vmem:[%s205 + $0x34] sm:$0xf]
      %v220 = vld [vmem:[%s205 + $0x38] sm:$0xf]
      %v221 = vld [vmem:[%s205 + $0x3c] sm:$0xf]
      %v222 = vld [vmem:[%s205 + $0x40] sm:$0xf]
      %v223 = vld [vmem:[%s205 + $0x44] sm:$0xf]
      %v224 = vld [vmem:[%s205 + $0x48] sm:$0xf]
      %v225 = vld [vmem:[%s205 + $0x4c] sm:$0xf]
      %v226 = vld [vmem:[%s205 + $0x50] sm:$0xf]
      %v227 = vld [vmem:[%s205 + $0x54] sm:$0xf]
      %v228 = vld [vmem:[%s205 + $0x58] sm:$0xf]
      %v229 = vld [vmem:[%s205 + $0x5c] sm:$0xf]
      %v230 = vld [vmem:[%s205 + $0x60] sm:$0xf]
      %v231 = vld [vmem:[%s205 + $0x64] sm:$0xf]
      %v232 = vld [vmem:[%s205 + $0x68] sm:$0xf]
      %v233 = vld [vmem:[%s205 + $0x6c] sm:$0xf]
      %v234 = vld [vmem:[%s205 + $0x70] sm:$0xf]
      %v235 = vld [vmem:[%s205 + $0x74] sm:$0xf]
      %v236 = vld [vmem:[%s205 + $0x78] sm:$0xf]
      %v237 = vld [vmem:[%s205 + $0x7c] sm:$0xf]
      %v239 = vunpack.c.l.b16 %v172
      %v240 = vunpack.c.h.b16 %v172
      %v241 = vpack.c.b16 %v239, %v239
      %v242 = vpack.c.b16 %v240, %v240
      %v244 = vshrl.u32 %v241, 16
      %v246 = vshll.u32 %v241, 16
      %v248 = vrot.slane %v246, 1
      %v249 = vor.u32 %v244, %v248
      %v251 = vshrl.u32 %v242, 16
      %v253 = vshll.u32 %v242, 16
      %v255 = vrot.slane %v253, 1
      %v256 = vor.u32 %v251, %v255
      %v291 = vunpack.c.l.b16 %v206
      %v292 = vunpack.c.l.b16 %v207
      %v293 = vunpack.c.l.b16 %v208
      %v294 = vunpack.c.l.b16 %v209
      %v295 = vunpack.c.l.b16 %v210
      %v296 = vunpack.c.l.b16 %v211
      %v297 = vunpack.c.l.b16 %v212
      %v298 = vunpack.c.l.b16 %v213
      %v299 = vunpack.c.l.b16 %v214
      %v300 = vunpack.c.l.b16 %v215
      %v301 = vunpack.c.l.b16 %v216
      %v302 = vunpack.c.l.b16 %v217
      %v303 = vunpack.c.l.b16 %v218
      %v304 = vunpack.c.l.b16 %v219
      %v305 = vunpack.c.l.b16 %v220
      %v306 = vunpack.c.l.b16 %v221
      %v307 = vunpack.c.l.b16 %v222
      %v308 = vunpack.c.l.b16 %v223
      %v309 = vunpack.c.l.b16 %v224
      %v310 = vunpack.c.l.b16 %v225
      %v311 = vunpack.c.l.b16 %v226
      %v312 = vunpack.c.l.b16 %v227
      %v313 = vunpack.c.l.b16 %v228
      %v314 = vunpack.c.l.b16 %v229
      %v315 = vunpack.c.l.b16 %v230
      %v316 = vunpack.c.l.b16 %v231
      %v317 = vunpack.c.l.b16 %v232
      %v318 = vunpack.c.l.b16 %v233
      %v319 = vunpack.c.l.b16 %v234
      %v320 = vunpack.c.l.b16 %v235
      %v321 = vunpack.c.l.b16 %v236
      %v322 = vunpack.c.l.b16 %v237
      %v323 = vpack.c.b16 %v292, %v291
      %v324 = vpack.c.b16 %v294, %v293
      %v325 = vpack.c.b16 %v296, %v295
      %v326 = vpack.c.b16 %v298, %v297
      %v327 = vpack.c.b16 %v300, %v299
      %v328 = vpack.c.b16 %v302, %v301
      %v329 = vpack.c.b16 %v304, %v303
      %v330 = vpack.c.b16 %v306, %v305
      %v331 = vpack.c.b16 %v308, %v307
      %v332 = vpack.c.b16 %v310, %v309
      %v333 = vpack.c.b16 %v312, %v311
      %v334 = vpack.c.b16 %v314, %v313
      %v335 = vpack.c.b16 %v316, %v315
      %v336 = vpack.c.b16 %v318, %v317
      %v337 = vpack.c.b16 %v320, %v319
      %v338 = vpack.c.b16 %v322, %v321
      %355 = vmatprep.subr.bf16.mxu0 0
      %356 = vmatpush1.bf16.msra.mxu0 %v330
      %357 = vmatprep.subr.bf16.mxu0 0
      %358 = vmatpush1.bf16.msra.mxu0 %v329
      %359 = vmatprep.subr.bf16.mxu0 0
      %360 = vmatpush1.bf16.msra.mxu0 %v328
      %361 = vmatprep.subr.bf16.mxu0 0
      %362 = vmatpush1.bf16.msra.mxu0 %v327
      %363 = vmatprep.subr.bf16.mxu0 0
      %364 = vmatpush1.bf16.msra.mxu0 %v326
      %365 = vmatprep.subr.bf16.mxu0 0
      %366 = vmatpush1.bf16.msra.mxu0 %v325
      %367 = vmatprep.subr.bf16.mxu0 0
      %368 = vmatpush1.bf16.msra.mxu0 %v324
      %369 = vmatprep.subr.bf16.mxu0 0
      %370 = vmatpush1.bf16.msra.mxu0 %v323
      %371 = vmatprep.subr.bf16.mxu0 0
      %372 = vmatpush2.bf16.msra.mxu0 %v338
      %373 = vmatprep.subr.bf16.mxu0 0
      %374 = vmatpush2.bf16.msra.mxu0 %v337
      %375 = vmatprep.subr.bf16.mxu0 0
      %376 = vmatpush2.bf16.msra.mxu0 %v336
      %377 = vmatprep.subr.bf16.mxu0 0
      %378 = vmatpush2.bf16.msra.mxu0 %v335
      %379 = vmatprep.subr.bf16.mxu0 0
      %380 = vmatpush2.bf16.msra.mxu0 %v334
      %381 = vmatprep.subr.bf16.mxu0 0
      %382 = vmatpush2.bf16.msra.mxu0 %v333
      %383 = vmatprep.subr.bf16.mxu0 0
      %384 = vmatpush2.bf16.msra.mxu0 %v332
      %385 = vmatprep.subr.bf16.mxu0 0
      %386 = vmatpush2.bf16.msra.mxu0 %v331
      %387 = vmatprep.mubr.bf16.mxu0 %v256
      %388 = vmatmul.mubr.bf16.gmra.mxu0 %v249
      %v389 = vpop.f32.mrf.mxu0
      %v390 = vadd.f32 0.0, %v389
      %v391 = vpop.f32.mrf.mxu0
      %v392 = vpop.f32.mrf.mxu0
      %v393 = vpop.f32.mrf.mxu0
      %394 = vdwg.mxu0
      %v429 = vunpack.c.l.b16 %v173
      %v430 = vunpack.c.l.b16 %v174
      %v431 = vunpack.c.l.b16 %v175
      %v432 = vunpack.c.l.b16 %v176
      %v433 = vunpack.c.l.b16 %v177
      %v434 = vunpack.c.l.b16 %v178
      %v435 = vunpack.c.l.b16 %v179
      %v436 = vunpack.c.l.b16 %v180
      %v437 = vunpack.c.l.b16 %v181
      %v438 = vunpack.c.l.b16 %v182
      %v439 = vunpack.c.l.b16 %v183
      %v440 = vunpack.c.l.b16 %v184
      %v441 = vunpack.c.l.b16 %v185
      %v442 = vunpack.c.l.b16 %v186
      %v443 = vunpack.c.l.b16 %v187
      %v444 = vunpack.c.l.b16 %v188
      %v445 = vunpack.c.l.b16 %v189
      %v446 = vunpack.c.l.b16 %v190
      %v447 = vunpack.c.l.b16 %v191
      %v448 = vunpack.c.l.b16 %v192
      %v449 = vunpack.c.l.b16 %v193
      %v450 = vunpack.c.l.b16 %v194
      %v451 = vunpack.c.l.b16 %v195
      %v452 = vunpack.c.l.b16 %v196
      %v453 = vunpack.c.l.b16 %v197
      %v454 = vunpack.c.l.b16 %v198
      %v455 = vunpack.c.l.b16 %v199
      %v456 = vunpack.c.l.b16 %v200
      %v457 = vunpack.c.l.b16 %v201
      %v458 = vunpack.c.l.b16 %v202
      %v459 = vunpack.c.l.b16 %v203
      %v460 = vunpack.c.l.b16 %v204
      %v461 = vpack.c.b16 %v430, %v429
      %v462 = vpack.c.b16 %v432, %v431
      %v463 = vpack.c.b16 %v434, %v433
      %v464 = vpack.c.b16 %v436, %v435
      %v465 = vpack.c.b16 %v438, %v437
      %v466 = vpack.c.b16 %v440, %v439
      %v467 = vpack.c.b16 %v442, %v441
      %v468 = vpack.c.b16 %v444, %v443
      %v469 = vpack.c.b16 %v446, %v445
      %v470 = vpack.c.b16 %v448, %v447
      %v471 = vpack.c.b16 %v450, %v449
      %v472 = vpack.c.b16 %v452, %v451
      %v473 = vpack.c.b16 %v454, %v453
      %v474 = vpack.c.b16 %v456, %v455
      %v475 = vpack.c.b16 %v458, %v457
      %v476 = vpack.c.b16 %v460, %v459
      %493 = vmatprep.subr.bf16.mxu0 0
      %494 = vmatpush1.bf16.msra.mxu0 %v468
      %495 = vmatprep.subr.bf16.mxu0 0
      %496 = vmatpush1.bf16.msra.mxu0 %v467
      %497 = vmatprep.subr.bf16.mxu0 0
      %498 = vmatpush1.bf16.msra.mxu0 %v466
      %499 = vmatprep.subr.bf16.mxu0 0
      %500 = vmatpush1.bf16.msra.mxu0 %v465
      %501 = vmatprep.subr.bf16.mxu0 0
      %502 = vmatpush1.bf16.msra.mxu0 %v464
      %503 = vmatprep.subr.bf16.mxu0 0
      %504 = vmatpush1.bf16.msra.mxu0 %v463
      %505 = vmatprep.subr.bf16.mxu0 0
      %506 = vmatpush1.bf16.msra.mxu0 %v462
      %507 = vmatprep.subr.bf16.mxu0 0
      %508 = vmatpush1.bf16.msra.mxu0 %v461
      %509 = vmatprep.subr.bf16.mxu0 0
      %510 = vmatpush2.bf16.msra.mxu0 %v476
      %511 = vmatprep.subr.bf16.mxu0 0
      %512 = vmatpush2.bf16.msra.mxu0 %v475
      %513 = vmatprep.subr.bf16.mxu0 0
      %514 = vmatpush2.bf16.msra.mxu0 %v474
      %515 = vmatprep.subr.bf16.mxu0 0
      %516 = vmatpush2.bf16.msra.mxu0 %v473
      %517 = vmatprep.subr.bf16.mxu0 0
      %518 = vmatpush2.bf16.msra.mxu0 %v472
      %519 = vmatprep.subr.bf16.mxu0 0
      %520 = vmatpush2.bf16.msra.mxu0 %v471
      %521 = vmatprep.subr.bf16.mxu0 0
      %522 = vmatpush2.bf16.msra.mxu0 %v470
      %523 = vmatprep.subr.bf16.mxu0 0
      %524 = vmatpush2.bf16.msra.mxu0 %v469
      %525 = vmatprep.mubr.bf16.mxu0 %v242
      %526 = vmatmul.mubr.bf16.gmra.mxu0 %v241
      %v527 = vpop.f32.mrf.mxu0
      %v528 = vadd.f32 %v390, %v527
      %v529 = vpop.f32.mrf.mxu0
      %v530 = vpop.f32.mrf.mxu0
      %v531 = vpop.f32.mrf.mxu0
      %532 = vdwg.mxu0
      %v533 = vld [vmem:[%s166] sm:$0x66]
      %s534 = scalar_lea.vmem %s1, 256
      %v535 = vld [vmem:[%s534] sm:$0xf]
      %v536 = vld [vmem:[%s534 + $0x4] sm:$0xf]
      %v537 = vld [vmem:[%s534 + $0x8] sm:$0xf]
      %v538 = vld [vmem:[%s534 + $0xc] sm:$0xf]
      %v539 = vld [vmem:[%s534 + $0x10] sm:$0xf]
      %v540 = vld [vmem:[%s534 + $0x14] sm:$0xf]
      %v541 = vld [vmem:[%s534 + $0x18] sm:$0xf]
      %v542 = vld [vmem:[%s534 + $0x1c] sm:$0xf]
      %v543 = vld [vmem:[%s534 + $0x20] sm:$0xf]
      %v544 = vld [vmem:[%s534 + $0x24] sm:$0xf]
      %v545 = vld [vmem:[%s534 + $0x28] sm:$0xf]
      %v546 = vld [vmem:[%s534 + $0x2c] sm:$0xf]
      %v547 = vld [vmem:[%s534 + $0x30] sm:$0xf]
      %v548 = vld [vmem:[%s534 + $0x34] sm:$0xf]
      %v549 = vld [vmem:[%s534 + $0x38] sm:$0xf]
      %v550 = vld [vmem:[%s534 + $0x3c] sm:$0xf]
      %v551 = vld [vmem:[%s534 + $0x40] sm:$0xf]
      %v552 = vld [vmem:[%s534 + $0x44] sm:$0xf]
      %v553 = vld [vmem:[%s534 + $0x48] sm:$0xf]
      %v554 = vld [vmem:[%s534 + $0x4c] sm:$0xf]
      %v555 = vld [vmem:[%s534 + $0x50] sm:$0xf]
      %v556 = vld [vmem:[%s534 + $0x54] sm:$0xf]
      %v557 = vld [vmem:[%s534 + $0x58] sm:$0xf]
      %v558 = vld [vmem:[%s534 + $0x5c] sm:$0xf]
      %v559 = vld [vmem:[%s534 + $0x60] sm:$0xf]
      %v560 = vld [vmem:[%s534 + $0x64] sm:$0xf]
      %v561 = vld [vmem:[%s534 + $0x68] sm:$0xf]
      %v562 = vld [vmem:[%s534 + $0x6c] sm:$0xf]
      %v563 = vld [vmem:[%s534 + $0x70] sm:$0xf]
      %v564 = vld [vmem:[%s534 + $0x74] sm:$0xf]
      %v565 = vld [vmem:[%s534 + $0x78] sm:$0xf]
      %v566 = vld [vmem:[%s534 + $0x7c] sm:$0xf]
      %v568 = vunpack.c.l.b16 %v533
      %v569 = vunpack.c.h.b16 %v533
      %v570 = vpack.c.b16 %v568, %v568
      %v571 = vpack.c.b16 %v569, %v569
      %v572 = vrot.slane %v570, 1
      %v573 = vrot.slane %v571, 1
      %v608 = vunpack.c.l.b16 %v535
      %v609 = vunpack.c.l.b16 %v536
      %v610 = vunpack.c.l.b16 %v537
      %v611 = vunpack.c.l.b16 %v538
      %v612 = vunpack.c.l.b16 %v539
      %v613 = vunpack.c.l.b16 %v540
      %v614 = vunpack.c.l.b16 %v541
      %v615 = vunpack.c.l.b16 %v542
      %v616 = vunpack.c.l.b16 %v543
      %v617 = vunpack.c.l.b16 %v544
      %v618 = vunpack.c.l.b16 %v545
      %v619 = vunpack.c.l.b16 %v546
      %v620 = vunpack.c.l.b16 %v547
      %v621 = vunpack.c.l.b16 %v548
      %v622 = vunpack.c.l.b16 %v549
      %v623 = vunpack.c.l.b16 %v550
      %v624 = vunpack.c.l.b16 %v551
      %v625 = vunpack.c.l.b16 %v552
      %v626 = vunpack.c.l.b16 %v553
      %v627 = vunpack.c.l.b16 %v554
      %v628 = vunpack.c.l.b16 %v555
      %v629 = vunpack.c.l.b16 %v556
      %v630 = vunpack.c.l.b16 %v557
      %v631 = vunpack.c.l.b16 %v558
      %v632 = vunpack.c.l.b16 %v559
      %v633 = vunpack.c.l.b16 %v560
      %v634 = vunpack.c.l.b16 %v561
      %v635 = vunpack.c.l.b16 %v562
      %v636 = vunpack.c.l.b16 %v563
      %v637 = vunpack.c.l.b16 %v564
      %v638 = vunpack.c.l.b16 %v565
      %v639 = vunpack.c.l.b16 %v566
      %v640 = vpack.c.b16 %v609, %v608
      %v641 = vpack.c.b16 %v611, %v610
      %v642 = vpack.c.b16 %v613, %v612
      %v643 = vpack.c.b16 %v615, %v614
      %v644 = vpack.c.b16 %v617, %v616
      %v645 = vpack.c.b16 %v619, %v618
      %v646 = vpack.c.b16 %v621, %v620
      %v647 = vpack.c.b16 %v623, %v622
      %v648 = vpack.c.b16 %v625, %v624
      %v649 = vpack.c.b16 %v627, %v626
      %v650 = vpack.c.b16 %v629, %v628
      %v651 = vpack.c.b16 %v631, %v630
      %v652 = vpack.c.b16 %v633, %v632
      %v653 = vpack.c.b16 %v635, %v634
      %v654 = vpack.c.b16 %v637, %v636
      %v655 = vpack.c.b16 %v639, %v638
      %672 = vmatprep.subr.bf16.mxu0 0
      %673 = vmatpush1.bf16.msra.mxu0 %v647
      %674 = vmatprep.subr.bf16.mxu0 0
      %675 = vmatpush1.bf16.msra.mxu0 %v646
      %676 = vmatprep.subr.bf16.mxu0 0
      %677 = vmatpush1.bf16.msra.mxu0 %v645
      %678 = vmatprep.subr.bf16.mxu0 0
      %679 = vmatpush1.bf16.msra.mxu0 %v644
      %680 = vmatprep.subr.bf16.mxu0 0
      %681 = vmatpush1.bf16.msra.mxu0 %v643
      %682 = vmatprep.subr.bf16.mxu0 0
      %683 = vmatpush1.bf16.msra.mxu0 %v642
      %684 = vmatprep.subr.bf16.mxu0 0
      %685 = vmatpush1.bf16.msra.mxu0 %v641
      %686 = vmatprep.subr.bf16.mxu0 0
      %687 = vmatpush1.bf16.msra.mxu0 %v640
      %688 = vmatprep.subr.bf16.mxu0 0
      %689 = vmatpush2.bf16.msra.mxu0 %v655
      %690 = vmatprep.subr.bf16.mxu0 0
      %691 = vmatpush2.bf16.msra.mxu0 %v654
      %692 = vmatprep.subr.bf16.mxu0 0
      %693 = vmatpush2.bf16.msra.mxu0 %v653
      %694 = vmatprep.subr.bf16.mxu0 0
      %695 = vmatpush2.bf16.msra.mxu0 %v652
      %696 = vmatprep.subr.bf16.mxu0 0
      %697 = vmatpush2.bf16.msra.mxu0 %v651
      %698 = vmatprep.subr.bf16.mxu0 0
      %699 = vmatpush2.bf16.msra.mxu0 %v650
      %700 = vmatprep.subr.bf16.mxu0 0
      %701 = vmatpush2.bf16.msra.mxu0 %v649
      %702 = vmatprep.subr.bf16.mxu0 0
      %703 = vmatpush2.bf16.msra.mxu0 %v648
      %704 = vmatprep.mubr.bf16.mxu0 %v573
      %705 = vmatmul.mubr.bf16.gmra.mxu0 %v572
      %v706 = vpop.f32.mrf.mxu0
      %v707 = vadd.f32 0.0, %v706
      %v708 = vpop.f32.mrf.mxu0
      %v709 = vpop.f32.mrf.mxu0
      %v710 = vpop.f32.mrf.mxu0
      %711 = vdwg.mxu0
      %v712 = vadd.f32 %v528, %v707
      %s713 = scalar_lea.vmem %s1, 384
      %v714 = vld [vmem:[%s713] sm:$0xf]
      %v715 = vld [vmem:[%s713 + $0x4] sm:$0xf]
      %v716 = vld [vmem:[%s713 + $0x8] sm:$0xf]
      %v717 = vld [vmem:[%s713 + $0xc] sm:$0xf]
      %v718 = vld [vmem:[%s713 + $0x10] sm:$0xf]
      %v719 = vld [vmem:[%s713 + $0x14] sm:$0xf]
      %v720 = vld [vmem:[%s713 + $0x18] sm:$0xf]
      %v721 = vld [vmem:[%s713 + $0x1c] sm:$0xf]
      %v722 = vld [vmem:[%s713 + $0x20] sm:$0xf]
      %v723 = vld [vmem:[%s713 + $0x24] sm:$0xf]
      %v724 = vld [vmem:[%s713 + $0x28] sm:$0xf]
      %v725 = vld [vmem:[%s713 + $0x2c] sm:$0xf]
      %v726 = vld [vmem:[%s713 + $0x30] sm:$0xf]
      %v727 = vld [vmem:[%s713 + $0x34] sm:$0xf]
      %v728 = vld [vmem:[%s713 + $0x38] sm:$0xf]
      %v729 = vld [vmem:[%s713 + $0x3c] sm:$0xf]
      %v730 = vld [vmem:[%s713 + $0x40] sm:$0xf]
      %v731 = vld [vmem:[%s713 + $0x44] sm:$0xf]
      %v732 = vld [vmem:[%s713 + $0x48] sm:$0xf]
      %v733 = vld [vmem:[%s713 + $0x4c] sm:$0xf]
      %v734 = vld [vmem:[%s713 + $0x50] sm:$0xf]
      %v735 = vld [vmem:[%s713 + $0x54] sm:$0xf]
      %v736 = vld [vmem:[%s713 + $0x58] sm:$0xf]
      %v737 = vld [vmem:[%s713 + $0x5c] sm:$0xf]
      %v738 = vld [vmem:[%s713 + $0x60] sm:$0xf]
      %v739 = vld [vmem:[%s713 + $0x64] sm:$0xf]
      %v740 = vld [vmem:[%s713 + $0x68] sm:$0xf]
      %v741 = vld [vmem:[%s713 + $0x6c] sm:$0xf]
      %v742 = vld [vmem:[%s713 + $0x70] sm:$0xf]
      %v743 = vld [vmem:[%s713 + $0x74] sm:$0xf]
      %v744 = vld [vmem:[%s713 + $0x78] sm:$0xf]
      %v745 = vld [vmem:[%s713 + $0x7c] sm:$0xf]
      %v747 = vshrl.u32 %v570, 16
      %v749 = vrot.slane %v747, 1
      %v750 = vshll.u32 %v570, 16
      %v752 = vrot.slane %v750, 2
      %v753 = vor.u32 %v749, %v752
      %v755 = vshrl.u32 %v571, 16
      %v757 = vrot.slane %v755, 1
      %v758 = vshll.u32 %v571, 16
      %v760 = vrot.slane %v758, 2
      %v761 = vor.u32 %v757, %v760
      %v796 = vunpack.c.l.b16 %v714
      %v797 = vunpack.c.l.b16 %v715
      %v798 = vunpack.c.l.b16 %v716
      %v799 = vunpack.c.l.b16 %v717
      %v800 = vunpack.c.l.b16 %v718
      %v801 = vunpack.c.l.b16 %v719
      %v802 = vunpack.c.l.b16 %v720
      %v803 = vunpack.c.l.b16 %v721
      %v804 = vunpack.c.l.b16 %v722
      %v805 = vunpack.c.l.b16 %v723
      %v806 = vunpack.c.l.b16 %v724
      %v807 = vunpack.c.l.b16 %v725
      %v808 = vunpack.c.l.b16 %v726
      %v809 = vunpack.c.l.b16 %v727
      %v810 = vunpack.c.l.b16 %v728
      %v811 = vunpack.c.l.b16 %v729
      %v812 = vunpack.c.l.b16 %v730
      %v813 = vunpack.c.l.b16 %v731
      %v814 = vunpack.c.l.b16 %v732
      %v815 = vunpack.c.l.b16 %v733
      %v816 = vunpack.c.l.b16 %v734
      %v817 = vunpack.c.l.b16 %v735
      %v818 = vunpack.c.l.b16 %v736
      %v819 = vunpack.c.l.b16 %v737
      %v820 = vunpack.c.l.b16 %v738
      %v821 = vunpack.c.l.b16 %v739
      %v822 = vunpack.c.l.b16 %v740
      %v823 = vunpack.c.l.b16 %v741
      %v824 = vunpack.c.l.b16 %v742
      %v825 = vunpack.c.l.b16 %v743
      %v826 = vunpack.c.l.b16 %v744
      %v827 = vunpack.c.l.b16 %v745
      %v828 = vpack.c.b16 %v797, %v796
      %v829 = vpack.c.b16 %v799, %v798
      %v830 = vpack.c.b16 %v801, %v800
      %v831 = vpack.c.b16 %v803, %v802
      %v832 = vpack.c.b16 %v805, %v804
      %v833 = vpack.c.b16 %v807, %v806
      %v834 = vpack.c.b16 %v809, %v808
      %v835 = vpack.c.b16 %v811, %v810
      %v836 = vpack.c.b16 %v813, %v812
      %v837 = vpack.c.b16 %v815, %v814
      %v838 = vpack.c.b16 %v817, %v816
      %v839 = vpack.c.b16 %v819, %v818
      %v840 = vpack.c.b16 %v821, %v820
      %v841 = vpack.c.b16 %v823, %v822
      %v842 = vpack.c.b16 %v825, %v824
      %v843 = vpack.c.b16 %v827, %v826
      %860 = vmatprep.subr.bf16.mxu0 0
      %861 = vmatpush1.bf16.msra.mxu0 %v835
      %862 = vmatprep.subr.bf16.mxu0 0
      %863 = vmatpush1.bf16.msra.mxu0 %v834
      %864 = vmatprep.subr.bf16.mxu0 0
      %865 = vmatpush1.bf16.msra.mxu0 %v833
      %866 = vmatprep.subr.bf16.mxu0 0
      %867 = vmatpush1.bf16.msra.mxu0 %v832
      %868 = vmatprep.subr.bf16.mxu0 0
      %869 = vmatpush1.bf16.msra.mxu0 %v831
      %870 = vmatprep.subr.bf16.mxu0 0
      %871 = vmatpush1.bf16.msra.mxu0 %v830
      %872 = vmatprep.subr.bf16.mxu0 0
      %873 = vmatpush1.bf16.msra.mxu0 %v829
      %874 = vmatprep.subr.bf16.mxu0 0
      %875 = vmatpush1.bf16.msra.mxu0 %v828
      %876 = vmatprep.subr.bf16.mxu0 0
      %877 = vmatpush2.bf16.msra.mxu0 %v843
      %878 = vmatprep.subr.bf16.mxu0 0
      %879 = vmatpush2.bf16.msra.mxu0 %v842
      %880 = vmatprep.subr.bf16.mxu0 0
      %881 = vmatpush2.bf16.msra.mxu0 %v841
      %882 = vmatprep.subr.bf16.mxu0 0
      %883 = vmatpush2.bf16.msra.mxu0 %v840
      %884 = vmatprep.subr.bf16.mxu0 0
      %885 = vmatpush2.bf16.msra.mxu0 %v839
      %886 = vmatprep.subr.bf16.mxu0 0
      %887 = vmatpush2.bf16.msra.mxu0 %v838
      %888 = vmatprep.subr.bf16.mxu0 0
      %889 = vmatpush2.bf16.msra.mxu0 %v837
      %890 = vmatprep.subr.bf16.mxu0 0
      %891 = vmatpush2.bf16.msra.mxu0 %v836
      %892 = vmatprep.mubr.bf16.mxu0 %v761
      %893 = vmatmul.mubr.bf16.gmra.mxu0 %v753
      %v894 = vpop.f32.mrf.mxu0
      %v895 = vadd.f32 0.0, %v894
      %v896 = vpop.f32.mrf.mxu0
      %v897 = vpop.f32.mrf.mxu0
      %v898 = vpop.f32.mrf.mxu0
      %899 = vdwg.mxu0
      %v900 = vadd.f32 %v712, %v895
      %v901 = vld [vmem:[%s166] sm:$0xcc]
      %s902 = scalar_lea.vmem %s1, 512
      %v903 = vld [vmem:[%s902] sm:$0xf]
      %v904 = vld [vmem:[%s902 + $0x4] sm:$0xf]
      %v905 = vld [vmem:[%s902 + $0x8] sm:$0xf]
      %v906 = vld [vmem:[%s902 + $0xc] sm:$0xf]
      %v907 = vld [vmem:[%s902 + $0x10] sm:$0xf]
      %v908 = vld [vmem:[%s902 + $0x14] sm:$0xf]
      %v909 = vld [vmem:[%s902 + $0x18] sm:$0xf]
      %v910 = vld [vmem:[%s902 + $0x1c] sm:$0xf]
      %v911 = vld [vmem:[%s902 + $0x20] sm:$0xf]
      %v912 = vld [vmem:[%s902 + $0x24] sm:$0xf]
      %v913 = vld [vmem:[%s902 + $0x28] sm:$0xf]
      %v914 = vld [vmem:[%s902 + $0x2c] sm:$0xf]
      %v915 = vld [vmem:[%s902 + $0x30] sm:$0xf]
      %v916 = vld [vmem:[%s902 + $0x34] sm:$0xf]
      %v917 = vld [vmem:[%s902 + $0x38] sm:$0xf]
      %v918 = vld [vmem:[%s902 + $0x3c] sm:$0xf]
      %v919 = vld [vmem:[%s902 + $0x40] sm:$0xf]
      %v920 = vld [vmem:[%s902 + $0x44] sm:$0xf]
      %v921 = vld [vmem:[%s902 + $0x48] sm:$0xf]
      %v922 = vld [vmem:[%s902 + $0x4c] sm:$0xf]
      %v923 = vld [vmem:[%s902 + $0x50] sm:$0xf]
      %v924 = vld [vmem:[%s902 + $0x54] sm:$0xf]
      %v925 = vld [vmem:[%s902 + $0x58] sm:$0xf]
      %v926 = vld [vmem:[%s902 + $0x5c] sm:$0xf]
      %v927 = vld [vmem:[%s902 + $0x60] sm:$0xf]
      %v928 = vld [vmem:[%s902 + $0x64] sm:$0xf]
      %v929 = vld [vmem:[%s902 + $0x68] sm:$0xf]
      %v930 = vld [vmem:[%s902 + $0x6c] sm:$0xf]
      %v931 = vld [vmem:[%s902 + $0x70] sm:$0xf]
      %v932 = vld [vmem:[%s902 + $0x74] sm:$0xf]
      %v933 = vld [vmem:[%s902 + $0x78] sm:$0xf]
      %v934 = vld [vmem:[%s902 + $0x7c] sm:$0xf]
      %v936 = vunpack.c.l.b16 %v901
      %v937 = vunpack.c.h.b16 %v901
      %v938 = vpack.c.b16 %v936, %v936
      %v939 = vpack.c.b16 %v937, %v937
      %v940 = vrot.slane %v938, 2
      %v941 = vrot.slane %v939, 2
      %v976 = vunpack.c.l.b16 %v903
      %v977 = vunpack.c.l.b16 %v904
      %v978 = vunpack.c.l.b16 %v905
      %v979 = vunpack.c.l.b16 %v906
      %v980 = vunpack.c.l.b16 %v907
      %v981 = vunpack.c.l.b16 %v908
      %v982 = vunpack.c.l.b16 %v909
      %v983 = vunpack.c.l.b16 %v910
      %v984 = vunpack.c.l.b16 %v911
      %v985 = vunpack.c.l.b16 %v912
      %v986 = vunpack.c.l.b16 %v913
      %v987 = vunpack.c.l.b16 %v914
      %v988 = vunpack.c.l.b16 %v915
      %v989 = vunpack.c.l.b16 %v916
      %v990 = vunpack.c.l.b16 %v917
      %v991 = vunpack.c.l.b16 %v918
      %v992 = vunpack.c.l.b16 %v919
      %v993 = vunpack.c.l.b16 %v920
      %v994 = vunpack.c.l.b16 %v921
      %v995 = vunpack.c.l.b16 %v922
      %v996 = vunpack.c.l.b16 %v923
      %v997 = vunpack.c.l.b16 %v924
      %v998 = vunpack.c.l.b16 %v925
      %v999 = vunpack.c.l.b16 %v926
      %v1000 = vunpack.c.l.b16 %v927
      %v1001 = vunpack.c.l.b16 %v928
      %v1002 = vunpack.c.l.b16 %v929
      %v1003 = vunpack.c.l.b16 %v930
      %v1004 = vunpack.c.l.b16 %v931
      %v1005 = vunpack.c.l.b16 %v932
      %v1006 = vunpack.c.l.b16 %v933
      %v1007 = vunpack.c.l.b16 %v934
      %v1008 = vpack.c.b16 %v977, %v976
      %v1009 = vpack.c.b16 %v979, %v978
      %v1010 = vpack.c.b16 %v981, %v980
      %v1011 = vpack.c.b16 %v983, %v982
      %v1012 = vpack.c.b16 %v985, %v984
      %v1013 = vpack.c.b16 %v987, %v986
      %v1014 = vpack.c.b16 %v989, %v988
      %v1015 = vpack.c.b16 %v991, %v990
      %v1016 = vpack.c.b16 %v993, %v992
      %v1017 = vpack.c.b16 %v995, %v994
      %v1018 = vpack.c.b16 %v997, %v996
      %v1019 = vpack.c.b16 %v999, %v998
      %v1020 = vpack.c.b16 %v1001, %v1000
      %v1021 = vpack.c.b16 %v1003, %v1002
      %v1022 = vpack.c.b16 %v1005, %v1004
      %v1023 = vpack.c.b16 %v1007, %v1006
      %1040 = vmatprep.subr.bf16.mxu0 0
      %1041 = vmatpush1.bf16.msra.mxu0 %v1015
      %1042 = vmatprep.subr.bf16.mxu0 0
      %1043 = vmatpush1.bf16.msra.mxu0 %v1014
      %1044 = vmatprep.subr.bf16.mxu0 0
      %1045 = vmatpush1.bf16.msra.mxu0 %v1013
      %1046 = vmatprep.subr.bf16.mxu0 0
      %1047 = vmatpush1.bf16.msra.mxu0 %v1012
      %1048 = vmatprep.subr.bf16.mxu0 0
      %1049 = vmatpush1.bf16.msra.mxu0 %v1011
      %1050 = vmatprep.subr.bf16.mxu0 0
      %1051 = vmatpush1.bf16.msra.mxu0 %v1010
      %1052 = vmatprep.subr.bf16.mxu0 0
      %1053 = vmatpush1.bf16.msra.mxu0 %v1009
      %1054 = vmatprep.subr.bf16.mxu0 0
      %1055 = vmatpush1.bf16.msra.mxu0 %v1008
      %1056 = vmatprep.subr.bf16.mxu0 0
      %1057 = vmatpush2.bf16.msra.mxu0 %v1023
      %1058 = vmatprep.subr.bf16.mxu0 0
      %1059 = vmatpush2.bf16.msra.mxu0 %v1022
      %1060 = vmatprep.subr.bf16.mxu0 0
      %1061 = vmatpush2.bf16.msra.mxu0 %v1021
      %1062 = vmatprep.subr.bf16.mxu0 0
      %1063 = vmatpush2.bf16.msra.mxu0 %v1020
      %1064 = vmatprep.subr.bf16.mxu0 0
      %1065 = vmatpush2.bf16.msra.mxu0 %v1019
      %1066 = vmatprep.subr.bf16.mxu0 0
      %1067 = vmatpush2.bf16.msra.mxu0 %v1018
      %1068 = vmatprep.subr.bf16.mxu0 0
      %1069 = vmatpush2.bf16.msra.mxu0 %v1017
      %1070 = vmatprep.subr.bf16.mxu0 0
      %1071 = vmatpush2.bf16.msra.mxu0 %v1016
      %1072 = vmatprep.mubr.bf16.mxu0 %v941
      %1073 = vmatmul.mubr.bf16.gmra.mxu0 %v940
      %v1074 = vpop.f32.mrf.mxu0
      %v1075 = vadd.f32 0.0, %v1074
      %v1076 = vpop.f32.mrf.mxu0
      %v1077 = vpop.f32.mrf.mxu0
      %v1078 = vpop.f32.mrf.mxu0
      %1079 = vdwg.mxu0
      %v1080 = vadd.f32 %v900, %v1075
      %s1081 = scalar_lea.vmem %s1, 640
      %v1082 = vld [vmem:[%s1081] sm:$0xf]
      %v1083 = vld [vmem:[%s1081 + $0x4] sm:$0xf]
      %v1084 = vld [vmem:[%s1081 + $0x8] sm:$0xf]
      %v1085 = vld [vmem:[%s1081 + $0xc] sm:$0xf]
      %v1086 = vld [vmem:[%s1081 + $0x10] sm:$0xf]
      %v1087 = vld [vmem:[%s1081 + $0x14] sm:$0xf]
      %v1088 = vld [vmem:[%s1081 + $0x18] sm:$0xf]
      %v1089 = vld [vmem:[%s1081 + $0x1c] sm:$0xf]
      %v1090 = vld [vmem:[%s1081 + $0x20] sm:$0xf]
      %v1091 = vld [vmem:[%s1081 + $0x24] sm:$0xf]
      %v1092 = vld [vmem:[%s1081 + $0x28] sm:$0xf]
      %v1093 = vld [vmem:[%s1081 + $0x2c] sm:$0xf]
      %v1094 = vld [vmem:[%s1081 + $0x30] sm:$0xf]
      %v1095 = vld [vmem:[%s1081 + $0x34] sm:$0xf]
      %v1096 = vld [vmem:[%s1081 + $0x38] sm:$0xf]
      %v1097 = vld [vmem:[%s1081 + $0x3c] sm:$0xf]
      %v1098 = vld [vmem:[%s1081 + $0x40] sm:$0xf]
      %v1099 = vld [vmem:[%s1081 + $0x44] sm:$0xf]
      %v1100 = vld [vmem:[%s1081 + $0x48] sm:$0xf]
      %v1101 = vld [vmem:[%s1081 + $0x4c] sm:$0xf]
      %v1102 = vld [vmem:[%s1081 + $0x50] sm:$0xf]
      %v1103 = vld [vmem:[%s1081 + $0x54] sm:$0xf]
      %v1104 = vld [vmem:[%s1081 + $0x58] sm:$0xf]
      %v1105 = vld [vmem:[%s1081 + $0x5c] sm:$0xf]
      %v1106 = vld [vmem:[%s1081 + $0x60] sm:$0xf]
      %v1107 = vld [vmem:[%s1081 + $0x64] sm:$0xf]
      %v1108 = vld [vmem:[%s1081 + $0x68] sm:$0xf]
      %v1109 = vld [vmem:[%s1081 + $0x6c] sm:$0xf]
      %v1110 = vld [vmem:[%s1081 + $0x70] sm:$0xf]
      %v1111 = vld [vmem:[%s1081 + $0x74] sm:$0xf]
      %v1112 = vld [vmem:[%s1081 + $0x78] sm:$0xf]
      %v1113 = vld [vmem:[%s1081 + $0x7c] sm:$0xf]
      %v1115 = vshrl.u32 %v938, 16
      %v1117 = vrot.slane %v1115, 2
      %v1118 = vshll.u32 %v938, 16
      %v1120 = vrot.slane %v1118, 3
      %v1121 = vor.u32 %v1117, %v1120
      %v1123 = vshrl.u32 %v939, 16
      %v1125 = vrot.slane %v1123, 2
      %v1126 = vshll.u32 %v939, 16
      %v1128 = vrot.slane %v1126, 3
      %v1129 = vor.u32 %v1125, %v1128
      %v1164 = vunpack.c.l.b16 %v1082
      %v1165 = vunpack.c.l.b16 %v1083
      %v1166 = vunpack.c.l.b16 %v1084
      %v1167 = vunpack.c.l.b16 %v1085
      %v1168 = vunpack.c.l.b16 %v1086
      %v1169 = vunpack.c.l.b16 %v1087
      %v1170 = vunpack.c.l.b16 %v1088
      %v1171 = vunpack.c.l.b16 %v1089
      %v1172 = vunpack.c.l.b16 %v1090
      %v1173 = vunpack.c.l.b16 %v1091
      %v1174 = vunpack.c.l.b16 %v1092
      %v1175 = vunpack.c.l.b16 %v1093
      %v1176 = vunpack.c.l.b16 %v1094
      %v1177 = vunpack.c.l.b16 %v1095
      %v1178 = vunpack.c.l.b16 %v1096
      %v1179 = vunpack.c.l.b16 %v1097
      %v1180 = vunpack.c.l.b16 %v1098
      %v1181 = vunpack.c.l.b16 %v1099
      %v1182 = vunpack.c.l.b16 %v1100
      %v1183 = vunpack.c.l.b16 %v1101
      %v1184 = vunpack.c.l.b16 %v1102
      %v1185 = vunpack.c.l.b16 %v1103
      %v1186 = vunpack.c.l.b16 %v1104
      %v1187 = vunpack.c.l.b16 %v1105
      %v1188 = vunpack.c.l.b16 %v1106
      %v1189 = vunpack.c.l.b16 %v1107
      %v1190 = vunpack.c.l.b16 %v1108
      %v1191 = vunpack.c.l.b16 %v1109
      %v1192 = vunpack.c.l.b16 %v1110
      %v1193 = vunpack.c.l.b16 %v1111
      %v1194 = vunpack.c.l.b16 %v1112
      %v1195 = vunpack.c.l.b16 %v1113
      %v1196 = vpack.c.b16 %v1165, %v1164
      %v1197 = vpack.c.b16 %v1167, %v1166
      %v1198 = vpack.c.b16 %v1169, %v1168
      %v1199 = vpack.c.b16 %v1171, %v1170
      %v1200 = vpack.c.b16 %v1173, %v1172
      %v1201 = vpack.c.b16 %v1175, %v1174
      %v1202 = vpack.c.b16 %v1177, %v1176
      %v1203 = vpack.c.b16 %v1179, %v1178
      %v1204 = vpack.c.b16 %v1181, %v1180
      %v1205 = vpack.c.b16 %v1183, %v1182
      %v1206 = vpack.c.b16 %v1185, %v1184
      %v1207 = vpack.c.b16 %v1187, %v1186
      %v1208 = vpack.c.b16 %v1189, %v1188
      %v1209 = vpack.c.b16 %v1191, %v1190
      %v1210 = vpack.c.b16 %v1193, %v1192
      %v1211 = vpack.c.b16 %v1195, %v1194
      %1228 = vmatprep.subr.bf16.mxu0 0
      %1229 = vmatpush1.bf16.msra.mxu0 %v1203
      %1230 = vmatprep.subr.bf16.mxu0 0
      %1231 = vmatpush1.bf16.msra.mxu0 %v1202
      %1232 = vmatprep.subr.bf16.mxu0 0
      %1233 = vmatpush1.bf16.msra.mxu0 %v1201
      %1234 = vmatprep.subr.bf16.mxu0 0
      %1235 = vmatpush1.bf16.msra.mxu0 %v1200
      %1236 = vmatprep.subr.bf16.mxu0 0
      %1237 = vmatpush1.bf16.msra.mxu0 %v1199
      %1238 = vmatprep.subr.bf16.mxu0 0
      %1239 = vmatpush1.bf16.msra.mxu0 %v1198
      %1240 = vmatprep.subr.bf16.mxu0 0
      %1241 = vmatpush1.bf16.msra.mxu0 %v1197
      %1242 = vmatprep.subr.bf16.mxu0 0
      %1243 = vmatpush1.bf16.msra.mxu0 %v1196
      %1244 = vmatprep.subr.bf16.mxu0 0
      %1245 = vmatpush2.bf16.msra.mxu0 %v1211
      %1246 = vmatprep.subr.bf16.mxu0 0
      %1247 = vmatpush2.bf16.msra.mxu0 %v1210
      %1248 = vmatprep.subr.bf16.mxu0 0
      %1249 = vmatpush2.bf16.msra.mxu0 %v1209
      %1250 = vmatprep.subr.bf16.mxu0 0
      %1251 = vmatpush2.bf16.msra.mxu0 %v1208
      %1252 = vmatprep.subr.bf16.mxu0 0
      %1253 = vmatpush2.bf16.msra.mxu0 %v1207
      %1254 = vmatprep.subr.bf16.mxu0 0
      %1255 = vmatpush2.bf16.msra.mxu0 %v1206
      %1256 = vmatprep.subr.bf16.mxu0 0
      %1257 = vmatpush2.bf16.msra.mxu0 %v1205
      %1258 = vmatprep.subr.bf16.mxu0 0
      %1259 = vmatpush2.bf16.msra.mxu0 %v1204
      %1260 = vmatprep.mubr.bf16.mxu0 %v1129
      %1261 = vmatmul.mubr.bf16.gmra.mxu0 %v1121
      %v1262 = vpop.f32.mrf.mxu0
      %v1263 = vadd.f32 0.0, %v1262
      %v1264 = vpop.f32.mrf.mxu0
      %v1265 = vpop.f32.mrf.mxu0
      %v1266 = vpop.f32.mrf.mxu0
      %1267 = vdwg.mxu0
      %v1268 = vadd.f32 %v1080, %v1263
      %v1269 = vld [vmem:[%s166] sm:$0x88]
      %v1270 = vld [vmem:[%s166 + $0x8] sm:$0x11]
      %s1271 = scalar_lea.vmem %s1, 768
      %v1272 = vld [vmem:[%s1271] sm:$0xf]
      %v1273 = vld [vmem:[%s1271 + $0x4] sm:$0xf]
      %v1274 = vld [vmem:[%s1271 + $0x8] sm:$0xf]
      %v1275 = vld [vmem:[%s1271 + $0xc] sm:$0xf]
      %v1276 = vld [vmem:[%s1271 + $0x10] sm:$0xf]
      %v1277 = vld [vmem:[%s1271 + $0x14] sm:$0xf]
      %v1278 = vld [vmem:[%s1271 + $0x18] sm:$0xf]
      %v1279 = vld [vmem:[%s1271 + $0x1c] sm:$0xf]
      %v1280 = vld [vmem:[%s1271 + $0x20] sm:$0xf]
      %v1281 = vld [vmem:[%s1271 + $0x24] sm:$0xf]
      %v1282 = vld [vmem:[%s1271 + $0x28] sm:$0xf]
      %v1283 = vld [vmem:[%s1271 + $0x2c] sm:$0xf]
      %v1284 = vld [vmem:[%s1271 + $0x30] sm:$0xf]
      %v1285 = vld [vmem:[%s1271 + $0x34] sm:$0xf]
      %v1286 = vld [vmem:[%s1271 + $0x38] sm:$0xf]
      %v1287 = vld [vmem:[%s1271 + $0x3c] sm:$0xf]
      %v1288 = vld [vmem:[%s1271 + $0x40] sm:$0xf]
      %v1289 = vld [vmem:[%s1271 + $0x44] sm:$0xf]
      %v1290 = vld [vmem:[%s1271 + $0x48] sm:$0xf]
      %v1291 = vld [vmem:[%s1271 + $0x4c] sm:$0xf]
      %v1292 = vld [vmem:[%s1271 + $0x50] sm:$0xf]
      %v1293 = vld [vmem:[%s1271 + $0x54] sm:$0xf]
      %v1294 = vld [vmem:[%s1271 + $0x58] sm:$0xf]
      %v1295 = vld [vmem:[%s1271 + $0x5c] sm:$0xf]
      %v1296 = vld [vmem:[%s1271 + $0x60] sm:$0xf]
      %v1297 = vld [vmem:[%s1271 + $0x64] sm:$0xf]
      %v1298 = vld [vmem:[%s1271 + $0x68] sm:$0xf]
      %v1299 = vld [vmem:[%s1271 + $0x6c] sm:$0xf]
      %v1300 = vld [vmem:[%s1271 + $0x70] sm:$0xf]
      %v1301 = vld [vmem:[%s1271 + $0x74] sm:$0xf]
      %v1302 = vld [vmem:[%s1271 + $0x78] sm:$0xf]
      %v1303 = vld [vmem:[%s1271 + $0x7c] sm:$0xf]
      %v1306 = vunpack.c.l.b16 %v1269
      %v1307 = vunpack.c.h.b16 %v1269
      %v1308 = vunpack.c.l.b16 %v1270
      %v1309 = vunpack.c.h.b16 %v1270
      %v1310 = vpack.c.b16 %v1308, %v1306
      %v1311 = vpack.c.b16 %v1309, %v1307
      %v1312 = vrot.slane %v1310, 3
      %v1313 = vrot.slane %v1311, 3
      %v1348 = vunpack.c.l.b16 %v1272
      %v1349 = vunpack.c.l.b16 %v1273
      %v1350 = vunpack.c.l.b16 %v1274
      %v1351 = vunpack.c.l.b16 %v1275
      %v1352 = vunpack.c.l.b16 %v1276
      %v1353 = vunpack.c.l.b16 %v1277
      %v1354 = vunpack.c.l.b16 %v1278
      %v1355 = vunpack.c.l.b16 %v1279
      %v1356 = vunpack.c.l.b16 %v1280
      %v1357 = vunpack.c.l.b16 %v1281
      %v1358 = vunpack.c.l.b16 %v1282
      %v1359 = vunpack.c.l.b16 %v1283
      %v1360 = vunpack.c.l.b16 %v1284
      %v1361 = vunpack.c.l.b16 %v1285
      %v1362 = vunpack.c.l.b16 %v1286
      %v1363 = vunpack.c.l.b16 %v1287
      %v1364 = vunpack.c.l.b16 %v1288
      %v1365 = vunpack.c.l.b16 %v1289
      %v1366 = vunpack.c.l.b16 %v1290
      %v1367 = vunpack.c.l.b16 %v1291
      %v1368 = vunpack.c.l.b16 %v1292
      %v1369 = vunpack.c.l.b16 %v1293
      %v1370 = vunpack.c.l.b16 %v1294
      %v1371 = vunpack.c.l.b16 %v1295
      %v1372 = vunpack.c.l.b16 %v1296
      %v1373 = vunpack.c.l.b16 %v1297
      %v1374 = vunpack.c.l.b16 %v1298
      %v1375 = vunpack.c.l.b16 %v1299
      %v1376 = vunpack.c.l.b16 %v1300
      %v1377 = vunpack.c.l.b16 %v1301
      %v1378 = vunpack.c.l.b16 %v1302
      %v1379 = vunpack.c.l.b16 %v1303
      %v1380 = vpack.c.b16 %v1349, %v1348
      %v1381 = vpack.c.b16 %v1351, %v1350
      %v1382 = vpack.c.b16 %v1353, %v1352
      %v1383 = vpack.c.b16 %v1355, %v1354
      %v1384 = vpack.c.b16 %v1357, %v1356
      %v1385 = vpack.c.b16 %v1359, %v1358
      %v1386 = vpack.c.b16 %v1361, %v1360
      %v1387 = vpack.c.b16 %v1363, %v1362
      %v1388 = vpack.c.b16 %v1365, %v1364
      %v1389 = vpack.c.b16 %v1367, %v1366
      %v1390 = vpack.c.b16 %v1369, %v1368
      %v1391 = vpack.c.b16 %v1371, %v1370
      %v1392 = vpack.c.b16 %v1373, %v1372
      %v1393 = vpack.c.b16 %v1375, %v1374
      %v1394 = vpack.c.b16 %v1377, %v1376
      %v1395 = vpack.c.b16 %v1379, %v1378
      %1412 = vmatprep.subr.bf16.mxu0 0
      %1413 = vmatpush1.bf16.msra.mxu0 %v1387
      %1414 = vmatprep.subr.bf16.mxu0 0
      %1415 = vmatpush1.bf16.msra.mxu0 %v1386
      %1416 = vmatprep.subr.bf16.mxu0 0
      %1417 = vmatpush1.bf16.msra.mxu0 %v1385
      %1418 = vmatprep.subr.bf16.mxu0 0
      %1419 = vmatpush1.bf16.msra.mxu0 %v1384
      %1420 = vmatprep.subr.bf16.mxu0 0
      %1421 = vmatpush1.bf16.msra.mxu0 %v1383
      %1422 = vmatprep.subr.bf16.mxu0 0
      %1423 = vmatpush1.bf16.msra.mxu0 %v1382
      %1424 = vmatprep.subr.bf16.mxu0 0
      %1425 = vmatpush1.bf16.msra.mxu0 %v1381
      %1426 = vmatprep.subr.bf16.mxu0 0
      %1427 = vmatpush1.bf16.msra.mxu0 %v1380
      %1428 = vmatprep.subr.bf16.mxu0 0
      %1429 = vmatpush2.bf16.msra.mxu0 %v1395
      %1430 = vmatprep.subr.bf16.mxu0 0
      %1431 = vmatpush2.bf16.msra.mxu0 %v1394
      %1432 = vmatprep.subr.bf16.mxu0 0
      %1433 = vmatpush2.bf16.msra.mxu0 %v1393
      %1434 = vmatprep.subr.bf16.mxu0 0
      %1435 = vmatpush2.bf16.msra.mxu0 %v1392
      %1436 = vmatprep.subr.bf16.mxu0 0
      %1437 = vmatpush2.bf16.msra.mxu0 %v1391
      %1438 = vmatprep.subr.bf16.mxu0 0
      %1439 = vmatpush2.bf16.msra.mxu0 %v1390
      %1440 = vmatprep.subr.bf16.mxu0 0
      %1441 = vmatpush2.bf16.msra.mxu0 %v1389
      %1442 = vmatprep.subr.bf16.mxu0 0
      %1443 = vmatpush2.bf16.msra.mxu0 %v1388
      %1444 = vmatprep.mubr.bf16.mxu0 %v1313
      %1445 = vmatmul.mubr.bf16.gmra.mxu0 %v1312
      %v1446 = vpop.f32.mrf.mxu0
      %v1447 = vadd.f32 0.0, %v1446
      %v1448 = vpop.f32.mrf.mxu0
      %v1449 = vpop.f32.mrf.mxu0
      %v1450 = vpop.f32.mrf.mxu0
      %1451 = vdwg.mxu0
      %v1452 = vadd.f32 %v1268, %v1447
      %s1453 = scalar_lea.vmem %s1, 896
      %v1454 = vld [vmem:[%s1453] sm:$0xf]
      %v1455 = vld [vmem:[%s1453 + $0x4] sm:$0xf]
      %v1456 = vld [vmem:[%s1453 + $0x8] sm:$0xf]
      %v1457 = vld [vmem:[%s1453 + $0xc] sm:$0xf]
      %v1458 = vld [vmem:[%s1453 + $0x10] sm:$0xf]
      %v1459 = vld [vmem:[%s1453 + $0x14] sm:$0xf]
      %v1460 = vld [vmem:[%s1453 + $0x18] sm:$0xf]
      %v1461 = vld [vmem:[%s1453 + $0x1c] sm:$0xf]
      %v1462 = vld [vmem:[%s1453 + $0x20] sm:$0xf]
      %v1463 = vld [vmem:[%s1453 + $0x24] sm:$0xf]
      %v1464 = vld [vmem:[%s1453 + $0x28] sm:$0xf]
      %v1465 = vld [vmem:[%s1453 + $0x2c] sm:$0xf]
      %v1466 = vld [vmem:[%s1453 + $0x30] sm:$0xf]
      %v1467 = vld [vmem:[%s1453 + $0x34] sm:$0xf]
      %v1468 = vld [vmem:[%s1453 + $0x38] sm:$0xf]
      %v1469 = vld [vmem:[%s1453 + $0x3c] sm:$0xf]
      %v1470 = vld [vmem:[%s1453 + $0x40] sm:$0xf]
      %v1471 = vld [vmem:[%s1453 + $0x44] sm:$0xf]
      %v1472 = vld [vmem:[%s1453 + $0x48] sm:$0xf]
      %v1473 = vld [vmem:[%s1453 + $0x4c] sm:$0xf]
      %v1474 = vld [vmem:[%s1453 + $0x50] sm:$0xf]
      %v1475 = vld [vmem:[%s1453 + $0x54] sm:$0xf]
      %v1476 = vld [vmem:[%s1453 + $0x58] sm:$0xf]
      %v1477 = vld [vmem:[%s1453 + $0x5c] sm:$0xf]
      %v1478 = vld [vmem:[%s1453 + $0x60] sm:$0xf]
      %v1479 = vld [vmem:[%s1453 + $0x64] sm:$0xf]
      %v1480 = vld [vmem:[%s1453 + $0x68] sm:$0xf]
      %v1481 = vld [vmem:[%s1453 + $0x6c] sm:$0xf]
      %v1482 = vld [vmem:[%s1453 + $0x70] sm:$0xf]
      %v1483 = vld [vmem:[%s1453 + $0x74] sm:$0xf]
      %v1484 = vld [vmem:[%s1453 + $0x78] sm:$0xf]
      %v1485 = vld [vmem:[%s1453 + $0x7c] sm:$0xf]
      %v1487 = vshrl.u32 %v1310, 16
      %v1489 = vrot.slane %v1487, 3
      %v1490 = vshll.u32 %v1310, 16
      %v1492 = vrot.slane %v1490, 4
      %v1493 = vor.u32 %v1489, %v1492
      %v1495 = vshrl.u32 %v1311, 16
      %v1497 = vrot.slane %v1495, 3
      %v1498 = vshll.u32 %v1311, 16
      %v1500 = vrot.slane %v1498, 4
      %v1501 = vor.u32 %v1497, %v1500
      %v1536 = vunpack.c.l.b16 %v1454
      %v1537 = vunpack.c.l.b16 %v1455
      %v1538 = vunpack.c.l.b16 %v1456
      %v1539 = vunpack.c.l.b16 %v1457
      %v1540 = vunpack.c.l.b16 %v1458
      %v1541 = vunpack.c.l.b16 %v1459
      %v1542 = vunpack.c.l.b16 %v1460
      %v1543 = vunpack.c.l.b16 %v1461
      %v1544 = vunpack.c.l.b16 %v1462
      %v1545 = vunpack.c.l.b16 %v1463
      %v1546 = vunpack.c.l.b16 %v1464
      %v1547 = vunpack.c.l.b16 %v1465
      %v1548 = vunpack.c.l.b16 %v1466
      %v1549 = vunpack.c.l.b16 %v1467
      %v1550 = vunpack.c.l.b16 %v1468
      %v1551 = vunpack.c.l.b16 %v1469
      %v1552 = vunpack.c.l.b16 %v1470
      %v1553 = vunpack.c.l.b16 %v1471
      %v1554 = vunpack.c.l.b16 %v1472
      %v1555 = vunpack.c.l.b16 %v1473
      %v1556 = vunpack.c.l.b16 %v1474
      %v1557 = vunpack.c.l.b16 %v1475
      %v1558 = vunpack.c.l.b16 %v1476
      %v1559 = vunpack.c.l.b16 %v1477
      %v1560 = vunpack.c.l.b16 %v1478
      %v1561 = vunpack.c.l.b16 %v1479
      %v1562 = vunpack.c.l.b16 %v1480
      %v1563 = vunpack.c.l.b16 %v1481
      %v1564 = vunpack.c.l.b16 %v1482
      %v1565 = vunpack.c.l.b16 %v1483
      %v1566 = vunpack.c.l.b16 %v1484
      %v1567 = vunpack.c.l.b16 %v1485
      %v1568 = vpack.c.b16 %v1537, %v1536
      %v1569 = vpack.c.b16 %v1539, %v1538
      %v1570 = vpack.c.b16 %v1541, %v1540
      %v1571 = vpack.c.b16 %v1543, %v1542
      %v1572 = vpack.c.b16 %v1545, %v1544
      %v1573 = vpack.c.b16 %v1547, %v1546
      %v1574 = vpack.c.b16 %v1549, %v1548
      %v1575 = vpack.c.b16 %v1551, %v1550
      %v1576 = vpack.c.b16 %v1553, %v1552
      %v1577 = vpack.c.b16 %v1555, %v1554
      %v1578 = vpack.c.b16 %v1557, %v1556
      %v1579 = vpack.c.b16 %v1559, %v1558
      %v1580 = vpack.c.b16 %v1561, %v1560
      %v1581 = vpack.c.b16 %v1563, %v1562
      %v1582 = vpack.c.b16 %v1565, %v1564
      %v1583 = vpack.c.b16 %v1567, %v1566
      %1600 = vmatprep.subr.bf16.mxu0 0
      %1601 = vmatpush1.bf16.msra.mxu0 %v1575
      %1602 = vmatprep.subr.bf16.mxu0 0
      %1603 = vmatpush1.bf16.msra.mxu0 %v1574
      %1604 = vmatprep.subr.bf16.mxu0 0
      %1605 = vmatpush1.bf16.msra.mxu0 %v1573
      %1606 = vmatprep.subr.bf16.mxu0 0
      %1607 = vmatpush1.bf16.msra.mxu0 %v1572
      %1608 = vmatprep.subr.bf16.mxu0 0
      %1609 = vmatpush1.bf16.msra.mxu0 %v1571
      %1610 = vmatprep.subr.bf16.mxu0 0
      %1611 = vmatpush1.bf16.msra.mxu0 %v1570
      %1612 = vmatprep.subr.bf16.mxu0 0
      %1613 = vmatpush1.bf16.msra.mxu0 %v1569
      %1614 = vmatprep.subr.bf16.mxu0 0
      %1615 = vmatpush1.bf16.msra.mxu0 %v1568
      %1616 = vmatprep.subr.bf16.mxu0 0
      %1617 = vmatpush2.bf16.msra.mxu0 %v1583
      %1618 = vmatprep.subr.bf16.mxu0 0
      %1619 = vmatpush2.bf16.msra.mxu0 %v1582
      %1620 = vmatprep.subr.bf16.mxu0 0
      %1621 = vmatpush2.bf16.msra.mxu0 %v1581
      %1622 = vmatprep.subr.bf16.mxu0 0
      %1623 = vmatpush2.bf16.msra.mxu0 %v1580
      %1624 = vmatprep.subr.bf16.mxu0 0
      %1625 = vmatpush2.bf16.msra.mxu0 %v1579
      %1626 = vmatprep.subr.bf16.mxu0 0
      %1627 = vmatpush2.bf16.msra.mxu0 %v1578
      %1628 = vmatprep.subr.bf16.mxu0 0
      %1629 = vmatpush2.bf16.msra.mxu0 %v1577
      %1630 = vmatprep.subr.bf16.mxu0 0
      %1631 = vmatpush2.bf16.msra.mxu0 %v1576
      %1632 = vmatprep.mubr.bf16.mxu0 %v1501
      %1633 = vmatmul.mubr.bf16.gmra.mxu0 %v1493
      %v1634 = vpop.f32.mrf.mxu0
      %v1635 = vadd.f32 0.0, %v1634
      %v1636 = vpop.f32.mrf.mxu0
      %v1637 = vpop.f32.mrf.mxu0
      %v1638 = vpop.f32.mrf.mxu0
      %1639 = vdwg.mxu0
      %v1640 = vadd.f32 %v1452, %v1635
      %v1641 = vld [vmem:[%s166 + $0x8] sm:$0x33]
      %s1642 = scalar_lea.vmem %s1, 1024
      %v1643 = vld [vmem:[%s1642] sm:$0xf]
      %v1644 = vld [vmem:[%s1642 + $0x4] sm:$0xf]
      %v1645 = vld [vmem:[%s1642 + $0x8] sm:$0xf]
      %v1646 = vld [vmem:[%s1642 + $0xc] sm:$0xf]
      %v1647 = vld [vmem:[%s1642 + $0x10] sm:$0xf]
      %v1648 = vld [vmem:[%s1642 + $0x14] sm:$0xf]
      %v1649 = vld [vmem:[%s1642 + $0x18] sm:$0xf]
      %v1650 = vld [vmem:[%s1642 + $0x1c] sm:$0xf]
      %v1651 = vld [vmem:[%s1642 + $0x20] sm:$0xf]
      %v1652 = vld [vmem:[%s1642 + $0x24] sm:$0xf]
      %v1653 = vld [vmem:[%s1642 + $0x28] sm:$0xf]
      %v1654 = vld [vmem:[%s1642 + $0x2c] sm:$0xf]
      %v1655 = vld [vmem:[%s1642 + $0x30] sm:$0xf]
      %v1656 = vld [vmem:[%s1642 + $0x34] sm:$0xf]
      %v1657 = vld [vmem:[%s1642 + $0x38] sm:$0xf]
      %v1658 = vld [vmem:[%s1642 + $0x3c] sm:$0xf]
      %v1659 = vld [vmem:[%s1642 + $0x40] sm:$0xf]
      %v1660 = vld [vmem:[%s1642 + $0x44] sm:$0xf]
      %v1661 = vld [vmem:[%s1642 + $0x48] sm:$0xf]
      %v1662 = vld [vmem:[%s1642 + $0x4c] sm:$0xf]
      %v1663 = vld [vmem:[%s1642 + $0x50] sm:$0xf]
      %v1664 = vld [vmem:[%s1642 + $0x54] sm:$0xf]
      %v1665 = vld [vmem:[%s1642 + $0x58] sm:$0xf]
      %v1666 = vld [vmem:[%s1642 + $0x5c] sm:$0xf]
      %v1667 = vld [vmem:[%s1642 + $0x60] sm:$0xf]
      %v1668 = vld [vmem:[%s1642 + $0x64] sm:$0xf]
      %v1669 = vld [vmem:[%s1642 + $0x68] sm:$0xf]
      %v1670 = vld [vmem:[%s1642 + $0x6c] sm:$0xf]
      %v1671 = vld [vmem:[%s1642 + $0x70] sm:$0xf]
      %v1672 = vld [vmem:[%s1642 + $0x74] sm:$0xf]
      %v1673 = vld [vmem:[%s1642 + $0x78] sm:$0xf]
      %v1674 = vld [vmem:[%s1642 + $0x7c] sm:$0xf]
      %v1676 = vunpack.c.l.b16 %v1641
      %v1677 = vunpack.c.h.b16 %v1641
      %v1678 = vpack.c.b16 %v1676, %v1676
      %v1679 = vpack.c.b16 %v1677, %v1677
      %v1714 = vunpack.c.l.b16 %v1643
      %v1715 = vunpack.c.l.b16 %v1644
      %v1716 = vunpack.c.l.b16 %v1645
      %v1717 = vunpack.c.l.b16 %v1646
      %v1718 = vunpack.c.l.b16 %v1647
      %v1719 = vunpack.c.l.b16 %v1648
      %v1720 = vunpack.c.l.b16 %v1649
      %v1721 = vunpack.c.l.b16 %v1650
      %v1722 = vunpack.c.l.b16 %v1651
      %v1723 = vunpack.c.l.b16 %v1652
      %v1724 = vunpack.c.l.b16 %v1653
      %v1725 = vunpack.c.l.b16 %v1654
      %v1726 = vunpack.c.l.b16 %v1655
      %v1727 = vunpack.c.l.b16 %v1656
      %v1728 = vunpack.c.l.b16 %v1657
      %v1729 = vunpack.c.l.b16 %v1658
      %v1730 = vunpack.c.l.b16 %v1659
      %v1731 = vunpack.c.l.b16 %v1660
      %v1732 = vunpack.c.l.b16 %v1661
      %v1733 = vunpack.c.l.b16 %v1662
      %v1734 = vunpack.c.l.b16 %v1663
      %v1735 = vunpack.c.l.b16 %v1664
      %v1736 = vunpack.c.l.b16 %v1665
      %v1737 = vunpack.c.l.b16 %v1666
      %v1738 = vunpack.c.l.b16 %v1667
      %v1739 = vunpack.c.l.b16 %v1668
      %v1740 = vunpack.c.l.b16 %v1669
      %v1741 = vunpack.c.l.b16 %v1670
      %v1742 = vunpack.c.l.b16 %v1671
      %v1743 = vunpack.c.l.b16 %v1672
      %v1744 = vunpack.c.l.b16 %v1673
      %v1745 = vunpack.c.l.b16 %v1674
      %v1746 = vpack.c.b16 %v1715, %v1714
      %v1747 = vpack.c.b16 %v1717, %v1716
      %v1748 = vpack.c.b16 %v1719, %v1718
      %v1749 = vpack.c.b16 %v1721, %v1720
      %v1750 = vpack.c.b16 %v1723, %v1722
      %v1751 = vpack.c.b16 %v1725, %v1724
      %v1752 = vpack.c.b16 %v1727, %v1726
      %v1753 = vpack.c.b16 %v1729, %v1728
      %v1754 = vpack.c.b16 %v1731, %v1730
      %v1755 = vpack.c.b16 %v1733, %v1732
      %v1756 = vpack.c.b16 %v1735, %v1734
      %v1757 = vpack.c.b16 %v1737, %v1736
      %v1758 = vpack.c.b16 %v1739, %v1738
      %v1759 = vpack.c.b16 %v1741, %v1740
      %v1760 = vpack.c.b16 %v1743, %v1742
      %v1761 = vpack.c.b16 %v1745, %v1744
      %1778 = vmatprep.subr.bf16.mxu0 0
      %1779 = vmatpush1.bf16.msra.mxu0 %v1753
      %1780 = vmatprep.subr.bf16.mxu0 0
      %1781 = vmatpush1.bf16.msra.mxu0 %v1752
      %1782 = vmatprep.subr.bf16.mxu0 0
      %1783 = vmatpush1.bf16.msra.mxu0 %v1751
      %1784 = vmatprep.subr.bf16.mxu0 0
      %1785 = vmatpush1.bf16.msra.mxu0 %v1750
      %1786 = vmatprep.subr.bf16.mxu0 0
      %1787 = vmatpush1.bf16.msra.mxu0 %v1749
      %1788 = vmatprep.subr.bf16.mxu0 0
      %1789 = vmatpush1.bf16.msra.mxu0 %v1748
      %1790 = vmatprep.subr.bf16.mxu0 0
      %1791 = vmatpush1.bf16.msra.mxu0 %v1747
      %1792 = vmatprep.subr.bf16.mxu0 0
      %1793 = vmatpush1.bf16.msra.mxu0 %v1746
      %1794 = vmatprep.subr.bf16.mxu0 0
      %1795 = vmatpush2.bf16.msra.mxu0 %v1761
      %1796 = vmatprep.subr.bf16.mxu0 0
      %1797 = vmatpush2.bf16.msra.mxu0 %v1760
      %1798 = vmatprep.subr.bf16.mxu0 0
      %1799 = vmatpush2.bf16.msra.mxu0 %v1759
      %1800 = vmatprep.subr.bf16.mxu0 0
      %1801 = vmatpush2.bf16.msra.mxu0 %v1758
      %1802 = vmatprep.subr.bf16.mxu0 0
      %1803 = vmatpush2.bf16.msra.mxu0 %v1757
      %1804 = vmatprep.subr.bf16.mxu0 0
      %1805 = vmatpush2.bf16.msra.mxu0 %v1756
      %1806 = vmatprep.subr.bf16.mxu0 0
      %1807 = vmatpush2.bf16.msra.mxu0 %v1755
      %1808 = vmatprep.subr.bf16.mxu0 0
      %1809 = vmatpush2.bf16.msra.mxu0 %v1754
      %1810 = vmatprep.mubr.bf16.mxu0 %v1679
      %1811 = vmatmul.mubr.bf16.gmra.mxu0 %v1678
      %v1812 = vpop.f32.mrf.mxu0
      %v1813 = vadd.f32 0.0, %v1812
      %v1814 = vpop.f32.mrf.mxu0
      %v1815 = vpop.f32.mrf.mxu0
      %v1816 = vpop.f32.mrf.mxu0
      %1817 = vdwg.mxu0
      %v1818 = vadd.f32 %v1640, %v1813
      %v1819 = vld [vmem:[#allocation2] sm:$0x1]
      %v1821 = vlaneseq
      %v1822 = vshrl.u32 %v1821, 7
      %v1823 = vsub.s32 0, %v1822
      %v1824 = vrot.slane %v1819, %v1823
      %v1826 = vadd.f32 %v1818, %v1824
      %vm1827 = vcmask 2048
      %1828 = vst.msk [vmem:[%s170] sm:$0x7] %vm1827, %v1826
      %p1829 = scmp.lt.s32.totalorder %s16, 1
      %s1830 = scalar_select %p1829, %s16, 1
      %s1831 = smul.addr %s1830, 4
      %s1832 = scalar_lea.vmem %s3, %s1831
      // Predicated region
      $region33: #{_lambda_.9} parent=31 // pred_check
        %p1833 = pneg %p102
      $region34: #{_lambda_.9} parent=31 // pred_check_branch
        %1835 = sbr.rel (%p1833) target = $region36
      $region35: #{_lambda_.9} parent=31 // pred_region
        _
      $region36: #{_lambda_.9} parent=31 // pred_fallthru
        _
    $region32: #{_lambda_.9} parent=5 // pred_fallthru
      _
    %p1836 = scmp.le.s32.totalorder 2, %s11
    // Predicated region
    $region37: #{_lambda_.9} parent=5 // pred_check
      %p1837 = pneg %p1836
    $region38: #{_lambda_.9} parent=5 // pred_check_branch
      %1839 = sbr.rel (%p1837) target = $region40
    $region39: #{_lambda_.9} parent=5 // pred_region
      %s1840 = ssub.s32 %s11, 2
      // Predicated region
      $region41: #{_lambda_.9} parent=39 // pred_check
        %p1841 = pneg %p108
      $region42: #{_lambda_.9} parent=39 // pred_check_branch
        %1843 = sbr.rel (%p1841) target = $region44
      $region43: #{_lambda_.9} parent=39 // pred_region
        %p1844 = scmp.lt.s32.totalorder %s17, 1
        %s1845 = scalar_select %p1844, %s17, 1
        %s1846 = smul.addr %s1845, 4
        %s1847 = scalar_lea.vmem %s3, %s1846
      $region44: #{_lambda_.9} parent=39 // pred_fallthru
        _
    $region40: #{_lambda_.9} parent=5 // pred_fallthru
      _
  $region6: #{_lambda_.9} parent=0 // loop_footer
    %s15 = sadd.s32 1, %s11
  $region7: #{_lambda_.9} parent=0 // loop_footer_branch
    %10 = sbr.rel target = $region3
  $region8: #{_lambda_.9} parent=0 // loop_exit
    _

</llo_original>
